<compile_context>
chip_gen: v7x
topology: tpu7x:2x2x1
jax: 0.10.0
libtpu: 0.0.40
codegen_flags: <defaults>
</compile_context>

<pallas_src>
import functools

import numpy as np
import jax
import jax.numpy as jnp
from jax import lax
from jax.experimental import pallas as pl
from jax.experimental.pallas import tpu as pltpu


# ------------------------------ Pallas kernel -------------------------------

def _conv_bn_relu_kernel(x_ref, w_ref, b_ref, out_ref, *, KH, KW, OH, OW, stride):
    # x_ref:   (NB, Hp, Wp, Cin)    zero-padded NHWC input chunk
    # w_ref:   (KH*KW, Cin, Cout)   conv weights with BN scale folded in
    # b_ref:   (1, Cout)            folded bias (conv bias + BN shift)
    # out_ref: (NB*OH*OW, Cout)     lane-dense output slab, row-major (n, oh, ow)
    NB = x_ref.shape[0]
    Cin = x_ref.shape[3]
    M = NB * OH * OW

    for t in range(KH * KW):
        kh, kw = t // KW, t % KW
        if stride == 1:
            tap = x_ref[:, pl.ds(kh, OH), pl.ds(kw, OW), :]
        else:
            tap = x_ref[:, pl.ds(kh, OH, stride), pl.ds(kw, OW, stride), :]
        tap2d = tap.reshape(M, Cin)                                  # (M, Cin)
        contrib = jnp.dot(tap2d, w_ref[t],
                          preferred_element_type=jnp.float32)       # (M, Cout)
        if t == 0:
            out_ref[...] = contrib
        else:
            out_ref[...] += contrib

    # epilogue in f32 on the accumulator: bias + ReLU
    out_ref[...] = jnp.maximum(out_ref[...] + b_ref[...], 0.0)


# -------------------------------- wrapper ------------------------------------

def conv_block_forward(x, params, *, stride=1, padding=0, batch_block=None):
    """x: (N, Cin, H, W) float32 NCHW.  Returns (N, Cout, OH, OW) float32."""
    N, Cin, H, W = x.shape
    w = params["w_folded"]                    # (KH*KW, Cin, Cout)
    b = params["b_folded"]                    # (1, Cout)
    K = params["kernel_size"]
    KHKW, Cin_w, Cout = w.shape
    assert KHKW == K * K and Cin_w == Cin

    OH = (H + 2 * padding - K) // stride + 1
    OW = (W + 2 * padding - K) // stride + 1
    Hp, Wp = H + 2 * padding, W + 2 * padding

    NB = N if batch_block is None else batch_block
    assert N % NB == 0, "batch_block must divide N"

    # layout plumbing (outside the kernel): NCHW -> zero-padded NHWC
    x_nhwc = jnp.transpose(x, (0, 2, 3, 1)).astype(jnp.float32)
    x_pad = jnp.pad(x_nhwc, ((0, 0), (padding, padding), (padding, padding), (0, 0)))

    kernel = functools.partial(_conv_bn_relu_kernel,
                               KH=K, KW=K, OH=OH, OW=OW, stride=stride)

    out2d = pl.pallas_call(
        kernel,
        out_shape=jax.ShapeDtypeStruct((N * OH * OW, Cout), jnp.float32),
        grid_spec=pltpu.PrefetchScalarGridSpec(
            num_scalar_prefetch=0,
            grid=(N // NB,),
            in_specs=[
                pl.BlockSpec((NB, Hp, Wp, Cin), lambda n: (n, 0, 0, 0)),
                pl.BlockSpec((K * K, Cin, Cout), lambda n: (0, 0, 0)),
                pl.BlockSpec((1, Cout), lambda n: (0, 0)),
            ],
            out_specs=pl.BlockSpec((NB * OH * OW, Cout), lambda n: (n, 0)),
        ),
        compiler_params=pltpu.CompilerParams(dimension_semantics=("parallel",)),
    )(x_pad, w, b)

    # (N*OH*OW, Cout) row-major (n, oh, ow)  ->  NCHW
    return out2d.reshape(N, OH, OW, Cout).transpose(0, 3, 1, 2)


def init_params(key, in_channels, out_channels, kernel_size, eps=1e-5):
    ks = jax.random.split(key, 6)
    conv_w = 0.1 * jax.random.normal(
        ks[0], (out_channels, in_channels, kernel_size, kernel_size), jnp.float32)
    conv_b = 0.1 * jax.random.normal(ks[1], (out_channels,), jnp.float32)
    gamma = 1.0 + 0.1 * jax.random.normal(ks[2], (out_channels,), jnp.float32)
    beta = 0.1 * jax.random.normal(ks[3], (out_channels,), jnp.float32)
    mean = 0.1 * jax.random.normal(ks[4], (out_channels,), jnp.float32)
    var = 1.0 + 0.05 * jnp.abs(jax.random.normal(ks[5], (out_channels,), jnp.float32))

    # Fold eval-mode BatchNorm into the conv: scale into weights, shift into bias.
    # TODO(synk): training-mode BatchNorm (batch statistics + stat updates) is not
    # implemented; this is the eval-mode (running-stats) forward pass.
    scale = gamma / jnp.sqrt(var + eps)                              # (Cout,)
    w_scaled = conv_w * scale[:, None, None, None]                   # (Cout,Cin,KH,KW)
    w_folded = jnp.transpose(w_scaled, (2, 3, 1, 0)).reshape(
        kernel_size * kernel_size, in_channels, out_channels)        # (KH*KW,Cin,Cout)
    b_folded = (beta + scale * (conv_b - mean)).reshape(1, out_channels)

    return dict(
        kernel_size=kernel_size,
        w_folded=w_folded,
        b_folded=b_folded,
        # raw parameters kept only for the pure-JAX reference
        _conv_w=conv_w, _conv_b=conv_b, _gamma=gamma, _beta=beta,
        _mean=mean, _var=var, _eps=eps,
    )


def reference_forward(x, p, stride, padding):
    conv = lax.conv_general_dilated(
        x, p["_conv_w"], window_strides=(stride, stride),
        padding=[(padding, padding), (padding, padding)],
        dimension_numbers=("NCHW", "OIHW", "NCHW"),
        precision=lax.Precision.HIGHEST,
    ) + p["_conv_b"][None, :, None, None]
    bn = (conv - p["_mean"][None, :, None, None]) / jnp.sqrt(
        p["_var"][None, :, None, None] + p["_eps"]
    ) * p["_gamma"][None, :, None, None] + p["_beta"][None, :, None, None]
    return jnp.maximum(bn, 0.0)


if __name__ == "__main__":
    key = jax.random.PRNGKey(0)
    kx, kp = jax.random.split(key)

    # conv_block(in_channels=4, out_channels=128, kernel_size=3, stride=1, padding=1)
    N, Cin, H, W = 2, 4, 16, 16
    Cout, K, stride, padding = 128, 3, 1, 1

    x = jax.random.normal(kx, (N, Cin, H, W), jnp.float32)
    params = init_params(kp, Cin, Cout, K)

    out = conv_block_forward(x, params, stride=stride, padding=padding)
    out = jax.block_until_ready(out)

    OH = (H + 2 * padding - K) // stride + 1
    OW = (W + 2 * padding - K) // stride + 1
    assert out.shape == (N, Cout, OH, OW)

    ref = reference_forward(x, params, stride, padding)
    np.testing.assert_allclose(np.asarray(out), np.asarray(ref), rtol=1e-4, atol=1e-4)

    print("KERNEL_OK")
</pallas_src>

<mosaic_0001>
module attributes {stable_mosaic.version = 11 : i64} {
  func.func @_conv_bn_relu_kernel(%arg0: i32, %arg1: memref<2x18x18x4xf32, #tpu.memory_space<vmem>>, %arg2: memref<9x4x128xf32, #tpu.memory_space<vmem>>, %arg3: memref<1x128xf32, #tpu.memory_space<vmem>>, %arg4: memref<512x128xf32, #tpu.memory_space<vmem>>) attributes {dimension_semantics = [#tpu.dimension_semantics<parallel>], iteration_bounds = array<i64: 1>, scalar_prefetch = 0 : i64, scratch_operands = 0 : i64, tpu.core_type = #tpu.core_type<tc>, window_params = [{transform_indices = @transform_0, window_bounds = array<i64: 2, 18, 18, 4>}, {pipeline_mode = #tpu.pipeline_mode<synchronous>, transform_indices = @transform_1, window_bounds = array<i64: 9, 4, 128>}, {pipeline_mode = #tpu.pipeline_mode<synchronous>, transform_indices = @transform_2, window_bounds = array<i64: 1, 128>}, {transform_indices = @transform_3, window_bounds = array<i64: 512, 128>}]} {
    %c0 = arith.constant 0 : index
    %c0_0 = arith.constant 0 : index
    %c0_1 = arith.constant 0 : index
    %c0_2 = arith.constant 0 : index
    %0 = vector.load %arg1[%c0, %c0_0, %c0_1, %c0_2] : memref<2x18x18x4xf32, #tpu.memory_space<vmem>>, vector<2x16x16x4xf32>
    %1 = vector.shape_cast %0 : vector<2x16x16x4xf32> to vector<512x4xf32>
    %c0_3 = arith.constant 0 : index
    %c0_4 = arith.constant 0 : index
    %c0_5 = arith.constant 0 : index
    %2 = vector.load %arg2[%c0_3, %c0_4, %c0_5] : memref<9x4x128xf32, #tpu.memory_space<vmem>>, vector<1x4x128xf32>
    %3 = vector.shape_cast %2 : vector<1x4x128xf32> to vector<4x128xf32>
    %cst = arith.constant dense<0.000000e+00> : vector<512x128xf32>
    %4 = tpu.matmul %1, %3, %cst {dimension_numbers = #tpu.dot_dimension_numbers<[1], [0], [0], [1], [0, 0, 1, 1], [], []>} : vector<512x4xf32>, vector<4x128xf32>, vector<512x128xf32> -> vector<512x128xf32>
    %c0_6 = arith.constant 0 : index
    %c0_7 = arith.constant 0 : index
    %5 = vector.load %arg4[%c0_6, %c0_7] : memref<512x128xf32, #tpu.memory_space<vmem>>, vector<512x128xf32>
    tpu.vector_store %arg4[%c0_6, %c0_7], %4 {strides = array<i32>} : memref<512x128xf32, #tpu.memory_space<vmem>>, vector<512x128xf32>,
    %c0_8 = arith.constant 0 : index
    %c0_9 = arith.constant 0 : index
    %c1 = arith.constant 1 : index
    %c0_10 = arith.constant 0 : index
    %6 = vector.load %arg1[%c0_8, %c0_9, %c1, %c0_10] : memref<2x18x18x4xf32, #tpu.memory_space<vmem>>, vector<2x16x16x4xf32>
    %7 = vector.shape_cast %6 : vector<2x16x16x4xf32> to vector<512x4xf32>
    %c1_11 = arith.constant 1 : index
    %c0_12 = arith.constant 0 : index
    %c0_13 = arith.constant 0 : index
    %8 = vector.load %arg2[%c1_11, %c0_12, %c0_13] : memref<9x4x128xf32, #tpu.memory_space<vmem>>, vector<1x4x128xf32>
    %9 = vector.shape_cast %8 : vector<1x4x128xf32> to vector<4x128xf32>
    %cst_14 = arith.constant dense<0.000000e+00> : vector<512x128xf32>
    %10 = tpu.matmul %7, %9, %cst_14 {dimension_numbers = #tpu.dot_dimension_numbers<[1], [0], [0], [1], [0, 0, 1, 1], [], []>} : vector<512x4xf32>, vector<4x128xf32>, vector<512x128xf32> -> vector<512x128xf32>
    %c0_15 = arith.constant 0 : index
    %c0_16 = arith.constant 0 : index
    %11 = vector.load %arg4[%c0_15, %c0_16] : memref<512x128xf32, #tpu.memory_space<vmem>>, vector<512x128xf32>
    %12 = arith.addf %11, %10 : vector<512x128xf32>
    %c0_17 = arith.constant 0 : index
    %c0_18 = arith.constant 0 : index
    %13 = vector.load %arg4[%c0_17, %c0_18] : memref<512x128xf32, #tpu.memory_space<vmem>>, vector<512x128xf32>
    tpu.vector_store %arg4[%c0_17, %c0_18], %12 {strides = array<i32>} : memref<512x128xf32, #tpu.memory_space<vmem>>, vector<512x128xf32>,
    %c0_19 = arith.constant 0 : index
    %c0_20 = arith.constant 0 : index
    %c2 = arith.constant 2 : index
    %c0_21 = arith.constant 0 : index
    %14 = vector.load %arg1[%c0_19, %c0_20, %c2, %c0_21] : memref<2x18x18x4xf32, #tpu.memory_space<vmem>>, vector<2x16x16x4xf32>
    %15 = vector.shape_cast %14 : vector<2x16x16x4xf32> to vector<512x4xf32>
    %c2_22 = arith.constant 2 : index
    %c0_23 = arith.constant 0 : index
    %c0_24 = arith.constant 0 : index
    %16 = vector.load %arg2[%c2_22, %c0_23, %c0_24] : memref<9x4x128xf32, #tpu.memory_space<vmem>>, vector<1x4x128xf32>
    %17 = vector.shape_cast %16 : vector<1x4x128xf32> to vector<4x128xf32>
    %cst_25 = arith.constant dense<0.000000e+00> : vector<512x128xf32>
    %18 = tpu.matmul %15, %17, %cst_25 {dimension_numbers = #tpu.dot_dimension_numbers<[1], [0], [0], [1], [0, 0, 1, 1], [], []>} : vector<512x4xf32>, vector<4x128xf32>, vector<512x128xf32> -> vector<512x128xf32>
    %c0_26 = arith.constant 0 : index
    %c0_27 = arith.constant 0 : index
    %19 = vector.load %arg4[%c0_26, %c0_27] : memref<512x128xf32, #tpu.memory_space<vmem>>, vector<512x128xf32>
    %20 = arith.addf %19, %18 : vector<512x128xf32>
    %c0_28 = arith.constant 0 : index
    %c0_29 = arith.constant 0 : index
    %21 = vector.load %arg4[%c0_28, %c0_29] : memref<512x128xf32, #tpu.memory_space<vmem>>, vector<512x128xf32>
    tpu.vector_store %arg4[%c0_28, %c0_29], %20 {strides = array<i32>} : memref<512x128xf32, #tpu.memory_space<vmem>>, vector<512x128xf32>,
    %c0_30 = arith.constant 0 : index
    %c1_31 = arith.constant 1 : index
    %c0_32 = arith.constant 0 : index
    %c0_33 = arith.constant 0 : index
    %22 = vector.load %arg1[%c0_30, %c1_31, %c0_32, %c0_33] : memref<2x18x18x4xf32, #tpu.memory_space<vmem>>, vector<2x16x16x4xf32>
    %23 = vector.shape_cast %22 : vector<2x16x16x4xf32> to vector<512x4xf32>
    %c3 = arith.constant 3 : index
    %c0_34 = arith.constant 0 : index
    %c0_35 = arith.constant 0 : index
    %24 = vector.load %arg2[%c3, %c0_34, %c0_35] : memref<9x4x128xf32, #tpu.memory_space<vmem>>, vector<1x4x128xf32>
    %25 = vector.shape_cast %24 : vector<1x4x128xf32> to vector<4x128xf32>
    %cst_36 = arith.constant dense<0.000000e+00> : vector<512x128xf32>
    %26 = tpu.matmul %23, %25, %cst_36 {dimension_numbers = #tpu.dot_dimension_numbers<[1], [0], [0], [1], [0, 0, 1, 1], [], []>} : vector<512x4xf32>, vector<4x128xf32>, vector<512x128xf32> -> vector<512x128xf32>
    %c0_37 = arith.constant 0 : index
    %c0_38 = arith.constant 0 : index
    %27 = vector.load %arg4[%c0_37, %c0_38] : memref<512x128xf32, #tpu.memory_space<vmem>>, vector<512x128xf32>
    %28 = arith.addf %27, %26 : vector<512x128xf32>
    %c0_39 = arith.constant 0 : index
    %c0_40 = arith.constant 0 : index
    %29 = vector.load %arg4[%c0_39, %c0_40] : memref<512x128xf32, #tpu.memory_space<vmem>>, vector<512x128xf32>
    tpu.vector_store %arg4[%c0_39, %c0_40], %28 {strides = array<i32>} : memref<512x128xf32, #tpu.memory_space<vmem>>, vector<512x128xf32>,
    %c0_41 = arith.constant 0 : index
    %c1_42 = arith.constant 1 : index
    %c1_43 = arith.constant 1 : index
    %c0_44 = arith.constant 0 : index
    %30 = vector.load %arg1[%c0_41, %c1_42, %c1_43, %c0_44] : memref<2x18x18x4xf32, #tpu.memory_space<vmem>>, vector<2x16x16x4xf32>
    %31 = vector.shape_cast %30 : vector<2x16x16x4xf32> to vector<512x4xf32>
    %c4 = arith.constant 4 : index
    %c0_45 = arith.constant 0 : index
    %c0_46 = arith.constant 0 : index
    %32 = vector.load %arg2[%c4, %c0_45, %c0_46] : memref<9x4x128xf32, #tpu.memory_space<vmem>>, vector<1x4x128xf32>
    %33 = vector.shape_cast %32 : vector<1x4x128xf32> to vector<4x128xf32>
    %cst_47 = arith.constant dense<0.000000e+00> : vector<512x128xf32>
    %34 = tpu.matmul %31, %33, %cst_47 {dimension_numbers = #tpu.dot_dimension_numbers<[1], [0], [0], [1], [0, 0, 1, 1], [], []>} : vector<512x4xf32>, vector<4x128xf32>, vector<512x128xf32> -> vector<512x128xf32>
    %c0_48 = arith.constant 0 : index
    %c0_49 = arith.constant 0 : index
    %35 = vector.load %arg4[%c0_48, %c0_49] : memref<512x128xf32, #tpu.memory_space<vmem>>, vector<512x128xf32>
    %36 = arith.addf %35, %34 : vector<512x128xf32>
    %c0_50 = arith.constant 0 : index
    %c0_51 = arith.constant 0 : index
    %37 = vector.load %arg4[%c0_50, %c0_51] : memref<512x128xf32, #tpu.memory_space<vmem>>, vector<512x128xf32>
    tpu.vector_store %arg4[%c0_50, %c0_51], %36 {strides = array<i32>} : memref<512x128xf32, #tpu.memory_space<vmem>>, vector<512x128xf32>,
    %c0_52 = arith.constant 0 : index
    %c1_53 = arith.constant 1 : index
    %c2_54 = arith.constant 2 : index
    %c0_55 = arith.constant 0 : index
    %38 = vector.load %arg1[%c0_52, %c1_53, %c2_54, %c0_55] : memref<2x18x18x4xf32, #tpu.memory_space<vmem>>, vector<2x16x16x4xf32>
    %39 = vector.shape_cast %38 : vector<2x16x16x4xf32> to vector<512x4xf32>
    %c5 = arith.constant 5 : index
    %c0_56 = arith.constant 0 : index
    %c0_57 = arith.constant 0 : index
    %40 = vector.load %arg2[%c5, %c0_56, %c0_57] : memref<9x4x128xf32, #tpu.memory_space<vmem>>, vector<1x4x128xf32>
    %41 = vector.shape_cast %40 : vector<1x4x128xf32> to vector<4x128xf32>
    %cst_58 = arith.constant dense<0.000000e+00> : vector<512x128xf32>
    %42 = tpu.matmul %39, %41, %cst_58 {dimension_numbers = #tpu.dot_dimension_numbers<[1], [0], [0], [1], [0, 0, 1, 1], [], []>} : vector<512x4xf32>, vector<4x128xf32>, vector<512x128xf32> -> vector<512x128xf32>
    %c0_59 = arith.constant 0 : index
    %c0_60 = arith.constant 0 : index
    %43 = vector.load %arg4[%c0_59, %c0_60] : memref<512x128xf32, #tpu.memory_space<vmem>>, vector<512x128xf32>
    %44 = arith.addf %43, %42 : vector<512x128xf32>
    %c0_61 = arith.constant 0 : index
    %c0_62 = arith.constant 0 : index
    %45 = vector.load %arg4[%c0_61, %c0_62] : memref<512x128xf32, #tpu.memory_space<vmem>>, vector<512x128xf32>
    tpu.vector_store %arg4[%c0_61, %c0_62], %44 {strides = array<i32>} : memref<512x128xf32, #tpu.memory_space<vmem>>, vector<512x128xf32>,
    %c0_63 = arith.constant 0 : index
    %c2_64 = arith.constant 2 : index
    %c0_65 = arith.constant 0 : index
    %c0_66 = arith.constant 0 : index
    %46 = vector.load %arg1[%c0_63, %c2_64, %c0_65, %c0_66] : memref<2x18x18x4xf32, #tpu.memory_space<vmem>>, vector<2x16x16x4xf32>
    %47 = vector.shape_cast %46 : vector<2x16x16x4xf32> to vector<512x4xf32>
    %c6 = arith.constant 6 : index
    %c0_67 = arith.constant 0 : index
    %c0_68 = arith.constant 0 : index
    %48 = vector.load %arg2[%c6, %c0_67, %c0_68] : memref<9x4x128xf32, #tpu.memory_space<vmem>>, vector<1x4x128xf32>
    %49 = vector.shape_cast %48 : vector<1x4x128xf32> to vector<4x128xf32>
    %cst_69 = arith.constant dense<0.000000e+00> : vector<512x128xf32>
    %50 = tpu.matmul %47, %49, %cst_69 {dimension_numbers = #tpu.dot_dimension_numbers<[1], [0], [0], [1], [0, 0, 1, 1], [], []>} : vector<512x4xf32>, vector<4x128xf32>, vector<512x128xf32> -> vector<512x128xf32>
    %c0_70 = arith.constant 0 : index
    %c0_71 = arith.constant 0 : index
    %51 = vector.load %arg4[%c0_70, %c0_71] : memref<512x128xf32, #tpu.memory_space<vmem>>, vector<512x128xf32>
    %52 = arith.addf %51, %50 : vector<512x128xf32>
    %c0_72 = arith.constant 0 : index
    %c0_73 = arith.constant 0 : index
    %53 = vector.load %arg4[%c0_72, %c0_73] : memref<512x128xf32, #tpu.memory_space<vmem>>, vector<512x128xf32>
    tpu.vector_store %arg4[%c0_72, %c0_73], %52 {strides = array<i32>} : memref<512x128xf32, #tpu.memory_space<vmem>>, vector<512x128xf32>,
    %c0_74 = arith.constant 0 : index
    %c2_75 = arith.constant 2 : index
    %c1_76 = arith.constant 1 : index
    %c0_77 = arith.constant 0 : index
    %54 = vector.load %arg1[%c0_74, %c2_75, %c1_76, %c0_77] : memref<2x18x18x4xf32, #tpu.memory_space<vmem>>, vector<2x16x16x4xf32>
    %55 = vector.shape_cast %54 : vector<2x16x16x4xf32> to vector<512x4xf32>
    %c7 = arith.constant 7 : index
    %c0_78 = arith.constant 0 : index
    %c0_79 = arith.constant 0 : index
    %56 = vector.load %arg2[%c7, %c0_78, %c0_79] : memref<9x4x128xf32, #tpu.memory_space<vmem>>, vector<1x4x128xf32>
    %57 = vector.shape_cast %56 : vector<1x4x128xf32> to vector<4x128xf32>
    %cst_80 = arith.constant dense<0.000000e+00> : vector<512x128xf32>
    %58 = tpu.matmul %55, %57, %cst_80 {dimension_numbers = #tpu.dot_dimension_numbers<[1], [0], [0], [1], [0, 0, 1, 1], [], []>} : vector<512x4xf32>, vector<4x128xf32>, vector<512x128xf32> -> vector<512x128xf32>
    %c0_81 = arith.constant 0 : index
    %c0_82 = arith.constant 0 : index
    %59 = vector.load %arg4[%c0_81, %c0_82] : memref<512x128xf32, #tpu.memory_space<vmem>>, vector<512x128xf32>
    %60 = arith.addf %59, %58 : vector<512x128xf32>
    %c0_83 = arith.constant 0 : index
    %c0_84 = arith.constant 0 : index
    %61 = vector.load %arg4[%c0_83, %c0_84] : memref<512x128xf32, #tpu.memory_space<vmem>>, vector<512x128xf32>
    tpu.vector_store %arg4[%c0_83, %c0_84], %60 {strides = array<i32>} : memref<512x128xf32, #tpu.memory_space<vmem>>, vector<512x128xf32>,
    %c0_85 = arith.constant 0 : index
    %c2_86 = arith.constant 2 : index
    %c2_87 = arith.constant 2 : index
    %c0_88 = arith.constant 0 : index
    %62 = vector.load %arg1[%c0_85, %c2_86, %c2_87, %c0_88] : memref<2x18x18x4xf32, #tpu.memory_space<vmem>>, vector<2x16x16x4xf32>
    %63 = vector.shape_cast %62 : vector<2x16x16x4xf32> to vector<512x4xf32>
    %c8 = arith.constant 8 : index
    %c0_89 = arith.constant 0 : index
    %c0_90 = arith.constant 0 : index
    %64 = vector.load %arg2[%c8, %c0_89, %c0_90] : memref<9x4x128xf32, #tpu.memory_space<vmem>>, vector<1x4x128xf32>
    %65 = vector.shape_cast %64 : vector<1x4x128xf32> to vector<4x128xf32>
    %cst_91 = arith.constant dense<0.000000e+00> : vector<512x128xf32>
    %66 = tpu.matmul %63, %65, %cst_91 {dimension_numbers = #tpu.dot_dimension_numbers<[1], [0], [0], [1], [0, 0, 1, 1], [], []>} : vector<512x4xf32>, vector<4x128xf32>, vector<512x128xf32> -> vector<512x128xf32>
    %c0_92 = arith.constant 0 : index
    %c0_93 = arith.constant 0 : index
    %67 = vector.load %arg4[%c0_92, %c0_93] : memref<512x128xf32, #tpu.memory_space<vmem>>, vector<512x128xf32>
    %68 = arith.addf %67, %66 : vector<512x128xf32>
    %c0_94 = arith.constant 0 : index
    %c0_95 = arith.constant 0 : index
    %69 = vector.load %arg4[%c0_94, %c0_95] : memref<512x128xf32, #tpu.memory_space<vmem>>, vector<512x128xf32>
    tpu.vector_store %arg4[%c0_94, %c0_95], %68 {strides = array<i32>} : memref<512x128xf32, #tpu.memory_space<vmem>>, vector<512x128xf32>,
    %c0_96 = arith.constant 0 : index
    %c0_97 = arith.constant 0 : index
    %70 = vector.load %arg4[%c0_96, %c0_97] : memref<512x128xf32, #tpu.memory_space<vmem>>, vector<512x128xf32>
    %c0_98 = arith.constant 0 : index
    %c0_99 = arith.constant 0 : index
    %71 = vector.load %arg3[%c0_98, %c0_99] : memref<1x128xf32, #tpu.memory_space<vmem>>, vector<1x128xf32>
    %72 = vector.broadcast %71 : vector<1x128xf32> to vector<512x128xf32>
    %73 = arith.addf %70, %72 : vector<512x128xf32>
    %cst_100 = arith.constant 0.000000e+00 : f32
    %74 = vector.broadcast %cst_100 : f32 to vector<512x128xf32>
    %75 = arith.maximumf %73, %74 : vector<512x128xf32>
    %c0_101 = arith.constant 0 : index
    %c0_102 = arith.constant 0 : index
    %76 = vector.load %arg4[%c0_101, %c0_102] : memref<512x128xf32, #tpu.memory_space<vmem>>, vector<512x128xf32>
    tpu.vector_store %arg4[%c0_101, %c0_102], %75 {strides = array<i32>} : memref<512x128xf32, #tpu.memory_space<vmem>>, vector<512x128xf32>,
    return
  }
  func.func @transform_0(%arg0: i32) -> (i32, i32, i32, i32) {
    %c0_i32 = arith.constant 0 : i32
    %c0_i32_0 = arith.constant 0 : i32
    %c0_i32_1 = arith.constant 0 : i32
    %c0_i32_2 = arith.constant 0 : i32
    return %arg0, %c0_i32, %c0_i32_0, %c0_i32_1 : i32, i32, i32, i32
  }
  func.func @transform_1(%arg0: i32) -> (i32, i32, i32) {
    %c0_i32 = arith.constant 0 : i32
    %c0_i32_0 = arith.constant 0 : i32
    %c0_i32_1 = arith.constant 0 : i32
    %c0_i32_2 = arith.constant 0 : i32
    return %c0_i32, %c0_i32_0, %c0_i32_1 : i32, i32, i32
  }
  func.func @transform_2(%arg0: i32) -> (i32, i32) {
    %c0_i32 = arith.constant 0 : i32
    %c0_i32_0 = arith.constant 0 : i32
    %c0_i32_1 = arith.constant 0 : i32
    return %c0_i32, %c0_i32_0 : i32, i32
  }
  func.func @transform_3(%arg0: i32) -> (i32, i32) {
    %c0_i32 = arith.constant 0 : i32
    %c0_i32_0 = arith.constant 0 : i32
    return %arg0, %c0_i32 : i32, i32
  }
}

</mosaic_0001>

<llo_original>
// kernel: tpu_custom_call.1
$region0: #{tpu_custom_call.1}
  #allocation0 [shape = 'u32[]', space=smem, size = 0x4, offset = 0x4, fixed_abs, tag = 'smem constant byte address 0x4 - core index']
  #allocation1 [shape = 'u32[144,128]{1,0:T(1,128)}', space=vmem, size = 0x12000, scoped, tag = 'internal scratch']
  %s0 = inlined_call_operand.vmem [shape: f32[2,18,18,4], index: 0, kind: input, shape index: {}]
  %s1 = inlined_call_operand.vmem [shape: f32[9,4,128], index: 1, kind: input, shape index: {}]
  %s2 = inlined_call_operand.vmem [shape: f32[1,128], index: 2, kind: input, shape index: {}]
  %s3 = inlined_call_operand.hbm [shape: f32[512,128], index: 3, kind: output, shape index: {}]
  %s4 = sld [smem:[#allocation0]]
  $region22: #{tpu_custom_call.1} parent=0
    _
  %s6 = ssub.s32 1, %s4
  %s7 = scalar_select 0, %s6, %s4
  $region1: #{tpu_custom_call.1} parent=0
    #allocation2 [shape = 'u8[262144]{0}', space=vmem, size = 0x40000, scoped, tag = 'output window, operand 0, single buffered']
    #allocation3 [shape = 's32[1]{0}', space=sflag, size = 0x4, scoped, tag = 'scoped memory for tpu_custom_call.1']
    %8 = vsyncpa [#allocation3], 0
    // Predicated region
    $region2: #{tpu_custom_call.1} parent=1 // pred_check
      _
    $region3: #{tpu_custom_call.1} parent=1 // pred_check_branch
      %10 = sbr.rel (0) target = $region5
    $region4: #{tpu_custom_call.1} parent=1 // pred_region
      _
    $region5: #{tpu_custom_call.1} parent=1 // pred_fallthru
      _
    // Predicated region
    $region6: #{tpu_custom_call.1} parent=1 // pred_check
      _
    $region7: #{tpu_custom_call.1} parent=1 // pred_check_branch
      %12 = sbr.rel (0) target = $region9
    $region8: #{tpu_custom_call.1} parent=1 // pred_region
      _
    $region9: #{tpu_custom_call.1} parent=1 // pred_fallthru
      _
    // Predicated region
    $region10: #{tpu_custom_call.1} parent=1 // pred_check
      _
    $region11: #{tpu_custom_call.1} parent=1 // pred_check_branch
      %14 = sbr.rel (0) target = $region13
    $region12: #{tpu_custom_call.1} parent=1 // pred_region
      _
    $region13: #{tpu_custom_call.1} parent=1 // pred_fallthru
      _
    %v15 = vld [vmem:[%s0] sm:$0xff]
    %v16 = vld [vmem:[%s0 + $0x8] sm:$0xff]
    %v17 = vld [vmem:[%s0 + $0x18] sm:$0xff]
    %v18 = vld [vmem:[%s0 + $0x20] sm:$0xff]
    %v19 = vld [vmem:[%s0 + $0x30] sm:$0xff]
    %v20 = vld [vmem:[%s0 + $0x38] sm:$0xff]
    %v21 = vld [vmem:[%s0 + $0x48] sm:$0xff]
    %v22 = vld [vmem:[%s0 + $0x50] sm:$0xff]
    %v23 = vld [vmem:[%s0 + $0x60] sm:$0xff]
    %v24 = vld [vmem:[%s0 + $0x68] sm:$0xff]
    %v25 = vld [vmem:[%s0 + $0x78] sm:$0xff]
    %v26 = vld [vmem:[%s0 + $0x80] sm:$0xff]
    %v27 = vld [vmem:[%s0 + $0x90] sm:$0xff]
    %v28 = vld [vmem:[%s0 + $0x98] sm:$0xff]
    %v29 = vld [vmem:[%s0 + $0xa8] sm:$0xff]
    %v30 = vld [vmem:[%s0 + $0xb0] sm:$0xff]
    %v31 = vld [vmem:[%s0 + $0xc0] sm:$0xff]
    %v32 = vld [vmem:[%s0 + $0xc8] sm:$0xff]
    %v33 = vld [vmem:[%s0 + $0xd8] sm:$0xff]
    %v34 = vld [vmem:[%s0 + $0xe0] sm:$0xff]
    %v35 = vld [vmem:[%s0 + $0xf0] sm:$0xff]
    %v36 = vld [vmem:[%s0 + $0xf8] sm:$0xff]
    %v37 = vld [vmem:[%s0 + $0x108] sm:$0xff]
    %v38 = vld [vmem:[%s0 + $0x110] sm:$0xff]
    %v39 = vld [vmem:[%s0 + $0x120] sm:$0xff]
    %v40 = vld [vmem:[%s0 + $0x128] sm:$0xff]
    %v41 = vld [vmem:[%s0 + $0x138] sm:$0xff]
    %v42 = vld [vmem:[%s0 + $0x140] sm:$0xff]
    %v43 = vld [vmem:[%s0 + $0x150] sm:$0xff]
    %v44 = vld [vmem:[%s0 + $0x158] sm:$0xff]
    %v45 = vld [vmem:[%s0 + $0x168] sm:$0xff]
    %v46 = vld [vmem:[%s0 + $0x170] sm:$0xff]
    %v47 = vld [vmem:[%s0 + $0x1b0] sm:$0xff]
    %v48 = vld [vmem:[%s0 + $0x1b8] sm:$0xff]
    %v49 = vld [vmem:[%s0 + $0x1c8] sm:$0xff]
    %v50 = vld [vmem:[%s0 + $0x1d0] sm:$0xff]
    %v51 = vld [vmem:[%s0 + $0x1e0] sm:$0xff]
    %v52 = vld [vmem:[%s0 + $0x1e8] sm:$0xff]
    %v53 = vld [vmem:[%s0 + $0x1f8] sm:$0xff]
    %v54 = vld [vmem:[%s0 + $0x200] sm:$0xff]
    %v55 = vld [vmem:[%s0 + $0x210] sm:$0xff]
    %v56 = vld [vmem:[%s0 + $0x218] sm:$0xff]
    %v57 = vld [vmem:[%s0 + $0x228] sm:$0xff]
    %v58 = vld [vmem:[%s0 + $0x230] sm:$0xff]
    %v59 = vld [vmem:[%s0 + $0x240] sm:$0xff]
    %v60 = vld [vmem:[%s0 + $0x248] sm:$0xff]
    %v61 = vld [vmem:[%s0 + $0x258] sm:$0xff]
    %v62 = vld [vmem:[%s0 + $0x260] sm:$0xff]
    %v63 = vld [vmem:[%s0 + $0x270] sm:$0xff]
    %v64 = vld [vmem:[%s0 + $0x278] sm:$0xff]
    %v65 = vld [vmem:[%s0 + $0x288] sm:$0xff]
    %v66 = vld [vmem:[%s0 + $0x290] sm:$0xff]
    %v67 = vld [vmem:[%s0 + $0x2a0] sm:$0xff]
    %v68 = vld [vmem:[%s0 + $0x2a8] sm:$0xff]
    %v69 = vld [vmem:[%s0 + $0x2b8] sm:$0xff]
    %v70 = vld [vmem:[%s0 + $0x2c0] sm:$0xff]
    %v71 = vld [vmem:[%s0 + $0x2d0] sm:$0xff]
    %v72 = vld [vmem:[%s0 + $0x2d8] sm:$0xff]
    %v73 = vld [vmem:[%s0 + $0x2e8] sm:$0xff]
    %v74 = vld [vmem:[%s0 + $0x2f0] sm:$0xff]
    %v75 = vld [vmem:[%s0 + $0x300] sm:$0xff]
    %v76 = vld [vmem:[%s0 + $0x308] sm:$0xff]
    %v77 = vld [vmem:[%s0 + $0x318] sm:$0xff]
    %v78 = vld [vmem:[%s0 + $0x320] sm:$0xff]
    %v79 = vld [vmem:[%s1] sm:$0xf]
    %vm80 = vcmask 31744
    %v82 = vsel %vm80, %v15, 0
    %v85 = vsel %vm80, %v16, 0
    %v88 = vsel %vm80, %v17, 0
    %v91 = vsel %vm80, %v18, 0
    %v94 = vsel %vm80, %v19, 0
    %v97 = vsel %vm80, %v20, 0
    %v100 = vsel %vm80, %v21, 0
    %v103 = vsel %vm80, %v22, 0
    %v106 = vsel %vm80, %v23, 0
    %v109 = vsel %vm80, %v24, 0
    %v112 = vsel %vm80, %v25, 0
    %v115 = vsel %vm80, %v26, 0
    %v118 = vsel %vm80, %v27, 0
    %v121 = vsel %vm80, %v28, 0
    %v124 = vsel %vm80, %v29, 0
    %v127 = vsel %vm80, %v30, 0
    %v130 = vsel %vm80, %v31, 0
    %v133 = vsel %vm80, %v32, 0
    %v136 = vsel %vm80, %v33, 0
    %v139 = vsel %vm80, %v34, 0
    %v142 = vsel %vm80, %v35, 0
    %v145 = vsel %vm80, %v36, 0
    %v148 = vsel %vm80, %v37, 0
    %v151 = vsel %vm80, %v38, 0
    %v154 = vsel %vm80, %v39, 0
    %v157 = vsel %vm80, %v40, 0
    %v160 = vsel %vm80, %v41, 0
    %v163 = vsel %vm80, %v42, 0
    %v166 = vsel %vm80, %v43, 0
    %v169 = vsel %vm80, %v44, 0
    %v172 = vsel %vm80, %v45, 0
    %v175 = vsel %vm80, %v46, 0
    %v178 = vsel %vm80, %v47, 0
    %v181 = vsel %vm80, %v48, 0
    %v184 = vsel %vm80, %v49, 0
    %v187 = vsel %vm80, %v50, 0
    %v190 = vsel %vm80, %v51, 0
    %v193 = vsel %vm80, %v52, 0
    %v196 = vsel %vm80, %v53, 0
    %v199 = vsel %vm80, %v54, 0
    %v202 = vsel %vm80, %v55, 0
    %v205 = vsel %vm80, %v56, 0
    %v208 = vsel %vm80, %v57, 0
    %v211 = vsel %vm80, %v58, 0
    %v214 = vsel %vm80, %v59, 0
    %v217 = vsel %vm80, %v60, 0
    %v220 = vsel %vm80, %v61, 0
    %v223 = vsel %vm80, %v62, 0
    %v226 = vsel %vm80, %v63, 0
    %v229 = vsel %vm80, %v64, 0
    %v232 = vsel %vm80, %v65, 0
    %v235 = vsel %vm80, %v66, 0
    %v238 = vsel %vm80, %v67, 0
    %v241 = vsel %vm80, %v68, 0
    %v244 = vsel %vm80, %v69, 0
    %v247 = vsel %vm80, %v70, 0
    %v250 = vsel %vm80, %v71, 0
    %v253 = vsel %vm80, %v72, 0
    %v256 = vsel %vm80, %v73, 0
    %v259 = vsel %vm80, %v74, 0
    %v262 = vsel %vm80, %v75, 0
    %v265 = vsel %vm80, %v76, 0
    %v268 = vsel %vm80, %v77, 0
    %v271 = vsel %vm80, %v78, 0
    %vm273 = vcmask 1043456
    %v275 = vsel %vm273, %v79, 0
    %277 = vmatprep.subr.mxu0 0.0
    %278 = vmatpush1.msra.mxu0 %v275
    %279 = vmatprep.subr.mxu0 0.0
    %280 = vmatpush1.msra.mxu0 0.0
    %281 = vmatprep.subr.mxu0 0.0
    %282 = vmatpush1.msra.mxu0 0.0
    %283 = vmatprep.subr.mxu0 0.0
    %284 = vmatpush1.msra.mxu0 0.0
    %285 = vmatprep.subr.mxu0 0.0
    %286 = vmatpush1.msra.mxu0 0.0
    %287 = vmatprep.subr.mxu0 0.0
    %288 = vmatpush1.msra.mxu0 0.0
    %289 = vmatprep.subr.mxu0 0.0
    %290 = vmatpush1.msra.mxu0 0.0
    %291 = vmatprep.subr.mxu0 0.0
    %292 = vmatpush1.msra.mxu0 0.0
    %293 = vmatprep.subr.mxu0 0.0
    %294 = vmatpush1.msra.mxu0 0.0
    %295 = vmatprep.subr.mxu0 0.0
    %296 = vmatpush1.msra.mxu0 0.0
    %297 = vmatprep.subr.mxu0 0.0
    %298 = vmatpush1.msra.mxu0 0.0
    %299 = vmatprep.subr.mxu0 0.0
    %300 = vmatpush1.msra.mxu0 0.0
    %301 = vmatprep.subr.mxu0 0.0
    %302 = vmatpush1.msra.mxu0 0.0
    %303 = vmatprep.subr.mxu0 0.0
    %304 = vmatpush1.msra.mxu0 0.0
    %305 = vmatprep.subr.mxu0 0.0
    %306 = vmatpush1.msra.mxu0 0.0
    %307 = vmatprep.subr.mxu0 0.0
    %308 = vmatpush1.msra.mxu0 0.0
    %309 = vmatprep.subr.mxu0 0.0
    %310 = vmatpush1.msra.mxu0 0.0
    %311 = vmatprep.subr.mxu0 0.0
    %312 = vmatpush1.msra.mxu0 0.0
    %313 = vmatprep.subr.mxu0 0.0
    %314 = vmatpush1.msra.mxu0 0.0
    %315 = vmatprep.subr.mxu0 0.0
    %316 = vmatpush1.msra.mxu0 0.0
    %317 = vmatprep.subr.mxu0 0.0
    %318 = vmatpush1.msra.mxu0 0.0
    %319 = vmatprep.subr.mxu0 0.0
    %320 = vmatpush1.msra.mxu0 0.0
    %321 = vmatprep.subr.mxu0 0.0
    %322 = vmatpush1.msra.mxu0 0.0
    %323 = vmatprep.subr.mxu0 0.0
    %324 = vmatpush1.msra.mxu0 0.0
    %325 = vmatprep.subr.mxu0 0.0
    %326 = vmatpush1.msra.mxu0 0.0
    %327 = vmatprep.subr.mxu0 0.0
    %328 = vmatpush1.msra.mxu0 0.0
    %329 = vmatprep.subr.mxu0 0.0
    %330 = vmatpush1.msra.mxu0 0.0
    %331 = vmatprep.subr.mxu0 0.0
    %332 = vmatpush1.msra.mxu0 0.0
    %333 = vmatprep.subr.mxu0 0.0
    %334 = vmatpush1.msra.mxu0 0.0
    %335 = vmatprep.subr.mxu0 0.0
    %336 = vmatpush1.msra.mxu0 0.0
    %337 = vmatprep.subr.mxu0 0.0
    %338 = vmatpush1.msra.mxu0 0.0
    %339 = vmatprep.subr.mxu0 0.0
    %340 = vmatpush1.msra.mxu0 0.0
    %341 = vmatprep.mubr.f32.mxu0 0.0
    %342 = vmatmul.mubr.f32.gmra.mrb[0].mxu0 %v82
    %v343 = vpop.f32.mrb[0].mxu0
    %v344 = vadd.f32 0.0, %v343
    %v345 = vpop.f32.mrb[0].mxu0
    %346 = vmatprep.mubr.f32.mxu0 0.0
    %347 = vmatmul.mubr.f32.gmra.mrb[0].mxu0 %v85
    %v348 = vpop.f32.mrb[0].mxu0
    %v349 = vadd.f32 0.0, %v348
    %v350 = vpop.f32.mrb[0].mxu0
    %351 = vmatprep.mubr.f32.mxu0 0.0
    %352 = vmatmul.mubr.f32.gmra.mrb[0].mxu0 %v88
    %v353 = vpop.f32.mrb[0].mxu0
    %v354 = vadd.f32 0.0, %v353
    %v355 = vpop.f32.mrb[0].mxu0
    %356 = vmatprep.mubr.f32.mxu0 0.0
    %357 = vmatmul.mubr.f32.gmra.mrb[0].mxu0 %v91
    %v358 = vpop.f32.mrb[0].mxu0
    %v359 = vadd.f32 0.0, %v358
    %v360 = vpop.f32.mrb[0].mxu0
    %361 = vmatprep.mubr.f32.mxu0 0.0
    %362 = vmatmul.mubr.f32.gmra.mrb[0].mxu0 %v94
    %v363 = vpop.f32.mrb[0].mxu0
    %v364 = vadd.f32 0.0, %v363
    %v365 = vpop.f32.mrb[0].mxu0
    %366 = vmatprep.mubr.f32.mxu0 0.0
    %367 = vmatmul.mubr.f32.gmra.mrb[0].mxu0 %v97
    %v368 = vpop.f32.mrb[0].mxu0
    %v369 = vadd.f32 0.0, %v368
    %v370 = vpop.f32.mrb[0].mxu0
    %371 = vmatprep.mubr.f32.mxu0 0.0
    %372 = vmatmul.mubr.f32.gmra.mrb[0].mxu0 %v100
    %v373 = vpop.f32.mrb[0].mxu0
    %v374 = vadd.f32 0.0, %v373
    %v375 = vpop.f32.mrb[0].mxu0
    %376 = vmatprep.mubr.f32.mxu0 0.0
    %377 = vmatmul.mubr.f32.gmra.mrb[0].mxu0 %v103
    %v378 = vpop.f32.mrb[0].mxu0
    %v379 = vadd.f32 0.0, %v378
    %v380 = vpop.f32.mrb[0].mxu0
    %381 = vmatprep.mubr.f32.mxu0 0.0
    %382 = vmatmul.mubr.f32.gmra.mrb[0].mxu0 %v106
    %v383 = vpop.f32.mrb[0].mxu0
    %v384 = vadd.f32 0.0, %v383
    %v385 = vpop.f32.mrb[0].mxu0
    %386 = vmatprep.mubr.f32.mxu0 0.0
    %387 = vmatmul.mubr.f32.gmra.mrb[0].mxu0 %v109
    %v388 = vpop.f32.mrb[0].mxu0
    %v389 = vadd.f32 0.0, %v388
    %v390 = vpop.f32.mrb[0].mxu0
    %391 = vmatprep.mubr.f32.mxu0 0.0
    %392 = vmatmul.mubr.f32.gmra.mrb[0].mxu0 %v112
    %v393 = vpop.f32.mrb[0].mxu0
    %v394 = vadd.f32 0.0, %v393
    %v395 = vpop.f32.mrb[0].mxu0
    %396 = vmatprep.mubr.f32.mxu0 0.0
    %397 = vmatmul.mubr.f32.gmra.mrb[0].mxu0 %v115
    %v398 = vpop.f32.mrb[0].mxu0
    %v399 = vadd.f32 0.0, %v398
    %v400 = vpop.f32.mrb[0].mxu0
    %401 = vmatprep.mubr.f32.mxu0 0.0
    %402 = vmatmul.mubr.f32.gmra.mrb[0].mxu0 %v118
    %v403 = vpop.f32.mrb[0].mxu0
    %v404 = vadd.f32 0.0, %v403
    %v405 = vpop.f32.mrb[0].mxu0
    %406 = vmatprep.mubr.f32.mxu0 0.0
    %407 = vmatmul.mubr.f32.gmra.mrb[0].mxu0 %v121
    %v408 = vpop.f32.mrb[0].mxu0
    %v409 = vadd.f32 0.0, %v408
    %v410 = vpop.f32.mrb[0].mxu0
    %411 = vmatprep.mubr.f32.mxu0 0.0
    %412 = vmatmul.mubr.f32.gmra.mrb[0].mxu0 %v124
    %v413 = vpop.f32.mrb[0].mxu0
    %v414 = vadd.f32 0.0, %v413
    %v415 = vpop.f32.mrb[0].mxu0
    %416 = vmatprep.mubr.f32.mxu0 0.0
    %417 = vmatmul.mubr.f32.gmra.mrb[0].mxu0 %v127
    %v418 = vpop.f32.mrb[0].mxu0
    %v419 = vadd.f32 0.0, %v418
    %v420 = vpop.f32.mrb[0].mxu0
    %421 = vmatprep.mubr.f32.mxu0 0.0
    %422 = vmatmul.mubr.f32.gmra.mrb[0].mxu0 %v130
    %v423 = vpop.f32.mrb[0].mxu0
    %v424 = vadd.f32 0.0, %v423
    %v425 = vpop.f32.mrb[0].mxu0
    %426 = vmatprep.mubr.f32.mxu0 0.0
    %427 = vmatmul.mubr.f32.gmra.mrb[0].mxu0 %v133
    %v428 = vpop.f32.mrb[0].mxu0
    %v429 = vadd.f32 0.0, %v428
    %v430 = vpop.f32.mrb[0].mxu0
    %431 = vmatprep.mubr.f32.mxu0 0.0
    %432 = vmatmul.mubr.f32.gmra.mrb[0].mxu0 %v136
    %v433 = vpop.f32.mrb[0].mxu0
    %v434 = vadd.f32 0.0, %v433
    %v435 = vpop.f32.mrb[0].mxu0
    %436 = vmatprep.mubr.f32.mxu0 0.0
    %437 = vmatmul.mubr.f32.gmra.mrb[0].mxu0 %v139
    %v438 = vpop.f32.mrb[0].mxu0
    %v439 = vadd.f32 0.0, %v438
    %v440 = vpop.f32.mrb[0].mxu0
    %441 = vmatprep.mubr.f32.mxu0 0.0
    %442 = vmatmul.mubr.f32.gmra.mrb[0].mxu0 %v142
    %v443 = vpop.f32.mrb[0].mxu0
    %v444 = vadd.f32 0.0, %v443
    %v445 = vpop.f32.mrb[0].mxu0
    %446 = vmatprep.mubr.f32.mxu0 0.0
    %447 = vmatmul.mubr.f32.gmra.mrb[0].mxu0 %v145
    %v448 = vpop.f32.mrb[0].mxu0
    %v449 = vadd.f32 0.0, %v448
    %v450 = vpop.f32.mrb[0].mxu0
    %451 = vmatprep.mubr.f32.mxu0 0.0
    %452 = vmatmul.mubr.f32.gmra.mrb[0].mxu0 %v148
    %v453 = vpop.f32.mrb[0].mxu0
    %v454 = vadd.f32 0.0, %v453
    %v455 = vpop.f32.mrb[0].mxu0
    %456 = vmatprep.mubr.f32.mxu0 0.0
    %457 = vmatmul.mubr.f32.gmra.mrb[0].mxu0 %v151
    %v458 = vpop.f32.mrb[0].mxu0
    %v459 = vadd.f32 0.0, %v458
    %v460 = vpop.f32.mrb[0].mxu0
    %461 = vmatprep.mubr.f32.mxu0 0.0
    %462 = vmatmul.mubr.f32.gmra.mrb[0].mxu0 %v154
    %v463 = vpop.f32.mrb[0].mxu0
    %v464 = vadd.f32 0.0, %v463
    %v465 = vpop.f32.mrb[0].mxu0
    %466 = vmatprep.mubr.f32.mxu0 0.0
    %467 = vmatmul.mubr.f32.gmra.mrb[0].mxu0 %v157
    %v468 = vpop.f32.mrb[0].mxu0
    %v469 = vadd.f32 0.0, %v468
    %v470 = vpop.f32.mrb[0].mxu0
    %471 = vmatprep.mubr.f32.mxu0 0.0
    %472 = vmatmul.mubr.f32.gmra.mrb[0].mxu0 %v160
    %v473 = vpop.f32.mrb[0].mxu0
    %v474 = vadd.f32 0.0, %v473
    %v475 = vpop.f32.mrb[0].mxu0
    %476 = vmatprep.mubr.f32.mxu0 0.0
    %477 = vmatmul.mubr.f32.gmra.mrb[0].mxu0 %v163
    %v478 = vpop.f32.mrb[0].mxu0
    %v479 = vadd.f32 0.0, %v478
    %v480 = vpop.f32.mrb[0].mxu0
    %481 = vmatprep.mubr.f32.mxu0 0.0
    %482 = vmatmul.mubr.f32.gmra.mrb[0].mxu0 %v166
    %v483 = vpop.f32.mrb[0].mxu0
    %v484 = vadd.f32 0.0, %v483
    %v485 = vpop.f32.mrb[0].mxu0
    %486 = vmatprep.mubr.f32.mxu0 0.0
    %487 = vmatmul.mubr.f32.gmra.mrb[0].mxu0 %v169
    %v488 = vpop.f32.mrb[0].mxu0
    %v489 = vadd.f32 0.0, %v488
    %v490 = vpop.f32.mrb[0].mxu0
    %491 = vmatprep.mubr.f32.mxu0 0.0
    %492 = vmatmul.mubr.f32.gmra.mrb[0].mxu0 %v172
    %v493 = vpop.f32.mrb[0].mxu0
    %v494 = vadd.f32 0.0, %v493
    %v495 = vpop.f32.mrb[0].mxu0
    %496 = vmatprep.mubr.f32.mxu0 0.0
    %497 = vmatmul.mubr.f32.gmra.mrb[0].mxu0 %v175
    %v498 = vpop.f32.mrb[0].mxu0
    %v499 = vadd.f32 0.0, %v498
    %v500 = vpop.f32.mrb[0].mxu0
    %501 = vmatprep.mubr.f32.mxu0 0.0
    %502 = vmatmul.mubr.f32.gmra.mrb[0].mxu0 %v178
    %v503 = vpop.f32.mrb[0].mxu0
    %v504 = vadd.f32 0.0, %v503
    %v505 = vpop.f32.mrb[0].mxu0
    %506 = vmatprep.mubr.f32.mxu0 0.0
    %507 = vmatmul.mubr.f32.gmra.mrb[0].mxu0 %v181
    %v508 = vpop.f32.mrb[0].mxu0
    %v509 = vadd.f32 0.0, %v508
    %v510 = vpop.f32.mrb[0].mxu0
    %511 = vmatprep.mubr.f32.mxu0 0.0
    %512 = vmatmul.mubr.f32.gmra.mrb[0].mxu0 %v184
    %v513 = vpop.f32.mrb[0].mxu0
    %v514 = vadd.f32 0.0, %v513
    %v515 = vpop.f32.mrb[0].mxu0
    %516 = vmatprep.mubr.f32.mxu0 0.0
    %517 = vmatmul.mubr.f32.gmra.mrb[0].mxu0 %v187
    %v518 = vpop.f32.mrb[0].mxu0
    %v519 = vadd.f32 0.0, %v518
    %v520 = vpop.f32.mrb[0].mxu0
    %521 = vmatprep.mubr.f32.mxu0 0.0
    %522 = vmatmul.mubr.f32.gmra.mrb[0].mxu0 %v190
    %v523 = vpop.f32.mrb[0].mxu0
    %v524 = vadd.f32 0.0, %v523
    %v525 = vpop.f32.mrb[0].mxu0
    %526 = vmatprep.mubr.f32.mxu0 0.0
    %527 = vmatmul.mubr.f32.gmra.mrb[0].mxu0 %v193
    %v528 = vpop.f32.mrb[0].mxu0
    %v529 = vadd.f32 0.0, %v528
    %v530 = vpop.f32.mrb[0].mxu0
    %531 = vmatprep.mubr.f32.mxu0 0.0
    %532 = vmatmul.mubr.f32.gmra.mrb[0].mxu0 %v196
    %v533 = vpop.f32.mrb[0].mxu0
    %v534 = vadd.f32 0.0, %v533
    %v535 = vpop.f32.mrb[0].mxu0
    %536 = vmatprep.mubr.f32.mxu0 0.0
    %537 = vmatmul.mubr.f32.gmra.mrb[0].mxu0 %v199
    %v538 = vpop.f32.mrb[0].mxu0
    %v539 = vadd.f32 0.0, %v538
    %v540 = vpop.f32.mrb[0].mxu0
    %541 = vmatprep.mubr.f32.mxu0 0.0
    %542 = vmatmul.mubr.f32.gmra.mrb[0].mxu0 %v202
    %v543 = vpop.f32.mrb[0].mxu0
    %v544 = vadd.f32 0.0, %v543
    %v545 = vpop.f32.mrb[0].mxu0
    %546 = vmatprep.mubr.f32.mxu0 0.0
    %547 = vmatmul.mubr.f32.gmra.mrb[0].mxu0 %v205
    %v548 = vpop.f32.mrb[0].mxu0
    %v549 = vadd.f32 0.0, %v548
    %v550 = vpop.f32.mrb[0].mxu0
    %551 = vmatprep.mubr.f32.mxu0 0.0
    %552 = vmatmul.mubr.f32.gmra.mrb[0].mxu0 %v208
    %v553 = vpop.f32.mrb[0].mxu0
    %v554 = vadd.f32 0.0, %v553
    %v555 = vpop.f32.mrb[0].mxu0
    %556 = vmatprep.mubr.f32.mxu0 0.0
    %557 = vmatmul.mubr.f32.gmra.mrb[0].mxu0 %v211
    %v558 = vpop.f32.mrb[0].mxu0
    %v559 = vadd.f32 0.0, %v558
    %v560 = vpop.f32.mrb[0].mxu0
    %561 = vmatprep.mubr.f32.mxu0 0.0
    %562 = vmatmul.mubr.f32.gmra.mrb[0].mxu0 %v214
    %v563 = vpop.f32.mrb[0].mxu0
    %v564 = vadd.f32 0.0, %v563
    %v565 = vpop.f32.mrb[0].mxu0
    %566 = vmatprep.mubr.f32.mxu0 0.0
    %567 = vmatmul.mubr.f32.gmra.mrb[0].mxu0 %v217
    %v568 = vpop.f32.mrb[0].mxu0
    %v569 = vadd.f32 0.0, %v568
    %v570 = vpop.f32.mrb[0].mxu0
    %571 = vmatprep.mubr.f32.mxu0 0.0
    %572 = vmatmul.mubr.f32.gmra.mrb[0].mxu0 %v220
    %v573 = vpop.f32.mrb[0].mxu0
    %v574 = vadd.f32 0.0, %v573
    %v575 = vpop.f32.mrb[0].mxu0
    %576 = vmatprep.mubr.f32.mxu0 0.0
    %577 = vmatmul.mubr.f32.gmra.mrb[0].mxu0 %v223
    %v578 = vpop.f32.mrb[0].mxu0
    %v579 = vadd.f32 0.0, %v578
    %v580 = vpop.f32.mrb[0].mxu0
    %581 = vmatprep.mubr.f32.mxu0 0.0
    %582 = vmatmul.mubr.f32.gmra.mrb[0].mxu0 %v226
    %v583 = vpop.f32.mrb[0].mxu0
    %v584 = vadd.f32 0.0, %v583
    %v585 = vpop.f32.mrb[0].mxu0
    %586 = vmatprep.mubr.f32.mxu0 0.0
    %587 = vmatmul.mubr.f32.gmra.mrb[0].mxu0 %v229
    %v588 = vpop.f32.mrb[0].mxu0
    %v589 = vadd.f32 0.0, %v588
    %v590 = vpop.f32.mrb[0].mxu0
    %591 = vmatprep.mubr.f32.mxu0 0.0
    %592 = vmatmul.mubr.f32.gmra.mrb[0].mxu0 %v232
    %v593 = vpop.f32.mrb[0].mxu0
    %v594 = vadd.f32 0.0, %v593
    %v595 = vpop.f32.mrb[0].mxu0
    %596 = vmatprep.mubr.f32.mxu0 0.0
    %597 = vmatmul.mubr.f32.gmra.mrb[0].mxu0 %v235
    %v598 = vpop.f32.mrb[0].mxu0
    %v599 = vadd.f32 0.0, %v598
    %v600 = vpop.f32.mrb[0].mxu0
    %601 = vmatprep.mubr.f32.mxu0 0.0
    %602 = vmatmul.mubr.f32.gmra.mrb[0].mxu0 %v238
    %v603 = vpop.f32.mrb[0].mxu0
    %v604 = vadd.f32 0.0, %v603
    %v605 = vpop.f32.mrb[0].mxu0
    %606 = vmatprep.mubr.f32.mxu0 0.0
    %607 = vmatmul.mubr.f32.gmra.mrb[0].mxu0 %v241
    %v608 = vpop.f32.mrb[0].mxu0
    %v609 = vadd.f32 0.0, %v608
    %v610 = vpop.f32.mrb[0].mxu0
    %611 = vmatprep.mubr.f32.mxu0 0.0
    %612 = vmatmul.mubr.f32.gmra.mrb[0].mxu0 %v244
    %v613 = vpop.f32.mrb[0].mxu0
    %v614 = vadd.f32 0.0, %v613
    %v615 = vpop.f32.mrb[0].mxu0
    %616 = vmatprep.mubr.f32.mxu0 0.0
    %617 = vmatmul.mubr.f32.gmra.mrb[0].mxu0 %v247
    %v618 = vpop.f32.mrb[0].mxu0
    %v619 = vadd.f32 0.0, %v618
    %v620 = vpop.f32.mrb[0].mxu0
    %621 = vmatprep.mubr.f32.mxu0 0.0
    %622 = vmatmul.mubr.f32.gmra.mrb[0].mxu0 %v250
    %v623 = vpop.f32.mrb[0].mxu0
    %v624 = vadd.f32 0.0, %v623
    %v625 = vpop.f32.mrb[0].mxu0
    %626 = vmatprep.mubr.f32.mxu0 0.0
    %627 = vmatmul.mubr.f32.gmra.mrb[0].mxu0 %v253
    %v628 = vpop.f32.mrb[0].mxu0
    %v629 = vadd.f32 0.0, %v628
    %v630 = vpop.f32.mrb[0].mxu0
    %631 = vmatprep.mubr.f32.mxu0 0.0
    %632 = vmatmul.mubr.f32.gmra.mrb[0].mxu0 %v256
    %v633 = vpop.f32.mrb[0].mxu0
    %v634 = vadd.f32 0.0, %v633
    %v635 = vpop.f32.mrb[0].mxu0
    %636 = vmatprep.mubr.f32.mxu0 0.0
    %637 = vmatmul.mubr.f32.gmra.mrb[0].mxu0 %v259
    %v638 = vpop.f32.mrb[0].mxu0
    %v639 = vadd.f32 0.0, %v638
    %v640 = vpop.f32.mrb[0].mxu0
    %641 = vmatprep.mubr.f32.mxu0 0.0
    %642 = vmatmul.mubr.f32.gmra.mrb[0].mxu0 %v262
    %v643 = vpop.f32.mrb[0].mxu0
    %v644 = vadd.f32 0.0, %v643
    %v645 = vpop.f32.mrb[0].mxu0
    %646 = vmatprep.mubr.f32.mxu0 0.0
    %647 = vmatmul.mubr.f32.gmra.mrb[0].mxu0 %v265
    %v648 = vpop.f32.mrb[0].mxu0
    %v649 = vadd.f32 0.0, %v648
    %v650 = vpop.f32.mrb[0].mxu0
    %651 = vmatprep.mubr.f32.mxu0 0.0
    %652 = vmatmul.mubr.f32.gmra.mrb[0].mxu0 %v268
    %v653 = vpop.f32.mrb[0].mxu0
    %v654 = vadd.f32 0.0, %v653
    %v655 = vpop.f32.mrb[0].mxu0
    %656 = vmatprep.mubr.f32.mxu0 0.0
    %657 = vmatmul.mubr.f32.gmra.mrb[0].mxu0 %v271
    %v658 = vpop.f32.mrb[0].mxu0
    %v659 = vadd.f32 0.0, %v658
    %v660 = vpop.f32.mrb[0].mxu0
    %661 = vdwg.mxu0
    %662 = vst [vmem:[#allocation2] sm:$0xff] %v344
    %663 = vst [vmem:[#allocation2 + $0x8] sm:$0xff] %v349
    %664 = vst [vmem:[#allocation2 + $0x10] sm:$0xff] %v354
    %665 = vst [vmem:[#allocation2 + $0x18] sm:$0xff] %v359
    %666 = vst [vmem:[#allocation2 + $0x20] sm:$0xff] %v364
    %667 = vst [vmem:[#allocation2 + $0x28] sm:$0xff] %v369
    %668 = vst [vmem:[#allocation2 + $0x30] sm:$0xff] %v374
    %669 = vst [vmem:[#allocation2 + $0x38] sm:$0xff] %v379
    %670 = vst [vmem:[#allocation2 + $0x40] sm:$0xff] %v384
    %671 = vst [vmem:[#allocation2 + $0x48] sm:$0xff] %v389
    %672 = vst [vmem:[#allocation2 + $0x50] sm:$0xff] %v394
    %673 = vst [vmem:[#allocation2 + $0x58] sm:$0xff] %v399
    %674 = vst [vmem:[#allocation2 + $0x60] sm:$0xff] %v404
    %675 = vst [vmem:[#allocation2 + $0x68] sm:$0xff] %v409
    %676 = vst [vmem:[#allocation2 + $0x70] sm:$0xff] %v414
    %677 = vst [vmem:[#allocation2 + $0x78] sm:$0xff] %v419
    %678 = vst [vmem:[#allocation2 + $0x80] sm:$0xff] %v424
    %679 = vst [vmem:[#allocation2 + $0x88] sm:$0xff] %v429
    %680 = vst [vmem:[#allocation2 + $0x90] sm:$0xff] %v434
    %681 = vst [vmem:[#allocation2 + $0x98] sm:$0xff] %v439
    %682 = vst [vmem:[#allocation2 + $0xa0] sm:$0xff] %v444
    %683 = vst [vmem:[#allocation2 + $0xa8] sm:$0xff] %v449
    %684 = vst [vmem:[#allocation2 + $0xb0] sm:$0xff] %v454
    %685 = vst [vmem:[#allocation2 + $0xb8] sm:$0xff] %v459
    %686 = vst [vmem:[#allocation2 + $0xc0] sm:$0xff] %v464
    %687 = vst [vmem:[#allocation2 + $0xc8] sm:$0xff] %v469
    %688 = vst [vmem:[#allocation2 + $0xd0] sm:$0xff] %v474
    %689 = vst [vmem:[#allocation2 + $0xd8] sm:$0xff] %v479
    %690 = vst [vmem:[#allocation2 + $0xe0] sm:$0xff] %v484
    %691 = vst [vmem:[#allocation2 + $0xe8] sm:$0xff] %v489
    %692 = vst [vmem:[#allocation2 + $0xf0] sm:$0xff] %v494
    %693 = vst [vmem:[#allocation2 + $0xf8] sm:$0xff] %v499
    %694 = vst [vmem:[#allocation2 + $0x100] sm:$0xff] %v504
    %695 = vst [vmem:[#allocation2 + $0x108] sm:$0xff] %v509
    %696 = vst [vmem:[#allocation2 + $0x110] sm:$0xff] %v514
    %697 = vst [vmem:[#allocation2 + $0x118] sm:$0xff] %v519
    %698 = vst [vmem:[#allocation2 + $0x120] sm:$0xff] %v524
    %699 = vst [vmem:[#allocation2 + $0x128] sm:$0xff] %v529
    %700 = vst [vmem:[#allocation2 + $0x130] sm:$0xff] %v534
    %701 = vst [vmem:[#allocation2 + $0x138] sm:$0xff] %v539
    %702 = vst [vmem:[#allocation2 + $0x140] sm:$0xff] %v544
    %703 = vst [vmem:[#allocation2 + $0x148] sm:$0xff] %v549
    %704 = vst [vmem:[#allocation2 + $0x150] sm:$0xff] %v554
    %705 = vst [vmem:[#allocation2 + $0x158] sm:$0xff] %v559
    %706 = vst [vmem:[#allocation2 + $0x160] sm:$0xff] %v564
    %707 = vst [vmem:[#allocation2 + $0x168] sm:$0xff] %v569
    %708 = vst [vmem:[#allocation2 + $0x170] sm:$0xff] %v574
    %709 = vst [vmem:[#allocation2 + $0x178] sm:$0xff] %v579
    %710 = vst [vmem:[#allocation2 + $0x180] sm:$0xff] %v584
    %711 = vst [vmem:[#allocation2 + $0x188] sm:$0xff] %v589
    %712 = vst [vmem:[#allocation2 + $0x190] sm:$0xff] %v594
    %713 = vst [vmem:[#allocation2 + $0x198] sm:$0xff] %v599
    %714 = vst [vmem:[#allocation2 + $0x1a0] sm:$0xff] %v604
    %715 = vst [vmem:[#allocation2 + $0x1a8] sm:$0xff] %v609
    %716 = vst [vmem:[#allocation2 + $0x1b0] sm:$0xff] %v614
    %717 = vst [vmem:[#allocation2 + $0x1b8] sm:$0xff] %v619
    %718 = vst [vmem:[#allocation2 + $0x1c0] sm:$0xff] %v624
    %719 = vst [vmem:[#allocation2 + $0x1c8] sm:$0xff] %v629
    %720 = vst [vmem:[#allocation2 + $0x1d0] sm:$0xff] %v634
    %721 = vst [vmem:[#allocation2 + $0x1d8] sm:$0xff] %v639
    %722 = vst [vmem:[#allocation2 + $0x1e0] sm:$0xff] %v644
    %723 = vst [vmem:[#allocation2 + $0x1e8] sm:$0xff] %v649
    %724 = vst [vmem:[#allocation2 + $0x1f0] sm:$0xff] %v654
    %725 = vst [vmem:[#allocation2 + $0x1f8] sm:$0xff] %v659
    %v726 = vld [vmem:[%s0 + $0x1] sm:$0xff]
    %v727 = vld [vmem:[%s0 + $0x9] sm:$0xff]
    %v728 = vld [vmem:[%s0 + $0x19] sm:$0xff]
    %v729 = vld [vmem:[%s0 + $0x21] sm:$0xff]
    %v730 = vld [vmem:[%s0 + $0x31] sm:$0xff]
    %v731 = vld [vmem:[%s0 + $0x39] sm:$0xff]
    %v732 = vld [vmem:[%s0 + $0x49] sm:$0xff]
    %v733 = vld [vmem:[%s0 + $0x51] sm:$0xff]
    %v734 = vld [vmem:[%s0 + $0x61] sm:$0xff]
    %v735 = vld [vmem:[%s0 + $0x69] sm:$0xff]
    %v736 = vld [vmem:[%s0 + $0x79] sm:$0xff]
    %v737 = vld [vmem:[%s0 + $0x81] sm:$0xff]
    %v738 = vld [vmem:[%s0 + $0x91] sm:$0xff]
    %v739 = vld [vmem:[%s0 + $0x99] sm:$0xff]
    %v740 = vld [vmem:[%s0 + $0xa9] sm:$0xff]
    %v741 = vld [vmem:[%s0 + $0xb1] sm:$0xff]
    %v742 = vld [vmem:[%s0 + $0xc1] sm:$0xff]
    %v743 = vld [vmem:[%s0 + $0xc9] sm:$0xff]
    %v744 = vld [vmem:[%s0 + $0xd9] sm:$0xff]
    %v745 = vld [vmem:[%s0 + $0xe1] sm:$0xff]
    %v746 = vld [vmem:[%s0 + $0xf1] sm:$0xff]
    %v747 = vld [vmem:[%s0 + $0xf9] sm:$0xff]
    %v748 = vld [vmem:[%s0 + $0x109] sm:$0xff]
    %v749 = vld [vmem:[%s0 + $0x111] sm:$0xff]
    %v750 = vld [vmem:[%s0 + $0x121] sm:$0xff]
    %v751 = vld [vmem:[%s0 + $0x129] sm:$0xff]
    %v752 = vld [vmem:[%s0 + $0x139] sm:$0xff]
    %v753 = vld [vmem:[%s0 + $0x141] sm:$0xff]
    %v754 = vld [vmem:[%s0 + $0x151] sm:$0xff]
    %v755 = vld [vmem:[%s0 + $0x159] sm:$0xff]
    %v756 = vld [vmem:[%s0 + $0x169] sm:$0xff]
    %v757 = vld [vmem:[%s0 + $0x171] sm:$0xff]
    %v758 = vld [vmem:[%s0 + $0x1b1] sm:$0xff]
    %v759 = vld [vmem:[%s0 + $0x1b9] sm:$0xff]
    %v760 = vld [vmem:[%s0 + $0x1c9] sm:$0xff]
    %v761 = vld [vmem:[%s0 + $0x1d1] sm:$0xff]
    %v762 = vld [vmem:[%s0 + $0x1e1] sm:$0xff]
    %v763 = vld [vmem:[%s0 + $0x1e9] sm:$0xff]
    %v764 = vld [vmem:[%s0 + $0x1f9] sm:$0xff]
    %v765 = vld [vmem:[%s0 + $0x201] sm:$0xff]
    %v766 = vld [vmem:[%s0 + $0x211] sm:$0xff]
    %v767 = vld [vmem:[%s0 + $0x219] sm:$0xff]
    %v768 = vld [vmem:[%s0 + $0x229] sm:$0xff]
    %v769 = vld [vmem:[%s0 + $0x231] sm:$0xff]
    %v770 = vld [vmem:[%s0 + $0x241] sm:$0xff]
    %v771 = vld [vmem:[%s0 + $0x249] sm:$0xff]
    %v772 = vld [vmem:[%s0 + $0x259] sm:$0xff]
    %v773 = vld [vmem:[%s0 + $0x261] sm:$0xff]
    %v774 = vld [vmem:[%s0 + $0x271] sm:$0xff]
    %v775 = vld [vmem:[%s0 + $0x279] sm:$0xff]
    %v776 = vld [vmem:[%s0 + $0x289] sm:$0xff]
    %v777 = vld [vmem:[%s0 + $0x291] sm:$0xff]
    %v778 = vld [vmem:[%s0 + $0x2a1] sm:$0xff]
    %v779 = vld [vmem:[%s0 + $0x2a9] sm:$0xff]
    %v780 = vld [vmem:[%s0 + $0x2b9] sm:$0xff]
    %v781 = vld [vmem:[%s0 + $0x2c1] sm:$0xff]
    %v782 = vld [vmem:[%s0 + $0x2d1] sm:$0xff]
    %v783 = vld [vmem:[%s0 + $0x2d9] sm:$0xff]
    %v784 = vld [vmem:[%s0 + $0x2e9] sm:$0xff]
    %v785 = vld [vmem:[%s0 + $0x2f1] sm:$0xff]
    %v786 = vld [vmem:[%s0 + $0x301] sm:$0xff]
    %v787 = vld [vmem:[%s0 + $0x309] sm:$0xff]
    %v788 = vld [vmem:[%s0 + $0x319] sm:$0xff]
    %v789 = vld [vmem:[%s0 + $0x321] sm:$0xff]
    %s790 = scalar_lea.vmem %s1, 4
    %v791 = vld [vmem:[%s790] sm:$0xf]
    %v793 = vsel %vm80, %v726, 0
    %v796 = vsel %vm80, %v727, 0
    %v799 = vsel %vm80, %v728, 0
    %v802 = vsel %vm80, %v729, 0
    %v805 = vsel %vm80, %v730, 0
    %v808 = vsel %vm80, %v731, 0
    %v811 = vsel %vm80, %v732, 0
    %v814 = vsel %vm80, %v733, 0
    %v817 = vsel %vm80, %v734, 0
    %v820 = vsel %vm80, %v735, 0
    %v823 = vsel %vm80, %v736, 0
    %v826 = vsel %vm80, %v737, 0
    %v829 = vsel %vm80, %v738, 0
    %v832 = vsel %vm80, %v739, 0
    %v835 = vsel %vm80, %v740, 0
    %v838 = vsel %vm80, %v741, 0
    %v841 = vsel %vm80, %v742, 0
    %v844 = vsel %vm80, %v743, 0
    %v847 = vsel %vm80, %v744, 0
    %v850 = vsel %vm80, %v745, 0
    %v853 = vsel %vm80, %v746, 0
    %v856 = vsel %vm80, %v747, 0
    %v859 = vsel %vm80, %v748, 0
    %v862 = vsel %vm80, %v749, 0
    %v865 = vsel %vm80, %v750, 0
    %v868 = vsel %vm80, %v751, 0
    %v871 = vsel %vm80, %v752, 0
    %v874 = vsel %vm80, %v753, 0
    %v877 = vsel %vm80, %v754, 0
    %v880 = vsel %vm80, %v755, 0
    %v883 = vsel %vm80, %v756, 0
    %v886 = vsel %vm80, %v757, 0
    %v889 = vsel %vm80, %v758, 0
    %v892 = vsel %vm80, %v759, 0
    %v895 = vsel %vm80, %v760, 0
    %v898 = vsel %vm80, %v761, 0
    %v901 = vsel %vm80, %v762, 0
    %v904 = vsel %vm80, %v763, 0
    %v907 = vsel %vm80, %v764, 0
    %v910 = vsel %vm80, %v765, 0
    %v913 = vsel %vm80, %v766, 0
    %v916 = vsel %vm80, %v767, 0
    %v919 = vsel %vm80, %v768, 0
    %v922 = vsel %vm80, %v769, 0
    %v925 = vsel %vm80, %v770, 0
    %v928 = vsel %vm80, %v771, 0
    %v931 = vsel %vm80, %v772, 0
    %v934 = vsel %vm80, %v773, 0
    %v937 = vsel %vm80, %v774, 0
    %v940 = vsel %vm80, %v775, 0
    %v943 = vsel %vm80, %v776, 0
    %v946 = vsel %vm80, %v777, 0
    %v949 = vsel %vm80, %v778, 0
    %v952 = vsel %vm80, %v779, 0
    %v955 = vsel %vm80, %v780, 0
    %v958 = vsel %vm80, %v781, 0
    %v961 = vsel %vm80, %v782, 0
    %v964 = vsel %vm80, %v783, 0
    %v967 = vsel %vm80, %v784, 0
    %v970 = vsel %vm80, %v785, 0
    %v973 = vsel %vm80, %v786, 0
    %v976 = vsel %vm80, %v787, 0
    %v979 = vsel %vm80, %v788, 0
    %v982 = vsel %vm80, %v789, 0
    %v985 = vsel %vm273, %v791, 0
    %987 = vmatprep.subr.mxu0 0.0
    %988 = vmatpush1.msra.mxu0 %v985
    %989 = vmatprep.subr.mxu0 0.0
    %990 = vmatpush1.msra.mxu0 0.0
    %991 = vmatprep.subr.mxu0 0.0
    %992 = vmatpush1.msra.mxu0 0.0
    %993 = vmatprep.subr.mxu0 0.0
    %994 = vmatpush1.msra.mxu0 0.0
    %995 = vmatprep.subr.mxu0 0.0
    %996 = vmatpush1.msra.mxu0 0.0
    %997 = vmatprep.subr.mxu0 0.0
    %998 = vmatpush1.msra.mxu0 0.0
    %999 = vmatprep.subr.mxu0 0.0
    %1000 = vmatpush1.msra.mxu0 0.0
    %1001 = vmatprep.subr.mxu0 0.0
    %1002 = vmatpush1.msra.mxu0 0.0
    %1003 = vmatprep.subr.mxu0 0.0
    %1004 = vmatpush1.msra.mxu0 0.0
    %1005 = vmatprep.subr.mxu0 0.0
    %1006 = vmatpush1.msra.mxu0 0.0
    %1007 = vmatprep.subr.mxu0 0.0
    %1008 = vmatpush1.msra.mxu0 0.0
    %1009 = vmatprep.subr.mxu0 0.0
    %1010 = vmatpush1.msra.mxu0 0.0
    %1011 = vmatprep.subr.mxu0 0.0
    %1012 = vmatpush1.msra.mxu0 0.0
    %1013 = vmatprep.subr.mxu0 0.0
    %1014 = vmatpush1.msra.mxu0 0.0
    %1015 = vmatprep.subr.mxu0 0.0
    %1016 = vmatpush1.msra.mxu0 0.0
    %1017 = vmatprep.subr.mxu0 0.0
    %1018 = vmatpush1.msra.mxu0 0.0
    %1019 = vmatprep.subr.mxu0 0.0
    %1020 = vmatpush1.msra.mxu0 0.0
    %1021 = vmatprep.subr.mxu0 0.0
    %1022 = vmatpush1.msra.mxu0 0.0
    %1023 = vmatprep.subr.mxu0 0.0
    %1024 = vmatpush1.msra.mxu0 0.0
    %1025 = vmatprep.subr.mxu0 0.0
    %1026 = vmatpush1.msra.mxu0 0.0
    %1027 = vmatprep.subr.mxu0 0.0
    %1028 = vmatpush1.msra.mxu0 0.0
    %1029 = vmatprep.subr.mxu0 0.0
    %1030 = vmatpush1.msra.mxu0 0.0
    %1031 = vmatprep.subr.mxu0 0.0
    %1032 = vmatpush1.msra.mxu0 0.0
    %1033 = vmatprep.subr.mxu0 0.0
    %1034 = vmatpush1.msra.mxu0 0.0
    %1035 = vmatprep.subr.mxu0 0.0
    %1036 = vmatpush1.msra.mxu0 0.0
    %1037 = vmatprep.subr.mxu0 0.0
    %1038 = vmatpush1.msra.mxu0 0.0
    %1039 = vmatprep.subr.mxu0 0.0
    %1040 = vmatpush1.msra.mxu0 0.0
    %1041 = vmatprep.subr.mxu0 0.0
    %1042 = vmatpush1.msra.mxu0 0.0
    %1043 = vmatprep.subr.mxu0 0.0
    %1044 = vmatpush1.msra.mxu0 0.0
    %1045 = vmatprep.subr.mxu0 0.0
    %1046 = vmatpush1.msra.mxu0 0.0
    %1047 = vmatprep.subr.mxu0 0.0
    %1048 = vmatpush1.msra.mxu0 0.0
    %1049 = vmatprep.subr.mxu0 0.0
    %1050 = vmatpush1.msra.mxu0 0.0
    %1051 = vmatprep.mubr.f32.mxu0 0.0
    %1052 = vmatmul.mubr.f32.gmra.mrb[0].mxu0 %v793
    %v1053 = vpop.f32.mrb[0].mxu0
    %v1054 = vadd.f32 0.0, %v1053
    %v1055 = vpop.f32.mrb[0].mxu0
    %1056 = vmatprep.mubr.f32.mxu0 0.0
    %1057 = vmatmul.mubr.f32.gmra.mrb[0].mxu0 %v796
    %v1058 = vpop.f32.mrb[0].mxu0
    %v1059 = vadd.f32 0.0, %v1058
    %v1060 = vpop.f32.mrb[0].mxu0
    %1061 = vmatprep.mubr.f32.mxu0 0.0
    %1062 = vmatmul.mubr.f32.gmra.mrb[0].mxu0 %v799
    %v1063 = vpop.f32.mrb[0].mxu0
    %v1064 = vadd.f32 0.0, %v1063
    %v1065 = vpop.f32.mrb[0].mxu0
    %1066 = vmatprep.mubr.f32.mxu0 0.0
    %1067 = vmatmul.mubr.f32.gmra.mrb[0].mxu0 %v802
    %v1068 = vpop.f32.mrb[0].mxu0
    %v1069 = vadd.f32 0.0, %v1068
    %v1070 = vpop.f32.mrb[0].mxu0
    %1071 = vmatprep.mubr.f32.mxu0 0.0
    %1072 = vmatmul.mubr.f32.gmra.mrb[0].mxu0 %v805
    %v1073 = vpop.f32.mrb[0].mxu0
    %v1074 = vadd.f32 0.0, %v1073
    %v1075 = vpop.f32.mrb[0].mxu0
    %1076 = vmatprep.mubr.f32.mxu0 0.0
    %1077 = vmatmul.mubr.f32.gmra.mrb[0].mxu0 %v808
    %v1078 = vpop.f32.mrb[0].mxu0
    %v1079 = vadd.f32 0.0, %v1078
    %v1080 = vpop.f32.mrb[0].mxu0
    %1081 = vmatprep.mubr.f32.mxu0 0.0
    %1082 = vmatmul.mubr.f32.gmra.mrb[0].mxu0 %v811
    %v1083 = vpop.f32.mrb[0].mxu0
    %v1084 = vadd.f32 0.0, %v1083
    %v1085 = vpop.f32.mrb[0].mxu0
    %1086 = vmatprep.mubr.f32.mxu0 0.0
    %1087 = vmatmul.mubr.f32.gmra.mrb[0].mxu0 %v814
    %v1088 = vpop.f32.mrb[0].mxu0
    %v1089 = vadd.f32 0.0, %v1088
    %v1090 = vpop.f32.mrb[0].mxu0
    %1091 = vmatprep.mubr.f32.mxu0 0.0
    %1092 = vmatmul.mubr.f32.gmra.mrb[0].mxu0 %v817
    %v1093 = vpop.f32.mrb[0].mxu0
    %v1094 = vadd.f32 0.0, %v1093
    %v1095 = vpop.f32.mrb[0].mxu0
    %1096 = vmatprep.mubr.f32.mxu0 0.0
    %1097 = vmatmul.mubr.f32.gmra.mrb[0].mxu0 %v820
    %v1098 = vpop.f32.mrb[0].mxu0
    %v1099 = vadd.f32 0.0, %v1098
    %v1100 = vpop.f32.mrb[0].mxu0
    %1101 = vmatprep.mubr.f32.mxu0 0.0
    %1102 = vmatmul.mubr.f32.gmra.mrb[0].mxu0 %v823
    %v1103 = vpop.f32.mrb[0].mxu0
    %v1104 = vadd.f32 0.0, %v1103
    %v1105 = vpop.f32.mrb[0].mxu0
    %1106 = vmatprep.mubr.f32.mxu0 0.0
    %1107 = vmatmul.mubr.f32.gmra.mrb[0].mxu0 %v826
    %v1108 = vpop.f32.mrb[0].mxu0
    %v1109 = vadd.f32 0.0, %v1108
    %v1110 = vpop.f32.mrb[0].mxu0
    %1111 = vmatprep.mubr.f32.mxu0 0.0
    %1112 = vmatmul.mubr.f32.gmra.mrb[0].mxu0 %v829
    %v1113 = vpop.f32.mrb[0].mxu0
    %v1114 = vadd.f32 0.0, %v1113
    %v1115 = vpop.f32.mrb[0].mxu0
    %1116 = vmatprep.mubr.f32.mxu0 0.0
    %1117 = vmatmul.mubr.f32.gmra.mrb[0].mxu0 %v832
    %v1118 = vpop.f32.mrb[0].mxu0
    %v1119 = vadd.f32 0.0, %v1118
    %v1120 = vpop.f32.mrb[0].mxu0
    %1121 = vmatprep.mubr.f32.mxu0 0.0
    %1122 = vmatmul.mubr.f32.gmra.mrb[0].mxu0 %v835
    %v1123 = vpop.f32.mrb[0].mxu0
    %v1124 = vadd.f32 0.0, %v1123
    %v1125 = vpop.f32.mrb[0].mxu0
    %1126 = vmatprep.mubr.f32.mxu0 0.0
    %1127 = vmatmul.mubr.f32.gmra.mrb[0].mxu0 %v838
    %v1128 = vpop.f32.mrb[0].mxu0
    %v1129 = vadd.f32 0.0, %v1128
    %v1130 = vpop.f32.mrb[0].mxu0
    %1131 = vmatprep.mubr.f32.mxu0 0.0
    %1132 = vmatmul.mubr.f32.gmra.mrb[0].mxu0 %v841
    %v1133 = vpop.f32.mrb[0].mxu0
    %v1134 = vadd.f32 0.0, %v1133
    %v1135 = vpop.f32.mrb[0].mxu0
    %1136 = vmatprep.mubr.f32.mxu0 0.0
    %1137 = vmatmul.mubr.f32.gmra.mrb[0].mxu0 %v844
    %v1138 = vpop.f32.mrb[0].mxu0
    %v1139 = vadd.f32 0.0, %v1138
    %v1140 = vpop.f32.mrb[0].mxu0
    %1141 = vmatprep.mubr.f32.mxu0 0.0
    %1142 = vmatmul.mubr.f32.gmra.mrb[0].mxu0 %v847
    %v1143 = vpop.f32.mrb[0].mxu0
    %v1144 = vadd.f32 0.0, %v1143
    %v1145 = vpop.f32.mrb[0].mxu0
    %1146 = vmatprep.mubr.f32.mxu0 0.0
    %1147 = vmatmul.mubr.f32.gmra.mrb[0].mxu0 %v850
    %v1148 = vpop.f32.mrb[0].mxu0
    %v1149 = vadd.f32 0.0, %v1148
    %v1150 = vpop.f32.mrb[0].mxu0
    %1151 = vmatprep.mubr.f32.mxu0 0.0
    %1152 = vmatmul.mubr.f32.gmra.mrb[0].mxu0 %v853
    %v1153 = vpop.f32.mrb[0].mxu0
    %v1154 = vadd.f32 0.0, %v1153
    %v1155 = vpop.f32.mrb[0].mxu0
    %1156 = vmatprep.mubr.f32.mxu0 0.0
    %1157 = vmatmul.mubr.f32.gmra.mrb[0].mxu0 %v856
    %v1158 = vpop.f32.mrb[0].mxu0
    %v1159 = vadd.f32 0.0, %v1158
    %v1160 = vpop.f32.mrb[0].mxu0
    %1161 = vmatprep.mubr.f32.mxu0 0.0
    %1162 = vmatmul.mubr.f32.gmra.mrb[0].mxu0 %v859
    %v1163 = vpop.f32.mrb[0].mxu0
    %v1164 = vadd.f32 0.0, %v1163
    %v1165 = vpop.f32.mrb[0].mxu0
    %1166 = vmatprep.mubr.f32.mxu0 0.0
    %1167 = vmatmul.mubr.f32.gmra.mrb[0].mxu0 %v862
    %v1168 = vpop.f32.mrb[0].mxu0
    %v1169 = vadd.f32 0.0, %v1168
    %v1170 = vpop.f32.mrb[0].mxu0
    %1171 = vmatprep.mubr.f32.mxu0 0.0
    %1172 = vmatmul.mubr.f32.gmra.mrb[0].mxu0 %v865
    %v1173 = vpop.f32.mrb[0].mxu0
    %v1174 = vadd.f32 0.0, %v1173
    %v1175 = vpop.f32.mrb[0].mxu0
    %1176 = vmatprep.mubr.f32.mxu0 0.0
    %1177 = vmatmul.mubr.f32.gmra.mrb[0].mxu0 %v868
    %v1178 = vpop.f32.mrb[0].mxu0
    %v1179 = vadd.f32 0.0, %v1178
    %v1180 = vpop.f32.mrb[0].mxu0
    %1181 = vmatprep.mubr.f32.mxu0 0.0
    %1182 = vmatmul.mubr.f32.gmra.mrb[0].mxu0 %v871
    %v1183 = vpop.f32.mrb[0].mxu0
    %v1184 = vadd.f32 0.0, %v1183
    %v1185 = vpop.f32.mrb[0].mxu0
    %1186 = vmatprep.mubr.f32.mxu0 0.0
    %1187 = vmatmul.mubr.f32.gmra.mrb[0].mxu0 %v874
    %v1188 = vpop.f32.mrb[0].mxu0
    %v1189 = vadd.f32 0.0, %v1188
    %v1190 = vpop.f32.mrb[0].mxu0
    %1191 = vmatprep.mubr.f32.mxu0 0.0
    %1192 = vmatmul.mubr.f32.gmra.mrb[0].mxu0 %v877
    %v1193 = vpop.f32.mrb[0].mxu0
    %v1194 = vadd.f32 0.0, %v1193
    %v1195 = vpop.f32.mrb[0].mxu0
    %1196 = vmatprep.mubr.f32.mxu0 0.0
    %1197 = vmatmul.mubr.f32.gmra.mrb[0].mxu0 %v880
    %v1198 = vpop.f32.mrb[0].mxu0
    %v1199 = vadd.f32 0.0, %v1198
    %v1200 = vpop.f32.mrb[0].mxu0
    %1201 = vmatprep.mubr.f32.mxu0 0.0
    %1202 = vmatmul.mubr.f32.gmra.mrb[0].mxu0 %v883
    %v1203 = vpop.f32.mrb[0].mxu0
    %v1204 = vadd.f32 0.0, %v1203
    %v1205 = vpop.f32.mrb[0].mxu0
    %1206 = vmatprep.mubr.f32.mxu0 0.0
    %1207 = vmatmul.mubr.f32.gmra.mrb[0].mxu0 %v886
    %v1208 = vpop.f32.mrb[0].mxu0
    %v1209 = vadd.f32 0.0, %v1208
    %v1210 = vpop.f32.mrb[0].mxu0
    %1211 = vmatprep.mubr.f32.mxu0 0.0
    %1212 = vmatmul.mubr.f32.gmra.mrb[0].mxu0 %v889
    %v1213 = vpop.f32.mrb[0].mxu0
    %v1214 = vadd.f32 0.0, %v1213
    %v1215 = vpop.f32.mrb[0].mxu0
    %1216 = vmatprep.mubr.f32.mxu0 0.0
    %1217 = vmatmul.mubr.f32.gmra.mrb[0].mxu0 %v892
    %v1218 = vpop.f32.mrb[0].mxu0
    %v1219 = vadd.f32 0.0, %v1218
    %v1220 = vpop.f32.mrb[0].mxu0
    %1221 = vmatprep.mubr.f32.mxu0 0.0
    %1222 = vmatmul.mubr.f32.gmra.mrb[0].mxu0 %v895
    %v1223 = vpop.f32.mrb[0].mxu0
    %v1224 = vadd.f32 0.0, %v1223
    %v1225 = vpop.f32.mrb[0].mxu0
    %1226 = vmatprep.mubr.f32.mxu0 0.0
    %1227 = vmatmul.mubr.f32.gmra.mrb[0].mxu0 %v898
    %v1228 = vpop.f32.mrb[0].mxu0
    %v1229 = vadd.f32 0.0, %v1228
    %v1230 = vpop.f32.mrb[0].mxu0
    %1231 = vmatprep.mubr.f32.mxu0 0.0
    %1232 = vmatmul.mubr.f32.gmra.mrb[0].mxu0 %v901
    %v1233 = vpop.f32.mrb[0].mxu0
    %v1234 = vadd.f32 0.0, %v1233
    %v1235 = vpop.f32.mrb[0].mxu0
    %1236 = vmatprep.mubr.f32.mxu0 0.0
    %1237 = vmatmul.mubr.f32.gmra.mrb[0].mxu0 %v904
    %v1238 = vpop.f32.mrb[0].mxu0
    %v1239 = vadd.f32 0.0, %v1238
    %v1240 = vpop.f32.mrb[0].mxu0
    %1241 = vmatprep.mubr.f32.mxu0 0.0
    %1242 = vmatmul.mubr.f32.gmra.mrb[0].mxu0 %v907
    %v1243 = vpop.f32.mrb[0].mxu0
    %v1244 = vadd.f32 0.0, %v1243
    %v1245 = vpop.f32.mrb[0].mxu0
    %1246 = vmatprep.mubr.f32.mxu0 0.0
    %1247 = vmatmul.mubr.f32.gmra.mrb[0].mxu0 %v910
    %v1248 = vpop.f32.mrb[0].mxu0
    %v1249 = vadd.f32 0.0, %v1248
    %v1250 = vpop.f32.mrb[0].mxu0
    %1251 = vmatprep.mubr.f32.mxu0 0.0
    %1252 = vmatmul.mubr.f32.gmra.mrb[0].mxu0 %v913
    %v1253 = vpop.f32.mrb[0].mxu0
    %v1254 = vadd.f32 0.0, %v1253
    %v1255 = vpop.f32.mrb[0].mxu0
    %1256 = vmatprep.mubr.f32.mxu0 0.0
    %1257 = vmatmul.mubr.f32.gmra.mrb[0].mxu0 %v916
    %v1258 = vpop.f32.mrb[0].mxu0
    %v1259 = vadd.f32 0.0, %v1258
    %v1260 = vpop.f32.mrb[0].mxu0
    %1261 = vmatprep.mubr.f32.mxu0 0.0
    %1262 = vmatmul.mubr.f32.gmra.mrb[0].mxu0 %v919
    %v1263 = vpop.f32.mrb[0].mxu0
    %v1264 = vadd.f32 0.0, %v1263
    %v1265 = vpop.f32.mrb[0].mxu0
    %1266 = vmatprep.mubr.f32.mxu0 0.0
    %1267 = vmatmul.mubr.f32.gmra.mrb[0].mxu0 %v922
    %v1268 = vpop.f32.mrb[0].mxu0
    %v1269 = vadd.f32 0.0, %v1268
    %v1270 = vpop.f32.mrb[0].mxu0
    %1271 = vmatprep.mubr.f32.mxu0 0.0
    %1272 = vmatmul.mubr.f32.gmra.mrb[0].mxu0 %v925
    %v1273 = vpop.f32.mrb[0].mxu0
    %v1274 = vadd.f32 0.0, %v1273
    %v1275 = vpop.f32.mrb[0].mxu0
    %1276 = vmatprep.mubr.f32.mxu0 0.0
    %1277 = vmatmul.mubr.f32.gmra.mrb[0].mxu0 %v928
    %v1278 = vpop.f32.mrb[0].mxu0
    %v1279 = vadd.f32 0.0, %v1278
    %v1280 = vpop.f32.mrb[0].mxu0
    %1281 = vmatprep.mubr.f32.mxu0 0.0
    %1282 = vmatmul.mubr.f32.gmra.mrb[0].mxu0 %v931
    %v1283 = vpop.f32.mrb[0].mxu0
    %v1284 = vadd.f32 0.0, %v1283
    %v1285 = vpop.f32.mrb[0].mxu0
    %1286 = vmatprep.mubr.f32.mxu0 0.0
    %1287 = vmatmul.mubr.f32.gmra.mrb[0].mxu0 %v934
    %v1288 = vpop.f32.mrb[0].mxu0
    %v1289 = vadd.f32 0.0, %v1288
    %v1290 = vpop.f32.mrb[0].mxu0
    %1291 = vmatprep.mubr.f32.mxu0 0.0
    %1292 = vmatmul.mubr.f32.gmra.mrb[0].mxu0 %v937
    %v1293 = vpop.f32.mrb[0].mxu0
    %v1294 = vadd.f32 0.0, %v1293
    %v1295 = vpop.f32.mrb[0].mxu0
    %1296 = vmatprep.mubr.f32.mxu0 0.0
    %1297 = vmatmul.mubr.f32.gmra.mrb[0].mxu0 %v940
    %v1298 = vpop.f32.mrb[0].mxu0
    %v1299 = vadd.f32 0.0, %v1298
    %v1300 = vpop.f32.mrb[0].mxu0
    %1301 = vmatprep.mubr.f32.mxu0 0.0
    %1302 = vmatmul.mubr.f32.gmra.mrb[0].mxu0 %v943
    %v1303 = vpop.f32.mrb[0].mxu0
    %v1304 = vadd.f32 0.0, %v1303
    %v1305 = vpop.f32.mrb[0].mxu0
    %1306 = vmatprep.mubr.f32.mxu0 0.0
    %1307 = vmatmul.mubr.f32.gmra.mrb[0].mxu0 %v946
    %v1308 = vpop.f32.mrb[0].mxu0
    %v1309 = vadd.f32 0.0, %v1308
    %v1310 = vpop.f32.mrb[0].mxu0
    %1311 = vmatprep.mubr.f32.mxu0 0.0
    %1312 = vmatmul.mubr.f32.gmra.mrb[0].mxu0 %v949
    %v1313 = vpop.f32.mrb[0].mxu0
    %v1314 = vadd.f32 0.0, %v1313
    %v1315 = vpop.f32.mrb[0].mxu0
    %1316 = vmatprep.mubr.f32.mxu0 0.0
    %1317 = vmatmul.mubr.f32.gmra.mrb[0].mxu0 %v952
    %v1318 = vpop.f32.mrb[0].mxu0
    %v1319 = vadd.f32 0.0, %v1318
    %v1320 = vpop.f32.mrb[0].mxu0
    %1321 = vmatprep.mubr.f32.mxu0 0.0
    %1322 = vmatmul.mubr.f32.gmra.mrb[0].mxu0 %v955
    %v1323 = vpop.f32.mrb[0].mxu0
    %v1324 = vadd.f32 0.0, %v1323
    %v1325 = vpop.f32.mrb[0].mxu0
    %1326 = vmatprep.mubr.f32.mxu0 0.0
    %1327 = vmatmul.mubr.f32.gmra.mrb[0].mxu0 %v958
    %v1328 = vpop.f32.mrb[0].mxu0
    %v1329 = vadd.f32 0.0, %v1328
    %v1330 = vpop.f32.mrb[0].mxu0
    %1331 = vmatprep.mubr.f32.mxu0 0.0
    %1332 = vmatmul.mubr.f32.gmra.mrb[0].mxu0 %v961
    %v1333 = vpop.f32.mrb[0].mxu0
    %v1334 = vadd.f32 0.0, %v1333
    %v1335 = vpop.f32.mrb[0].mxu0
    %1336 = vmatprep.mubr.f32.mxu0 0.0
    %1337 = vmatmul.mubr.f32.gmra.mrb[0].mxu0 %v964
    %v1338 = vpop.f32.mrb[0].mxu0
    %v1339 = vadd.f32 0.0, %v1338
    %v1340 = vpop.f32.mrb[0].mxu0
    %1341 = vmatprep.mubr.f32.mxu0 0.0
    %1342 = vmatmul.mubr.f32.gmra.mrb[0].mxu0 %v967
    %v1343 = vpop.f32.mrb[0].mxu0
    %v1344 = vadd.f32 0.0, %v1343
    %v1345 = vpop.f32.mrb[0].mxu0
    %1346 = vmatprep.mubr.f32.mxu0 0.0
    %1347 = vmatmul.mubr.f32.gmra.mrb[0].mxu0 %v970
    %v1348 = vpop.f32.mrb[0].mxu0
    %v1349 = vadd.f32 0.0, %v1348
    %v1350 = vpop.f32.mrb[0].mxu0
    %1351 = vmatprep.mubr.f32.mxu0 0.0
    %1352 = vmatmul.mubr.f32.gmra.mrb[0].mxu0 %v973
    %v1353 = vpop.f32.mrb[0].mxu0
    %v1354 = vadd.f32 0.0, %v1353
    %v1355 = vpop.f32.mrb[0].mxu0
    %1356 = vmatprep.mubr.f32.mxu0 0.0
    %1357 = vmatmul.mubr.f32.gmra.mrb[0].mxu0 %v976
    %v1358 = vpop.f32.mrb[0].mxu0
    %v1359 = vadd.f32 0.0, %v1358
    %v1360 = vpop.f32.mrb[0].mxu0
    %1361 = vmatprep.mubr.f32.mxu0 0.0
    %1362 = vmatmul.mubr.f32.gmra.mrb[0].mxu0 %v979
    %v1363 = vpop.f32.mrb[0].mxu0
    %v1364 = vadd.f32 0.0, %v1363
    %v1365 = vpop.f32.mrb[0].mxu0
    %1366 = vmatprep.mubr.f32.mxu0 0.0
    %1367 = vmatmul.mubr.f32.gmra.mrb[0].mxu0 %v982
    %v1368 = vpop.f32.mrb[0].mxu0
    %v1369 = vadd.f32 0.0, %v1368
    %v1370 = vpop.f32.mrb[0].mxu0
    %1371 = vdwg.mxu0
    %v1372 = vld [vmem:[#allocation2] sm:$0xff]
    %v1373 = vld [vmem:[#allocation2 + $0x8] sm:$0xff]
    %v1374 = vld [vmem:[#allocation2 + $0x10] sm:$0xff]
    %v1375 = vld [vmem:[#allocation2 + $0x18] sm:$0xff]
    %v1376 = vld [vmem:[#allocation2 + $0x20] sm:$0xff]
    %v1377 = vld [vmem:[#allocation2 + $0x28] sm:$0xff]
    %v1378 = vld [vmem:[#allocation2 + $0x30] sm:$0xff]
    %v1379 = vld [vmem:[#allocation2 + $0x38] sm:$0xff]
    %v1380 = vld [vmem:[#allocation2 + $0x40] sm:$0xff]
    %v1381 = vld [vmem:[#allocation2 + $0x48] sm:$0xff]
    %v1382 = vld [vmem:[#allocation2 + $0x50] sm:$0xff]
    %v1383 = vld [vmem:[#allocation2 + $0x58] sm:$0xff]
    %v1384 = vld [vmem:[#allocation2 + $0x60] sm:$0xff]
    %v1385 = vld [vmem:[#allocation2 + $0x68] sm:$0xff]
    %v1386 = vld [vmem:[#allocation2 + $0x70] sm:$0xff]
    %v1387 = vld [vmem:[#allocation2 + $0x78] sm:$0xff]
    %v1388 = vld [vmem:[#allocation2 + $0x80] sm:$0xff]
    %v1389 = vld [vmem:[#allocation2 + $0x88] sm:$0xff]
    %v1390 = vld [vmem:[#allocation2 + $0x90] sm:$0xff]
    %v1391 = vld [vmem:[#allocation2 + $0x98] sm:$0xff]
    %v1392 = vld [vmem:[#allocation2 + $0xa0] sm:$0xff]
    %v1393 = vld [vmem:[#allocation2 + $0xa8] sm:$0xff]
    %v1394 = vld [vmem:[#allocation2 + $0xb0] sm:$0xff]
    %v1395 = vld [vmem:[#allocation2 + $0xb8] sm:$0xff]
    %v1396 = vld [vmem:[#allocation2 + $0xc0] sm:$0xff]
    %v1397 = vld [vmem:[#allocation2 + $0xc8] sm:$0xff]
    %v1398 = vld [vmem:[#allocation2 + $0xd0] sm:$0xff]
    %v1399 = vld [vmem:[#allocation2 + $0xd8] sm:$0xff]
    %v1400 = vld [vmem:[#allocation2 + $0xe0] sm:$0xff]
    %v1401 = vld [vmem:[#allocation2 + $0xe8] sm:$0xff]
    %v1402 = vld [vmem:[#allocation2 + $0xf0] sm:$0xff]
    %v1403 = vld [vmem:[#allocation2 + $0xf8] sm:$0xff]
    %v1404 = vld [vmem:[#allocation2 + $0x100] sm:$0xff]
    %v1405 = vld [vmem:[#allocation2 + $0x108] sm:$0xff]
    %v1406 = vld [vmem:[#allocation2 + $0x110] sm:$0xff]
    %v1407 = vld [vmem:[#allocation2 + $0x118] sm:$0xff]
    %v1408 = vld [vmem:[#allocation2 + $0x120] sm:$0xff]
    %v1409 = vld [vmem:[#allocation2 + $0x128] sm:$0xff]
    %v1410 = vld [vmem:[#allocation2 + $0x130] sm:$0xff]
    %v1411 = vld [vmem:[#allocation2 + $0x138] sm:$0xff]
    %v1412 = vld [vmem:[#allocation2 + $0x140] sm:$0xff]
    %v1413 = vld [vmem:[#allocation2 + $0x148] sm:$0xff]
    %v1414 = vld [vmem:[#allocation2 + $0x150] sm:$0xff]
    %v1415 = vld [vmem:[#allocation2 + $0x158] sm:$0xff]
    %v1416 = vld [vmem:[#allocation2 + $0x160] sm:$0xff]
    %v1417 = vld [vmem:[#allocation2 + $0x168] sm:$0xff]
    %v1418 = vld [vmem:[#allocation2 + $0x170] sm:$0xff]
    %v1419 = vld [vmem:[#allocation2 + $0x178] sm:$0xff]
    %v1420 = vld [vmem:[#allocation2 + $0x180] sm:$0xff]
    %v1421 = vld [vmem:[#allocation2 + $0x188] sm:$0xff]
    %v1422 = vld [vmem:[#allocation2 + $0x190] sm:$0xff]
    %v1423 = vld [vmem:[#allocation2 + $0x198] sm:$0xff]
    %v1424 = vld [vmem:[#allocation2 + $0x1a0] sm:$0xff]
    %v1425 = vld [vmem:[#allocation2 + $0x1a8] sm:$0xff]
    %v1426 = vld [vmem:[#allocation2 + $0x1b0] sm:$0xff]
    %v1427 = vld [vmem:[#allocation2 + $0x1b8] sm:$0xff]
    %v1428 = vld [vmem:[#allocation2 + $0x1c0] sm:$0xff]
    %v1429 = vld [vmem:[#allocation2 + $0x1c8] sm:$0xff]
    %v1430 = vld [vmem:[#allocation2 + $0x1d0] sm:$0xff]
    %v1431 = vld [vmem:[#allocation2 + $0x1d8] sm:$0xff]
    %v1432 = vld [vmem:[#allocation2 + $0x1e0] sm:$0xff]
    %v1433 = vld [vmem:[#allocation2 + $0x1e8] sm:$0xff]
    %v1434 = vld [vmem:[#allocation2 + $0x1f0] sm:$0xff]
    %v1435 = vld [vmem:[#allocation2 + $0x1f8] sm:$0xff]
    %v1436 = vadd.f32 %v1372, %v1054
    %v1437 = vadd.f32 %v1373, %v1059
    %v1438 = vadd.f32 %v1374, %v1064
    %v1439 = vadd.f32 %v1375, %v1069
    %v1440 = vadd.f32 %v1376, %v1074
    %v1441 = vadd.f32 %v1377, %v1079
    %v1442 = vadd.f32 %v1378, %v1084
    %v1443 = vadd.f32 %v1379, %v1089
    %v1444 = vadd.f32 %v1380, %v1094
    %v1445 = vadd.f32 %v1381, %v1099
    %v1446 = vadd.f32 %v1382, %v1104
    %v1447 = vadd.f32 %v1383, %v1109
    %v1448 = vadd.f32 %v1384, %v1114
    %v1449 = vadd.f32 %v1385, %v1119
    %v1450 = vadd.f32 %v1386, %v1124
    %v1451 = vadd.f32 %v1387, %v1129
    %v1452 = vadd.f32 %v1388, %v1134
    %v1453 = vadd.f32 %v1389, %v1139
    %v1454 = vadd.f32 %v1390, %v1144
    %v1455 = vadd.f32 %v1391, %v1149
    %v1456 = vadd.f32 %v1392, %v1154
    %v1457 = vadd.f32 %v1393, %v1159
    %v1458 = vadd.f32 %v1394, %v1164
    %v1459 = vadd.f32 %v1395, %v1169
    %v1460 = vadd.f32 %v1396, %v1174
    %v1461 = vadd.f32 %v1397, %v1179
    %v1462 = vadd.f32 %v1398, %v1184
    %v1463 = vadd.f32 %v1399, %v1189
    %v1464 = vadd.f32 %v1400, %v1194
    %v1465 = vadd.f32 %v1401, %v1199
    %v1466 = vadd.f32 %v1402, %v1204
    %v1467 = vadd.f32 %v1403, %v1209
    %v1468 = vadd.f32 %v1404, %v1214
    %v1469 = vadd.f32 %v1405, %v1219
    %v1470 = vadd.f32 %v1406, %v1224
    %v1471 = vadd.f32 %v1407, %v1229
    %v1472 = vadd.f32 %v1408, %v1234
    %v1473 = vadd.f32 %v1409, %v1239
    %v1474 = vadd.f32 %v1410, %v1244
    %v1475 = vadd.f32 %v1411, %v1249
    %v1476 = vadd.f32 %v1412, %v1254
    %v1477 = vadd.f32 %v1413, %v1259
    %v1478 = vadd.f32 %v1414, %v1264
    %v1479 = vadd.f32 %v1415, %v1269
    %v1480 = vadd.f32 %v1416, %v1274
    %v1481 = vadd.f32 %v1417, %v1279
    %v1482 = vadd.f32 %v1418, %v1284
    %v1483 = vadd.f32 %v1419, %v1289
    %v1484 = vadd.f32 %v1420, %v1294
    %v1485 = vadd.f32 %v1421, %v1299
    %v1486 = vadd.f32 %v1422, %v1304
    %v1487 = vadd.f32 %v1423, %v1309
    %v1488 = vadd.f32 %v1424, %v1314
    %v1489 = vadd.f32 %v1425, %v1319
    %v1490 = vadd.f32 %v1426, %v1324
    %v1491 = vadd.f32 %v1427, %v1329
    %v1492 = vadd.f32 %v1428, %v1334
    %v1493 = vadd.f32 %v1429, %v1339
    %v1494 = vadd.f32 %v1430, %v1344
    %v1495 = vadd.f32 %v1431, %v1349
    %v1496 = vadd.f32 %v1432, %v1354
    %v1497 = vadd.f32 %v1433, %v1359
    %v1498 = vadd.f32 %v1434, %v1364
    %v1499 = vadd.f32 %v1435, %v1369
    %1500 = vst [vmem:[#allocation2] sm:$0xff] %v1436
    %1501 = vst [vmem:[#allocation2 + $0x8] sm:$0xff] %v1437
    %1502 = vst [vmem:[#allocation2 + $0x10] sm:$0xff] %v1438
    %1503 = vst [vmem:[#allocation2 + $0x18] sm:$0xff] %v1439
    %1504 = vst [vmem:[#allocation2 + $0x20] sm:$0xff] %v1440
    %1505 = vst [vmem:[#allocation2 + $0x28] sm:$0xff] %v1441
    %1506 = vst [vmem:[#allocation2 + $0x30] sm:$0xff] %v1442
    %1507 = vst [vmem:[#allocation2 + $0x38] sm:$0xff] %v1443
    %1508 = vst [vmem:[#allocation2 + $0x40] sm:$0xff] %v1444
    %1509 = vst [vmem:[#allocation2 + $0x48] sm:$0xff] %v1445
    %1510 = vst [vmem:[#allocation2 + $0x50] sm:$0xff] %v1446
    %1511 = vst [vmem:[#allocation2 + $0x58] sm:$0xff] %v1447
    %1512 = vst [vmem:[#allocation2 + $0x60] sm:$0xff] %v1448
    %1513 = vst [vmem:[#allocation2 + $0x68] sm:$0xff] %v1449
    %1514 = vst [vmem:[#allocation2 + $0x70] sm:$0xff] %v1450
    %1515 = vst [vmem:[#allocation2 + $0x78] sm:$0xff] %v1451
    %1516 = vst [vmem:[#allocation2 + $0x80] sm:$0xff] %v1452
    %1517 = vst [vmem:[#allocation2 + $0x88] sm:$0xff] %v1453
    %1518 = vst [vmem:[#allocation2 + $0x90] sm:$0xff] %v1454
    %1519 = vst [vmem:[#allocation2 + $0x98] sm:$0xff] %v1455
    %1520 = vst [vmem:[#allocation2 + $0xa0] sm:$0xff] %v1456
    %1521 = vst [vmem:[#allocation2 + $0xa8] sm:$0xff] %v1457
    %1522 = vst [vmem:[#allocation2 + $0xb0] sm:$0xff] %v1458
    %1523 = vst [vmem:[#allocation2 + $0xb8] sm:$0xff] %v1459
    %1524 = vst [vmem:[#allocation2 + $0xc0] sm:$0xff] %v1460
    %1525 = vst [vmem:[#allocation2 + $0xc8] sm:$0xff] %v1461
    %1526 = vst [vmem:[#allocation2 + $0xd0] sm:$0xff] %v1462
    %1527 = vst [vmem:[#allocation2 + $0xd8] sm:$0xff] %v1463
    %1528 = vst [vmem:[#allocation2 + $0xe0] sm:$0xff] %v1464
    %1529 = vst [vmem:[#allocation2 + $0xe8] sm:$0xff] %v1465
    %1530 = vst [vmem:[#allocation2 + $0xf0] sm:$0xff] %v1466
    %1531 = vst [vmem:[#allocation2 + $0xf8] sm:$0xff] %v1467
    %1532 = vst [vmem:[#allocation2 + $0x100] sm:$0xff] %v1468
    %1533 = vst [vmem:[#allocation2 + $0x108] sm:$0xff] %v1469
    %1534 = vst [vmem:[#allocation2 + $0x110] sm:$0xff] %v1470
    %1535 = vst [vmem:[#allocation2 + $0x118] sm:$0xff] %v1471
    %1536 = vst [vmem:[#allocation2 + $0x120] sm:$0xff] %v1472
    %1537 = vst [vmem:[#allocation2 + $0x128] sm:$0xff] %v1473
    %1538 = vst [vmem:[#allocation2 + $0x130] sm:$0xff] %v1474
    %1539 = vst [vmem:[#allocation2 + $0x138] sm:$0xff] %v1475
    %1540 = vst [vmem:[#allocation2 + $0x140] sm:$0xff] %v1476
    %1541 = vst [vmem:[#allocation2 + $0x148] sm:$0xff] %v1477
    %1542 = vst [vmem:[#allocation2 + $0x150] sm:$0xff] %v1478
    %1543 = vst [vmem:[#allocation2 + $0x158] sm:$0xff] %v1479
    %1544 = vst [vmem:[#allocation2 + $0x160] sm:$0xff] %v1480
    %1545 = vst [vmem:[#allocation2 + $0x168] sm:$0xff] %v1481
    %1546 = vst [vmem:[#allocation2 + $0x170] sm:$0xff] %v1482
    %1547 = vst [vmem:[#allocation2 + $0x178] sm:$0xff] %v1483
    %1548 = vst [vmem:[#allocation2 + $0x180] sm:$0xff] %v1484
    %1549 = vst [vmem:[#allocation2 + $0x188] sm:$0xff] %v1485
    %1550 = vst [vmem:[#allocation2 + $0x190] sm:$0xff] %v1486
    %1551 = vst [vmem:[#allocation2 + $0x198] sm:$0xff] %v1487
    %1552 = vst [vmem:[#allocation2 + $0x1a0] sm:$0xff] %v1488
    %1553 = vst [vmem:[#allocation2 + $0x1a8] sm:$0xff] %v1489
    %1554 = vst [vmem:[#allocation2 + $0x1b0] sm:$0xff] %v1490
    %1555 = vst [vmem:[#allocation2 + $0x1b8] sm:$0xff] %v1491
    %1556 = vst [vmem:[#allocation2 + $0x1c0] sm:$0xff] %v1492
    %1557 = vst [vmem:[#allocation2 + $0x1c8] sm:$0xff] %v1493
    %1558 = vst [vmem:[#allocation2 + $0x1d0] sm:$0xff] %v1494
    %1559 = vst [vmem:[#allocation2 + $0x1d8] sm:$0xff] %v1495
    %1560 = vst [vmem:[#allocation2 + $0x1e0] sm:$0xff] %v1496
    %1561 = vst [vmem:[#allocation2 + $0x1e8] sm:$0xff] %v1497
    %1562 = vst [vmem:[#allocation2 + $0x1f0] sm:$0xff] %v1498
    %1563 = vst [vmem:[#allocation2 + $0x1f8] sm:$0xff] %v1499
    %v1564 = vld [vmem:[%s0 + $0x2] sm:$0xff]
    %v1565 = vld [vmem:[%s0 + $0xa] sm:$0xff]
    %v1566 = vld [vmem:[%s0 + $0x1a] sm:$0xff]
    %v1567 = vld [vmem:[%s0 + $0x22] sm:$0xff]
    %v1568 = vld [vmem:[%s0 + $0x32] sm:$0xff]
    %v1569 = vld [vmem:[%s0 + $0x3a] sm:$0xff]
    %v1570 = vld [vmem:[%s0 + $0x4a] sm:$0xff]
    %v1571 = vld [vmem:[%s0 + $0x52] sm:$0xff]
    %v1572 = vld [vmem:[%s0 + $0x62] sm:$0xff]
    %v1573 = vld [vmem:[%s0 + $0x6a] sm:$0xff]
    %v1574 = vld [vmem:[%s0 + $0x7a] sm:$0xff]
    %v1575 = vld [vmem:[%s0 + $0x82] sm:$0xff]
    %v1576 = vld [vmem:[%s0 + $0x92] sm:$0xff]
    %v1577 = vld [vmem:[%s0 + $0x9a] sm:$0xff]
    %v1578 = vld [vmem:[%s0 + $0xaa] sm:$0xff]
    %v1579 = vld [vmem:[%s0 + $0xb2] sm:$0xff]
    %v1580 = vld [vmem:[%s0 + $0xc2] sm:$0xff]
    %v1581 = vld [vmem:[%s0 + $0xca] sm:$0xff]
    %v1582 = vld [vmem:[%s0 + $0xda] sm:$0xff]
    %v1583 = vld [vmem:[%s0 + $0xe2] sm:$0xff]
    %v1584 = vld [vmem:[%s0 + $0xf2] sm:$0xff]
    %v1585 = vld [vmem:[%s0 + $0xfa] sm:$0xff]
    %v1586 = vld [vmem:[%s0 + $0x10a] sm:$0xff]
    %v1587 = vld [vmem:[%s0 + $0x112] sm:$0xff]
    %v1588 = vld [vmem:[%s0 + $0x122] sm:$0xff]
    %v1589 = vld [vmem:[%s0 + $0x12a] sm:$0xff]
    %v1590 = vld [vmem:[%s0 + $0x13a] sm:$0xff]
    %v1591 = vld [vmem:[%s0 + $0x142] sm:$0xff]
    %v1592 = vld [vmem:[%s0 + $0x152] sm:$0xff]
    %v1593 = vld [vmem:[%s0 + $0x15a] sm:$0xff]
    %v1594 = vld [vmem:[%s0 + $0x16a] sm:$0xff]
    %v1595 = vld [vmem:[%s0 + $0x172] sm:$0xff]
    %v1596 = vld [vmem:[%s0 + $0x1b2] sm:$0xff]
    %v1597 = vld [vmem:[%s0 + $0x1ba] sm:$0xff]
    %v1598 = vld [vmem:[%s0 + $0x1ca] sm:$0xff]
    %v1599 = vld [vmem:[%s0 + $0x1d2] sm:$0xff]
    %v1600 = vld [vmem:[%s0 + $0x1e2] sm:$0xff]
    %v1601 = vld [vmem:[%s0 + $0x1ea] sm:$0xff]
    %v1602 = vld [vmem:[%s0 + $0x1fa] sm:$0xff]
    %v1603 = vld [vmem:[%s0 + $0x202] sm:$0xff]
    %v1604 = vld [vmem:[%s0 + $0x212] sm:$0xff]
    %v1605 = vld [vmem:[%s0 + $0x21a] sm:$0xff]
    %v1606 = vld [vmem:[%s0 + $0x22a] sm:$0xff]
    %v1607 = vld [vmem:[%s0 + $0x232] sm:$0xff]
    %v1608 = vld [vmem:[%s0 + $0x242] sm:$0xff]
    %v1609 = vld [vmem:[%s0 + $0x24a] sm:$0xff]
    %v1610 = vld [vmem:[%s0 + $0x25a] sm:$0xff]
    %v1611 = vld [vmem:[%s0 + $0x262] sm:$0xff]
    %v1612 = vld [vmem:[%s0 + $0x272] sm:$0xff]
    %v1613 = vld [vmem:[%s0 + $0x27a] sm:$0xff]
    %v1614 = vld [vmem:[%s0 + $0x28a] sm:$0xff]
    %v1615 = vld [vmem:[%s0 + $0x292] sm:$0xff]
    %v1616 = vld [vmem:[%s0 + $0x2a2] sm:$0xff]
    %v1617 = vld [vmem:[%s0 + $0x2aa] sm:$0xff]
    %v1618 = vld [vmem:[%s0 + $0x2ba] sm:$0xff]
    %v1619 = vld [vmem:[%s0 + $0x2c2] sm:$0xff]
    %v1620 = vld [vmem:[%s0 + $0x2d2] sm:$0xff]
    %v1621 = vld [vmem:[%s0 + $0x2da] sm:$0xff]
    %v1622 = vld [vmem:[%s0 + $0x2ea] sm:$0xff]
    %v1623 = vld [vmem:[%s0 + $0x2f2] sm:$0xff]
    %v1624 = vld [vmem:[%s0 + $0x302] sm:$0xff]
    %v1625 = vld [vmem:[%s0 + $0x30a] sm:$0xff]
    %v1626 = vld [vmem:[%s0 + $0x31a] sm:$0xff]
    %v1627 = vld [vmem:[%s0 + $0x322] sm:$0xff]
    %s1628 = scalar_lea.vmem %s1, 8
    %v1629 = vld [vmem:[%s1628] sm:$0xf]
    %v1631 = vsel %vm80, %v1564, 0
    %v1634 = vsel %vm80, %v1565, 0
    %v1637 = vsel %vm80, %v1566, 0
    %v1640 = vsel %vm80, %v1567, 0
    %v1643 = vsel %vm80, %v1568, 0
    %v1646 = vsel %vm80, %v1569, 0
    %v1649 = vsel %vm80, %v1570, 0
    %v1652 = vsel %vm80, %v1571, 0
    %v1655 = vsel %vm80, %v1572, 0
    %v1658 = vsel %vm80, %v1573, 0
    %v1661 = vsel %vm80, %v1574, 0
    %v1664 = vsel %vm80, %v1575, 0
    %v1667 = vsel %vm80, %v1576, 0
    %v1670 = vsel %vm80, %v1577, 0
    %v1673 = vsel %vm80, %v1578, 0
    %v1676 = vsel %vm80, %v1579, 0
    %v1679 = vsel %vm80, %v1580, 0
    %v1682 = vsel %vm80, %v1581, 0
    %v1685 = vsel %vm80, %v1582, 0
    %v1688 = vsel %vm80, %v1583, 0
    %v1691 = vsel %vm80, %v1584, 0
    %v1694 = vsel %vm80, %v1585, 0
    %v1697 = vsel %vm80, %v1586, 0
    %v1700 = vsel %vm80, %v1587, 0
    %v1703 = vsel %vm80, %v1588, 0
    %v1706 = vsel %vm80, %v1589, 0
    %v1709 = vsel %vm80, %v1590, 0
    %v1712 = vsel %vm80, %v1591, 0
    %v1715 = vsel %vm80, %v1592, 0
    %v1718 = vsel %vm80, %v1593, 0
    %v1721 = vsel %vm80, %v1594, 0
    %v1724 = vsel %vm80, %v1595, 0
    %v1727 = vsel %vm80, %v1596, 0
    %v1730 = vsel %vm80, %v1597, 0
    %v1733 = vsel %vm80, %v1598, 0
    %v1736 = vsel %vm80, %v1599, 0
    %v1739 = vsel %vm80, %v1600, 0
    %v1742 = vsel %vm80, %v1601, 0
    %v1745 = vsel %vm80, %v1602, 0
    %v1748 = vsel %vm80, %v1603, 0
    %v1751 = vsel %vm80, %v1604, 0
    %v1754 = vsel %vm80, %v1605, 0
    %v1757 = vsel %vm80, %v1606, 0
    %v1760 = vsel %vm80, %v1607, 0
    %v1763 = vsel %vm80, %v1608, 0
    %v1766 = vsel %vm80, %v1609, 0
    %v1769 = vsel %vm80, %v1610, 0
    %v1772 = vsel %vm80, %v1611, 0
    %v1775 = vsel %vm80, %v1612, 0
    %v1778 = vsel %vm80, %v1613, 0
    %v1781 = vsel %vm80, %v1614, 0
    %v1784 = vsel %vm80, %v1615, 0
    %v1787 = vsel %vm80, %v1616, 0
    %v1790 = vsel %vm80, %v1617, 0
    %v1793 = vsel %vm80, %v1618, 0
    %v1796 = vsel %vm80, %v1619, 0
    %v1799 = vsel %vm80, %v1620, 0
    %v1802 = vsel %vm80, %v1621, 0
    %v1805 = vsel %vm80, %v1622, 0
    %v1808 = vsel %vm80, %v1623, 0
    %v1811 = vsel %vm80, %v1624, 0
    %v1814 = vsel %vm80, %v1625, 0
    %v1817 = vsel %vm80, %v1626, 0
    %v1820 = vsel %vm80, %v1627, 0
    %v1823 = vsel %vm273, %v1629, 0
    %1825 = vmatprep.subr.mxu0 0.0
    %1826 = vmatpush1.msra.mxu0 %v1823
    %1827 = vmatprep.subr.mxu0 0.0
    %1828 = vmatpush1.msra.mxu0 0.0
    %1829 = vmatprep.subr.mxu0 0.0
    %1830 = vmatpush1.msra.mxu0 0.0
    %1831 = vmatprep.subr.mxu0 0.0
    %1832 = vmatpush1.msra.mxu0 0.0
    %1833 = vmatprep.subr.mxu0 0.0
    %1834 = vmatpush1.msra.mxu0 0.0
    %1835 = vmatprep.subr.mxu0 0.0
    %1836 = vmatpush1.msra.mxu0 0.0
    %1837 = vmatprep.subr.mxu0 0.0
    %1838 = vmatpush1.msra.mxu0 0.0
    %1839 = vmatprep.subr.mxu0 0.0
    %1840 = vmatpush1.msra.mxu0 0.0
    %1841 = vmatprep.subr.mxu0 0.0
    %1842 = vmatpush1.msra.mxu0 0.0
    %1843 = vmatprep.subr.mxu0 0.0
    %1844 = vmatpush1.msra.mxu0 0.0
    %1845 = vmatprep.subr.mxu0 0.0
    %1846 = vmatpush1.msra.mxu0 0.0
    %1847 = vmatprep.subr.mxu0 0.0
    %1848 = vmatpush1.msra.mxu0 0.0
    %1849 = vmatprep.subr.mxu0 0.0
    %1850 = vmatpush1.msra.mxu0 0.0
    %1851 = vmatprep.subr.mxu0 0.0
    %1852 = vmatpush1.msra.mxu0 0.0
    %1853 = vmatprep.subr.mxu0 0.0
    %1854 = vmatpush1.msra.mxu0 0.0
    %1855 = vmatprep.subr.mxu0 0.0
    %1856 = vmatpush1.msra.mxu0 0.0
    %1857 = vmatprep.subr.mxu0 0.0
    %1858 = vmatpush1.msra.mxu0 0.0
    %1859 = vmatprep.subr.mxu0 0.0
    %1860 = vmatpush1.msra.mxu0 0.0
    %1861 = vmatprep.subr.mxu0 0.0
    %1862 = vmatpush1.msra.mxu0 0.0
    %1863 = vmatprep.subr.mxu0 0.0
    %1864 = vmatpush1.msra.mxu0 0.0
    %1865 = vmatprep.subr.mxu0 0.0
    %1866 = vmatpush1.msra.mxu0 0.0
    %1867 = vmatprep.subr.mxu0 0.0
    %1868 = vmatpush1.msra.mxu0 0.0
    %1869 = vmatprep.subr.mxu0 0.0
    %1870 = vmatpush1.msra.mxu0 0.0
    %1871 = vmatprep.subr.mxu0 0.0
    %1872 = vmatpush1.msra.mxu0 0.0
    %1873 = vmatprep.subr.mxu0 0.0
    %1874 = vmatpush1.msra.mxu0 0.0
    %1875 = vmatprep.subr.mxu0 0.0
    %1876 = vmatpush1.msra.mxu0 0.0
    %1877 = vmatprep.subr.mxu0 0.0
    %1878 = vmatpush1.msra.mxu0 0.0
    %1879 = vmatprep.subr.mxu0 0.0
    %1880 = vmatpush1.msra.mxu0 0.0
    %1881 = vmatprep.subr.mxu0 0.0
    %1882 = vmatpush1.msra.mxu0 0.0
    %1883 = vmatprep.subr.mxu0 0.0
    %1884 = vmatpush1.msra.mxu0 0.0
    %1885 = vmatprep.subr.mxu0 0.0
    %1886 = vmatpush1.msra.mxu0 0.0
    %1887 = vmatprep.subr.mxu0 0.0
    %1888 = vmatpush1.msra.mxu0 0.0
    %1889 = vmatprep.mubr.f32.mxu0 0.0
    %1890 = vmatmul.mubr.f32.gmra.mrb[0].mxu0 %v1631
    %v1891 = vpop.f32.mrb[0].mxu0
    %v1892 = vadd.f32 0.0, %v1891
    %v1893 = vpop.f32.mrb[0].mxu0
    %1894 = vmatprep.mubr.f32.mxu0 0.0
    %1895 = vmatmul.mubr.f32.gmra.mrb[0].mxu0 %v1634
    %v1896 = vpop.f32.mrb[0].mxu0
    %v1897 = vadd.f32 0.0, %v1896
    %v1898 = vpop.f32.mrb[0].mxu0
    %1899 = vmatprep.mubr.f32.mxu0 0.0
    %1900 = vmatmul.mubr.f32.gmra.mrb[0].mxu0 %v1637
    %v1901 = vpop.f32.mrb[0].mxu0
    %v1902 = vadd.f32 0.0, %v1901
    %v1903 = vpop.f32.mrb[0].mxu0
    %1904 = vmatprep.mubr.f32.mxu0 0.0
    %1905 = vmatmul.mubr.f32.gmra.mrb[0].mxu0 %v1640
    %v1906 = vpop.f32.mrb[0].mxu0
    %v1907 = vadd.f32 0.0, %v1906
    %v1908 = vpop.f32.mrb[0].mxu0
    %1909 = vmatprep.mubr.f32.mxu0 0.0
    %1910 = vmatmul.mubr.f32.gmra.mrb[0].mxu0 %v1643
    %v1911 = vpop.f32.mrb[0].mxu0
    %v1912 = vadd.f32 0.0, %v1911
    %v1913 = vpop.f32.mrb[0].mxu0
    %1914 = vmatprep.mubr.f32.mxu0 0.0
    %1915 = vmatmul.mubr.f32.gmra.mrb[0].mxu0 %v1646
    %v1916 = vpop.f32.mrb[0].mxu0
    %v1917 = vadd.f32 0.0, %v1916
    %v1918 = vpop.f32.mrb[0].mxu0
    %1919 = vmatprep.mubr.f32.mxu0 0.0
    %1920 = vmatmul.mubr.f32.gmra.mrb[0].mxu0 %v1649
    %v1921 = vpop.f32.mrb[0].mxu0
    %v1922 = vadd.f32 0.0, %v1921
    %v1923 = vpop.f32.mrb[0].mxu0
    %1924 = vmatprep.mubr.f32.mxu0 0.0
    %1925 = vmatmul.mubr.f32.gmra.mrb[0].mxu0 %v1652
    %v1926 = vpop.f32.mrb[0].mxu0
    %v1927 = vadd.f32 0.0, %v1926
    %v1928 = vpop.f32.mrb[0].mxu0
    %1929 = vmatprep.mubr.f32.mxu0 0.0
    %1930 = vmatmul.mubr.f32.gmra.mrb[0].mxu0 %v1655
    %v1931 = vpop.f32.mrb[0].mxu0
    %v1932 = vadd.f32 0.0, %v1931
    %v1933 = vpop.f32.mrb[0].mxu0
    %1934 = vmatprep.mubr.f32.mxu0 0.0
    %1935 = vmatmul.mubr.f32.gmra.mrb[0].mxu0 %v1658
    %v1936 = vpop.f32.mrb[0].mxu0
    %v1937 = vadd.f32 0.0, %v1936
    %v1938 = vpop.f32.mrb[0].mxu0
    %1939 = vmatprep.mubr.f32.mxu0 0.0
    %1940 = vmatmul.mubr.f32.gmra.mrb[0].mxu0 %v1661
    %v1941 = vpop.f32.mrb[0].mxu0
    %v1942 = vadd.f32 0.0, %v1941
    %v1943 = vpop.f32.mrb[0].mxu0
    %1944 = vmatprep.mubr.f32.mxu0 0.0
    %1945 = vmatmul.mubr.f32.gmra.mrb[0].mxu0 %v1664
    %v1946 = vpop.f32.mrb[0].mxu0
    %v1947 = vadd.f32 0.0, %v1946
    %v1948 = vpop.f32.mrb[0].mxu0
    %1949 = vmatprep.mubr.f32.mxu0 0.0
    %1950 = vmatmul.mubr.f32.gmra.mrb[0].mxu0 %v1667
    %v1951 = vpop.f32.mrb[0].mxu0
    %v1952 = vadd.f32 0.0, %v1951
    %v1953 = vpop.f32.mrb[0].mxu0
    %1954 = vmatprep.mubr.f32.mxu0 0.0
    %1955 = vmatmul.mubr.f32.gmra.mrb[0].mxu0 %v1670
    %v1956 = vpop.f32.mrb[0].mxu0
    %v1957 = vadd.f32 0.0, %v1956
    %v1958 = vpop.f32.mrb[0].mxu0
    %1959 = vmatprep.mubr.f32.mxu0 0.0
    %1960 = vmatmul.mubr.f32.gmra.mrb[0].mxu0 %v1673
    %v1961 = vpop.f32.mrb[0].mxu0
    %v1962 = vadd.f32 0.0, %v1961
    %v1963 = vpop.f32.mrb[0].mxu0
    %1964 = vmatprep.mubr.f32.mxu0 0.0
    %1965 = vmatmul.mubr.f32.gmra.mrb[0].mxu0 %v1676
    %v1966 = vpop.f32.mrb[0].mxu0
    %v1967 = vadd.f32 0.0, %v1966
    %v1968 = vpop.f32.mrb[0].mxu0
    %1969 = vmatprep.mubr.f32.mxu0 0.0
    %1970 = vmatmul.mubr.f32.gmra.mrb[0].mxu0 %v1679
    %v1971 = vpop.f32.mrb[0].mxu0
    %v1972 = vadd.f32 0.0, %v1971
    %v1973 = vpop.f32.mrb[0].mxu0
    %1974 = vmatprep.mubr.f32.mxu0 0.0
    %1975 = vmatmul.mubr.f32.gmra.mrb[0].mxu0 %v1682
    %v1976 = vpop.f32.mrb[0].mxu0
    %v1977 = vadd.f32 0.0, %v1976
    %v1978 = vpop.f32.mrb[0].mxu0
    %1979 = vmatprep.mubr.f32.mxu0 0.0
    %1980 = vmatmul.mubr.f32.gmra.mrb[0].mxu0 %v1685
    %v1981 = vpop.f32.mrb[0].mxu0
    %v1982 = vadd.f32 0.0, %v1981
    %v1983 = vpop.f32.mrb[0].mxu0
    %1984 = vmatprep.mubr.f32.mxu0 0.0
    %1985 = vmatmul.mubr.f32.gmra.mrb[0].mxu0 %v1688
    %v1986 = vpop.f32.mrb[0].mxu0
    %v1987 = vadd.f32 0.0, %v1986
    %v1988 = vpop.f32.mrb[0].mxu0
    %1989 = vmatprep.mubr.f32.mxu0 0.0
    %1990 = vmatmul.mubr.f32.gmra.mrb[0].mxu0 %v1691
    %v1991 = vpop.f32.mrb[0].mxu0
    %v1992 = vadd.f32 0.0, %v1991
    %v1993 = vpop.f32.mrb[0].mxu0
    %1994 = vmatprep.mubr.f32.mxu0 0.0
    %1995 = vmatmul.mubr.f32.gmra.mrb[0].mxu0 %v1694
    %v1996 = vpop.f32.mrb[0].mxu0
    %v1997 = vadd.f32 0.0, %v1996
    %v1998 = vpop.f32.mrb[0].mxu0
    %1999 = vmatprep.mubr.f32.mxu0 0.0
    %2000 = vmatmul.mubr.f32.gmra.mrb[0].mxu0 %v1697
    %v2001 = vpop.f32.mrb[0].mxu0
    %v2002 = vadd.f32 0.0, %v2001
    %v2003 = vpop.f32.mrb[0].mxu0
    %2004 = vmatprep.mubr.f32.mxu0 0.0
    %2005 = vmatmul.mubr.f32.gmra.mrb[0].mxu0 %v1700
    %v2006 = vpop.f32.mrb[0].mxu0
    %v2007 = vadd.f32 0.0, %v2006
    %v2008 = vpop.f32.mrb[0].mxu0
    %2009 = vmatprep.mubr.f32.mxu0 0.0
    %2010 = vmatmul.mubr.f32.gmra.mrb[0].mxu0 %v1703
    %v2011 = vpop.f32.mrb[0].mxu0
    %v2012 = vadd.f32 0.0, %v2011
    %v2013 = vpop.f32.mrb[0].mxu0
    %2014 = vmatprep.mubr.f32.mxu0 0.0
    %2015 = vmatmul.mubr.f32.gmra.mrb[0].mxu0 %v1706
    %v2016 = vpop.f32.mrb[0].mxu0
    %v2017 = vadd.f32 0.0, %v2016
    %v2018 = vpop.f32.mrb[0].mxu0
    %2019 = vmatprep.mubr.f32.mxu0 0.0
    %2020 = vmatmul.mubr.f32.gmra.mrb[0].mxu0 %v1709
    %v2021 = vpop.f32.mrb[0].mxu0
    %v2022 = vadd.f32 0.0, %v2021
    %v2023 = vpop.f32.mrb[0].mxu0
    %2024 = vmatprep.mubr.f32.mxu0 0.0
    %2025 = vmatmul.mubr.f32.gmra.mrb[0].mxu0 %v1712
    %v2026 = vpop.f32.mrb[0].mxu0
    %v2027 = vadd.f32 0.0, %v2026
    %v2028 = vpop.f32.mrb[0].mxu0
    %2029 = vmatprep.mubr.f32.mxu0 0.0
    %2030 = vmatmul.mubr.f32.gmra.mrb[0].mxu0 %v1715
    %v2031 = vpop.f32.mrb[0].mxu0
    %v2032 = vadd.f32 0.0, %v2031
    %v2033 = vpop.f32.mrb[0].mxu0
    %2034 = vmatprep.mubr.f32.mxu0 0.0
    %2035 = vmatmul.mubr.f32.gmra.mrb[0].mxu0 %v1718
    %v2036 = vpop.f32.mrb[0].mxu0
    %v2037 = vadd.f32 0.0, %v2036
    %v2038 = vpop.f32.mrb[0].mxu0
    %2039 = vmatprep.mubr.f32.mxu0 0.0
    %2040 = vmatmul.mubr.f32.gmra.mrb[0].mxu0 %v1721
    %v2041 = vpop.f32.mrb[0].mxu0
    %v2042 = vadd.f32 0.0, %v2041
    %v2043 = vpop.f32.mrb[0].mxu0
    %2044 = vmatprep.mubr.f32.mxu0 0.0
    %2045 = vmatmul.mubr.f32.gmra.mrb[0].mxu0 %v1724
    %v2046 = vpop.f32.mrb[0].mxu0
    %v2047 = vadd.f32 0.0, %v2046
    %v2048 = vpop.f32.mrb[0].mxu0
    %2049 = vmatprep.mubr.f32.mxu0 0.0
    %2050 = vmatmul.mubr.f32.gmra.mrb[0].mxu0 %v1727
    %v2051 = vpop.f32.mrb[0].mxu0
    %v2052 = vadd.f32 0.0, %v2051
    %v2053 = vpop.f32.mrb[0].mxu0
    %2054 = vmatprep.mubr.f32.mxu0 0.0
    %2055 = vmatmul.mubr.f32.gmra.mrb[0].mxu0 %v1730
    %v2056 = vpop.f32.mrb[0].mxu0
    %v2057 = vadd.f32 0.0, %v2056
    %v2058 = vpop.f32.mrb[0].mxu0
    %2059 = vmatprep.mubr.f32.mxu0 0.0
    %2060 = vmatmul.mubr.f32.gmra.mrb[0].mxu0 %v1733
    %v2061 = vpop.f32.mrb[0].mxu0
    %v2062 = vadd.f32 0.0, %v2061
    %v2063 = vpop.f32.mrb[0].mxu0
    %2064 = vmatprep.mubr.f32.mxu0 0.0
    %2065 = vmatmul.mubr.f32.gmra.mrb[0].mxu0 %v1736
    %v2066 = vpop.f32.mrb[0].mxu0
    %v2067 = vadd.f32 0.0, %v2066
    %v2068 = vpop.f32.mrb[0].mxu0
    %2069 = vmatprep.mubr.f32.mxu0 0.0
    %2070 = vmatmul.mubr.f32.gmra.mrb[0].mxu0 %v1739
    %v2071 = vpop.f32.mrb[0].mxu0
    %v2072 = vadd.f32 0.0, %v2071
    %v2073 = vpop.f32.mrb[0].mxu0
    %2074 = vmatprep.mubr.f32.mxu0 0.0
    %2075 = vmatmul.mubr.f32.gmra.mrb[0].mxu0 %v1742
    %v2076 = vpop.f32.mrb[0].mxu0
    %v2077 = vadd.f32 0.0, %v2076
    %v2078 = vpop.f32.mrb[0].mxu0
    %2079 = vmatprep.mubr.f32.mxu0 0.0
    %2080 = vmatmul.mubr.f32.gmra.mrb[0].mxu0 %v1745
    %v2081 = vpop.f32.mrb[0].mxu0
    %v2082 = vadd.f32 0.0, %v2081
    %v2083 = vpop.f32.mrb[0].mxu0
    %2084 = vmatprep.mubr.f32.mxu0 0.0
    %2085 = vmatmul.mubr.f32.gmra.mrb[0].mxu0 %v1748
    %v2086 = vpop.f32.mrb[0].mxu0
    %v2087 = vadd.f32 0.0, %v2086
    %v2088 = vpop.f32.mrb[0].mxu0
    %2089 = vmatprep.mubr.f32.mxu0 0.0
    %2090 = vmatmul.mubr.f32.gmra.mrb[0].mxu0 %v1751
    %v2091 = vpop.f32.mrb[0].mxu0
    %v2092 = vadd.f32 0.0, %v2091
    %v2093 = vpop.f32.mrb[0].mxu0
    %2094 = vmatprep.mubr.f32.mxu0 0.0
    %2095 = vmatmul.mubr.f32.gmra.mrb[0].mxu0 %v1754
    %v2096 = vpop.f32.mrb[0].mxu0
    %v2097 = vadd.f32 0.0, %v2096
    %v2098 = vpop.f32.mrb[0].mxu0
    %2099 = vmatprep.mubr.f32.mxu0 0.0
    %2100 = vmatmul.mubr.f32.gmra.mrb[0].mxu0 %v1757
    %v2101 = vpop.f32.mrb[0].mxu0
    %v2102 = vadd.f32 0.0, %v2101
    %v2103 = vpop.f32.mrb[0].mxu0
    %2104 = vmatprep.mubr.f32.mxu0 0.0
    %2105 = vmatmul.mubr.f32.gmra.mrb[0].mxu0 %v1760
    %v2106 = vpop.f32.mrb[0].mxu0
    %v2107 = vadd.f32 0.0, %v2106
    %v2108 = vpop.f32.mrb[0].mxu0
    %2109 = vmatprep.mubr.f32.mxu0 0.0
    %2110 = vmatmul.mubr.f32.gmra.mrb[0].mxu0 %v1763
    %v2111 = vpop.f32.mrb[0].mxu0
    %v2112 = vadd.f32 0.0, %v2111
    %v2113 = vpop.f32.mrb[0].mxu0
    %2114 = vmatprep.mubr.f32.mxu0 0.0
    %2115 = vmatmul.mubr.f32.gmra.mrb[0].mxu0 %v1766
    %v2116 = vpop.f32.mrb[0].mxu0
    %v2117 = vadd.f32 0.0, %v2116
    %v2118 = vpop.f32.mrb[0].mxu0
    %2119 = vmatprep.mubr.f32.mxu0 0.0
    %2120 = vmatmul.mubr.f32.gmra.mrb[0].mxu0 %v1769
    %v2121 = vpop.f32.mrb[0].mxu0
    %v2122 = vadd.f32 0.0, %v2121
    %v2123 = vpop.f32.mrb[0].mxu0
    %2124 = vmatprep.mubr.f32.mxu0 0.0
    %2125 = vmatmul.mubr.f32.gmra.mrb[0].mxu0 %v1772
    %v2126 = vpop.f32.mrb[0].mxu0
    %v2127 = vadd.f32 0.0, %v2126
    %v2128 = vpop.f32.mrb[0].mxu0
    %2129 = vmatprep.mubr.f32.mxu0 0.0
    %2130 = vmatmul.mubr.f32.gmra.mrb[0].mxu0 %v1775
    %v2131 = vpop.f32.mrb[0].mxu0
    %v2132 = vadd.f32 0.0, %v2131
    %v2133 = vpop.f32.mrb[0].mxu0
    %2134 = vmatprep.mubr.f32.mxu0 0.0
    %2135 = vmatmul.mubr.f32.gmra.mrb[0].mxu0 %v1778
    %v2136 = vpop.f32.mrb[0].mxu0
    %v2137 = vadd.f32 0.0, %v2136
    %v2138 = vpop.f32.mrb[0].mxu0
    %2139 = vmatprep.mubr.f32.mxu0 0.0
    %2140 = vmatmul.mubr.f32.gmra.mrb[0].mxu0 %v1781
    %v2141 = vpop.f32.mrb[0].mxu0
    %v2142 = vadd.f32 0.0, %v2141
    %v2143 = vpop.f32.mrb[0].mxu0
    %2144 = vmatprep.mubr.f32.mxu0 0.0
    %2145 = vmatmul.mubr.f32.gmra.mrb[0].mxu0 %v1784
    %v2146 = vpop.f32.mrb[0].mxu0
    %v2147 = vadd.f32 0.0, %v2146
    %v2148 = vpop.f32.mrb[0].mxu0
    %2149 = vmatprep.mubr.f32.mxu0 0.0
    %2150 = vmatmul.mubr.f32.gmra.mrb[0].mxu0 %v1787
    %v2151 = vpop.f32.mrb[0].mxu0
    %v2152 = vadd.f32 0.0, %v2151
    %v2153 = vpop.f32.mrb[0].mxu0
    %2154 = vmatprep.mubr.f32.mxu0 0.0
    %2155 = vmatmul.mubr.f32.gmra.mrb[0].mxu0 %v1790
    %v2156 = vpop.f32.mrb[0].mxu0
    %v2157 = vadd.f32 0.0, %v2156
    %v2158 = vpop.f32.mrb[0].mxu0
    %2159 = vmatprep.mubr.f32.mxu0 0.0
    %2160 = vmatmul.mubr.f32.gmra.mrb[0].mxu0 %v1793
    %v2161 = vpop.f32.mrb[0].mxu0
    %v2162 = vadd.f32 0.0, %v2161
    %v2163 = vpop.f32.mrb[0].mxu0
    %2164 = vmatprep.mubr.f32.mxu0 0.0
    %2165 = vmatmul.mubr.f32.gmra.mrb[0].mxu0 %v1796
    %v2166 = vpop.f32.mrb[0].mxu0
    %v2167 = vadd.f32 0.0, %v2166
    %v2168 = vpop.f32.mrb[0].mxu0
    %2169 = vmatprep.mubr.f32.mxu0 0.0
    %2170 = vmatmul.mubr.f32.gmra.mrb[0].mxu0 %v1799
    %v2171 = vpop.f32.mrb[0].mxu0
    %v2172 = vadd.f32 0.0, %v2171
    %v2173 = vpop.f32.mrb[0].mxu0
    %2174 = vmatprep.mubr.f32.mxu0 0.0
    %2175 = vmatmul.mubr.f32.gmra.mrb[0].mxu0 %v1802
    %v2176 = vpop.f32.mrb[0].mxu0
    %v2177 = vadd.f32 0.0, %v2176
    %v2178 = vpop.f32.mrb[0].mxu0
    %2179 = vmatprep.mubr.f32.mxu0 0.0
    %2180 = vmatmul.mubr.f32.gmra.mrb[0].mxu0 %v1805
    %v2181 = vpop.f32.mrb[0].mxu0
    %v2182 = vadd.f32 0.0, %v2181
    %v2183 = vpop.f32.mrb[0].mxu0
    %2184 = vmatprep.mubr.f32.mxu0 0.0
    %2185 = vmatmul.mubr.f32.gmra.mrb[0].mxu0 %v1808
    %v2186 = vpop.f32.mrb[0].mxu0
    %v2187 = vadd.f32 0.0, %v2186
    %v2188 = vpop.f32.mrb[0].mxu0
    %2189 = vmatprep.mubr.f32.mxu0 0.0
    %2190 = vmatmul.mubr.f32.gmra.mrb[0].mxu0 %v1811
    %v2191 = vpop.f32.mrb[0].mxu0
    %v2192 = vadd.f32 0.0, %v2191
    %v2193 = vpop.f32.mrb[0].mxu0
    %2194 = vmatprep.mubr.f32.mxu0 0.0
    %2195 = vmatmul.mubr.f32.gmra.mrb[0].mxu0 %v1814
    %v2196 = vpop.f32.mrb[0].mxu0
    %v2197 = vadd.f32 0.0, %v2196
    %v2198 = vpop.f32.mrb[0].mxu0
    %2199 = vmatprep.mubr.f32.mxu0 0.0
    %2200 = vmatmul.mubr.f32.gmra.mrb[0].mxu0 %v1817
    %v2201 = vpop.f32.mrb[0].mxu0
    %v2202 = vadd.f32 0.0, %v2201
    %v2203 = vpop.f32.mrb[0].mxu0
    %2204 = vmatprep.mubr.f32.mxu0 0.0
    %2205 = vmatmul.mubr.f32.gmra.mrb[0].mxu0 %v1820
    %v2206 = vpop.f32.mrb[0].mxu0
    %v2207 = vadd.f32 0.0, %v2206
    %v2208 = vpop.f32.mrb[0].mxu0
    %2209 = vdwg.mxu0
    %v2210 = vld [vmem:[#allocation2] sm:$0xff]
    %v2211 = vld [vmem:[#allocation2 + $0x8] sm:$0xff]
    %v2212 = vld [vmem:[#allocation2 + $0x10] sm:$0xff]
    %v2213 = vld [vmem:[#allocation2 + $0x18] sm:$0xff]
    %v2214 = vld [vmem:[#allocation2 + $0x20] sm:$0xff]
    %v2215 = vld [vmem:[#allocation2 + $0x28] sm:$0xff]
    %v2216 = vld [vmem:[#allocation2 + $0x30] sm:$0xff]
    %v2217 = vld [vmem:[#allocation2 + $0x38] sm:$0xff]
    %v2218 = vld [vmem:[#allocation2 + $0x40] sm:$0xff]
    %v2219 = vld [vmem:[#allocation2 + $0x48] sm:$0xff]
    %v2220 = vld [vmem:[#allocation2 + $0x50] sm:$0xff]
    %v2221 = vld [vmem:[#allocation2 + $0x58] sm:$0xff]
    %v2222 = vld [vmem:[#allocation2 + $0x60] sm:$0xff]
    %v2223 = vld [vmem:[#allocation2 + $0x68] sm:$0xff]
    %v2224 = vld [vmem:[#allocation2 + $0x70] sm:$0xff]
    %v2225 = vld [vmem:[#allocation2 + $0x78] sm:$0xff]
    %v2226 = vld [vmem:[#allocation2 + $0x80] sm:$0xff]
    %v2227 = vld [vmem:[#allocation2 + $0x88] sm:$0xff]
    %v2228 = vld [vmem:[#allocation2 + $0x90] sm:$0xff]
    %v2229 = vld [vmem:[#allocation2 + $0x98] sm:$0xff]
    %v2230 = vld [vmem:[#allocation2 + $0xa0] sm:$0xff]
    %v2231 = vld [vmem:[#allocation2 + $0xa8] sm:$0xff]
    %v2232 = vld [vmem:[#allocation2 + $0xb0] sm:$0xff]
    %v2233 = vld [vmem:[#allocation2 + $0xb8] sm:$0xff]
    %v2234 = vld [vmem:[#allocation2 + $0xc0] sm:$0xff]
    %v2235 = vld [vmem:[#allocation2 + $0xc8] sm:$0xff]
    %v2236 = vld [vmem:[#allocation2 + $0xd0] sm:$0xff]
    %v2237 = vld [vmem:[#allocation2 + $0xd8] sm:$0xff]
    %v2238 = vld [vmem:[#allocation2 + $0xe0] sm:$0xff]
    %v2239 = vld [vmem:[#allocation2 + $0xe8] sm:$0xff]
    %v2240 = vld [vmem:[#allocation2 + $0xf0] sm:$0xff]
    %v2241 = vld [vmem:[#allocation2 + $0xf8] sm:$0xff]
    %v2242 = vld [vmem:[#allocation2 + $0x100] sm:$0xff]
    %v2243 = vld [vmem:[#allocation2 + $0x108] sm:$0xff]
    %v2244 = vld [vmem:[#allocation2 + $0x110] sm:$0xff]
    %v2245 = vld [vmem:[#allocation2 + $0x118] sm:$0xff]
    %v2246 = vld [vmem:[#allocation2 + $0x120] sm:$0xff]
    %v2247 = vld [vmem:[#allocation2 + $0x128] sm:$0xff]
    %v2248 = vld [vmem:[#allocation2 + $0x130] sm:$0xff]
    %v2249 = vld [vmem:[#allocation2 + $0x138] sm:$0xff]
    %v2250 = vld [vmem:[#allocation2 + $0x140] sm:$0xff]
    %v2251 = vld [vmem:[#allocation2 + $0x148] sm:$0xff]
    %v2252 = vld [vmem:[#allocation2 + $0x150] sm:$0xff]
    %v2253 = vld [vmem:[#allocation2 + $0x158] sm:$0xff]
    %v2254 = vld [vmem:[#allocation2 + $0x160] sm:$0xff]
    %v2255 = vld [vmem:[#allocation2 + $0x168] sm:$0xff]
    %v2256 = vld [vmem:[#allocation2 + $0x170] sm:$0xff]
    %v2257 = vld [vmem:[#allocation2 + $0x178] sm:$0xff]
    %v2258 = vld [vmem:[#allocation2 + $0x180] sm:$0xff]
    %v2259 = vld [vmem:[#allocation2 + $0x188] sm:$0xff]
    %v2260 = vld [vmem:[#allocation2 + $0x190] sm:$0xff]
    %v2261 = vld [vmem:[#allocation2 + $0x198] sm:$0xff]
    %v2262 = vld [vmem:[#allocation2 + $0x1a0] sm:$0xff]
    %v2263 = vld [vmem:[#allocation2 + $0x1a8] sm:$0xff]
    %v2264 = vld [vmem:[#allocation2 + $0x1b0] sm:$0xff]
    %v2265 = vld [vmem:[#allocation2 + $0x1b8] sm:$0xff]
    %v2266 = vld [vmem:[#allocation2 + $0x1c0] sm:$0xff]
    %v2267 = vld [vmem:[#allocation2 + $0x1c8] sm:$0xff]
    %v2268 = vld [vmem:[#allocation2 + $0x1d0] sm:$0xff]
    %v2269 = vld [vmem:[#allocation2 + $0x1d8] sm:$0xff]
    %v2270 = vld [vmem:[#allocation2 + $0x1e0] sm:$0xff]
    %v2271 = vld [vmem:[#allocation2 + $0x1e8] sm:$0xff]
    %v2272 = vld [vmem:[#allocation2 + $0x1f0] sm:$0xff]
    %v2273 = vld [vmem:[#allocation2 + $0x1f8] sm:$0xff]
    %v2274 = vadd.f32 %v2210, %v1892
    %v2275 = vadd.f32 %v2211, %v1897
    %v2276 = vadd.f32 %v2212, %v1902
    %v2277 = vadd.f32 %v2213, %v1907
    %v2278 = vadd.f32 %v2214, %v1912
    %v2279 = vadd.f32 %v2215, %v1917
    %v2280 = vadd.f32 %v2216, %v1922
    %v2281 = vadd.f32 %v2217, %v1927
    %v2282 = vadd.f32 %v2218, %v1932
    %v2283 = vadd.f32 %v2219, %v1937
    %v2284 = vadd.f32 %v2220, %v1942
    %v2285 = vadd.f32 %v2221, %v1947
    %v2286 = vadd.f32 %v2222, %v1952
    %v2287 = vadd.f32 %v2223, %v1957
    %v2288 = vadd.f32 %v2224, %v1962
    %v2289 = vadd.f32 %v2225, %v1967
    %v2290 = vadd.f32 %v2226, %v1972
    %v2291 = vadd.f32 %v2227, %v1977
    %v2292 = vadd.f32 %v2228, %v1982
    %v2293 = vadd.f32 %v2229, %v1987
    %v2294 = vadd.f32 %v2230, %v1992
    %v2295 = vadd.f32 %v2231, %v1997
    %v2296 = vadd.f32 %v2232, %v2002
    %v2297 = vadd.f32 %v2233, %v2007
    %v2298 = vadd.f32 %v2234, %v2012
    %v2299 = vadd.f32 %v2235, %v2017
    %v2300 = vadd.f32 %v2236, %v2022
    %v2301 = vadd.f32 %v2237, %v2027
    %v2302 = vadd.f32 %v2238, %v2032
    %v2303 = vadd.f32 %v2239, %v2037
    %v2304 = vadd.f32 %v2240, %v2042
    %v2305 = vadd.f32 %v2241, %v2047
    %v2306 = vadd.f32 %v2242, %v2052
    %v2307 = vadd.f32 %v2243, %v2057
    %v2308 = vadd.f32 %v2244, %v2062
    %v2309 = vadd.f32 %v2245, %v2067
    %v2310 = vadd.f32 %v2246, %v2072
    %v2311 = vadd.f32 %v2247, %v2077
    %v2312 = vadd.f32 %v2248, %v2082
    %v2313 = vadd.f32 %v2249, %v2087
    %v2314 = vadd.f32 %v2250, %v2092
    %v2315 = vadd.f32 %v2251, %v2097
    %v2316 = vadd.f32 %v2252, %v2102
    %v2317 = vadd.f32 %v2253, %v2107
    %v2318 = vadd.f32 %v2254, %v2112
    %v2319 = vadd.f32 %v2255, %v2117
    %v2320 = vadd.f32 %v2256, %v2122
    %v2321 = vadd.f32 %v2257, %v2127
    %v2322 = vadd.f32 %v2258, %v2132
    %v2323 = vadd.f32 %v2259, %v2137
    %v2324 = vadd.f32 %v2260, %v2142
    %v2325 = vadd.f32 %v2261, %v2147
    %v2326 = vadd.f32 %v2262, %v2152
    %v2327 = vadd.f32 %v2263, %v2157
    %v2328 = vadd.f32 %v2264, %v2162
    %v2329 = vadd.f32 %v2265, %v2167
    %v2330 = vadd.f32 %v2266, %v2172
    %v2331 = vadd.f32 %v2267, %v2177
    %v2332 = vadd.f32 %v2268, %v2182
    %v2333 = vadd.f32 %v2269, %v2187
    %v2334 = vadd.f32 %v2270, %v2192
    %v2335 = vadd.f32 %v2271, %v2197
    %v2336 = vadd.f32 %v2272, %v2202
    %v2337 = vadd.f32 %v2273, %v2207
    %2338 = vst [vmem:[#allocation2] sm:$0xff] %v2274
    %2339 = vst [vmem:[#allocation2 + $0x8] sm:$0xff] %v2275
    %2340 = vst [vmem:[#allocation2 + $0x10] sm:$0xff] %v2276
    %2341 = vst [vmem:[#allocation2 + $0x18] sm:$0xff] %v2277
    %2342 = vst [vmem:[#allocation2 + $0x20] sm:$0xff] %v2278
    %2343 = vst [vmem:[#allocation2 + $0x28] sm:$0xff] %v2279
    %2344 = vst [vmem:[#allocation2 + $0x30] sm:$0xff] %v2280
    %2345 = vst [vmem:[#allocation2 + $0x38] sm:$0xff] %v2281
    %2346 = vst [vmem:[#allocation2 + $0x40] sm:$0xff] %v2282
    %2347 = vst [vmem:[#allocation2 + $0x48] sm:$0xff] %v2283
    %2348 = vst [vmem:[#allocation2 + $0x50] sm:$0xff] %v2284
    %2349 = vst [vmem:[#allocation2 + $0x58] sm:$0xff] %v2285
    %2350 = vst [vmem:[#allocation2 + $0x60] sm:$0xff] %v2286
    %2351 = vst [vmem:[#allocation2 + $0x68] sm:$0xff] %v2287
    %2352 = vst [vmem:[#allocation2 + $0x70] sm:$0xff] %v2288
    %2353 = vst [vmem:[#allocation2 + $0x78] sm:$0xff] %v2289
    %2354 = vst [vmem:[#allocation2 + $0x80] sm:$0xff] %v2290
    %2355 = vst [vmem:[#allocation2 + $0x88] sm:$0xff] %v2291
    %2356 = vst [vmem:[#allocation2 + $0x90] sm:$0xff] %v2292
    %2357 = vst [vmem:[#allocation2 + $0x98] sm:$0xff] %v2293
    %2358 = vst [vmem:[#allocation2 + $0xa0] sm:$0xff] %v2294
    %2359 = vst [vmem:[#allocation2 + $0xa8] sm:$0xff] %v2295
    %2360 = vst [vmem:[#allocation2 + $0xb0] sm:$0xff] %v2296
    %2361 = vst [vmem:[#allocation2 + $0xb8] sm:$0xff] %v2297
    %2362 = vst [vmem:[#allocation2 + $0xc0] sm:$0xff] %v2298
    %2363 = vst [vmem:[#allocation2 + $0xc8] sm:$0xff] %v2299
    %2364 = vst [vmem:[#allocation2 + $0xd0] sm:$0xff] %v2300
    %2365 = vst [vmem:[#allocation2 + $0xd8] sm:$0xff] %v2301
    %2366 = vst [vmem:[#allocation2 + $0xe0] sm:$0xff] %v2302
    %2367 = vst [vmem:[#allocation2 + $0xe8] sm:$0xff] %v2303
    %2368 = vst [vmem:[#allocation2 + $0xf0] sm:$0xff] %v2304
    %2369 = vst [vmem:[#allocation2 + $0xf8] sm:$0xff] %v2305
    %2370 = vst [vmem:[#allocation2 + $0x100] sm:$0xff] %v2306
    %2371 = vst [vmem:[#allocation2 + $0x108] sm:$0xff] %v2307
    %2372 = vst [vmem:[#allocation2 + $0x110] sm:$0xff] %v2308
    %2373 = vst [vmem:[#allocation2 + $0x118] sm:$0xff] %v2309
    %2374 = vst [vmem:[#allocation2 + $0x120] sm:$0xff] %v2310
    %2375 = vst [vmem:[#allocation2 + $0x128] sm:$0xff] %v2311
    %2376 = vst [vmem:[#allocation2 + $0x130] sm:$0xff] %v2312
    %2377 = vst [vmem:[#allocation2 + $0x138] sm:$0xff] %v2313
    %2378 = vst [vmem:[#allocation2 + $0x140] sm:$0xff] %v2314
    %2379 = vst [vmem:[#allocation2 + $0x148] sm:$0xff] %v2315
    %2380 = vst [vmem:[#allocation2 + $0x150] sm:$0xff] %v2316
    %2381 = vst [vmem:[#allocation2 + $0x158] sm:$0xff] %v2317
    %2382 = vst [vmem:[#allocation2 + $0x160] sm:$0xff] %v2318
    %2383 = vst [vmem:[#allocation2 + $0x168] sm:$0xff] %v2319
    %2384 = vst [vmem:[#allocation2 + $0x170] sm:$0xff] %v2320
    %2385 = vst [vmem:[#allocation2 + $0x178] sm:$0xff] %v2321
    %2386 = vst [vmem:[#allocation2 + $0x180] sm:$0xff] %v2322
    %2387 = vst [vmem:[#allocation2 + $0x188] sm:$0xff] %v2323
    %2388 = vst [vmem:[#allocation2 + $0x190] sm:$0xff] %v2324
    %2389 = vst [vmem:[#allocation2 + $0x198] sm:$0xff] %v2325
    %2390 = vst [vmem:[#allocation2 + $0x1a0] sm:$0xff] %v2326
    %2391 = vst [vmem:[#allocation2 + $0x1a8] sm:$0xff] %v2327
    %2392 = vst [vmem:[#allocation2 + $0x1b0] sm:$0xff] %v2328
    %2393 = vst [vmem:[#allocation2 + $0x1b8] sm:$0xff] %v2329
    %2394 = vst [vmem:[#allocation2 + $0x1c0] sm:$0xff] %v2330
    %2395 = vst [vmem:[#allocation2 + $0x1c8] sm:$0xff] %v2331
    %2396 = vst [vmem:[#allocation2 + $0x1d0] sm:$0xff] %v2332
    %2397 = vst [vmem:[#allocation2 + $0x1d8] sm:$0xff] %v2333
    %2398 = vst [vmem:[#allocation2 + $0x1e0] sm:$0xff] %v2334
    %2399 = vst [vmem:[#allocation2 + $0x1e8] sm:$0xff] %v2335
    %2400 = vst [vmem:[#allocation2 + $0x1f0] sm:$0xff] %v2336
    %2401 = vst [vmem:[#allocation2 + $0x1f8] sm:$0xff] %v2337
    %s2402 = scalar_lea.vmem %s0, 24
    %v2403 = vld [vmem:[%s2402] sm:$0xff]
    %v2404 = vld [vmem:[%s2402 + $0x8] sm:$0xff]
    %v2405 = vld [vmem:[%s2402 + $0x18] sm:$0xff]
    %v2406 = vld [vmem:[%s2402 + $0x20] sm:$0xff]
    %v2407 = vld [vmem:[%s2402 + $0x30] sm:$0xff]
    %v2408 = vld [vmem:[%s2402 + $0x38] sm:$0xff]
    %v2409 = vld [vmem:[%s2402 + $0x48] sm:$0xff]
    %v2410 = vld [vmem:[%s2402 + $0x50] sm:$0xff]
    %v2411 = vld [vmem:[%s2402 + $0x60] sm:$0xff]
    %v2412 = vld [vmem:[%s2402 + $0x68] sm:$0xff]
    %v2413 = vld [vmem:[%s2402 + $0x78] sm:$0xff]
    %v2414 = vld [vmem:[%s2402 + $0x80] sm:$0xff]
    %v2415 = vld [vmem:[%s2402 + $0x90] sm:$0xff]
    %v2416 = vld [vmem:[%s2402 + $0x98] sm:$0xff]
    %v2417 = vld [vmem:[%s2402 + $0xa8] sm:$0xff]
    %v2418 = vld [vmem:[%s2402 + $0xb0] sm:$0xff]
    %v2419 = vld [vmem:[%s2402 + $0xc0] sm:$0xff]
    %v2420 = vld [vmem:[%s2402 + $0xc8] sm:$0xff]
    %v2421 = vld [vmem:[%s2402 + $0xd8] sm:$0xff]
    %v2422 = vld [vmem:[%s2402 + $0xe0] sm:$0xff]
    %v2423 = vld [vmem:[%s2402 + $0xf0] sm:$0xff]
    %v2424 = vld [vmem:[%s2402 + $0xf8] sm:$0xff]
    %v2425 = vld [vmem:[%s2402 + $0x108] sm:$0xff]
    %v2426 = vld [vmem:[%s2402 + $0x110] sm:$0xff]
    %v2427 = vld [vmem:[%s2402 + $0x120] sm:$0xff]
    %v2428 = vld [vmem:[%s2402 + $0x128] sm:$0xff]
    %v2429 = vld [vmem:[%s2402 + $0x138] sm:$0xff]
    %v2430 = vld [vmem:[%s2402 + $0x140] sm:$0xff]
    %v2431 = vld [vmem:[%s2402 + $0x150] sm:$0xff]
    %v2432 = vld [vmem:[%s2402 + $0x158] sm:$0xff]
    %v2433 = vld [vmem:[%s2402 + $0x168] sm:$0xff]
    %v2434 = vld [vmem:[%s2402 + $0x170] sm:$0xff]
    %v2435 = vld [vmem:[%s2402 + $0x1b0] sm:$0xff]
    %v2436 = vld [vmem:[%s2402 + $0x1b8] sm:$0xff]
    %v2437 = vld [vmem:[%s2402 + $0x1c8] sm:$0xff]
    %v2438 = vld [vmem:[%s2402 + $0x1d0] sm:$0xff]
    %v2439 = vld [vmem:[%s2402 + $0x1e0] sm:$0xff]
    %v2440 = vld [vmem:[%s2402 + $0x1e8] sm:$0xff]
    %v2441 = vld [vmem:[%s2402 + $0x1f8] sm:$0xff]
    %v2442 = vld [vmem:[%s2402 + $0x200] sm:$0xff]
    %v2443 = vld [vmem:[%s2402 + $0x210] sm:$0xff]
    %v2444 = vld [vmem:[%s2402 + $0x218] sm:$0xff]
    %v2445 = vld [vmem:[%s2402 + $0x228] sm:$0xff]
    %v2446 = vld [vmem:[%s2402 + $0x230] sm:$0xff]
    %v2447 = vld [vmem:[%s2402 + $0x240] sm:$0xff]
    %v2448 = vld [vmem:[%s2402 + $0x248] sm:$0xff]
    %v2449 = vld [vmem:[%s2402 + $0x258] sm:$0xff]
    %v2450 = vld [vmem:[%s2402 + $0x260] sm:$0xff]
    %v2451 = vld [vmem:[%s2402 + $0x270] sm:$0xff]
    %v2452 = vld [vmem:[%s2402 + $0x278] sm:$0xff]
    %v2453 = vld [vmem:[%s2402 + $0x288] sm:$0xff]
    %v2454 = vld [vmem:[%s2402 + $0x290] sm:$0xff]
    %v2455 = vld [vmem:[%s2402 + $0x2a0] sm:$0xff]
    %v2456 = vld [vmem:[%s2402 + $0x2a8] sm:$0xff]
    %v2457 = vld [vmem:[%s2402 + $0x2b8] sm:$0xff]
    %v2458 = vld [vmem:[%s2402 + $0x2c0] sm:$0xff]
    %v2459 = vld [vmem:[%s2402 + $0x2d0] sm:$0xff]
    %v2460 = vld [vmem:[%s2402 + $0x2d8] sm:$0xff]
    %v2461 = vld [vmem:[%s2402 + $0x2e8] sm:$0xff]
    %v2462 = vld [vmem:[%s2402 + $0x2f0] sm:$0xff]
    %v2463 = vld [vmem:[%s2402 + $0x300] sm:$0xff]
    %v2464 = vld [vmem:[%s2402 + $0x308] sm:$0xff]
    %v2465 = vld [vmem:[%s2402 + $0x318] sm:$0xff]
    %v2466 = vld [vmem:[%s2402 + $0x320] sm:$0xff]
    %s2467 = scalar_lea.vmem %s1, 12
    %v2468 = vld [vmem:[%s2467] sm:$0xf]
    %v2470 = vsel %vm80, %v2403, 0
    %v2473 = vsel %vm80, %v2404, 0
    %v2476 = vsel %vm80, %v2405, 0
    %v2479 = vsel %vm80, %v2406, 0
    %v2482 = vsel %vm80, %v2407, 0
    %v2485 = vsel %vm80, %v2408, 0
    %v2488 = vsel %vm80, %v2409, 0
    %v2491 = vsel %vm80, %v2410, 0
    %v2494 = vsel %vm80, %v2411, 0
    %v2497 = vsel %vm80, %v2412, 0
    %v2500 = vsel %vm80, %v2413, 0
    %v2503 = vsel %vm80, %v2414, 0
    %v2506 = vsel %vm80, %v2415, 0
    %v2509 = vsel %vm80, %v2416, 0
    %v2512 = vsel %vm80, %v2417, 0
    %v2515 = vsel %vm80, %v2418, 0
    %v2518 = vsel %vm80, %v2419, 0
    %v2521 = vsel %vm80, %v2420, 0
    %v2524 = vsel %vm80, %v2421, 0
    %v2527 = vsel %vm80, %v2422, 0
    %v2530 = vsel %vm80, %v2423, 0
    %v2533 = vsel %vm80, %v2424, 0
    %v2536 = vsel %vm80, %v2425, 0
    %v2539 = vsel %vm80, %v2426, 0
    %v2542 = vsel %vm80, %v2427, 0
    %v2545 = vsel %vm80, %v2428, 0
    %v2548 = vsel %vm80, %v2429, 0
    %v2551 = vsel %vm80, %v2430, 0
    %v2554 = vsel %vm80, %v2431, 0
    %v2557 = vsel %vm80, %v2432, 0
    %v2560 = vsel %vm80, %v2433, 0
    %v2563 = vsel %vm80, %v2434, 0
    %v2566 = vsel %vm80, %v2435, 0
    %v2569 = vsel %vm80, %v2436, 0
    %v2572 = vsel %vm80, %v2437, 0
    %v2575 = vsel %vm80, %v2438, 0
    %v2578 = vsel %vm80, %v2439, 0
    %v2581 = vsel %vm80, %v2440, 0
    %v2584 = vsel %vm80, %v2441, 0
    %v2587 = vsel %vm80, %v2442, 0
    %v2590 = vsel %vm80, %v2443, 0
    %v2593 = vsel %vm80, %v2444, 0
    %v2596 = vsel %vm80, %v2445, 0
    %v2599 = vsel %vm80, %v2446, 0
    %v2602 = vsel %vm80, %v2447, 0
    %v2605 = vsel %vm80, %v2448, 0
    %v2608 = vsel %vm80, %v2449, 0
    %v2611 = vsel %vm80, %v2450, 0
    %v2614 = vsel %vm80, %v2451, 0
    %v2617 = vsel %vm80, %v2452, 0
    %v2620 = vsel %vm80, %v2453, 0
    %v2623 = vsel %vm80, %v2454, 0
    %v2626 = vsel %vm80, %v2455, 0
    %v2629 = vsel %vm80, %v2456, 0
    %v2632 = vsel %vm80, %v2457, 0
    %v2635 = vsel %vm80, %v2458, 0
    %v2638 = vsel %vm80, %v2459, 0
    %v2641 = vsel %vm80, %v2460, 0
    %v2644 = vsel %vm80, %v2461, 0
    %v2647 = vsel %vm80, %v2462, 0
    %v2650 = vsel %vm80, %v2463, 0
    %v2653 = vsel %vm80, %v2464, 0
    %v2656 = vsel %vm80, %v2465, 0
    %v2659 = vsel %vm80, %v2466, 0
    %v2662 = vsel %vm273, %v2468, 0
    %2664 = vmatprep.subr.mxu0 0.0
    %2665 = vmatpush1.msra.mxu0 %v2662
    %2666 = vmatprep.subr.mxu0 0.0
    %2667 = vmatpush1.msra.mxu0 0.0
    %2668 = vmatprep.subr.mxu0 0.0
    %2669 = vmatpush1.msra.mxu0 0.0
    %2670 = vmatprep.subr.mxu0 0.0
    %2671 = vmatpush1.msra.mxu0 0.0
    %2672 = vmatprep.subr.mxu0 0.0
    %2673 = vmatpush1.msra.mxu0 0.0
    %2674 = vmatprep.subr.mxu0 0.0
    %2675 = vmatpush1.msra.mxu0 0.0
    %2676 = vmatprep.subr.mxu0 0.0
    %2677 = vmatpush1.msra.mxu0 0.0
    %2678 = vmatprep.subr.mxu0 0.0
    %2679 = vmatpush1.msra.mxu0 0.0
    %2680 = vmatprep.subr.mxu0 0.0
    %2681 = vmatpush1.msra.mxu0 0.0
    %2682 = vmatprep.subr.mxu0 0.0
    %2683 = vmatpush1.msra.mxu0 0.0
    %2684 = vmatprep.subr.mxu0 0.0
    %2685 = vmatpush1.msra.mxu0 0.0
    %2686 = vmatprep.subr.mxu0 0.0
    %2687 = vmatpush1.msra.mxu0 0.0
    %2688 = vmatprep.subr.mxu0 0.0
    %2689 = vmatpush1.msra.mxu0 0.0
    %2690 = vmatprep.subr.mxu0 0.0
    %2691 = vmatpush1.msra.mxu0 0.0
    %2692 = vmatprep.subr.mxu0 0.0
    %2693 = vmatpush1.msra.mxu0 0.0
    %2694 = vmatprep.subr.mxu0 0.0
    %2695 = vmatpush1.msra.mxu0 0.0
    %2696 = vmatprep.subr.mxu0 0.0
    %2697 = vmatpush1.msra.mxu0 0.0
    %2698 = vmatprep.subr.mxu0 0.0
    %2699 = vmatpush1.msra.mxu0 0.0
    %2700 = vmatprep.subr.mxu0 0.0
    %2701 = vmatpush1.msra.mxu0 0.0
    %2702 = vmatprep.subr.mxu0 0.0
    %2703 = vmatpush1.msra.mxu0 0.0
    %2704 = vmatprep.subr.mxu0 0.0
    %2705 = vmatpush1.msra.mxu0 0.0
    %2706 = vmatprep.subr.mxu0 0.0
    %2707 = vmatpush1.msra.mxu0 0.0
    %2708 = vmatprep.subr.mxu0 0.0
    %2709 = vmatpush1.msra.mxu0 0.0
    %2710 = vmatprep.subr.mxu0 0.0
    %2711 = vmatpush1.msra.mxu0 0.0
    %2712 = vmatprep.subr.mxu0 0.0
    %2713 = vmatpush1.msra.mxu0 0.0
    %2714 = vmatprep.subr.mxu0 0.0
    %2715 = vmatpush1.msra.mxu0 0.0
    %2716 = vmatprep.subr.mxu0 0.0
    %2717 = vmatpush1.msra.mxu0 0.0
    %2718 = vmatprep.subr.mxu0 0.0
    %2719 = vmatpush1.msra.mxu0 0.0
    %2720 = vmatprep.subr.mxu0 0.0
    %2721 = vmatpush1.msra.mxu0 0.0
    %2722 = vmatprep.subr.mxu0 0.0
    %2723 = vmatpush1.msra.mxu0 0.0
    %2724 = vmatprep.subr.mxu0 0.0
    %2725 = vmatpush1.msra.mxu0 0.0
    %2726 = vmatprep.subr.mxu0 0.0
    %2727 = vmatpush1.msra.mxu0 0.0
    %2728 = vmatprep.mubr.f32.mxu0 0.0
    %2729 = vmatmul.mubr.f32.gmra.mrb[0].mxu0 %v2470
    %v2730 = vpop.f32.mrb[0].mxu0
    %v2731 = vadd.f32 0.0, %v2730
    %v2732 = vpop.f32.mrb[0].mxu0
    %2733 = vmatprep.mubr.f32.mxu0 0.0
    %2734 = vmatmul.mubr.f32.gmra.mrb[0].mxu0 %v2473
    %v2735 = vpop.f32.mrb[0].mxu0
    %v2736 = vadd.f32 0.0, %v2735
    %v2737 = vpop.f32.mrb[0].mxu0
    %2738 = vmatprep.mubr.f32.mxu0 0.0
    %2739 = vmatmul.mubr.f32.gmra.mrb[0].mxu0 %v2476
    %v2740 = vpop.f32.mrb[0].mxu0
    %v2741 = vadd.f32 0.0, %v2740
    %v2742 = vpop.f32.mrb[0].mxu0
    %2743 = vmatprep.mubr.f32.mxu0 0.0
    %2744 = vmatmul.mubr.f32.gmra.mrb[0].mxu0 %v2479
    %v2745 = vpop.f32.mrb[0].mxu0
    %v2746 = vadd.f32 0.0, %v2745
    %v2747 = vpop.f32.mrb[0].mxu0
    %2748 = vmatprep.mubr.f32.mxu0 0.0
    %2749 = vmatmul.mubr.f32.gmra.mrb[0].mxu0 %v2482
    %v2750 = vpop.f32.mrb[0].mxu0
    %v2751 = vadd.f32 0.0, %v2750
    %v2752 = vpop.f32.mrb[0].mxu0
    %2753 = vmatprep.mubr.f32.mxu0 0.0
    %2754 = vmatmul.mubr.f32.gmra.mrb[0].mxu0 %v2485
    %v2755 = vpop.f32.mrb[0].mxu0
    %v2756 = vadd.f32 0.0, %v2755
    %v2757 = vpop.f32.mrb[0].mxu0
    %2758 = vmatprep.mubr.f32.mxu0 0.0
    %2759 = vmatmul.mubr.f32.gmra.mrb[0].mxu0 %v2488
    %v2760 = vpop.f32.mrb[0].mxu0
    %v2761 = vadd.f32 0.0, %v2760
    %v2762 = vpop.f32.mrb[0].mxu0
    %2763 = vmatprep.mubr.f32.mxu0 0.0
    %2764 = vmatmul.mubr.f32.gmra.mrb[0].mxu0 %v2491
    %v2765 = vpop.f32.mrb[0].mxu0
    %v2766 = vadd.f32 0.0, %v2765
    %v2767 = vpop.f32.mrb[0].mxu0
    %2768 = vmatprep.mubr.f32.mxu0 0.0
    %2769 = vmatmul.mubr.f32.gmra.mrb[0].mxu0 %v2494
    %v2770 = vpop.f32.mrb[0].mxu0
    %v2771 = vadd.f32 0.0, %v2770
    %v2772 = vpop.f32.mrb[0].mxu0
    %2773 = vmatprep.mubr.f32.mxu0 0.0
    %2774 = vmatmul.mubr.f32.gmra.mrb[0].mxu0 %v2497
    %v2775 = vpop.f32.mrb[0].mxu0
    %v2776 = vadd.f32 0.0, %v2775
    %v2777 = vpop.f32.mrb[0].mxu0
    %2778 = vmatprep.mubr.f32.mxu0 0.0
    %2779 = vmatmul.mubr.f32.gmra.mrb[0].mxu0 %v2500
    %v2780 = vpop.f32.mrb[0].mxu0
    %v2781 = vadd.f32 0.0, %v2780
    %v2782 = vpop.f32.mrb[0].mxu0
    %2783 = vmatprep.mubr.f32.mxu0 0.0
    %2784 = vmatmul.mubr.f32.gmra.mrb[0].mxu0 %v2503
    %v2785 = vpop.f32.mrb[0].mxu0
    %v2786 = vadd.f32 0.0, %v2785
    %v2787 = vpop.f32.mrb[0].mxu0
    %2788 = vmatprep.mubr.f32.mxu0 0.0
    %2789 = vmatmul.mubr.f32.gmra.mrb[0].mxu0 %v2506
    %v2790 = vpop.f32.mrb[0].mxu0
    %v2791 = vadd.f32 0.0, %v2790
    %v2792 = vpop.f32.mrb[0].mxu0
    %2793 = vmatprep.mubr.f32.mxu0 0.0
    %2794 = vmatmul.mubr.f32.gmra.mrb[0].mxu0 %v2509
    %v2795 = vpop.f32.mrb[0].mxu0
    %v2796 = vadd.f32 0.0, %v2795
    %v2797 = vpop.f32.mrb[0].mxu0
    %2798 = vmatprep.mubr.f32.mxu0 0.0
    %2799 = vmatmul.mubr.f32.gmra.mrb[0].mxu0 %v2512
    %v2800 = vpop.f32.mrb[0].mxu0
    %v2801 = vadd.f32 0.0, %v2800
    %v2802 = vpop.f32.mrb[0].mxu0
    %2803 = vmatprep.mubr.f32.mxu0 0.0
    %2804 = vmatmul.mubr.f32.gmra.mrb[0].mxu0 %v2515
    %v2805 = vpop.f32.mrb[0].mxu0
    %v2806 = vadd.f32 0.0, %v2805
    %v2807 = vpop.f32.mrb[0].mxu0
    %2808 = vmatprep.mubr.f32.mxu0 0.0
    %2809 = vmatmul.mubr.f32.gmra.mrb[0].mxu0 %v2518
    %v2810 = vpop.f32.mrb[0].mxu0
    %v2811 = vadd.f32 0.0, %v2810
    %v2812 = vpop.f32.mrb[0].mxu0
    %2813 = vmatprep.mubr.f32.mxu0 0.0
    %2814 = vmatmul.mubr.f32.gmra.mrb[0].mxu0 %v2521
    %v2815 = vpop.f32.mrb[0].mxu0
    %v2816 = vadd.f32 0.0, %v2815
    %v2817 = vpop.f32.mrb[0].mxu0
    %2818 = vmatprep.mubr.f32.mxu0 0.0
    %2819 = vmatmul.mubr.f32.gmra.mrb[0].mxu0 %v2524
    %v2820 = vpop.f32.mrb[0].mxu0
    %v2821 = vadd.f32 0.0, %v2820
    %v2822 = vpop.f32.mrb[0].mxu0
    %2823 = vmatprep.mubr.f32.mxu0 0.0
    %2824 = vmatmul.mubr.f32.gmra.mrb[0].mxu0 %v2527
    %v2825 = vpop.f32.mrb[0].mxu0
    %v2826 = vadd.f32 0.0, %v2825
    %v2827 = vpop.f32.mrb[0].mxu0
    %2828 = vmatprep.mubr.f32.mxu0 0.0
    %2829 = vmatmul.mubr.f32.gmra.mrb[0].mxu0 %v2530
    %v2830 = vpop.f32.mrb[0].mxu0
    %v2831 = vadd.f32 0.0, %v2830
    %v2832 = vpop.f32.mrb[0].mxu0
    %2833 = vmatprep.mubr.f32.mxu0 0.0
    %2834 = vmatmul.mubr.f32.gmra.mrb[0].mxu0 %v2533
    %v2835 = vpop.f32.mrb[0].mxu0
    %v2836 = vadd.f32 0.0, %v2835
    %v2837 = vpop.f32.mrb[0].mxu0
    %2838 = vmatprep.mubr.f32.mxu0 0.0
    %2839 = vmatmul.mubr.f32.gmra.mrb[0].mxu0 %v2536
    %v2840 = vpop.f32.mrb[0].mxu0
    %v2841 = vadd.f32 0.0, %v2840
    %v2842 = vpop.f32.mrb[0].mxu0
    %2843 = vmatprep.mubr.f32.mxu0 0.0
    %2844 = vmatmul.mubr.f32.gmra.mrb[0].mxu0 %v2539
    %v2845 = vpop.f32.mrb[0].mxu0
    %v2846 = vadd.f32 0.0, %v2845
    %v2847 = vpop.f32.mrb[0].mxu0
    %2848 = vmatprep.mubr.f32.mxu0 0.0
    %2849 = vmatmul.mubr.f32.gmra.mrb[0].mxu0 %v2542
    %v2850 = vpop.f32.mrb[0].mxu0
    %v2851 = vadd.f32 0.0, %v2850
    %v2852 = vpop.f32.mrb[0].mxu0
    %2853 = vmatprep.mubr.f32.mxu0 0.0
    %2854 = vmatmul.mubr.f32.gmra.mrb[0].mxu0 %v2545
    %v2855 = vpop.f32.mrb[0].mxu0
    %v2856 = vadd.f32 0.0, %v2855
    %v2857 = vpop.f32.mrb[0].mxu0
    %2858 = vmatprep.mubr.f32.mxu0 0.0
    %2859 = vmatmul.mubr.f32.gmra.mrb[0].mxu0 %v2548
    %v2860 = vpop.f32.mrb[0].mxu0
    %v2861 = vadd.f32 0.0, %v2860
    %v2862 = vpop.f32.mrb[0].mxu0
    %2863 = vmatprep.mubr.f32.mxu0 0.0
    %2864 = vmatmul.mubr.f32.gmra.mrb[0].mxu0 %v2551
    %v2865 = vpop.f32.mrb[0].mxu0
    %v2866 = vadd.f32 0.0, %v2865
    %v2867 = vpop.f32.mrb[0].mxu0
    %2868 = vmatprep.mubr.f32.mxu0 0.0
    %2869 = vmatmul.mubr.f32.gmra.mrb[0].mxu0 %v2554
    %v2870 = vpop.f32.mrb[0].mxu0
    %v2871 = vadd.f32 0.0, %v2870
    %v2872 = vpop.f32.mrb[0].mxu0
    %2873 = vmatprep.mubr.f32.mxu0 0.0
    %2874 = vmatmul.mubr.f32.gmra.mrb[0].mxu0 %v2557
    %v2875 = vpop.f32.mrb[0].mxu0
    %v2876 = vadd.f32 0.0, %v2875
    %v2877 = vpop.f32.mrb[0].mxu0
    %2878 = vmatprep.mubr.f32.mxu0 0.0
    %2879 = vmatmul.mubr.f32.gmra.mrb[0].mxu0 %v2560
    %v2880 = vpop.f32.mrb[0].mxu0
    %v2881 = vadd.f32 0.0, %v2880
    %v2882 = vpop.f32.mrb[0].mxu0
    %2883 = vmatprep.mubr.f32.mxu0 0.0
    %2884 = vmatmul.mubr.f32.gmra.mrb[0].mxu0 %v2563
    %v2885 = vpop.f32.mrb[0].mxu0
    %v2886 = vadd.f32 0.0, %v2885
    %v2887 = vpop.f32.mrb[0].mxu0
    %2888 = vmatprep.mubr.f32.mxu0 0.0
    %2889 = vmatmul.mubr.f32.gmra.mrb[0].mxu0 %v2566
    %v2890 = vpop.f32.mrb[0].mxu0
    %v2891 = vadd.f32 0.0, %v2890
    %v2892 = vpop.f32.mrb[0].mxu0
    %2893 = vmatprep.mubr.f32.mxu0 0.0
    %2894 = vmatmul.mubr.f32.gmra.mrb[0].mxu0 %v2569
    %v2895 = vpop.f32.mrb[0].mxu0
    %v2896 = vadd.f32 0.0, %v2895
    %v2897 = vpop.f32.mrb[0].mxu0
    %2898 = vmatprep.mubr.f32.mxu0 0.0
    %2899 = vmatmul.mubr.f32.gmra.mrb[0].mxu0 %v2572
    %v2900 = vpop.f32.mrb[0].mxu0
    %v2901 = vadd.f32 0.0, %v2900
    %v2902 = vpop.f32.mrb[0].mxu0
    %2903 = vmatprep.mubr.f32.mxu0 0.0
    %2904 = vmatmul.mubr.f32.gmra.mrb[0].mxu0 %v2575
    %v2905 = vpop.f32.mrb[0].mxu0
    %v2906 = vadd.f32 0.0, %v2905
    %v2907 = vpop.f32.mrb[0].mxu0
    %2908 = vmatprep.mubr.f32.mxu0 0.0
    %2909 = vmatmul.mubr.f32.gmra.mrb[0].mxu0 %v2578
    %v2910 = vpop.f32.mrb[0].mxu0
    %v2911 = vadd.f32 0.0, %v2910
    %v2912 = vpop.f32.mrb[0].mxu0
    %2913 = vmatprep.mubr.f32.mxu0 0.0
    %2914 = vmatmul.mubr.f32.gmra.mrb[0].mxu0 %v2581
    %v2915 = vpop.f32.mrb[0].mxu0
    %v2916 = vadd.f32 0.0, %v2915
    %v2917 = vpop.f32.mrb[0].mxu0
    %2918 = vmatprep.mubr.f32.mxu0 0.0
    %2919 = vmatmul.mubr.f32.gmra.mrb[0].mxu0 %v2584
    %v2920 = vpop.f32.mrb[0].mxu0
    %v2921 = vadd.f32 0.0, %v2920
    %v2922 = vpop.f32.mrb[0].mxu0
    %2923 = vmatprep.mubr.f32.mxu0 0.0
    %2924 = vmatmul.mubr.f32.gmra.mrb[0].mxu0 %v2587
    %v2925 = vpop.f32.mrb[0].mxu0
    %v2926 = vadd.f32 0.0, %v2925
    %v2927 = vpop.f32.mrb[0].mxu0
    %2928 = vmatprep.mubr.f32.mxu0 0.0
    %2929 = vmatmul.mubr.f32.gmra.mrb[0].mxu0 %v2590
    %v2930 = vpop.f32.mrb[0].mxu0
    %v2931 = vadd.f32 0.0, %v2930
    %v2932 = vpop.f32.mrb[0].mxu0
    %2933 = vmatprep.mubr.f32.mxu0 0.0
    %2934 = vmatmul.mubr.f32.gmra.mrb[0].mxu0 %v2593
    %v2935 = vpop.f32.mrb[0].mxu0
    %v2936 = vadd.f32 0.0, %v2935
    %v2937 = vpop.f32.mrb[0].mxu0
    %2938 = vmatprep.mubr.f32.mxu0 0.0
    %2939 = vmatmul.mubr.f32.gmra.mrb[0].mxu0 %v2596
    %v2940 = vpop.f32.mrb[0].mxu0
    %v2941 = vadd.f32 0.0, %v2940
    %v2942 = vpop.f32.mrb[0].mxu0
    %2943 = vmatprep.mubr.f32.mxu0 0.0
    %2944 = vmatmul.mubr.f32.gmra.mrb[0].mxu0 %v2599
    %v2945 = vpop.f32.mrb[0].mxu0
    %v2946 = vadd.f32 0.0, %v2945
    %v2947 = vpop.f32.mrb[0].mxu0
    %2948 = vmatprep.mubr.f32.mxu0 0.0
    %2949 = vmatmul.mubr.f32.gmra.mrb[0].mxu0 %v2602
    %v2950 = vpop.f32.mrb[0].mxu0
    %v2951 = vadd.f32 0.0, %v2950
    %v2952 = vpop.f32.mrb[0].mxu0
    %2953 = vmatprep.mubr.f32.mxu0 0.0
    %2954 = vmatmul.mubr.f32.gmra.mrb[0].mxu0 %v2605
    %v2955 = vpop.f32.mrb[0].mxu0
    %v2956 = vadd.f32 0.0, %v2955
    %v2957 = vpop.f32.mrb[0].mxu0
    %2958 = vmatprep.mubr.f32.mxu0 0.0
    %2959 = vmatmul.mubr.f32.gmra.mrb[0].mxu0 %v2608
    %v2960 = vpop.f32.mrb[0].mxu0
    %v2961 = vadd.f32 0.0, %v2960
    %v2962 = vpop.f32.mrb[0].mxu0
    %2963 = vmatprep.mubr.f32.mxu0 0.0
    %2964 = vmatmul.mubr.f32.gmra.mrb[0].mxu0 %v2611
    %v2965 = vpop.f32.mrb[0].mxu0
    %v2966 = vadd.f32 0.0, %v2965
    %v2967 = vpop.f32.mrb[0].mxu0
    %2968 = vmatprep.mubr.f32.mxu0 0.0
    %2969 = vmatmul.mubr.f32.gmra.mrb[0].mxu0 %v2614
    %v2970 = vpop.f32.mrb[0].mxu0
    %v2971 = vadd.f32 0.0, %v2970
    %v2972 = vpop.f32.mrb[0].mxu0
    %2973 = vmatprep.mubr.f32.mxu0 0.0
    %2974 = vmatmul.mubr.f32.gmra.mrb[0].mxu0 %v2617
    %v2975 = vpop.f32.mrb[0].mxu0
    %v2976 = vadd.f32 0.0, %v2975
    %v2977 = vpop.f32.mrb[0].mxu0
    %2978 = vmatprep.mubr.f32.mxu0 0.0
    %2979 = vmatmul.mubr.f32.gmra.mrb[0].mxu0 %v2620
    %v2980 = vpop.f32.mrb[0].mxu0
    %v2981 = vadd.f32 0.0, %v2980
    %v2982 = vpop.f32.mrb[0].mxu0
    %2983 = vmatprep.mubr.f32.mxu0 0.0
    %2984 = vmatmul.mubr.f32.gmra.mrb[0].mxu0 %v2623
    %v2985 = vpop.f32.mrb[0].mxu0
    %v2986 = vadd.f32 0.0, %v2985
    %v2987 = vpop.f32.mrb[0].mxu0
    %2988 = vmatprep.mubr.f32.mxu0 0.0
    %2989 = vmatmul.mubr.f32.gmra.mrb[0].mxu0 %v2626
    %v2990 = vpop.f32.mrb[0].mxu0
    %v2991 = vadd.f32 0.0, %v2990
    %v2992 = vpop.f32.mrb[0].mxu0
    %2993 = vmatprep.mubr.f32.mxu0 0.0
    %2994 = vmatmul.mubr.f32.gmra.mrb[0].mxu0 %v2629
    %v2995 = vpop.f32.mrb[0].mxu0
    %v2996 = vadd.f32 0.0, %v2995
    %v2997 = vpop.f32.mrb[0].mxu0
    %2998 = vmatprep.mubr.f32.mxu0 0.0
    %2999 = vmatmul.mubr.f32.gmra.mrb[0].mxu0 %v2632
    %v3000 = vpop.f32.mrb[0].mxu0
    %v3001 = vadd.f32 0.0, %v3000
    %v3002 = vpop.f32.mrb[0].mxu0
    %3003 = vmatprep.mubr.f32.mxu0 0.0
    %3004 = vmatmul.mubr.f32.gmra.mrb[0].mxu0 %v2635
    %v3005 = vpop.f32.mrb[0].mxu0
    %v3006 = vadd.f32 0.0, %v3005
    %v3007 = vpop.f32.mrb[0].mxu0
    %3008 = vmatprep.mubr.f32.mxu0 0.0
    %3009 = vmatmul.mubr.f32.gmra.mrb[0].mxu0 %v2638
    %v3010 = vpop.f32.mrb[0].mxu0
    %v3011 = vadd.f32 0.0, %v3010
    %v3012 = vpop.f32.mrb[0].mxu0
    %3013 = vmatprep.mubr.f32.mxu0 0.0
    %3014 = vmatmul.mubr.f32.gmra.mrb[0].mxu0 %v2641
    %v3015 = vpop.f32.mrb[0].mxu0
    %v3016 = vadd.f32 0.0, %v3015
    %v3017 = vpop.f32.mrb[0].mxu0
    %3018 = vmatprep.mubr.f32.mxu0 0.0
    %3019 = vmatmul.mubr.f32.gmra.mrb[0].mxu0 %v2644
    %v3020 = vpop.f32.mrb[0].mxu0
    %v3021 = vadd.f32 0.0, %v3020
    %v3022 = vpop.f32.mrb[0].mxu0
    %3023 = vmatprep.mubr.f32.mxu0 0.0
    %3024 = vmatmul.mubr.f32.gmra.mrb[0].mxu0 %v2647
    %v3025 = vpop.f32.mrb[0].mxu0
    %v3026 = vadd.f32 0.0, %v3025
    %v3027 = vpop.f32.mrb[0].mxu0
    %3028 = vmatprep.mubr.f32.mxu0 0.0
    %3029 = vmatmul.mubr.f32.gmra.mrb[0].mxu0 %v2650
    %v3030 = vpop.f32.mrb[0].mxu0
    %v3031 = vadd.f32 0.0, %v3030
    %v3032 = vpop.f32.mrb[0].mxu0
    %3033 = vmatprep.mubr.f32.mxu0 0.0
    %3034 = vmatmul.mubr.f32.gmra.mrb[0].mxu0 %v2653
    %v3035 = vpop.f32.mrb[0].mxu0
    %v3036 = vadd.f32 0.0, %v3035
    %v3037 = vpop.f32.mrb[0].mxu0
    %3038 = vmatprep.mubr.f32.mxu0 0.0
    %3039 = vmatmul.mubr.f32.gmra.mrb[0].mxu0 %v2656
    %v3040 = vpop.f32.mrb[0].mxu0
    %v3041 = vadd.f32 0.0, %v3040
    %v3042 = vpop.f32.mrb[0].mxu0
    %3043 = vmatprep.mubr.f32.mxu0 0.0
    %3044 = vmatmul.mubr.f32.gmra.mrb[0].mxu0 %v2659
    %v3045 = vpop.f32.mrb[0].mxu0
    %v3046 = vadd.f32 0.0, %v3045
    %v3047 = vpop.f32.mrb[0].mxu0
    %3048 = vdwg.mxu0
    %v3049 = vld [vmem:[#allocation2] sm:$0xff]
    %v3050 = vld [vmem:[#allocation2 + $0x8] sm:$0xff]
    %v3051 = vld [vmem:[#allocation2 + $0x10] sm:$0xff]
    %v3052 = vld [vmem:[#allocation2 + $0x18] sm:$0xff]
    %v3053 = vld [vmem:[#allocation2 + $0x20] sm:$0xff]
    %v3054 = vld [vmem:[#allocation2 + $0x28] sm:$0xff]
    %v3055 = vld [vmem:[#allocation2 + $0x30] sm:$0xff]
    %v3056 = vld [vmem:[#allocation2 + $0x38] sm:$0xff]
    %v3057 = vld [vmem:[#allocation2 + $0x40] sm:$0xff]
    %v3058 = vld [vmem:[#allocation2 + $0x48] sm:$0xff]
    %v3059 = vld [vmem:[#allocation2 + $0x50] sm:$0xff]
    %v3060 = vld [vmem:[#allocation2 + $0x58] sm:$0xff]
    %v3061 = vld [vmem:[#allocation2 + $0x60] sm:$0xff]
    %v3062 = vld [vmem:[#allocation2 + $0x68] sm:$0xff]
    %v3063 = vld [vmem:[#allocation2 + $0x70] sm:$0xff]
    %v3064 = vld [vmem:[#allocation2 + $0x78] sm:$0xff]
    %v3065 = vld [vmem:[#allocation2 + $0x80] sm:$0xff]
    %v3066 = vld [vmem:[#allocation2 + $0x88] sm:$0xff]
    %v3067 = vld [vmem:[#allocation2 + $0x90] sm:$0xff]
    %v3068 = vld [vmem:[#allocation2 + $0x98] sm:$0xff]
    %v3069 = vld [vmem:[#allocation2 + $0xa0] sm:$0xff]
    %v3070 = vld [vmem:[#allocation2 + $0xa8] sm:$0xff]
    %v3071 = vld [vmem:[#allocation2 + $0xb0] sm:$0xff]
    %v3072 = vld [vmem:[#allocation2 + $0xb8] sm:$0xff]
    %v3073 = vld [vmem:[#allocation2 + $0xc0] sm:$0xff]
    %v3074 = vld [vmem:[#allocation2 + $0xc8] sm:$0xff]
    %v3075 = vld [vmem:[#allocation2 + $0xd0] sm:$0xff]
    %v3076 = vld [vmem:[#allocation2 + $0xd8] sm:$0xff]
    %v3077 = vld [vmem:[#allocation2 + $0xe0] sm:$0xff]
    %v3078 = vld [vmem:[#allocation2 + $0xe8] sm:$0xff]
    %v3079 = vld [vmem:[#allocation2 + $0xf0] sm:$0xff]
    %v3080 = vld [vmem:[#allocation2 + $0xf8] sm:$0xff]
    %v3081 = vld [vmem:[#allocation2 + $0x100] sm:$0xff]
    %v3082 = vld [vmem:[#allocation2 + $0x108] sm:$0xff]
    %v3083 = vld [vmem:[#allocation2 + $0x110] sm:$0xff]
    %v3084 = vld [vmem:[#allocation2 + $0x118] sm:$0xff]
    %v3085 = vld [vmem:[#allocation2 + $0x120] sm:$0xff]
    %v3086 = vld [vmem:[#allocation2 + $0x128] sm:$0xff]
    %v3087 = vld [vmem:[#allocation2 + $0x130] sm:$0xff]
    %v3088 = vld [vmem:[#allocation2 + $0x138] sm:$0xff]
    %v3089 = vld [vmem:[#allocation2 + $0x140] sm:$0xff]
    %v3090 = vld [vmem:[#allocation2 + $0x148] sm:$0xff]
    %v3091 = vld [vmem:[#allocation2 + $0x150] sm:$0xff]
    %v3092 = vld [vmem:[#allocation2 + $0x158] sm:$0xff]
    %v3093 = vld [vmem:[#allocation2 + $0x160] sm:$0xff]
    %v3094 = vld [vmem:[#allocation2 + $0x168] sm:$0xff]
    %v3095 = vld [vmem:[#allocation2 + $0x170] sm:$0xff]
    %v3096 = vld [vmem:[#allocation2 + $0x178] sm:$0xff]
    %v3097 = vld [vmem:[#allocation2 + $0x180] sm:$0xff]
    %v3098 = vld [vmem:[#allocation2 + $0x188] sm:$0xff]
    %v3099 = vld [vmem:[#allocation2 + $0x190] sm:$0xff]
    %v3100 = vld [vmem:[#allocation2 + $0x198] sm:$0xff]
    %v3101 = vld [vmem:[#allocation2 + $0x1a0] sm:$0xff]
    %v3102 = vld [vmem:[#allocation2 + $0x1a8] sm:$0xff]
    %v3103 = vld [vmem:[#allocation2 + $0x1b0] sm:$0xff]
    %v3104 = vld [vmem:[#allocation2 + $0x1b8] sm:$0xff]
    %v3105 = vld [vmem:[#allocation2 + $0x1c0] sm:$0xff]
    %v3106 = vld [vmem:[#allocation2 + $0x1c8] sm:$0xff]
    %v3107 = vld [vmem:[#allocation2 + $0x1d0] sm:$0xff]
    %v3108 = vld [vmem:[#allocation2 + $0x1d8] sm:$0xff]
    %v3109 = vld [vmem:[#allocation2 + $0x1e0] sm:$0xff]
    %v3110 = vld [vmem:[#allocation2 + $0x1e8] sm:$0xff]
    %v3111 = vld [vmem:[#allocation2 + $0x1f0] sm:$0xff]
    %v3112 = vld [vmem:[#allocation2 + $0x1f8] sm:$0xff]
    %v3113 = vadd.f32 %v3049, %v2731
    %v3114 = vadd.f32 %v3050, %v2736
    %v3115 = vadd.f32 %v3051, %v2741
    %v3116 = vadd.f32 %v3052, %v2746
    %v3117 = vadd.f32 %v3053, %v2751
    %v3118 = vadd.f32 %v3054, %v2756
    %v3119 = vadd.f32 %v3055, %v2761
    %v3120 = vadd.f32 %v3056, %v2766
    %v3121 = vadd.f32 %v3057, %v2771
    %v3122 = vadd.f32 %v3058, %v2776
    %v3123 = vadd.f32 %v3059, %v2781
    %v3124 = vadd.f32 %v3060, %v2786
    %v3125 = vadd.f32 %v3061, %v2791
    %v3126 = vadd.f32 %v3062, %v2796
    %v3127 = vadd.f32 %v3063, %v2801
    %v3128 = vadd.f32 %v3064, %v2806
    %v3129 = vadd.f32 %v3065, %v2811
    %v3130 = vadd.f32 %v3066, %v2816
    %v3131 = vadd.f32 %v3067, %v2821
    %v3132 = vadd.f32 %v3068, %v2826
    %v3133 = vadd.f32 %v3069, %v2831
    %v3134 = vadd.f32 %v3070, %v2836
    %v3135 = vadd.f32 %v3071, %v2841
    %v3136 = vadd.f32 %v3072, %v2846
    %v3137 = vadd.f32 %v3073, %v2851
    %v3138 = vadd.f32 %v3074, %v2856
    %v3139 = vadd.f32 %v3075, %v2861
    %v3140 = vadd.f32 %v3076, %v2866
    %v3141 = vadd.f32 %v3077, %v2871
    %v3142 = vadd.f32 %v3078, %v2876
    %v3143 = vadd.f32 %v3079, %v2881
    %v3144 = vadd.f32 %v3080, %v2886
    %v3145 = vadd.f32 %v3081, %v2891
    %v3146 = vadd.f32 %v3082, %v2896
    %v3147 = vadd.f32 %v3083, %v2901
    %v3148 = vadd.f32 %v3084, %v2906
    %v3149 = vadd.f32 %v3085, %v2911
    %v3150 = vadd.f32 %v3086, %v2916
    %v3151 = vadd.f32 %v3087, %v2921
    %v3152 = vadd.f32 %v3088, %v2926
    %v3153 = vadd.f32 %v3089, %v2931
    %v3154 = vadd.f32 %v3090, %v2936
    %v3155 = vadd.f32 %v3091, %v2941
    %v3156 = vadd.f32 %v3092, %v2946
    %v3157 = vadd.f32 %v3093, %v2951
    %v3158 = vadd.f32 %v3094, %v2956
    %v3159 = vadd.f32 %v3095, %v2961
    %v3160 = vadd.f32 %v3096, %v2966
    %v3161 = vadd.f32 %v3097, %v2971
    %v3162 = vadd.f32 %v3098, %v2976
    %v3163 = vadd.f32 %v3099, %v2981
    %v3164 = vadd.f32 %v3100, %v2986
    %v3165 = vadd.f32 %v3101, %v2991
    %v3166 = vadd.f32 %v3102, %v2996
    %v3167 = vadd.f32 %v3103, %v3001
    %v3168 = vadd.f32 %v3104, %v3006
    %v3169 = vadd.f32 %v3105, %v3011
    %v3170 = vadd.f32 %v3106, %v3016
    %v3171 = vadd.f32 %v3107, %v3021
    %v3172 = vadd.f32 %v3108, %v3026
    %v3173 = vadd.f32 %v3109, %v3031
    %v3174 = vadd.f32 %v3110, %v3036
    %v3175 = vadd.f32 %v3111, %v3041
    %v3176 = vadd.f32 %v3112, %v3046
    %3177 = vst [vmem:[#allocation2] sm:$0xff] %v3113
    %3178 = vst [vmem:[#allocation2 + $0x8] sm:$0xff] %v3114
    %3179 = vst [vmem:[#allocation2 + $0x10] sm:$0xff] %v3115
    %3180 = vst [vmem:[#allocation2 + $0x18] sm:$0xff] %v3116
    %3181 = vst [vmem:[#allocation2 + $0x20] sm:$0xff] %v3117
    %3182 = vst [vmem:[#allocation2 + $0x28] sm:$0xff] %v3118
    %3183 = vst [vmem:[#allocation2 + $0x30] sm:$0xff] %v3119
    %3184 = vst [vmem:[#allocation2 + $0x38] sm:$0xff] %v3120
    %3185 = vst [vmem:[#allocation2 + $0x40] sm:$0xff] %v3121
    %3186 = vst [vmem:[#allocation2 + $0x48] sm:$0xff] %v3122
    %3187 = vst [vmem:[#allocation2 + $0x50] sm:$0xff] %v3123
    %3188 = vst [vmem:[#allocation2 + $0x58] sm:$0xff] %v3124
    %3189 = vst [vmem:[#allocation2 + $0x60] sm:$0xff] %v3125
    %3190 = vst [vmem:[#allocation2 + $0x68] sm:$0xff] %v3126
    %3191 = vst [vmem:[#allocation2 + $0x70] sm:$0xff] %v3127
    %3192 = vst [vmem:[#allocation2 + $0x78] sm:$0xff] %v3128
    %3193 = vst [vmem:[#allocation2 + $0x80] sm:$0xff] %v3129
    %3194 = vst [vmem:[#allocation2 + $0x88] sm:$0xff] %v3130
    %3195 = vst [vmem:[#allocation2 + $0x90] sm:$0xff] %v3131
    %3196 = vst [vmem:[#allocation2 + $0x98] sm:$0xff] %v3132
    %3197 = vst [vmem:[#allocation2 + $0xa0] sm:$0xff] %v3133
    %3198 = vst [vmem:[#allocation2 + $0xa8] sm:$0xff] %v3134
    %3199 = vst [vmem:[#allocation2 + $0xb0] sm:$0xff] %v3135
    %3200 = vst [vmem:[#allocation2 + $0xb8] sm:$0xff] %v3136
    %3201 = vst [vmem:[#allocation2 + $0xc0] sm:$0xff] %v3137
    %3202 = vst [vmem:[#allocation2 + $0xc8] sm:$0xff] %v3138
    %3203 = vst [vmem:[#allocation2 + $0xd0] sm:$0xff] %v3139
    %3204 = vst [vmem:[#allocation2 + $0xd8] sm:$0xff] %v3140
    %3205 = vst [vmem:[#allocation2 + $0xe0] sm:$0xff] %v3141
    %3206 = vst [vmem:[#allocation2 + $0xe8] sm:$0xff] %v3142
    %3207 = vst [vmem:[#allocation2 + $0xf0] sm:$0xff] %v3143
    %3208 = vst [vmem:[#allocation2 + $0xf8] sm:$0xff] %v3144
    %3209 = vst [vmem:[#allocation2 + $0x100] sm:$0xff] %v3145
    %3210 = vst [vmem:[#allocation2 + $0x108] sm:$0xff] %v3146
    %3211 = vst [vmem:[#allocation2 + $0x110] sm:$0xff] %v3147
    %3212 = vst [vmem:[#allocation2 + $0x118] sm:$0xff] %v3148
    %3213 = vst [vmem:[#allocation2 + $0x120] sm:$0xff] %v3149
    %3214 = vst [vmem:[#allocation2 + $0x128] sm:$0xff] %v3150
    %3215 = vst [vmem:[#allocation2 + $0x130] sm:$0xff] %v3151
    %3216 = vst [vmem:[#allocation2 + $0x138] sm:$0xff] %v3152
    %3217 = vst [vmem:[#allocation2 + $0x140] sm:$0xff] %v3153
    %3218 = vst [vmem:[#allocation2 + $0x148] sm:$0xff] %v3154
    %3219 = vst [vmem:[#allocation2 + $0x150] sm:$0xff] %v3155
    %3220 = vst [vmem:[#allocation2 + $0x158] sm:$0xff] %v3156
    %3221 = vst [vmem:[#allocation2 + $0x160] sm:$0xff] %v3157
    %3222 = vst [vmem:[#allocation2 + $0x168] sm:$0xff] %v3158
    %3223 = vst [vmem:[#allocation2 + $0x170] sm:$0xff] %v3159
    %3224 = vst [vmem:[#allocation2 + $0x178] sm:$0xff] %v3160
    %3225 = vst [vmem:[#allocation2 + $0x180] sm:$0xff] %v3161
    %3226 = vst [vmem:[#allocation2 + $0x188] sm:$0xff] %v3162
    %3227 = vst [vmem:[#allocation2 + $0x190] sm:$0xff] %v3163
    %3228 = vst [vmem:[#allocation2 + $0x198] sm:$0xff] %v3164
    %3229 = vst [vmem:[#allocation2 + $0x1a0] sm:$0xff] %v3165
    %3230 = vst [vmem:[#allocation2 + $0x1a8] sm:$0xff] %v3166
    %3231 = vst [vmem:[#allocation2 + $0x1b0] sm:$0xff] %v3167
    %3232 = vst [vmem:[#allocation2 + $0x1b8] sm:$0xff] %v3168
    %3233 = vst [vmem:[#allocation2 + $0x1c0] sm:$0xff] %v3169
    %3234 = vst [vmem:[#allocation2 + $0x1c8] sm:$0xff] %v3170
    %3235 = vst [vmem:[#allocation2 + $0x1d0] sm:$0xff] %v3171
    %3236 = vst [vmem:[#allocation2 + $0x1d8] sm:$0xff] %v3172
    %3237 = vst [vmem:[#allocation2 + $0x1e0] sm:$0xff] %v3173
    %3238 = vst [vmem:[#allocation2 + $0x1e8] sm:$0xff] %v3174
    %3239 = vst [vmem:[#allocation2 + $0x1f0] sm:$0xff] %v3175
    %3240 = vst [vmem:[#allocation2 + $0x1f8] sm:$0xff] %v3176
    %v3241 = vld [vmem:[%s2402 + $0x1] sm:$0xff]
    %v3242 = vld [vmem:[%s2402 + $0x9] sm:$0xff]
    %v3243 = vld [vmem:[%s2402 + $0x19] sm:$0xff]
    %v3244 = vld [vmem:[%s2402 + $0x21] sm:$0xff]
    %v3245 = vld [vmem:[%s2402 + $0x31] sm:$0xff]
    %v3246 = vld [vmem:[%s2402 + $0x39] sm:$0xff]
    %v3247 = vld [vmem:[%s2402 + $0x49] sm:$0xff]
    %v3248 = vld [vmem:[%s2402 + $0x51] sm:$0xff]
    %v3249 = vld [vmem:[%s2402 + $0x61] sm:$0xff]
    %v3250 = vld [vmem:[%s2402 + $0x69] sm:$0xff]
    %v3251 = vld [vmem:[%s2402 + $0x79] sm:$0xff]
    %v3252 = vld [vmem:[%s2402 + $0x81] sm:$0xff]
    %v3253 = vld [vmem:[%s2402 + $0x91] sm:$0xff]
    %v3254 = vld [vmem:[%s2402 + $0x99] sm:$0xff]
    %v3255 = vld [vmem:[%s2402 + $0xa9] sm:$0xff]
    %v3256 = vld [vmem:[%s2402 + $0xb1] sm:$0xff]
    %v3257 = vld [vmem:[%s2402 + $0xc1] sm:$0xff]
    %v3258 = vld [vmem:[%s2402 + $0xc9] sm:$0xff]
    %v3259 = vld [vmem:[%s2402 + $0xd9] sm:$0xff]
    %v3260 = vld [vmem:[%s2402 + $0xe1] sm:$0xff]
    %v3261 = vld [vmem:[%s2402 + $0xf1] sm:$0xff]
    %v3262 = vld [vmem:[%s2402 + $0xf9] sm:$0xff]
    %v3263 = vld [vmem:[%s2402 + $0x109] sm:$0xff]
    %v3264 = vld [vmem:[%s2402 + $0x111] sm:$0xff]
    %v3265 = vld [vmem:[%s2402 + $0x121] sm:$0xff]
    %v3266 = vld [vmem:[%s2402 + $0x129] sm:$0xff]
    %v3267 = vld [vmem:[%s2402 + $0x139] sm:$0xff]
    %v3268 = vld [vmem:[%s2402 + $0x141] sm:$0xff]
    %v3269 = vld [vmem:[%s2402 + $0x151] sm:$0xff]
    %v3270 = vld [vmem:[%s2402 + $0x159] sm:$0xff]
    %v3271 = vld [vmem:[%s2402 + $0x169] sm:$0xff]
    %v3272 = vld [vmem:[%s2402 + $0x171] sm:$0xff]
    %v3273 = vld [vmem:[%s2402 + $0x1b1] sm:$0xff]
    %v3274 = vld [vmem:[%s2402 + $0x1b9] sm:$0xff]
    %v3275 = vld [vmem:[%s2402 + $0x1c9] sm:$0xff]
    %v3276 = vld [vmem:[%s2402 + $0x1d1] sm:$0xff]
    %v3277 = vld [vmem:[%s2402 + $0x1e1] sm:$0xff]
    %v3278 = vld [vmem:[%s2402 + $0x1e9] sm:$0xff]
    %v3279 = vld [vmem:[%s2402 + $0x1f9] sm:$0xff]
    %v3280 = vld [vmem:[%s2402 + $0x201] sm:$0xff]
    %v3281 = vld [vmem:[%s2402 + $0x211] sm:$0xff]
    %v3282 = vld [vmem:[%s2402 + $0x219] sm:$0xff]
    %v3283 = vld [vmem:[%s2402 + $0x229] sm:$0xff]
    %v3284 = vld [vmem:[%s2402 + $0x231] sm:$0xff]
    %v3285 = vld [vmem:[%s2402 + $0x241] sm:$0xff]
    %v3286 = vld [vmem:[%s2402 + $0x249] sm:$0xff]
    %v3287 = vld [vmem:[%s2402 + $0x259] sm:$0xff]
    %v3288 = vld [vmem:[%s2402 + $0x261] sm:$0xff]
    %v3289 = vld [vmem:[%s2402 + $0x271] sm:$0xff]
    %v3290 = vld [vmem:[%s2402 + $0x279] sm:$0xff]
    %v3291 = vld [vmem:[%s2402 + $0x289] sm:$0xff]
    %v3292 = vld [vmem:[%s2402 + $0x291] sm:$0xff]
    %v3293 = vld [vmem:[%s2402 + $0x2a1] sm:$0xff]
    %v3294 = vld [vmem:[%s2402 + $0x2a9] sm:$0xff]
    %v3295 = vld [vmem:[%s2402 + $0x2b9] sm:$0xff]
    %v3296 = vld [vmem:[%s2402 + $0x2c1] sm:$0xff]
    %v3297 = vld [vmem:[%s2402 + $0x2d1] sm:$0xff]
    %v3298 = vld [vmem:[%s2402 + $0x2d9] sm:$0xff]
    %v3299 = vld [vmem:[%s2402 + $0x2e9] sm:$0xff]
    %v3300 = vld [vmem:[%s2402 + $0x2f1] sm:$0xff]
    %v3301 = vld [vmem:[%s2402 + $0x301] sm:$0xff]
    %v3302 = vld [vmem:[%s2402 + $0x309] sm:$0xff]
    %v3303 = vld [vmem:[%s2402 + $0x319] sm:$0xff]
    %v3304 = vld [vmem:[%s2402 + $0x321] sm:$0xff]
    %s3305 = scalar_lea.vmem %s1, 16
    %v3306 = vld [vmem:[%s3305] sm:$0xf]
    %v3308 = vsel %vm80, %v3241, 0
    %v3311 = vsel %vm80, %v3242, 0
    %v3314 = vsel %vm80, %v3243, 0
    %v3317 = vsel %vm80, %v3244, 0
    %v3320 = vsel %vm80, %v3245, 0
    %v3323 = vsel %vm80, %v3246, 0
    %v3326 = vsel %vm80, %v3247, 0
    %v3329 = vsel %vm80, %v3248, 0
    %v3332 = vsel %vm80, %v3249, 0
    %v3335 = vsel %vm80, %v3250, 0
    %v3338 = vsel %vm80, %v3251, 0
    %v3341 = vsel %vm80, %v3252, 0
    %v3344 = vsel %vm80, %v3253, 0
    %v3347 = vsel %vm80, %v3254, 0
    %v3350 = vsel %vm80, %v3255, 0
    %v3353 = vsel %vm80, %v3256, 0
    %v3356 = vsel %vm80, %v3257, 0
    %v3359 = vsel %vm80, %v3258, 0
    %v3362 = vsel %vm80, %v3259, 0
    %v3365 = vsel %vm80, %v3260, 0
    %v3368 = vsel %vm80, %v3261, 0
    %v3371 = vsel %vm80, %v3262, 0
    %v3374 = vsel %vm80, %v3263, 0
    %v3377 = vsel %vm80, %v3264, 0
    %v3380 = vsel %vm80, %v3265, 0
    %v3383 = vsel %vm80, %v3266, 0
    %v3386 = vsel %vm80, %v3267, 0
    %v3389 = vsel %vm80, %v3268, 0
    %v3392 = vsel %vm80, %v3269, 0
    %v3395 = vsel %vm80, %v3270, 0
    %v3398 = vsel %vm80, %v3271, 0
    %v3401 = vsel %vm80, %v3272, 0
    %v3404 = vsel %vm80, %v3273, 0
    %v3407 = vsel %vm80, %v3274, 0
    %v3410 = vsel %vm80, %v3275, 0
    %v3413 = vsel %vm80, %v3276, 0
    %v3416 = vsel %vm80, %v3277, 0
    %v3419 = vsel %vm80, %v3278, 0
    %v3422 = vsel %vm80, %v3279, 0
    %v3425 = vsel %vm80, %v3280, 0
    %v3428 = vsel %vm80, %v3281, 0
    %v3431 = vsel %vm80, %v3282, 0
    %v3434 = vsel %vm80, %v3283, 0
    %v3437 = vsel %vm80, %v3284, 0
    %v3440 = vsel %vm80, %v3285, 0
    %v3443 = vsel %vm80, %v3286, 0
    %v3446 = vsel %vm80, %v3287, 0
    %v3449 = vsel %vm80, %v3288, 0
    %v3452 = vsel %vm80, %v3289, 0
    %v3455 = vsel %vm80, %v3290, 0
    %v3458 = vsel %vm80, %v3291, 0
    %v3461 = vsel %vm80, %v3292, 0
    %v3464 = vsel %vm80, %v3293, 0
    %v3467 = vsel %vm80, %v3294, 0
    %v3470 = vsel %vm80, %v3295, 0
    %v3473 = vsel %vm80, %v3296, 0
    %v3476 = vsel %vm80, %v3297, 0
    %v3479 = vsel %vm80, %v3298, 0
    %v3482 = vsel %vm80, %v3299, 0
    %v3485 = vsel %vm80, %v3300, 0
    %v3488 = vsel %vm80, %v3301, 0
    %v3491 = vsel %vm80, %v3302, 0
    %v3494 = vsel %vm80, %v3303, 0
    %v3497 = vsel %vm80, %v3304, 0
    %v3500 = vsel %vm273, %v3306, 0
    %3502 = vmatprep.subr.mxu0 0.0
    %3503 = vmatpush1.msra.mxu0 %v3500
    %3504 = vmatprep.subr.mxu0 0.0
    %3505 = vmatpush1.msra.mxu0 0.0
    %3506 = vmatprep.subr.mxu0 0.0
    %3507 = vmatpush1.msra.mxu0 0.0
    %3508 = vmatprep.subr.mxu0 0.0
    %3509 = vmatpush1.msra.mxu0 0.0
    %3510 = vmatprep.subr.mxu0 0.0
    %3511 = vmatpush1.msra.mxu0 0.0
    %3512 = vmatprep.subr.mxu0 0.0
    %3513 = vmatpush1.msra.mxu0 0.0
    %3514 = vmatprep.subr.mxu0 0.0
    %3515 = vmatpush1.msra.mxu0 0.0
    %3516 = vmatprep.subr.mxu0 0.0
    %3517 = vmatpush1.msra.mxu0 0.0
    %3518 = vmatprep.subr.mxu0 0.0
    %3519 = vmatpush1.msra.mxu0 0.0
    %3520 = vmatprep.subr.mxu0 0.0
    %3521 = vmatpush1.msra.mxu0 0.0
    %3522 = vmatprep.subr.mxu0 0.0
    %3523 = vmatpush1.msra.mxu0 0.0
    %3524 = vmatprep.subr.mxu0 0.0
    %3525 = vmatpush1.msra.mxu0 0.0
    %3526 = vmatprep.subr.mxu0 0.0
    %3527 = vmatpush1.msra.mxu0 0.0
    %3528 = vmatprep.subr.mxu0 0.0
    %3529 = vmatpush1.msra.mxu0 0.0
    %3530 = vmatprep.subr.mxu0 0.0
    %3531 = vmatpush1.msra.mxu0 0.0
    %3532 = vmatprep.subr.mxu0 0.0
    %3533 = vmatpush1.msra.mxu0 0.0
    %3534 = vmatprep.subr.mxu0 0.0
    %3535 = vmatpush1.msra.mxu0 0.0
    %3536 = vmatprep.subr.mxu0 0.0
    %3537 = vmatpush1.msra.mxu0 0.0
    %3538 = vmatprep.subr.mxu0 0.0
    %3539 = vmatpush1.msra.mxu0 0.0
    %3540 = vmatprep.subr.mxu0 0.0
    %3541 = vmatpush1.msra.mxu0 0.0
    %3542 = vmatprep.subr.mxu0 0.0
    %3543 = vmatpush1.msra.mxu0 0.0
    %3544 = vmatprep.subr.mxu0 0.0
    %3545 = vmatpush1.msra.mxu0 0.0
    %3546 = vmatprep.subr.mxu0 0.0
    %3547 = vmatpush1.msra.mxu0 0.0
    %3548 = vmatprep.subr.mxu0 0.0
    %3549 = vmatpush1.msra.mxu0 0.0
    %3550 = vmatprep.subr.mxu0 0.0
    %3551 = vmatpush1.msra.mxu0 0.0
    %3552 = vmatprep.subr.mxu0 0.0
    %3553 = vmatpush1.msra.mxu0 0.0
    %3554 = vmatprep.subr.mxu0 0.0
    %3555 = vmatpush1.msra.mxu0 0.0
    %3556 = vmatprep.subr.mxu0 0.0
    %3557 = vmatpush1.msra.mxu0 0.0
    %3558 = vmatprep.subr.mxu0 0.0
    %3559 = vmatpush1.msra.mxu0 0.0
    %3560 = vmatprep.subr.mxu0 0.0
    %3561 = vmatpush1.msra.mxu0 0.0
    %3562 = vmatprep.subr.mxu0 0.0
    %3563 = vmatpush1.msra.mxu0 0.0
    %3564 = vmatprep.subr.mxu0 0.0
    %3565 = vmatpush1.msra.mxu0 0.0
    %3566 = vmatprep.mubr.f32.mxu0 0.0
    %3567 = vmatmul.mubr.f32.gmra.mrb[0].mxu0 %v3308
    %v3568 = vpop.f32.mrb[0].mxu0
    %v3569 = vadd.f32 0.0, %v3568
    %v3570 = vpop.f32.mrb[0].mxu0
    %3571 = vmatprep.mubr.f32.mxu0 0.0
    %3572 = vmatmul.mubr.f32.gmra.mrb[0].mxu0 %v3311
    %v3573 = vpop.f32.mrb[0].mxu0
    %v3574 = vadd.f32 0.0, %v3573
    %v3575 = vpop.f32.mrb[0].mxu0
    %3576 = vmatprep.mubr.f32.mxu0 0.0
    %3577 = vmatmul.mubr.f32.gmra.mrb[0].mxu0 %v3314
    %v3578 = vpop.f32.mrb[0].mxu0
    %v3579 = vadd.f32 0.0, %v3578
    %v3580 = vpop.f32.mrb[0].mxu0
    %3581 = vmatprep.mubr.f32.mxu0 0.0
    %3582 = vmatmul.mubr.f32.gmra.mrb[0].mxu0 %v3317
    %v3583 = vpop.f32.mrb[0].mxu0
    %v3584 = vadd.f32 0.0, %v3583
    %v3585 = vpop.f32.mrb[0].mxu0
    %3586 = vmatprep.mubr.f32.mxu0 0.0
    %3587 = vmatmul.mubr.f32.gmra.mrb[0].mxu0 %v3320
    %v3588 = vpop.f32.mrb[0].mxu0
    %v3589 = vadd.f32 0.0, %v3588
    %v3590 = vpop.f32.mrb[0].mxu0
    %3591 = vmatprep.mubr.f32.mxu0 0.0
    %3592 = vmatmul.mubr.f32.gmra.mrb[0].mxu0 %v3323
    %v3593 = vpop.f32.mrb[0].mxu0
    %v3594 = vadd.f32 0.0, %v3593
    %v3595 = vpop.f32.mrb[0].mxu0
    %3596 = vmatprep.mubr.f32.mxu0 0.0
    %3597 = vmatmul.mubr.f32.gmra.mrb[0].mxu0 %v3326
    %v3598 = vpop.f32.mrb[0].mxu0
    %v3599 = vadd.f32 0.0, %v3598
    %v3600 = vpop.f32.mrb[0].mxu0
    %3601 = vmatprep.mubr.f32.mxu0 0.0
    %3602 = vmatmul.mubr.f32.gmra.mrb[0].mxu0 %v3329
    %v3603 = vpop.f32.mrb[0].mxu0
    %v3604 = vadd.f32 0.0, %v3603
    %v3605 = vpop.f32.mrb[0].mxu0
    %3606 = vmatprep.mubr.f32.mxu0 0.0
    %3607 = vmatmul.mubr.f32.gmra.mrb[0].mxu0 %v3332
    %v3608 = vpop.f32.mrb[0].mxu0
    %v3609 = vadd.f32 0.0, %v3608
    %v3610 = vpop.f32.mrb[0].mxu0
    %3611 = vmatprep.mubr.f32.mxu0 0.0
    %3612 = vmatmul.mubr.f32.gmra.mrb[0].mxu0 %v3335
    %v3613 = vpop.f32.mrb[0].mxu0
    %v3614 = vadd.f32 0.0, %v3613
    %v3615 = vpop.f32.mrb[0].mxu0
    %3616 = vmatprep.mubr.f32.mxu0 0.0
    %3617 = vmatmul.mubr.f32.gmra.mrb[0].mxu0 %v3338
    %v3618 = vpop.f32.mrb[0].mxu0
    %v3619 = vadd.f32 0.0, %v3618
    %v3620 = vpop.f32.mrb[0].mxu0
    %3621 = vmatprep.mubr.f32.mxu0 0.0
    %3622 = vmatmul.mubr.f32.gmra.mrb[0].mxu0 %v3341
    %v3623 = vpop.f32.mrb[0].mxu0
    %v3624 = vadd.f32 0.0, %v3623
    %v3625 = vpop.f32.mrb[0].mxu0
    %3626 = vmatprep.mubr.f32.mxu0 0.0
    %3627 = vmatmul.mubr.f32.gmra.mrb[0].mxu0 %v3344
    %v3628 = vpop.f32.mrb[0].mxu0
    %v3629 = vadd.f32 0.0, %v3628
    %v3630 = vpop.f32.mrb[0].mxu0
    %3631 = vmatprep.mubr.f32.mxu0 0.0
    %3632 = vmatmul.mubr.f32.gmra.mrb[0].mxu0 %v3347
    %v3633 = vpop.f32.mrb[0].mxu0
    %v3634 = vadd.f32 0.0, %v3633
    %v3635 = vpop.f32.mrb[0].mxu0
    %3636 = vmatprep.mubr.f32.mxu0 0.0
    %3637 = vmatmul.mubr.f32.gmra.mrb[0].mxu0 %v3350
    %v3638 = vpop.f32.mrb[0].mxu0
    %v3639 = vadd.f32 0.0, %v3638
    %v3640 = vpop.f32.mrb[0].mxu0
    %3641 = vmatprep.mubr.f32.mxu0 0.0
    %3642 = vmatmul.mubr.f32.gmra.mrb[0].mxu0 %v3353
    %v3643 = vpop.f32.mrb[0].mxu0
    %v3644 = vadd.f32 0.0, %v3643
    %v3645 = vpop.f32.mrb[0].mxu0
    %3646 = vmatprep.mubr.f32.mxu0 0.0
    %3647 = vmatmul.mubr.f32.gmra.mrb[0].mxu0 %v3356
    %v3648 = vpop.f32.mrb[0].mxu0
    %v3649 = vadd.f32 0.0, %v3648
    %v3650 = vpop.f32.mrb[0].mxu0
    %3651 = vmatprep.mubr.f32.mxu0 0.0
    %3652 = vmatmul.mubr.f32.gmra.mrb[0].mxu0 %v3359
    %v3653 = vpop.f32.mrb[0].mxu0
    %v3654 = vadd.f32 0.0, %v3653
    %v3655 = vpop.f32.mrb[0].mxu0
    %3656 = vmatprep.mubr.f32.mxu0 0.0
    %3657 = vmatmul.mubr.f32.gmra.mrb[0].mxu0 %v3362
    %v3658 = vpop.f32.mrb[0].mxu0
    %v3659 = vadd.f32 0.0, %v3658
    %v3660 = vpop.f32.mrb[0].mxu0
    %3661 = vmatprep.mubr.f32.mxu0 0.0
    %3662 = vmatmul.mubr.f32.gmra.mrb[0].mxu0 %v3365
    %v3663 = vpop.f32.mrb[0].mxu0
    %v3664 = vadd.f32 0.0, %v3663
    %v3665 = vpop.f32.mrb[0].mxu0
    %3666 = vmatprep.mubr.f32.mxu0 0.0
    %3667 = vmatmul.mubr.f32.gmra.mrb[0].mxu0 %v3368
    %v3668 = vpop.f32.mrb[0].mxu0
    %v3669 = vadd.f32 0.0, %v3668
    %v3670 = vpop.f32.mrb[0].mxu0
    %3671 = vmatprep.mubr.f32.mxu0 0.0
    %3672 = vmatmul.mubr.f32.gmra.mrb[0].mxu0 %v3371
    %v3673 = vpop.f32.mrb[0].mxu0
    %v3674 = vadd.f32 0.0, %v3673
    %v3675 = vpop.f32.mrb[0].mxu0
    %3676 = vmatprep.mubr.f32.mxu0 0.0
    %3677 = vmatmul.mubr.f32.gmra.mrb[0].mxu0 %v3374
    %v3678 = vpop.f32.mrb[0].mxu0
    %v3679 = vadd.f32 0.0, %v3678
    %v3680 = vpop.f32.mrb[0].mxu0
    %3681 = vmatprep.mubr.f32.mxu0 0.0
    %3682 = vmatmul.mubr.f32.gmra.mrb[0].mxu0 %v3377
    %v3683 = vpop.f32.mrb[0].mxu0
    %v3684 = vadd.f32 0.0, %v3683
    %v3685 = vpop.f32.mrb[0].mxu0
    %3686 = vmatprep.mubr.f32.mxu0 0.0
    %3687 = vmatmul.mubr.f32.gmra.mrb[0].mxu0 %v3380
    %v3688 = vpop.f32.mrb[0].mxu0
    %v3689 = vadd.f32 0.0, %v3688
    %v3690 = vpop.f32.mrb[0].mxu0
    %3691 = vmatprep.mubr.f32.mxu0 0.0
    %3692 = vmatmul.mubr.f32.gmra.mrb[0].mxu0 %v3383
    %v3693 = vpop.f32.mrb[0].mxu0
    %v3694 = vadd.f32 0.0, %v3693
    %v3695 = vpop.f32.mrb[0].mxu0
    %3696 = vmatprep.mubr.f32.mxu0 0.0
    %3697 = vmatmul.mubr.f32.gmra.mrb[0].mxu0 %v3386
    %v3698 = vpop.f32.mrb[0].mxu0
    %v3699 = vadd.f32 0.0, %v3698
    %v3700 = vpop.f32.mrb[0].mxu0
    %3701 = vmatprep.mubr.f32.mxu0 0.0
    %3702 = vmatmul.mubr.f32.gmra.mrb[0].mxu0 %v3389
    %v3703 = vpop.f32.mrb[0].mxu0
    %v3704 = vadd.f32 0.0, %v3703
    %v3705 = vpop.f32.mrb[0].mxu0
    %3706 = vmatprep.mubr.f32.mxu0 0.0
    %3707 = vmatmul.mubr.f32.gmra.mrb[0].mxu0 %v3392
    %v3708 = vpop.f32.mrb[0].mxu0
    %v3709 = vadd.f32 0.0, %v3708
    %v3710 = vpop.f32.mrb[0].mxu0
    %3711 = vmatprep.mubr.f32.mxu0 0.0
    %3712 = vmatmul.mubr.f32.gmra.mrb[0].mxu0 %v3395
    %v3713 = vpop.f32.mrb[0].mxu0
    %v3714 = vadd.f32 0.0, %v3713
    %v3715 = vpop.f32.mrb[0].mxu0
    %3716 = vmatprep.mubr.f32.mxu0 0.0
    %3717 = vmatmul.mubr.f32.gmra.mrb[0].mxu0 %v3398
    %v3718 = vpop.f32.mrb[0].mxu0
    %v3719 = vadd.f32 0.0, %v3718
    %v3720 = vpop.f32.mrb[0].mxu0
    %3721 = vmatprep.mubr.f32.mxu0 0.0
    %3722 = vmatmul.mubr.f32.gmra.mrb[0].mxu0 %v3401
    %v3723 = vpop.f32.mrb[0].mxu0
    %v3724 = vadd.f32 0.0, %v3723
    %v3725 = vpop.f32.mrb[0].mxu0
    %3726 = vmatprep.mubr.f32.mxu0 0.0
    %3727 = vmatmul.mubr.f32.gmra.mrb[0].mxu0 %v3404
    %v3728 = vpop.f32.mrb[0].mxu0
    %v3729 = vadd.f32 0.0, %v3728
    %v3730 = vpop.f32.mrb[0].mxu0
    %3731 = vmatprep.mubr.f32.mxu0 0.0
    %3732 = vmatmul.mubr.f32.gmra.mrb[0].mxu0 %v3407
    %v3733 = vpop.f32.mrb[0].mxu0
    %v3734 = vadd.f32 0.0, %v3733
    %v3735 = vpop.f32.mrb[0].mxu0
    %3736 = vmatprep.mubr.f32.mxu0 0.0
    %3737 = vmatmul.mubr.f32.gmra.mrb[0].mxu0 %v3410
    %v3738 = vpop.f32.mrb[0].mxu0
    %v3739 = vadd.f32 0.0, %v3738
    %v3740 = vpop.f32.mrb[0].mxu0
    %3741 = vmatprep.mubr.f32.mxu0 0.0
    %3742 = vmatmul.mubr.f32.gmra.mrb[0].mxu0 %v3413
    %v3743 = vpop.f32.mrb[0].mxu0
    %v3744 = vadd.f32 0.0, %v3743
    %v3745 = vpop.f32.mrb[0].mxu0
    %3746 = vmatprep.mubr.f32.mxu0 0.0
    %3747 = vmatmul.mubr.f32.gmra.mrb[0].mxu0 %v3416
    %v3748 = vpop.f32.mrb[0].mxu0
    %v3749 = vadd.f32 0.0, %v3748
    %v3750 = vpop.f32.mrb[0].mxu0
    %3751 = vmatprep.mubr.f32.mxu0 0.0
    %3752 = vmatmul.mubr.f32.gmra.mrb[0].mxu0 %v3419
    %v3753 = vpop.f32.mrb[0].mxu0
    %v3754 = vadd.f32 0.0, %v3753
    %v3755 = vpop.f32.mrb[0].mxu0
    %3756 = vmatprep.mubr.f32.mxu0 0.0
    %3757 = vmatmul.mubr.f32.gmra.mrb[0].mxu0 %v3422
    %v3758 = vpop.f32.mrb[0].mxu0
    %v3759 = vadd.f32 0.0, %v3758
    %v3760 = vpop.f32.mrb[0].mxu0
    %3761 = vmatprep.mubr.f32.mxu0 0.0
    %3762 = vmatmul.mubr.f32.gmra.mrb[0].mxu0 %v3425
    %v3763 = vpop.f32.mrb[0].mxu0
    %v3764 = vadd.f32 0.0, %v3763
    %v3765 = vpop.f32.mrb[0].mxu0
    %3766 = vmatprep.mubr.f32.mxu0 0.0
    %3767 = vmatmul.mubr.f32.gmra.mrb[0].mxu0 %v3428
    %v3768 = vpop.f32.mrb[0].mxu0
    %v3769 = vadd.f32 0.0, %v3768
    %v3770 = vpop.f32.mrb[0].mxu0
    %3771 = vmatprep.mubr.f32.mxu0 0.0
    %3772 = vmatmul.mubr.f32.gmra.mrb[0].mxu0 %v3431
    %v3773 = vpop.f32.mrb[0].mxu0
    %v3774 = vadd.f32 0.0, %v3773
    %v3775 = vpop.f32.mrb[0].mxu0
    %3776 = vmatprep.mubr.f32.mxu0 0.0
    %3777 = vmatmul.mubr.f32.gmra.mrb[0].mxu0 %v3434
    %v3778 = vpop.f32.mrb[0].mxu0
    %v3779 = vadd.f32 0.0, %v3778
    %v3780 = vpop.f32.mrb[0].mxu0
    %3781 = vmatprep.mubr.f32.mxu0 0.0
    %3782 = vmatmul.mubr.f32.gmra.mrb[0].mxu0 %v3437
    %v3783 = vpop.f32.mrb[0].mxu0
    %v3784 = vadd.f32 0.0, %v3783
    %v3785 = vpop.f32.mrb[0].mxu0
    %3786 = vmatprep.mubr.f32.mxu0 0.0
    %3787 = vmatmul.mubr.f32.gmra.mrb[0].mxu0 %v3440
    %v3788 = vpop.f32.mrb[0].mxu0
    %v3789 = vadd.f32 0.0, %v3788
    %v3790 = vpop.f32.mrb[0].mxu0
    %3791 = vmatprep.mubr.f32.mxu0 0.0
    %3792 = vmatmul.mubr.f32.gmra.mrb[0].mxu0 %v3443
    %v3793 = vpop.f32.mrb[0].mxu0
    %v3794 = vadd.f32 0.0, %v3793
    %v3795 = vpop.f32.mrb[0].mxu0
    %3796 = vmatprep.mubr.f32.mxu0 0.0
    %3797 = vmatmul.mubr.f32.gmra.mrb[0].mxu0 %v3446
    %v3798 = vpop.f32.mrb[0].mxu0
    %v3799 = vadd.f32 0.0, %v3798
    %v3800 = vpop.f32.mrb[0].mxu0
    %3801 = vmatprep.mubr.f32.mxu0 0.0
    %3802 = vmatmul.mubr.f32.gmra.mrb[0].mxu0 %v3449
    %v3803 = vpop.f32.mrb[0].mxu0
    %v3804 = vadd.f32 0.0, %v3803
    %v3805 = vpop.f32.mrb[0].mxu0
    %3806 = vmatprep.mubr.f32.mxu0 0.0
    %3807 = vmatmul.mubr.f32.gmra.mrb[0].mxu0 %v3452
    %v3808 = vpop.f32.mrb[0].mxu0
    %v3809 = vadd.f32 0.0, %v3808
    %v3810 = vpop.f32.mrb[0].mxu0
    %3811 = vmatprep.mubr.f32.mxu0 0.0
    %3812 = vmatmul.mubr.f32.gmra.mrb[0].mxu0 %v3455
    %v3813 = vpop.f32.mrb[0].mxu0
    %v3814 = vadd.f32 0.0, %v3813
    %v3815 = vpop.f32.mrb[0].mxu0
    %3816 = vmatprep.mubr.f32.mxu0 0.0
    %3817 = vmatmul.mubr.f32.gmra.mrb[0].mxu0 %v3458
    %v3818 = vpop.f32.mrb[0].mxu0
    %v3819 = vadd.f32 0.0, %v3818
    %v3820 = vpop.f32.mrb[0].mxu0
    %3821 = vmatprep.mubr.f32.mxu0 0.0
    %3822 = vmatmul.mubr.f32.gmra.mrb[0].mxu0 %v3461
    %v3823 = vpop.f32.mrb[0].mxu0
    %v3824 = vadd.f32 0.0, %v3823
    %v3825 = vpop.f32.mrb[0].mxu0
    %3826 = vmatprep.mubr.f32.mxu0 0.0
    %3827 = vmatmul.mubr.f32.gmra.mrb[0].mxu0 %v3464
    %v3828 = vpop.f32.mrb[0].mxu0
    %v3829 = vadd.f32 0.0, %v3828
    %v3830 = vpop.f32.mrb[0].mxu0
    %3831 = vmatprep.mubr.f32.mxu0 0.0
    %3832 = vmatmul.mubr.f32.gmra.mrb[0].mxu0 %v3467
    %v3833 = vpop.f32.mrb[0].mxu0
    %v3834 = vadd.f32 0.0, %v3833
    %v3835 = vpop.f32.mrb[0].mxu0
    %3836 = vmatprep.mubr.f32.mxu0 0.0
    %3837 = vmatmul.mubr.f32.gmra.mrb[0].mxu0 %v3470
    %v3838 = vpop.f32.mrb[0].mxu0
    %v3839 = vadd.f32 0.0, %v3838
    %v3840 = vpop.f32.mrb[0].mxu0
    %3841 = vmatprep.mubr.f32.mxu0 0.0
    %3842 = vmatmul.mubr.f32.gmra.mrb[0].mxu0 %v3473
    %v3843 = vpop.f32.mrb[0].mxu0
    %v3844 = vadd.f32 0.0, %v3843
    %v3845 = vpop.f32.mrb[0].mxu0
    %3846 = vmatprep.mubr.f32.mxu0 0.0
    %3847 = vmatmul.mubr.f32.gmra.mrb[0].mxu0 %v3476
    %v3848 = vpop.f32.mrb[0].mxu0
    %v3849 = vadd.f32 0.0, %v3848
    %v3850 = vpop.f32.mrb[0].mxu0
    %3851 = vmatprep.mubr.f32.mxu0 0.0
    %3852 = vmatmul.mubr.f32.gmra.mrb[0].mxu0 %v3479
    %v3853 = vpop.f32.mrb[0].mxu0
    %v3854 = vadd.f32 0.0, %v3853
    %v3855 = vpop.f32.mrb[0].mxu0
    %3856 = vmatprep.mubr.f32.mxu0 0.0
    %3857 = vmatmul.mubr.f32.gmra.mrb[0].mxu0 %v3482
    %v3858 = vpop.f32.mrb[0].mxu0
    %v3859 = vadd.f32 0.0, %v3858
    %v3860 = vpop.f32.mrb[0].mxu0
    %3861 = vmatprep.mubr.f32.mxu0 0.0
    %3862 = vmatmul.mubr.f32.gmra.mrb[0].mxu0 %v3485
    %v3863 = vpop.f32.mrb[0].mxu0
    %v3864 = vadd.f32 0.0, %v3863
    %v3865 = vpop.f32.mrb[0].mxu0
    %3866 = vmatprep.mubr.f32.mxu0 0.0
    %3867 = vmatmul.mubr.f32.gmra.mrb[0].mxu0 %v3488
    %v3868 = vpop.f32.mrb[0].mxu0
    %v3869 = vadd.f32 0.0, %v3868
    %v3870 = vpop.f32.mrb[0].mxu0
    %3871 = vmatprep.mubr.f32.mxu0 0.0
    %3872 = vmatmul.mubr.f32.gmra.mrb[0].mxu0 %v3491
    %v3873 = vpop.f32.mrb[0].mxu0
    %v3874 = vadd.f32 0.0, %v3873
    %v3875 = vpop.f32.mrb[0].mxu0
    %3876 = vmatprep.mubr.f32.mxu0 0.0
    %3877 = vmatmul.mubr.f32.gmra.mrb[0].mxu0 %v3494
    %v3878 = vpop.f32.mrb[0].mxu0
    %v3879 = vadd.f32 0.0, %v3878
    %v3880 = vpop.f32.mrb[0].mxu0
    %3881 = vmatprep.mubr.f32.mxu0 0.0
    %3882 = vmatmul.mubr.f32.gmra.mrb[0].mxu0 %v3497
    %v3883 = vpop.f32.mrb[0].mxu0
    %v3884 = vadd.f32 0.0, %v3883
    %v3885 = vpop.f32.mrb[0].mxu0
    %3886 = vdwg.mxu0
    %v3887 = vld [vmem:[#allocation2] sm:$0xff]
    %v3888 = vld [vmem:[#allocation2 + $0x8] sm:$0xff]
    %v3889 = vld [vmem:[#allocation2 + $0x10] sm:$0xff]
    %v3890 = vld [vmem:[#allocation2 + $0x18] sm:$0xff]
    %v3891 = vld [vmem:[#allocation2 + $0x20] sm:$0xff]
    %v3892 = vld [vmem:[#allocation2 + $0x28] sm:$0xff]
    %v3893 = vld [vmem:[#allocation2 + $0x30] sm:$0xff]
    %v3894 = vld [vmem:[#allocation2 + $0x38] sm:$0xff]
    %v3895 = vld [vmem:[#allocation2 + $0x40] sm:$0xff]
    %v3896 = vld [vmem:[#allocation2 + $0x48] sm:$0xff]
    %v3897 = vld [vmem:[#allocation2 + $0x50] sm:$0xff]
    %v3898 = vld [vmem:[#allocation2 + $0x58] sm:$0xff]
    %v3899 = vld [vmem:[#allocation2 + $0x60] sm:$0xff]
    %v3900 = vld [vmem:[#allocation2 + $0x68] sm:$0xff]
    %v3901 = vld [vmem:[#allocation2 + $0x70] sm:$0xff]
    %v3902 = vld [vmem:[#allocation2 + $0x78] sm:$0xff]
    %v3903 = vld [vmem:[#allocation2 + $0x80] sm:$0xff]
    %v3904 = vld [vmem:[#allocation2 + $0x88] sm:$0xff]
    %v3905 = vld [vmem:[#allocation2 + $0x90] sm:$0xff]
    %v3906 = vld [vmem:[#allocation2 + $0x98] sm:$0xff]
    %v3907 = vld [vmem:[#allocation2 + $0xa0] sm:$0xff]
    %v3908 = vld [vmem:[#allocation2 + $0xa8] sm:$0xff]
    %v3909 = vld [vmem:[#allocation2 + $0xb0] sm:$0xff]
    %v3910 = vld [vmem:[#allocation2 + $0xb8] sm:$0xff]
    %v3911 = vld [vmem:[#allocation2 + $0xc0] sm:$0xff]
    %v3912 = vld [vmem:[#allocation2 + $0xc8] sm:$0xff]
    %v3913 = vld [vmem:[#allocation2 + $0xd0] sm:$0xff]
    %v3914 = vld [vmem:[#allocation2 + $0xd8] sm:$0xff]
    %v3915 = vld [vmem:[#allocation2 + $0xe0] sm:$0xff]
    %v3916 = vld [vmem:[#allocation2 + $0xe8] sm:$0xff]
    %v3917 = vld [vmem:[#allocation2 + $0xf0] sm:$0xff]
    %v3918 = vld [vmem:[#allocation2 + $0xf8] sm:$0xff]
    %v3919 = vld [vmem:[#allocation2 + $0x100] sm:$0xff]
    %v3920 = vld [vmem:[#allocation2 + $0x108] sm:$0xff]
    %v3921 = vld [vmem:[#allocation2 + $0x110] sm:$0xff]
    %v3922 = vld [vmem:[#allocation2 + $0x118] sm:$0xff]
    %v3923 = vld [vmem:[#allocation2 + $0x120] sm:$0xff]
    %v3924 = vld [vmem:[#allocation2 + $0x128] sm:$0xff]
    %v3925 = vld [vmem:[#allocation2 + $0x130] sm:$0xff]
    %v3926 = vld [vmem:[#allocation2 + $0x138] sm:$0xff]
    %v3927 = vld [vmem:[#allocation2 + $0x140] sm:$0xff]
    %v3928 = vld [vmem:[#allocation2 + $0x148] sm:$0xff]
    %v3929 = vld [vmem:[#allocation2 + $0x150] sm:$0xff]
    %v3930 = vld [vmem:[#allocation2 + $0x158] sm:$0xff]
    %v3931 = vld [vmem:[#allocation2 + $0x160] sm:$0xff]
    %v3932 = vld [vmem:[#allocation2 + $0x168] sm:$0xff]
    %v3933 = vld [vmem:[#allocation2 + $0x170] sm:$0xff]
    %v3934 = vld [vmem:[#allocation2 + $0x178] sm:$0xff]
    %v3935 = vld [vmem:[#allocation2 + $0x180] sm:$0xff]
    %v3936 = vld [vmem:[#allocation2 + $0x188] sm:$0xff]
    %v3937 = vld [vmem:[#allocation2 + $0x190] sm:$0xff]
    %v3938 = vld [vmem:[#allocation2 + $0x198] sm:$0xff]
    %v3939 = vld [vmem:[#allocation2 + $0x1a0] sm:$0xff]
    %v3940 = vld [vmem:[#allocation2 + $0x1a8] sm:$0xff]
    %v3941 = vld [vmem:[#allocation2 + $0x1b0] sm:$0xff]
    %v3942 = vld [vmem:[#allocation2 + $0x1b8] sm:$0xff]
    %v3943 = vld [vmem:[#allocation2 + $0x1c0] sm:$0xff]
    %v3944 = vld [vmem:[#allocation2 + $0x1c8] sm:$0xff]
    %v3945 = vld [vmem:[#allocation2 + $0x1d0] sm:$0xff]
    %v3946 = vld [vmem:[#allocation2 + $0x1d8] sm:$0xff]
    %v3947 = vld [vmem:[#allocation2 + $0x1e0] sm:$0xff]
    %v3948 = vld [vmem:[#allocation2 + $0x1e8] sm:$0xff]
    %v3949 = vld [vmem:[#allocation2 + $0x1f0] sm:$0xff]
    %v3950 = vld [vmem:[#allocation2 + $0x1f8] sm:$0xff]
    %v3951 = vadd.f32 %v3887, %v3569
    %v3952 = vadd.f32 %v3888, %v3574
    %v3953 = vadd.f32 %v3889, %v3579
    %v3954 = vadd.f32 %v3890, %v3584
    %v3955 = vadd.f32 %v3891, %v3589
    %v3956 = vadd.f32 %v3892, %v3594
    %v3957 = vadd.f32 %v3893, %v3599
    %v3958 = vadd.f32 %v3894, %v3604
    %v3959 = vadd.f32 %v3895, %v3609
    %v3960 = vadd.f32 %v3896, %v3614
    %v3961 = vadd.f32 %v3897, %v3619
    %v3962 = vadd.f32 %v3898, %v3624
    %v3963 = vadd.f32 %v3899, %v3629
    %v3964 = vadd.f32 %v3900, %v3634
    %v3965 = vadd.f32 %v3901, %v3639
    %v3966 = vadd.f32 %v3902, %v3644
    %v3967 = vadd.f32 %v3903, %v3649
    %v3968 = vadd.f32 %v3904, %v3654
    %v3969 = vadd.f32 %v3905, %v3659
    %v3970 = vadd.f32 %v3906, %v3664
    %v3971 = vadd.f32 %v3907, %v3669
    %v3972 = vadd.f32 %v3908, %v3674
    %v3973 = vadd.f32 %v3909, %v3679
    %v3974 = vadd.f32 %v3910, %v3684
    %v3975 = vadd.f32 %v3911, %v3689
    %v3976 = vadd.f32 %v3912, %v3694
    %v3977 = vadd.f32 %v3913, %v3699
    %v3978 = vadd.f32 %v3914, %v3704
    %v3979 = vadd.f32 %v3915, %v3709
    %v3980 = vadd.f32 %v3916, %v3714
    %v3981 = vadd.f32 %v3917, %v3719
    %v3982 = vadd.f32 %v3918, %v3724
    %v3983 = vadd.f32 %v3919, %v3729
    %v3984 = vadd.f32 %v3920, %v3734
    %v3985 = vadd.f32 %v3921, %v3739
    %v3986 = vadd.f32 %v3922, %v3744
    %v3987 = vadd.f32 %v3923, %v3749
    %v3988 = vadd.f32 %v3924, %v3754
    %v3989 = vadd.f32 %v3925, %v3759
    %v3990 = vadd.f32 %v3926, %v3764
    %v3991 = vadd.f32 %v3927, %v3769
    %v3992 = vadd.f32 %v3928, %v3774
    %v3993 = vadd.f32 %v3929, %v3779
    %v3994 = vadd.f32 %v3930, %v3784
    %v3995 = vadd.f32 %v3931, %v3789
    %v3996 = vadd.f32 %v3932, %v3794
    %v3997 = vadd.f32 %v3933, %v3799
    %v3998 = vadd.f32 %v3934, %v3804
    %v3999 = vadd.f32 %v3935, %v3809
    %v4000 = vadd.f32 %v3936, %v3814
    %v4001 = vadd.f32 %v3937, %v3819
    %v4002 = vadd.f32 %v3938, %v3824
    %v4003 = vadd.f32 %v3939, %v3829
    %v4004 = vadd.f32 %v3940, %v3834
    %v4005 = vadd.f32 %v3941, %v3839
    %v4006 = vadd.f32 %v3942, %v3844
    %v4007 = vadd.f32 %v3943, %v3849
    %v4008 = vadd.f32 %v3944, %v3854
    %v4009 = vadd.f32 %v3945, %v3859
    %v4010 = vadd.f32 %v3946, %v3864
    %v4011 = vadd.f32 %v3947, %v3869
    %v4012 = vadd.f32 %v3948, %v3874
    %v4013 = vadd.f32 %v3949, %v3879
    %v4014 = vadd.f32 %v3950, %v3884
    %4015 = vst [vmem:[#allocation2] sm:$0xff] %v3951
    %4016 = vst [vmem:[#allocation2 + $0x8] sm:$0xff] %v3952
    %4017 = vst [vmem:[#allocation2 + $0x10] sm:$0xff] %v3953
    %4018 = vst [vmem:[#allocation2 + $0x18] sm:$0xff] %v3954
    %4019 = vst [vmem:[#allocation2 + $0x20] sm:$0xff] %v3955
    %4020 = vst [vmem:[#allocation2 + $0x28] sm:$0xff] %v3956
    %4021 = vst [vmem:[#allocation2 + $0x30] sm:$0xff] %v3957
    %4022 = vst [vmem:[#allocation2 + $0x38] sm:$0xff] %v3958
    %4023 = vst [vmem:[#allocation2 + $0x40] sm:$0xff] %v3959
    %4024 = vst [vmem:[#allocation2 + $0x48] sm:$0xff] %v3960
    %4025 = vst [vmem:[#allocation2 + $0x50] sm:$0xff] %v3961
    %4026 = vst [vmem:[#allocation2 + $0x58] sm:$0xff] %v3962
    %4027 = vst [vmem:[#allocation2 + $0x60] sm:$0xff] %v3963
    %4028 = vst [vmem:[#allocation2 + $0x68] sm:$0xff] %v3964
    %4029 = vst [vmem:[#allocation2 + $0x70] sm:$0xff] %v3965
    %4030 = vst [vmem:[#allocation2 + $0x78] sm:$0xff] %v3966
    %4031 = vst [vmem:[#allocation2 + $0x80] sm:$0xff] %v3967
    %4032 = vst [vmem:[#allocation2 + $0x88] sm:$0xff] %v3968
    %4033 = vst [vmem:[#allocation2 + $0x90] sm:$0xff] %v3969
    %4034 = vst [vmem:[#allocation2 + $0x98] sm:$0xff] %v3970
    %4035 = vst [vmem:[#allocation2 + $0xa0] sm:$0xff] %v3971
    %4036 = vst [vmem:[#allocation2 + $0xa8] sm:$0xff] %v3972
    %4037 = vst [vmem:[#allocation2 + $0xb0] sm:$0xff] %v3973
    %4038 = vst [vmem:[#allocation2 + $0xb8] sm:$0xff] %v3974
    %4039 = vst [vmem:[#allocation2 + $0xc0] sm:$0xff] %v3975
    %4040 = vst [vmem:[#allocation2 + $0xc8] sm:$0xff] %v3976
    %4041 = vst [vmem:[#allocation2 + $0xd0] sm:$0xff] %v3977
    %4042 = vst [vmem:[#allocation2 + $0xd8] sm:$0xff] %v3978
    %4043 = vst [vmem:[#allocation2 + $0xe0] sm:$0xff] %v3979
    %4044 = vst [vmem:[#allocation2 + $0xe8] sm:$0xff] %v3980
    %4045 = vst [vmem:[#allocation2 + $0xf0] sm:$0xff] %v3981
    %4046 = vst [vmem:[#allocation2 + $0xf8] sm:$0xff] %v3982
    %4047 = vst [vmem:[#allocation2 + $0x100] sm:$0xff] %v3983
    %4048 = vst [vmem:[#allocation2 + $0x108] sm:$0xff] %v3984
    %4049 = vst [vmem:[#allocation2 + $0x110] sm:$0xff] %v3985
    %4050 = vst [vmem:[#allocation2 + $0x118] sm:$0xff] %v3986
    %4051 = vst [vmem:[#allocation2 + $0x120] sm:$0xff] %v3987
    %4052 = vst [vmem:[#allocation2 + $0x128] sm:$0xff] %v3988
    %4053 = vst [vmem:[#allocation2 + $0x130] sm:$0xff] %v3989
    %4054 = vst [vmem:[#allocation2 + $0x138] sm:$0xff] %v3990
    %4055 = vst [vmem:[#allocation2 + $0x140] sm:$0xff] %v3991
    %4056 = vst [vmem:[#allocation2 + $0x148] sm:$0xff] %v3992
    %4057 = vst [vmem:[#allocation2 + $0x150] sm:$0xff] %v3993
    %4058 = vst [vmem:[#allocation2 + $0x158] sm:$0xff] %v3994
    %4059 = vst [vmem:[#allocation2 + $0x160] sm:$0xff] %v3995
    %4060 = vst [vmem:[#allocation2 + $0x168] sm:$0xff] %v3996
    %4061 = vst [vmem:[#allocation2 + $0x170] sm:$0xff] %v3997
    %4062 = vst [vmem:[#allocation2 + $0x178] sm:$0xff] %v3998
    %4063 = vst [vmem:[#allocation2 + $0x180] sm:$0xff] %v3999
    %4064 = vst [vmem:[#allocation2 + $0x188] sm:$0xff] %v4000
    %4065 = vst [vmem:[#allocation2 + $0x190] sm:$0xff] %v4001
    %4066 = vst [vmem:[#allocation2 + $0x198] sm:$0xff] %v4002
    %4067 = vst [vmem:[#allocation2 + $0x1a0] sm:$0xff] %v4003
    %4068 = vst [vmem:[#allocation2 + $0x1a8] sm:$0xff] %v4004
    %4069 = vst [vmem:[#allocation2 + $0x1b0] sm:$0xff] %v4005
    %4070 = vst [vmem:[#allocation2 + $0x1b8] sm:$0xff] %v4006
    %4071 = vst [vmem:[#allocation2 + $0x1c0] sm:$0xff] %v4007
    %4072 = vst [vmem:[#allocation2 + $0x1c8] sm:$0xff] %v4008
    %4073 = vst [vmem:[#allocation2 + $0x1d0] sm:$0xff] %v4009
    %4074 = vst [vmem:[#allocation2 + $0x1d8] sm:$0xff] %v4010
    %4075 = vst [vmem:[#allocation2 + $0x1e0] sm:$0xff] %v4011
    %4076 = vst [vmem:[#allocation2 + $0x1e8] sm:$0xff] %v4012
    %4077 = vst [vmem:[#allocation2 + $0x1f0] sm:$0xff] %v4013
    %4078 = vst [vmem:[#allocation2 + $0x1f8] sm:$0xff] %v4014
    %v4079 = vld [vmem:[%s2402 + $0x2] sm:$0xff]
    %v4080 = vld [vmem:[%s2402 + $0xa] sm:$0xff]
    %v4081 = vld [vmem:[%s2402 + $0x1a] sm:$0xff]
    %v4082 = vld [vmem:[%s2402 + $0x22] sm:$0xff]
    %v4083 = vld [vmem:[%s2402 + $0x32] sm:$0xff]
    %v4084 = vld [vmem:[%s2402 + $0x3a] sm:$0xff]
    %v4085 = vld [vmem:[%s2402 + $0x4a] sm:$0xff]
    %v4086 = vld [vmem:[%s2402 + $0x52] sm:$0xff]
    %v4087 = vld [vmem:[%s2402 + $0x62] sm:$0xff]
    %v4088 = vld [vmem:[%s2402 + $0x6a] sm:$0xff]
    %v4089 = vld [vmem:[%s2402 + $0x7a] sm:$0xff]
    %v4090 = vld [vmem:[%s2402 + $0x82] sm:$0xff]
    %v4091 = vld [vmem:[%s2402 + $0x92] sm:$0xff]
    %v4092 = vld [vmem:[%s2402 + $0x9a] sm:$0xff]
    %v4093 = vld [vmem:[%s2402 + $0xaa] sm:$0xff]
    %v4094 = vld [vmem:[%s2402 + $0xb2] sm:$0xff]
    %v4095 = vld [vmem:[%s2402 + $0xc2] sm:$0xff]
    %v4096 = vld [vmem:[%s2402 + $0xca] sm:$0xff]
    %v4097 = vld [vmem:[%s2402 + $0xda] sm:$0xff]
    %v4098 = vld [vmem:[%s2402 + $0xe2] sm:$0xff]
    %v4099 = vld [vmem:[%s2402 + $0xf2] sm:$0xff]
    %v4100 = vld [vmem:[%s2402 + $0xfa] sm:$0xff]
    %v4101 = vld [vmem:[%s2402 + $0x10a] sm:$0xff]
    %v4102 = vld [vmem:[%s2402 + $0x112] sm:$0xff]
    %v4103 = vld [vmem:[%s2402 + $0x122] sm:$0xff]
    %v4104 = vld [vmem:[%s2402 + $0x12a] sm:$0xff]
    %v4105 = vld [vmem:[%s2402 + $0x13a] sm:$0xff]
    %v4106 = vld [vmem:[%s2402 + $0x142] sm:$0xff]
    %v4107 = vld [vmem:[%s2402 + $0x152] sm:$0xff]
    %v4108 = vld [vmem:[%s2402 + $0x15a] sm:$0xff]
    %v4109 = vld [vmem:[%s2402 + $0x16a] sm:$0xff]
    %v4110 = vld [vmem:[%s2402 + $0x172] sm:$0xff]
    %v4111 = vld [vmem:[%s2402 + $0x1b2] sm:$0xff]
    %v4112 = vld [vmem:[%s2402 + $0x1ba] sm:$0xff]
    %v4113 = vld [vmem:[%s2402 + $0x1ca] sm:$0xff]
    %v4114 = vld [vmem:[%s2402 + $0x1d2] sm:$0xff]
    %v4115 = vld [vmem:[%s2402 + $0x1e2] sm:$0xff]
    %v4116 = vld [vmem:[%s2402 + $0x1ea] sm:$0xff]
    %v4117 = vld [vmem:[%s2402 + $0x1fa] sm:$0xff]
    %v4118 = vld [vmem:[%s2402 + $0x202] sm:$0xff]
    %v4119 = vld [vmem:[%s2402 + $0x212] sm:$0xff]
    %v4120 = vld [vmem:[%s2402 + $0x21a] sm:$0xff]
    %v4121 = vld [vmem:[%s2402 + $0x22a] sm:$0xff]
    %v4122 = vld [vmem:[%s2402 + $0x232] sm:$0xff]
    %v4123 = vld [vmem:[%s2402 + $0x242] sm:$0xff]
    %v4124 = vld [vmem:[%s2402 + $0x24a] sm:$0xff]
    %v4125 = vld [vmem:[%s2402 + $0x25a] sm:$0xff]
    %v4126 = vld [vmem:[%s2402 + $0x262] sm:$0xff]
    %v4127 = vld [vmem:[%s2402 + $0x272] sm:$0xff]
    %v4128 = vld [vmem:[%s2402 + $0x27a] sm:$0xff]
    %v4129 = vld [vmem:[%s2402 + $0x28a] sm:$0xff]
    %v4130 = vld [vmem:[%s2402 + $0x292] sm:$0xff]
    %v4131 = vld [vmem:[%s2402 + $0x2a2] sm:$0xff]
    %v4132 = vld [vmem:[%s2402 + $0x2aa] sm:$0xff]
    %v4133 = vld [vmem:[%s2402 + $0x2ba] sm:$0xff]
    %v4134 = vld [vmem:[%s2402 + $0x2c2] sm:$0xff]
    %v4135 = vld [vmem:[%s2402 + $0x2d2] sm:$0xff]
    %v4136 = vld [vmem:[%s2402 + $0x2da] sm:$0xff]
    %v4137 = vld [vmem:[%s2402 + $0x2ea] sm:$0xff]
    %v4138 = vld [vmem:[%s2402 + $0x2f2] sm:$0xff]
    %v4139 = vld [vmem:[%s2402 + $0x302] sm:$0xff]
    %v4140 = vld [vmem:[%s2402 + $0x30a] sm:$0xff]
    %v4141 = vld [vmem:[%s2402 + $0x31a] sm:$0xff]
    %v4142 = vld [vmem:[%s2402 + $0x322] sm:$0xff]
    %s4143 = scalar_lea.vmem %s1, 20
    %v4144 = vld [vmem:[%s4143] sm:$0xf]
    %v4146 = vsel %vm80, %v4079, 0
    %v4149 = vsel %vm80, %v4080, 0
    %v4152 = vsel %vm80, %v4081, 0
    %v4155 = vsel %vm80, %v4082, 0
    %v4158 = vsel %vm80, %v4083, 0
    %v4161 = vsel %vm80, %v4084, 0
    %v4164 = vsel %vm80, %v4085, 0
    %v4167 = vsel %vm80, %v4086, 0
    %v4170 = vsel %vm80, %v4087, 0
    %v4173 = vsel %vm80, %v4088, 0
    %v4176 = vsel %vm80, %v4089, 0
    %v4179 = vsel %vm80, %v4090, 0
    %v4182 = vsel %vm80, %v4091, 0
    %v4185 = vsel %vm80, %v4092, 0
    %v4188 = vsel %vm80, %v4093, 0
    %v4191 = vsel %vm80, %v4094, 0
    %v4194 = vsel %vm80, %v4095, 0
    %v4197 = vsel %vm80, %v4096, 0
    %v4200 = vsel %vm80, %v4097, 0
    %v4203 = vsel %vm80, %v4098, 0
    %v4206 = vsel %vm80, %v4099, 0
    %v4209 = vsel %vm80, %v4100, 0
    %v4212 = vsel %vm80, %v4101, 0
    %v4215 = vsel %vm80, %v4102, 0
    %v4218 = vsel %vm80, %v4103, 0
    %v4221 = vsel %vm80, %v4104, 0
    %v4224 = vsel %vm80, %v4105, 0
    %v4227 = vsel %vm80, %v4106, 0
    %v4230 = vsel %vm80, %v4107, 0
    %v4233 = vsel %vm80, %v4108, 0
    %v4236 = vsel %vm80, %v4109, 0
    %v4239 = vsel %vm80, %v4110, 0
    %v4242 = vsel %vm80, %v4111, 0
    %v4245 = vsel %vm80, %v4112, 0
    %v4248 = vsel %vm80, %v4113, 0
    %v4251 = vsel %vm80, %v4114, 0
    %v4254 = vsel %vm80, %v4115, 0
    %v4257 = vsel %vm80, %v4116, 0
    %v4260 = vsel %vm80, %v4117, 0
    %v4263 = vsel %vm80, %v4118, 0
    %v4266 = vsel %vm80, %v4119, 0
    %v4269 = vsel %vm80, %v4120, 0
    %v4272 = vsel %vm80, %v4121, 0
    %v4275 = vsel %vm80, %v4122, 0
    %v4278 = vsel %vm80, %v4123, 0
    %v4281 = vsel %vm80, %v4124, 0
    %v4284 = vsel %vm80, %v4125, 0
    %v4287 = vsel %vm80, %v4126, 0
    %v4290 = vsel %vm80, %v4127, 0
    %v4293 = vsel %vm80, %v4128, 0
    %v4296 = vsel %vm80, %v4129, 0
    %v4299 = vsel %vm80, %v4130, 0
    %v4302 = vsel %vm80, %v4131, 0
    %v4305 = vsel %vm80, %v4132, 0
    %v4308 = vsel %vm80, %v4133, 0
    %v4311 = vsel %vm80, %v4134, 0
    %v4314 = vsel %vm80, %v4135, 0
    %v4317 = vsel %vm80, %v4136, 0
    %v4320 = vsel %vm80, %v4137, 0
    %v4323 = vsel %vm80, %v4138, 0
    %v4326 = vsel %vm80, %v4139, 0
    %v4329 = vsel %vm80, %v4140, 0
    %v4332 = vsel %vm80, %v4141, 0
    %v4335 = vsel %vm80, %v4142, 0
    %v4338 = vsel %vm273, %v4144, 0
    %4340 = vmatprep.subr.mxu0 0.0
    %4341 = vmatpush1.msra.mxu0 %v4338
    %4342 = vmatprep.subr.mxu0 0.0
    %4343 = vmatpush1.msra.mxu0 0.0
    %4344 = vmatprep.subr.mxu0 0.0
    %4345 = vmatpush1.msra.mxu0 0.0
    %4346 = vmatprep.subr.mxu0 0.0
    %4347 = vmatpush1.msra.mxu0 0.0
    %4348 = vmatprep.subr.mxu0 0.0
    %4349 = vmatpush1.msra.mxu0 0.0
    %4350 = vmatprep.subr.mxu0 0.0
    %4351 = vmatpush1.msra.mxu0 0.0
    %4352 = vmatprep.subr.mxu0 0.0
    %4353 = vmatpush1.msra.mxu0 0.0
    %4354 = vmatprep.subr.mxu0 0.0
    %4355 = vmatpush1.msra.mxu0 0.0
    %4356 = vmatprep.subr.mxu0 0.0
    %4357 = vmatpush1.msra.mxu0 0.0
    %4358 = vmatprep.subr.mxu0 0.0
    %4359 = vmatpush1.msra.mxu0 0.0
    %4360 = vmatprep.subr.mxu0 0.0
    %4361 = vmatpush1.msra.mxu0 0.0
    %4362 = vmatprep.subr.mxu0 0.0
    %4363 = vmatpush1.msra.mxu0 0.0
    %4364 = vmatprep.subr.mxu0 0.0
    %4365 = vmatpush1.msra.mxu0 0.0
    %4366 = vmatprep.subr.mxu0 0.0
    %4367 = vmatpush1.msra.mxu0 0.0
    %4368 = vmatprep.subr.mxu0 0.0
    %4369 = vmatpush1.msra.mxu0 0.0
    %4370 = vmatprep.subr.mxu0 0.0
    %4371 = vmatpush1.msra.mxu0 0.0
    %4372 = vmatprep.subr.mxu0 0.0
    %4373 = vmatpush1.msra.mxu0 0.0
    %4374 = vmatprep.subr.mxu0 0.0
    %4375 = vmatpush1.msra.mxu0 0.0
    %4376 = vmatprep.subr.mxu0 0.0
    %4377 = vmatpush1.msra.mxu0 0.0
    %4378 = vmatprep.subr.mxu0 0.0
    %4379 = vmatpush1.msra.mxu0 0.0
    %4380 = vmatprep.subr.mxu0 0.0
    %4381 = vmatpush1.msra.mxu0 0.0
    %4382 = vmatprep.subr.mxu0 0.0
    %4383 = vmatpush1.msra.mxu0 0.0
    %4384 = vmatprep.subr.mxu0 0.0
    %4385 = vmatpush1.msra.mxu0 0.0
    %4386 = vmatprep.subr.mxu0 0.0
    %4387 = vmatpush1.msra.mxu0 0.0
    %4388 = vmatprep.subr.mxu0 0.0
    %4389 = vmatpush1.msra.mxu0 0.0
    %4390 = vmatprep.subr.mxu0 0.0
    %4391 = vmatpush1.msra.mxu0 0.0
    %4392 = vmatprep.subr.mxu0 0.0
    %4393 = vmatpush1.msra.mxu0 0.0
    %4394 = vmatprep.subr.mxu0 0.0
    %4395 = vmatpush1.msra.mxu0 0.0
    %4396 = vmatprep.subr.mxu0 0.0
    %4397 = vmatpush1.msra.mxu0 0.0
    %4398 = vmatprep.subr.mxu0 0.0
    %4399 = vmatpush1.msra.mxu0 0.0
    %4400 = vmatprep.subr.mxu0 0.0
    %4401 = vmatpush1.msra.mxu0 0.0
    %4402 = vmatprep.subr.mxu0 0.0
    %4403 = vmatpush1.msra.mxu0 0.0
    %4404 = vmatprep.mubr.f32.mxu0 0.0
    %4405 = vmatmul.mubr.f32.gmra.mrb[0].mxu0 %v4146
    %v4406 = vpop.f32.mrb[0].mxu0
    %v4407 = vadd.f32 0.0, %v4406
    %v4408 = vpop.f32.mrb[0].mxu0
    %4409 = vmatprep.mubr.f32.mxu0 0.0
    %4410 = vmatmul.mubr.f32.gmra.mrb[0].mxu0 %v4149
    %v4411 = vpop.f32.mrb[0].mxu0
    %v4412 = vadd.f32 0.0, %v4411
    %v4413 = vpop.f32.mrb[0].mxu0
    %4414 = vmatprep.mubr.f32.mxu0 0.0
    %4415 = vmatmul.mubr.f32.gmra.mrb[0].mxu0 %v4152
    %v4416 = vpop.f32.mrb[0].mxu0
    %v4417 = vadd.f32 0.0, %v4416
    %v4418 = vpop.f32.mrb[0].mxu0
    %4419 = vmatprep.mubr.f32.mxu0 0.0
    %4420 = vmatmul.mubr.f32.gmra.mrb[0].mxu0 %v4155
    %v4421 = vpop.f32.mrb[0].mxu0
    %v4422 = vadd.f32 0.0, %v4421
    %v4423 = vpop.f32.mrb[0].mxu0
    %4424 = vmatprep.mubr.f32.mxu0 0.0
    %4425 = vmatmul.mubr.f32.gmra.mrb[0].mxu0 %v4158
    %v4426 = vpop.f32.mrb[0].mxu0
    %v4427 = vadd.f32 0.0, %v4426
    %v4428 = vpop.f32.mrb[0].mxu0
    %4429 = vmatprep.mubr.f32.mxu0 0.0
    %4430 = vmatmul.mubr.f32.gmra.mrb[0].mxu0 %v4161
    %v4431 = vpop.f32.mrb[0].mxu0
    %v4432 = vadd.f32 0.0, %v4431
    %v4433 = vpop.f32.mrb[0].mxu0
    %4434 = vmatprep.mubr.f32.mxu0 0.0
    %4435 = vmatmul.mubr.f32.gmra.mrb[0].mxu0 %v4164
    %v4436 = vpop.f32.mrb[0].mxu0
    %v4437 = vadd.f32 0.0, %v4436
    %v4438 = vpop.f32.mrb[0].mxu0
    %4439 = vmatprep.mubr.f32.mxu0 0.0
    %4440 = vmatmul.mubr.f32.gmra.mrb[0].mxu0 %v4167
    %v4441 = vpop.f32.mrb[0].mxu0
    %v4442 = vadd.f32 0.0, %v4441
    %v4443 = vpop.f32.mrb[0].mxu0
    %4444 = vmatprep.mubr.f32.mxu0 0.0
    %4445 = vmatmul.mubr.f32.gmra.mrb[0].mxu0 %v4170
    %v4446 = vpop.f32.mrb[0].mxu0
    %v4447 = vadd.f32 0.0, %v4446
    %v4448 = vpop.f32.mrb[0].mxu0
    %4449 = vmatprep.mubr.f32.mxu0 0.0
    %4450 = vmatmul.mubr.f32.gmra.mrb[0].mxu0 %v4173
    %v4451 = vpop.f32.mrb[0].mxu0
    %v4452 = vadd.f32 0.0, %v4451
    %v4453 = vpop.f32.mrb[0].mxu0
    %4454 = vmatprep.mubr.f32.mxu0 0.0
    %4455 = vmatmul.mubr.f32.gmra.mrb[0].mxu0 %v4176
    %v4456 = vpop.f32.mrb[0].mxu0
    %v4457 = vadd.f32 0.0, %v4456
    %v4458 = vpop.f32.mrb[0].mxu0
    %4459 = vmatprep.mubr.f32.mxu0 0.0
    %4460 = vmatmul.mubr.f32.gmra.mrb[0].mxu0 %v4179
    %v4461 = vpop.f32.mrb[0].mxu0
    %v4462 = vadd.f32 0.0, %v4461
    %v4463 = vpop.f32.mrb[0].mxu0
    %4464 = vmatprep.mubr.f32.mxu0 0.0
    %4465 = vmatmul.mubr.f32.gmra.mrb[0].mxu0 %v4182
    %v4466 = vpop.f32.mrb[0].mxu0
    %v4467 = vadd.f32 0.0, %v4466
    %v4468 = vpop.f32.mrb[0].mxu0
    %4469 = vmatprep.mubr.f32.mxu0 0.0
    %4470 = vmatmul.mubr.f32.gmra.mrb[0].mxu0 %v4185
    %v4471 = vpop.f32.mrb[0].mxu0
    %v4472 = vadd.f32 0.0, %v4471
    %v4473 = vpop.f32.mrb[0].mxu0
    %4474 = vmatprep.mubr.f32.mxu0 0.0
    %4475 = vmatmul.mubr.f32.gmra.mrb[0].mxu0 %v4188
    %v4476 = vpop.f32.mrb[0].mxu0
    %v4477 = vadd.f32 0.0, %v4476
    %v4478 = vpop.f32.mrb[0].mxu0
    %4479 = vmatprep.mubr.f32.mxu0 0.0
    %4480 = vmatmul.mubr.f32.gmra.mrb[0].mxu0 %v4191
    %v4481 = vpop.f32.mrb[0].mxu0
    %v4482 = vadd.f32 0.0, %v4481
    %v4483 = vpop.f32.mrb[0].mxu0
    %4484 = vmatprep.mubr.f32.mxu0 0.0
    %4485 = vmatmul.mubr.f32.gmra.mrb[0].mxu0 %v4194
    %v4486 = vpop.f32.mrb[0].mxu0
    %v4487 = vadd.f32 0.0, %v4486
    %v4488 = vpop.f32.mrb[0].mxu0
    %4489 = vmatprep.mubr.f32.mxu0 0.0
    %4490 = vmatmul.mubr.f32.gmra.mrb[0].mxu0 %v4197
    %v4491 = vpop.f32.mrb[0].mxu0
    %v4492 = vadd.f32 0.0, %v4491
    %v4493 = vpop.f32.mrb[0].mxu0
    %4494 = vmatprep.mubr.f32.mxu0 0.0
    %4495 = vmatmul.mubr.f32.gmra.mrb[0].mxu0 %v4200
    %v4496 = vpop.f32.mrb[0].mxu0
    %v4497 = vadd.f32 0.0, %v4496
    %v4498 = vpop.f32.mrb[0].mxu0
    %4499 = vmatprep.mubr.f32.mxu0 0.0
    %4500 = vmatmul.mubr.f32.gmra.mrb[0].mxu0 %v4203
    %v4501 = vpop.f32.mrb[0].mxu0
    %v4502 = vadd.f32 0.0, %v4501
    %v4503 = vpop.f32.mrb[0].mxu0
    %4504 = vmatprep.mubr.f32.mxu0 0.0
    %4505 = vmatmul.mubr.f32.gmra.mrb[0].mxu0 %v4206
    %v4506 = vpop.f32.mrb[0].mxu0
    %v4507 = vadd.f32 0.0, %v4506
    %v4508 = vpop.f32.mrb[0].mxu0
    %4509 = vmatprep.mubr.f32.mxu0 0.0
    %4510 = vmatmul.mubr.f32.gmra.mrb[0].mxu0 %v4209
    %v4511 = vpop.f32.mrb[0].mxu0
    %v4512 = vadd.f32 0.0, %v4511
    %v4513 = vpop.f32.mrb[0].mxu0
    %4514 = vmatprep.mubr.f32.mxu0 0.0
    %4515 = vmatmul.mubr.f32.gmra.mrb[0].mxu0 %v4212
    %v4516 = vpop.f32.mrb[0].mxu0
    %v4517 = vadd.f32 0.0, %v4516
    %v4518 = vpop.f32.mrb[0].mxu0
    %4519 = vmatprep.mubr.f32.mxu0 0.0
    %4520 = vmatmul.mubr.f32.gmra.mrb[0].mxu0 %v4215
    %v4521 = vpop.f32.mrb[0].mxu0
    %v4522 = vadd.f32 0.0, %v4521
    %v4523 = vpop.f32.mrb[0].mxu0
    %4524 = vmatprep.mubr.f32.mxu0 0.0
    %4525 = vmatmul.mubr.f32.gmra.mrb[0].mxu0 %v4218
    %v4526 = vpop.f32.mrb[0].mxu0
    %v4527 = vadd.f32 0.0, %v4526
    %v4528 = vpop.f32.mrb[0].mxu0
    %4529 = vmatprep.mubr.f32.mxu0 0.0
    %4530 = vmatmul.mubr.f32.gmra.mrb[0].mxu0 %v4221
    %v4531 = vpop.f32.mrb[0].mxu0
    %v4532 = vadd.f32 0.0, %v4531
    %v4533 = vpop.f32.mrb[0].mxu0
    %4534 = vmatprep.mubr.f32.mxu0 0.0
    %4535 = vmatmul.mubr.f32.gmra.mrb[0].mxu0 %v4224
    %v4536 = vpop.f32.mrb[0].mxu0
    %v4537 = vadd.f32 0.0, %v4536
    %v4538 = vpop.f32.mrb[0].mxu0
    %4539 = vmatprep.mubr.f32.mxu0 0.0
    %4540 = vmatmul.mubr.f32.gmra.mrb[0].mxu0 %v4227
    %v4541 = vpop.f32.mrb[0].mxu0
    %v4542 = vadd.f32 0.0, %v4541
    %v4543 = vpop.f32.mrb[0].mxu0
    %4544 = vmatprep.mubr.f32.mxu0 0.0
    %4545 = vmatmul.mubr.f32.gmra.mrb[0].mxu0 %v4230
    %v4546 = vpop.f32.mrb[0].mxu0
    %v4547 = vadd.f32 0.0, %v4546
    %v4548 = vpop.f32.mrb[0].mxu0
    %4549 = vmatprep.mubr.f32.mxu0 0.0
    %4550 = vmatmul.mubr.f32.gmra.mrb[0].mxu0 %v4233
    %v4551 = vpop.f32.mrb[0].mxu0
    %v4552 = vadd.f32 0.0, %v4551
    %v4553 = vpop.f32.mrb[0].mxu0
    %4554 = vmatprep.mubr.f32.mxu0 0.0
    %4555 = vmatmul.mubr.f32.gmra.mrb[0].mxu0 %v4236
    %v4556 = vpop.f32.mrb[0].mxu0
    %v4557 = vadd.f32 0.0, %v4556
    %v4558 = vpop.f32.mrb[0].mxu0
    %4559 = vmatprep.mubr.f32.mxu0 0.0
    %4560 = vmatmul.mubr.f32.gmra.mrb[0].mxu0 %v4239
    %v4561 = vpop.f32.mrb[0].mxu0
    %v4562 = vadd.f32 0.0, %v4561
    %v4563 = vpop.f32.mrb[0].mxu0
    %4564 = vmatprep.mubr.f32.mxu0 0.0
    %4565 = vmatmul.mubr.f32.gmra.mrb[0].mxu0 %v4242
    %v4566 = vpop.f32.mrb[0].mxu0
    %v4567 = vadd.f32 0.0, %v4566
    %v4568 = vpop.f32.mrb[0].mxu0
    %4569 = vmatprep.mubr.f32.mxu0 0.0
    %4570 = vmatmul.mubr.f32.gmra.mrb[0].mxu0 %v4245
    %v4571 = vpop.f32.mrb[0].mxu0
    %v4572 = vadd.f32 0.0, %v4571
    %v4573 = vpop.f32.mrb[0].mxu0
    %4574 = vmatprep.mubr.f32.mxu0 0.0
    %4575 = vmatmul.mubr.f32.gmra.mrb[0].mxu0 %v4248
    %v4576 = vpop.f32.mrb[0].mxu0
    %v4577 = vadd.f32 0.0, %v4576
    %v4578 = vpop.f32.mrb[0].mxu0
    %4579 = vmatprep.mubr.f32.mxu0 0.0
    %4580 = vmatmul.mubr.f32.gmra.mrb[0].mxu0 %v4251
    %v4581 = vpop.f32.mrb[0].mxu0
    %v4582 = vadd.f32 0.0, %v4581
    %v4583 = vpop.f32.mrb[0].mxu0
    %4584 = vmatprep.mubr.f32.mxu0 0.0
    %4585 = vmatmul.mubr.f32.gmra.mrb[0].mxu0 %v4254
    %v4586 = vpop.f32.mrb[0].mxu0
    %v4587 = vadd.f32 0.0, %v4586
    %v4588 = vpop.f32.mrb[0].mxu0
    %4589 = vmatprep.mubr.f32.mxu0 0.0
    %4590 = vmatmul.mubr.f32.gmra.mrb[0].mxu0 %v4257
    %v4591 = vpop.f32.mrb[0].mxu0
    %v4592 = vadd.f32 0.0, %v4591
    %v4593 = vpop.f32.mrb[0].mxu0
    %4594 = vmatprep.mubr.f32.mxu0 0.0
    %4595 = vmatmul.mubr.f32.gmra.mrb[0].mxu0 %v4260
    %v4596 = vpop.f32.mrb[0].mxu0
    %v4597 = vadd.f32 0.0, %v4596
    %v4598 = vpop.f32.mrb[0].mxu0
    %4599 = vmatprep.mubr.f32.mxu0 0.0
    %4600 = vmatmul.mubr.f32.gmra.mrb[0].mxu0 %v4263
    %v4601 = vpop.f32.mrb[0].mxu0
    %v4602 = vadd.f32 0.0, %v4601
    %v4603 = vpop.f32.mrb[0].mxu0
    %4604 = vmatprep.mubr.f32.mxu0 0.0
    %4605 = vmatmul.mubr.f32.gmra.mrb[0].mxu0 %v4266
    %v4606 = vpop.f32.mrb[0].mxu0
    %v4607 = vadd.f32 0.0, %v4606
    %v4608 = vpop.f32.mrb[0].mxu0
    %4609 = vmatprep.mubr.f32.mxu0 0.0
    %4610 = vmatmul.mubr.f32.gmra.mrb[0].mxu0 %v4269
    %v4611 = vpop.f32.mrb[0].mxu0
    %v4612 = vadd.f32 0.0, %v4611
    %v4613 = vpop.f32.mrb[0].mxu0
    %4614 = vmatprep.mubr.f32.mxu0 0.0
    %4615 = vmatmul.mubr.f32.gmra.mrb[0].mxu0 %v4272
    %v4616 = vpop.f32.mrb[0].mxu0
    %v4617 = vadd.f32 0.0, %v4616
    %v4618 = vpop.f32.mrb[0].mxu0
    %4619 = vmatprep.mubr.f32.mxu0 0.0
    %4620 = vmatmul.mubr.f32.gmra.mrb[0].mxu0 %v4275
    %v4621 = vpop.f32.mrb[0].mxu0
    %v4622 = vadd.f32 0.0, %v4621
    %v4623 = vpop.f32.mrb[0].mxu0
    %4624 = vmatprep.mubr.f32.mxu0 0.0
    %4625 = vmatmul.mubr.f32.gmra.mrb[0].mxu0 %v4278
    %v4626 = vpop.f32.mrb[0].mxu0
    %v4627 = vadd.f32 0.0, %v4626
    %v4628 = vpop.f32.mrb[0].mxu0
    %4629 = vmatprep.mubr.f32.mxu0 0.0
    %4630 = vmatmul.mubr.f32.gmra.mrb[0].mxu0 %v4281
    %v4631 = vpop.f32.mrb[0].mxu0
    %v4632 = vadd.f32 0.0, %v4631
    %v4633 = vpop.f32.mrb[0].mxu0
    %4634 = vmatprep.mubr.f32.mxu0 0.0
    %4635 = vmatmul.mubr.f32.gmra.mrb[0].mxu0 %v4284
    %v4636 = vpop.f32.mrb[0].mxu0
    %v4637 = vadd.f32 0.0, %v4636
    %v4638 = vpop.f32.mrb[0].mxu0
    %4639 = vmatprep.mubr.f32.mxu0 0.0
    %4640 = vmatmul.mubr.f32.gmra.mrb[0].mxu0 %v4287
    %v4641 = vpop.f32.mrb[0].mxu0
    %v4642 = vadd.f32 0.0, %v4641
    %v4643 = vpop.f32.mrb[0].mxu0
    %4644 = vmatprep.mubr.f32.mxu0 0.0
    %4645 = vmatmul.mubr.f32.gmra.mrb[0].mxu0 %v4290
    %v4646 = vpop.f32.mrb[0].mxu0
    %v4647 = vadd.f32 0.0, %v4646
    %v4648 = vpop.f32.mrb[0].mxu0
    %4649 = vmatprep.mubr.f32.mxu0 0.0
    %4650 = vmatmul.mubr.f32.gmra.mrb[0].mxu0 %v4293
    %v4651 = vpop.f32.mrb[0].mxu0
    %v4652 = vadd.f32 0.0, %v4651
    %v4653 = vpop.f32.mrb[0].mxu0
    %4654 = vmatprep.mubr.f32.mxu0 0.0
    %4655 = vmatmul.mubr.f32.gmra.mrb[0].mxu0 %v4296
    %v4656 = vpop.f32.mrb[0].mxu0
    %v4657 = vadd.f32 0.0, %v4656
    %v4658 = vpop.f32.mrb[0].mxu0
    %4659 = vmatprep.mubr.f32.mxu0 0.0
    %4660 = vmatmul.mubr.f32.gmra.mrb[0].mxu0 %v4299
    %v4661 = vpop.f32.mrb[0].mxu0
    %v4662 = vadd.f32 0.0, %v4661
    %v4663 = vpop.f32.mrb[0].mxu0
    %4664 = vmatprep.mubr.f32.mxu0 0.0
    %4665 = vmatmul.mubr.f32.gmra.mrb[0].mxu0 %v4302
    %v4666 = vpop.f32.mrb[0].mxu0
    %v4667 = vadd.f32 0.0, %v4666
    %v4668 = vpop.f32.mrb[0].mxu0
    %4669 = vmatprep.mubr.f32.mxu0 0.0
    %4670 = vmatmul.mubr.f32.gmra.mrb[0].mxu0 %v4305
    %v4671 = vpop.f32.mrb[0].mxu0
    %v4672 = vadd.f32 0.0, %v4671
    %v4673 = vpop.f32.mrb[0].mxu0
    %4674 = vmatprep.mubr.f32.mxu0 0.0
    %4675 = vmatmul.mubr.f32.gmra.mrb[0].mxu0 %v4308
    %v4676 = vpop.f32.mrb[0].mxu0
    %v4677 = vadd.f32 0.0, %v4676
    %v4678 = vpop.f32.mrb[0].mxu0
    %4679 = vmatprep.mubr.f32.mxu0 0.0
    %4680 = vmatmul.mubr.f32.gmra.mrb[0].mxu0 %v4311
    %v4681 = vpop.f32.mrb[0].mxu0
    %v4682 = vadd.f32 0.0, %v4681
    %v4683 = vpop.f32.mrb[0].mxu0
    %4684 = vmatprep.mubr.f32.mxu0 0.0
    %4685 = vmatmul.mubr.f32.gmra.mrb[0].mxu0 %v4314
    %v4686 = vpop.f32.mrb[0].mxu0
    %v4687 = vadd.f32 0.0, %v4686
    %v4688 = vpop.f32.mrb[0].mxu0
    %4689 = vmatprep.mubr.f32.mxu0 0.0
    %4690 = vmatmul.mubr.f32.gmra.mrb[0].mxu0 %v4317
    %v4691 = vpop.f32.mrb[0].mxu0
    %v4692 = vadd.f32 0.0, %v4691
    %v4693 = vpop.f32.mrb[0].mxu0
    %4694 = vmatprep.mubr.f32.mxu0 0.0
    %4695 = vmatmul.mubr.f32.gmra.mrb[0].mxu0 %v4320
    %v4696 = vpop.f32.mrb[0].mxu0
    %v4697 = vadd.f32 0.0, %v4696
    %v4698 = vpop.f32.mrb[0].mxu0
    %4699 = vmatprep.mubr.f32.mxu0 0.0
    %4700 = vmatmul.mubr.f32.gmra.mrb[0].mxu0 %v4323
    %v4701 = vpop.f32.mrb[0].mxu0
    %v4702 = vadd.f32 0.0, %v4701
    %v4703 = vpop.f32.mrb[0].mxu0
    %4704 = vmatprep.mubr.f32.mxu0 0.0
    %4705 = vmatmul.mubr.f32.gmra.mrb[0].mxu0 %v4326
    %v4706 = vpop.f32.mrb[0].mxu0
    %v4707 = vadd.f32 0.0, %v4706
    %v4708 = vpop.f32.mrb[0].mxu0
    %4709 = vmatprep.mubr.f32.mxu0 0.0
    %4710 = vmatmul.mubr.f32.gmra.mrb[0].mxu0 %v4329
    %v4711 = vpop.f32.mrb[0].mxu0
    %v4712 = vadd.f32 0.0, %v4711
    %v4713 = vpop.f32.mrb[0].mxu0
    %4714 = vmatprep.mubr.f32.mxu0 0.0
    %4715 = vmatmul.mubr.f32.gmra.mrb[0].mxu0 %v4332
    %v4716 = vpop.f32.mrb[0].mxu0
    %v4717 = vadd.f32 0.0, %v4716
    %v4718 = vpop.f32.mrb[0].mxu0
    %4719 = vmatprep.mubr.f32.mxu0 0.0
    %4720 = vmatmul.mubr.f32.gmra.mrb[0].mxu0 %v4335
    %v4721 = vpop.f32.mrb[0].mxu0
    %v4722 = vadd.f32 0.0, %v4721
    %v4723 = vpop.f32.mrb[0].mxu0
    %4724 = vdwg.mxu0
    %v4725 = vld [vmem:[#allocation2] sm:$0xff]
    %v4726 = vld [vmem:[#allocation2 + $0x8] sm:$0xff]
    %v4727 = vld [vmem:[#allocation2 + $0x10] sm:$0xff]
    %v4728 = vld [vmem:[#allocation2 + $0x18] sm:$0xff]
    %v4729 = vld [vmem:[#allocation2 + $0x20] sm:$0xff]
    %v4730 = vld [vmem:[#allocation2 + $0x28] sm:$0xff]
    %v4731 = vld [vmem:[#allocation2 + $0x30] sm:$0xff]
    %v4732 = vld [vmem:[#allocation2 + $0x38] sm:$0xff]
    %v4733 = vld [vmem:[#allocation2 + $0x40] sm:$0xff]
    %v4734 = vld [vmem:[#allocation2 + $0x48] sm:$0xff]
    %v4735 = vld [vmem:[#allocation2 + $0x50] sm:$0xff]
    %v4736 = vld [vmem:[#allocation2 + $0x58] sm:$0xff]
    %v4737 = vld [vmem:[#allocation2 + $0x60] sm:$0xff]
    %v4738 = vld [vmem:[#allocation2 + $0x68] sm:$0xff]
    %v4739 = vld [vmem:[#allocation2 + $0x70] sm:$0xff]
    %v4740 = vld [vmem:[#allocation2 + $0x78] sm:$0xff]
    %v4741 = vld [vmem:[#allocation2 + $0x80] sm:$0xff]
    %v4742 = vld [vmem:[#allocation2 + $0x88] sm:$0xff]
    %v4743 = vld [vmem:[#allocation2 + $0x90] sm:$0xff]
    %v4744 = vld [vmem:[#allocation2 + $0x98] sm:$0xff]
    %v4745 = vld [vmem:[#allocation2 + $0xa0] sm:$0xff]
    %v4746 = vld [vmem:[#allocation2 + $0xa8] sm:$0xff]
    %v4747 = vld [vmem:[#allocation2 + $0xb0] sm:$0xff]
    %v4748 = vld [vmem:[#allocation2 + $0xb8] sm:$0xff]
    %v4749 = vld [vmem:[#allocation2 + $0xc0] sm:$0xff]
    %v4750 = vld [vmem:[#allocation2 + $0xc8] sm:$0xff]
    %v4751 = vld [vmem:[#allocation2 + $0xd0] sm:$0xff]
    %v4752 = vld [vmem:[#allocation2 + $0xd8] sm:$0xff]
    %v4753 = vld [vmem:[#allocation2 + $0xe0] sm:$0xff]
    %v4754 = vld [vmem:[#allocation2 + $0xe8] sm:$0xff]
    %v4755 = vld [vmem:[#allocation2 + $0xf0] sm:$0xff]
    %v4756 = vld [vmem:[#allocation2 + $0xf8] sm:$0xff]
    %v4757 = vld [vmem:[#allocation2 + $0x100] sm:$0xff]
    %v4758 = vld [vmem:[#allocation2 + $0x108] sm:$0xff]
    %v4759 = vld [vmem:[#allocation2 + $0x110] sm:$0xff]
    %v4760 = vld [vmem:[#allocation2 + $0x118] sm:$0xff]
    %v4761 = vld [vmem:[#allocation2 + $0x120] sm:$0xff]
    %v4762 = vld [vmem:[#allocation2 + $0x128] sm:$0xff]
    %v4763 = vld [vmem:[#allocation2 + $0x130] sm:$0xff]
    %v4764 = vld [vmem:[#allocation2 + $0x138] sm:$0xff]
    %v4765 = vld [vmem:[#allocation2 + $0x140] sm:$0xff]
    %v4766 = vld [vmem:[#allocation2 + $0x148] sm:$0xff]
    %v4767 = vld [vmem:[#allocation2 + $0x150] sm:$0xff]
    %v4768 = vld [vmem:[#allocation2 + $0x158] sm:$0xff]
    %v4769 = vld [vmem:[#allocation2 + $0x160] sm:$0xff]
    %v4770 = vld [vmem:[#allocation2 + $0x168] sm:$0xff]
    %v4771 = vld [vmem:[#allocation2 + $0x170] sm:$0xff]
    %v4772 = vld [vmem:[#allocation2 + $0x178] sm:$0xff]
    %v4773 = vld [vmem:[#allocation2 + $0x180] sm:$0xff]
    %v4774 = vld [vmem:[#allocation2 + $0x188] sm:$0xff]
    %v4775 = vld [vmem:[#allocation2 + $0x190] sm:$0xff]
    %v4776 = vld [vmem:[#allocation2 + $0x198] sm:$0xff]
    %v4777 = vld [vmem:[#allocation2 + $0x1a0] sm:$0xff]
    %v4778 = vld [vmem:[#allocation2 + $0x1a8] sm:$0xff]
    %v4779 = vld [vmem:[#allocation2 + $0x1b0] sm:$0xff]
    %v4780 = vld [vmem:[#allocation2 + $0x1b8] sm:$0xff]
    %v4781 = vld [vmem:[#allocation2 + $0x1c0] sm:$0xff]
    %v4782 = vld [vmem:[#allocation2 + $0x1c8] sm:$0xff]
    %v4783 = vld [vmem:[#allocation2 + $0x1d0] sm:$0xff]
    %v4784 = vld [vmem:[#allocation2 + $0x1d8] sm:$0xff]
    %v4785 = vld [vmem:[#allocation2 + $0x1e0] sm:$0xff]
    %v4786 = vld [vmem:[#allocation2 + $0x1e8] sm:$0xff]
    %v4787 = vld [vmem:[#allocation2 + $0x1f0] sm:$0xff]
    %v4788 = vld [vmem:[#allocation2 + $0x1f8] sm:$0xff]
    %v4789 = vadd.f32 %v4725, %v4407
    %v4790 = vadd.f32 %v4726, %v4412
    %v4791 = vadd.f32 %v4727, %v4417
    %v4792 = vadd.f32 %v4728, %v4422
    %v4793 = vadd.f32 %v4729, %v4427
    %v4794 = vadd.f32 %v4730, %v4432
    %v4795 = vadd.f32 %v4731, %v4437
    %v4796 = vadd.f32 %v4732, %v4442
    %v4797 = vadd.f32 %v4733, %v4447
    %v4798 = vadd.f32 %v4734, %v4452
    %v4799 = vadd.f32 %v4735, %v4457
    %v4800 = vadd.f32 %v4736, %v4462
    %v4801 = vadd.f32 %v4737, %v4467
    %v4802 = vadd.f32 %v4738, %v4472
    %v4803 = vadd.f32 %v4739, %v4477
    %v4804 = vadd.f32 %v4740, %v4482
    %v4805 = vadd.f32 %v4741, %v4487
    %v4806 = vadd.f32 %v4742, %v4492
    %v4807 = vadd.f32 %v4743, %v4497
    %v4808 = vadd.f32 %v4744, %v4502
    %v4809 = vadd.f32 %v4745, %v4507
    %v4810 = vadd.f32 %v4746, %v4512
    %v4811 = vadd.f32 %v4747, %v4517
    %v4812 = vadd.f32 %v4748, %v4522
    %v4813 = vadd.f32 %v4749, %v4527
    %v4814 = vadd.f32 %v4750, %v4532
    %v4815 = vadd.f32 %v4751, %v4537
    %v4816 = vadd.f32 %v4752, %v4542
    %v4817 = vadd.f32 %v4753, %v4547
    %v4818 = vadd.f32 %v4754, %v4552
    %v4819 = vadd.f32 %v4755, %v4557
    %v4820 = vadd.f32 %v4756, %v4562
    %v4821 = vadd.f32 %v4757, %v4567
    %v4822 = vadd.f32 %v4758, %v4572
    %v4823 = vadd.f32 %v4759, %v4577
    %v4824 = vadd.f32 %v4760, %v4582
    %v4825 = vadd.f32 %v4761, %v4587
    %v4826 = vadd.f32 %v4762, %v4592
    %v4827 = vadd.f32 %v4763, %v4597
    %v4828 = vadd.f32 %v4764, %v4602
    %v4829 = vadd.f32 %v4765, %v4607
    %v4830 = vadd.f32 %v4766, %v4612
    %v4831 = vadd.f32 %v4767, %v4617
    %v4832 = vadd.f32 %v4768, %v4622
    %v4833 = vadd.f32 %v4769, %v4627
    %v4834 = vadd.f32 %v4770, %v4632
    %v4835 = vadd.f32 %v4771, %v4637
    %v4836 = vadd.f32 %v4772, %v4642
    %v4837 = vadd.f32 %v4773, %v4647
    %v4838 = vadd.f32 %v4774, %v4652
    %v4839 = vadd.f32 %v4775, %v4657
    %v4840 = vadd.f32 %v4776, %v4662
    %v4841 = vadd.f32 %v4777, %v4667
    %v4842 = vadd.f32 %v4778, %v4672
    %v4843 = vadd.f32 %v4779, %v4677
    %v4844 = vadd.f32 %v4780, %v4682
    %v4845 = vadd.f32 %v4781, %v4687
    %v4846 = vadd.f32 %v4782, %v4692
    %v4847 = vadd.f32 %v4783, %v4697
    %v4848 = vadd.f32 %v4784, %v4702
    %v4849 = vadd.f32 %v4785, %v4707
    %v4850 = vadd.f32 %v4786, %v4712
    %v4851 = vadd.f32 %v4787, %v4717
    %v4852 = vadd.f32 %v4788, %v4722
    %4853 = vst [vmem:[#allocation2] sm:$0xff] %v4789
    %4854 = vst [vmem:[#allocation2 + $0x8] sm:$0xff] %v4790
    %4855 = vst [vmem:[#allocation2 + $0x10] sm:$0xff] %v4791
    %4856 = vst [vmem:[#allocation2 + $0x18] sm:$0xff] %v4792
    %4857 = vst [vmem:[#allocation2 + $0x20] sm:$0xff] %v4793
    %4858 = vst [vmem:[#allocation2 + $0x28] sm:$0xff] %v4794
    %4859 = vst [vmem:[#allocation2 + $0x30] sm:$0xff] %v4795
    %4860 = vst [vmem:[#allocation2 + $0x38] sm:$0xff] %v4796
    %4861 = vst [vmem:[#allocation2 + $0x40] sm:$0xff] %v4797
    %4862 = vst [vmem:[#allocation2 + $0x48] sm:$0xff] %v4798
    %4863 = vst [vmem:[#allocation2 + $0x50] sm:$0xff] %v4799
    %4864 = vst [vmem:[#allocation2 + $0x58] sm:$0xff] %v4800
    %4865 = vst [vmem:[#allocation2 + $0x60] sm:$0xff] %v4801
    %4866 = vst [vmem:[#allocation2 + $0x68] sm:$0xff] %v4802
    %4867 = vst [vmem:[#allocation2 + $0x70] sm:$0xff] %v4803
    %4868 = vst [vmem:[#allocation2 + $0x78] sm:$0xff] %v4804
    %4869 = vst [vmem:[#allocation2 + $0x80] sm:$0xff] %v4805
    %4870 = vst [vmem:[#allocation2 + $0x88] sm:$0xff] %v4806
    %4871 = vst [vmem:[#allocation2 + $0x90] sm:$0xff] %v4807
    %4872 = vst [vmem:[#allocation2 + $0x98] sm:$0xff] %v4808
    %4873 = vst [vmem:[#allocation2 + $0xa0] sm:$0xff] %v4809
    %4874 = vst [vmem:[#allocation2 + $0xa8] sm:$0xff] %v4810
    %4875 = vst [vmem:[#allocation2 + $0xb0] sm:$0xff] %v4811
    %4876 = vst [vmem:[#allocation2 + $0xb8] sm:$0xff] %v4812
    %4877 = vst [vmem:[#allocation2 + $0xc0] sm:$0xff] %v4813
    %4878 = vst [vmem:[#allocation2 + $0xc8] sm:$0xff] %v4814
    %4879 = vst [vmem:[#allocation2 + $0xd0] sm:$0xff] %v4815
    %4880 = vst [vmem:[#allocation2 + $0xd8] sm:$0xff] %v4816
    %4881 = vst [vmem:[#allocation2 + $0xe0] sm:$0xff] %v4817
    %4882 = vst [vmem:[#allocation2 + $0xe8] sm:$0xff] %v4818
    %4883 = vst [vmem:[#allocation2 + $0xf0] sm:$0xff] %v4819
    %4884 = vst [vmem:[#allocation2 + $0xf8] sm:$0xff] %v4820
    %4885 = vst [vmem:[#allocation2 + $0x100] sm:$0xff] %v4821
    %4886 = vst [vmem:[#allocation2 + $0x108] sm:$0xff] %v4822
    %4887 = vst [vmem:[#allocation2 + $0x110] sm:$0xff] %v4823
    %4888 = vst [vmem:[#allocation2 + $0x118] sm:$0xff] %v4824
    %4889 = vst [vmem:[#allocation2 + $0x120] sm:$0xff] %v4825
    %4890 = vst [vmem:[#allocation2 + $0x128] sm:$0xff] %v4826
    %4891 = vst [vmem:[#allocation2 + $0x130] sm:$0xff] %v4827
    %4892 = vst [vmem:[#allocation2 + $0x138] sm:$0xff] %v4828
    %4893 = vst [vmem:[#allocation2 + $0x140] sm:$0xff] %v4829
    %4894 = vst [vmem:[#allocation2 + $0x148] sm:$0xff] %v4830
    %4895 = vst [vmem:[#allocation2 + $0x150] sm:$0xff] %v4831
    %4896 = vst [vmem:[#allocation2 + $0x158] sm:$0xff] %v4832
    %4897 = vst [vmem:[#allocation2 + $0x160] sm:$0xff] %v4833
    %4898 = vst [vmem:[#allocation2 + $0x168] sm:$0xff] %v4834
    %4899 = vst [vmem:[#allocation2 + $0x170] sm:$0xff] %v4835
    %4900 = vst [vmem:[#allocation2 + $0x178] sm:$0xff] %v4836
    %4901 = vst [vmem:[#allocation2 + $0x180] sm:$0xff] %v4837
    %4902 = vst [vmem:[#allocation2 + $0x188] sm:$0xff] %v4838
    %4903 = vst [vmem:[#allocation2 + $0x190] sm:$0xff] %v4839
    %4904 = vst [vmem:[#allocation2 + $0x198] sm:$0xff] %v4840
    %4905 = vst [vmem:[#allocation2 + $0x1a0] sm:$0xff] %v4841
    %4906 = vst [vmem:[#allocation2 + $0x1a8] sm:$0xff] %v4842
    %4907 = vst [vmem:[#allocation2 + $0x1b0] sm:$0xff] %v4843
    %4908 = vst [vmem:[#allocation2 + $0x1b8] sm:$0xff] %v4844
    %4909 = vst [vmem:[#allocation2 + $0x1c0] sm:$0xff] %v4845
    %4910 = vst [vmem:[#allocation2 + $0x1c8] sm:$0xff] %v4846
    %4911 = vst [vmem:[#allocation2 + $0x1d0] sm:$0xff] %v4847
    %4912 = vst [vmem:[#allocation2 + $0x1d8] sm:$0xff] %v4848
    %4913 = vst [vmem:[#allocation2 + $0x1e0] sm:$0xff] %v4849
    %4914 = vst [vmem:[#allocation2 + $0x1e8] sm:$0xff] %v4850
    %4915 = vst [vmem:[#allocation2 + $0x1f0] sm:$0xff] %v4851
    %4916 = vst [vmem:[#allocation2 + $0x1f8] sm:$0xff] %v4852
    %s4917 = scalar_lea.vmem %s0, 48
    %v4918 = vld [vmem:[%s4917] sm:$0xff]
    %v4919 = vld [vmem:[%s4917 + $0x8] sm:$0xff]
    %v4920 = vld [vmem:[%s4917 + $0x18] sm:$0xff]
    %v4921 = vld [vmem:[%s4917 + $0x20] sm:$0xff]
    %v4922 = vld [vmem:[%s4917 + $0x30] sm:$0xff]
    %v4923 = vld [vmem:[%s4917 + $0x38] sm:$0xff]
    %v4924 = vld [vmem:[%s4917 + $0x48] sm:$0xff]
    %v4925 = vld [vmem:[%s4917 + $0x50] sm:$0xff]
    %v4926 = vld [vmem:[%s4917 + $0x60] sm:$0xff]
    %v4927 = vld [vmem:[%s4917 + $0x68] sm:$0xff]
    %v4928 = vld [vmem:[%s4917 + $0x78] sm:$0xff]
    %v4929 = vld [vmem:[%s4917 + $0x80] sm:$0xff]
    %v4930 = vld [vmem:[%s4917 + $0x90] sm:$0xff]
    %v4931 = vld [vmem:[%s4917 + $0x98] sm:$0xff]
    %v4932 = vld [vmem:[%s4917 + $0xa8] sm:$0xff]
    %v4933 = vld [vmem:[%s4917 + $0xb0] sm:$0xff]
    %v4934 = vld [vmem:[%s4917 + $0xc0] sm:$0xff]
    %v4935 = vld [vmem:[%s4917 + $0xc8] sm:$0xff]
    %v4936 = vld [vmem:[%s4917 + $0xd8] sm:$0xff]
    %v4937 = vld [vmem:[%s4917 + $0xe0] sm:$0xff]
    %v4938 = vld [vmem:[%s4917 + $0xf0] sm:$0xff]
    %v4939 = vld [vmem:[%s4917 + $0xf8] sm:$0xff]
    %v4940 = vld [vmem:[%s4917 + $0x108] sm:$0xff]
    %v4941 = vld [vmem:[%s4917 + $0x110] sm:$0xff]
    %v4942 = vld [vmem:[%s4917 + $0x120] sm:$0xff]
    %v4943 = vld [vmem:[%s4917 + $0x128] sm:$0xff]
    %v4944 = vld [vmem:[%s4917 + $0x138] sm:$0xff]
    %v4945 = vld [vmem:[%s4917 + $0x140] sm:$0xff]
    %v4946 = vld [vmem:[%s4917 + $0x150] sm:$0xff]
    %v4947 = vld [vmem:[%s4917 + $0x158] sm:$0xff]
    %v4948 = vld [vmem:[%s4917 + $0x168] sm:$0xff]
    %v4949 = vld [vmem:[%s4917 + $0x170] sm:$0xff]
    %v4950 = vld [vmem:[%s4917 + $0x1b0] sm:$0xff]
    %v4951 = vld [vmem:[%s4917 + $0x1b8] sm:$0xff]
    %v4952 = vld [vmem:[%s4917 + $0x1c8] sm:$0xff]
    %v4953 = vld [vmem:[%s4917 + $0x1d0] sm:$0xff]
    %v4954 = vld [vmem:[%s4917 + $0x1e0] sm:$0xff]
    %v4955 = vld [vmem:[%s4917 + $0x1e8] sm:$0xff]
    %v4956 = vld [vmem:[%s4917 + $0x1f8] sm:$0xff]
    %v4957 = vld [vmem:[%s4917 + $0x200] sm:$0xff]
    %v4958 = vld [vmem:[%s4917 + $0x210] sm:$0xff]
    %v4959 = vld [vmem:[%s4917 + $0x218] sm:$0xff]
    %v4960 = vld [vmem:[%s4917 + $0x228] sm:$0xff]
    %v4961 = vld [vmem:[%s4917 + $0x230] sm:$0xff]
    %v4962 = vld [vmem:[%s4917 + $0x240] sm:$0xff]
    %v4963 = vld [vmem:[%s4917 + $0x248] sm:$0xff]
    %v4964 = vld [vmem:[%s4917 + $0x258] sm:$0xff]
    %v4965 = vld [vmem:[%s4917 + $0x260] sm:$0xff]
    %v4966 = vld [vmem:[%s4917 + $0x270] sm:$0xff]
    %v4967 = vld [vmem:[%s4917 + $0x278] sm:$0xff]
    %v4968 = vld [vmem:[%s4917 + $0x288] sm:$0xff]
    %v4969 = vld [vmem:[%s4917 + $0x290] sm:$0xff]
    %v4970 = vld [vmem:[%s4917 + $0x2a0] sm:$0xff]
    %v4971 = vld [vmem:[%s4917 + $0x2a8] sm:$0xff]
    %v4972 = vld [vmem:[%s4917 + $0x2b8] sm:$0xff]
    %v4973 = vld [vmem:[%s4917 + $0x2c0] sm:$0xff]
    %v4974 = vld [vmem:[%s4917 + $0x2d0] sm:$0xff]
    %v4975 = vld [vmem:[%s4917 + $0x2d8] sm:$0xff]
    %v4976 = vld [vmem:[%s4917 + $0x2e8] sm:$0xff]
    %v4977 = vld [vmem:[%s4917 + $0x2f0] sm:$0xff]
    %v4978 = vld [vmem:[%s4917 + $0x300] sm:$0xff]
    %v4979 = vld [vmem:[%s4917 + $0x308] sm:$0xff]
    %v4980 = vld [vmem:[%s4917 + $0x318] sm:$0xff]
    %v4981 = vld [vmem:[%s4917 + $0x320] sm:$0xff]
    %s4982 = scalar_lea.vmem %s1, 24
    %v4983 = vld [vmem:[%s4982] sm:$0xf]
    %v4985 = vsel %vm80, %v4918, 0
    %v4988 = vsel %vm80, %v4919, 0
    %v4991 = vsel %vm80, %v4920, 0
    %v4994 = vsel %vm80, %v4921, 0
    %v4997 = vsel %vm80, %v4922, 0
    %v5000 = vsel %vm80, %v4923, 0
    %v5003 = vsel %vm80, %v4924, 0
    %v5006 = vsel %vm80, %v4925, 0
    %v5009 = vsel %vm80, %v4926, 0
    %v5012 = vsel %vm80, %v4927, 0
    %v5015 = vsel %vm80, %v4928, 0
    %v5018 = vsel %vm80, %v4929, 0
    %v5021 = vsel %vm80, %v4930, 0
    %v5024 = vsel %vm80, %v4931, 0
    %v5027 = vsel %vm80, %v4932, 0
    %v5030 = vsel %vm80, %v4933, 0
    %v5033 = vsel %vm80, %v4934, 0
    %v5036 = vsel %vm80, %v4935, 0
    %v5039 = vsel %vm80, %v4936, 0
    %v5042 = vsel %vm80, %v4937, 0
    %v5045 = vsel %vm80, %v4938, 0
    %v5048 = vsel %vm80, %v4939, 0
    %v5051 = vsel %vm80, %v4940, 0
    %v5054 = vsel %vm80, %v4941, 0
    %v5057 = vsel %vm80, %v4942, 0
    %v5060 = vsel %vm80, %v4943, 0
    %v5063 = vsel %vm80, %v4944, 0
    %v5066 = vsel %vm80, %v4945, 0
    %v5069 = vsel %vm80, %v4946, 0
    %v5072 = vsel %vm80, %v4947, 0
    %v5075 = vsel %vm80, %v4948, 0
    %v5078 = vsel %vm80, %v4949, 0
    %v5081 = vsel %vm80, %v4950, 0
    %v5084 = vsel %vm80, %v4951, 0
    %v5087 = vsel %vm80, %v4952, 0
    %v5090 = vsel %vm80, %v4953, 0
    %v5093 = vsel %vm80, %v4954, 0
    %v5096 = vsel %vm80, %v4955, 0
    %v5099 = vsel %vm80, %v4956, 0
    %v5102 = vsel %vm80, %v4957, 0
    %v5105 = vsel %vm80, %v4958, 0
    %v5108 = vsel %vm80, %v4959, 0
    %v5111 = vsel %vm80, %v4960, 0
    %v5114 = vsel %vm80, %v4961, 0
    %v5117 = vsel %vm80, %v4962, 0
    %v5120 = vsel %vm80, %v4963, 0
    %v5123 = vsel %vm80, %v4964, 0
    %v5126 = vsel %vm80, %v4965, 0
    %v5129 = vsel %vm80, %v4966, 0
    %v5132 = vsel %vm80, %v4967, 0
    %v5135 = vsel %vm80, %v4968, 0
    %v5138 = vsel %vm80, %v4969, 0
    %v5141 = vsel %vm80, %v4970, 0
    %v5144 = vsel %vm80, %v4971, 0
    %v5147 = vsel %vm80, %v4972, 0
    %v5150 = vsel %vm80, %v4973, 0
    %v5153 = vsel %vm80, %v4974, 0
    %v5156 = vsel %vm80, %v4975, 0
    %v5159 = vsel %vm80, %v4976, 0
    %v5162 = vsel %vm80, %v4977, 0
    %v5165 = vsel %vm80, %v4978, 0
    %v5168 = vsel %vm80, %v4979, 0
    %v5171 = vsel %vm80, %v4980, 0
    %v5174 = vsel %vm80, %v4981, 0
    %v5177 = vsel %vm273, %v4983, 0
    %5179 = vmatprep.subr.mxu0 0.0
    %5180 = vmatpush1.msra.mxu0 %v5177
    %5181 = vmatprep.subr.mxu0 0.0
    %5182 = vmatpush1.msra.mxu0 0.0
    %5183 = vmatprep.subr.mxu0 0.0
    %5184 = vmatpush1.msra.mxu0 0.0
    %5185 = vmatprep.subr.mxu0 0.0
    %5186 = vmatpush1.msra.mxu0 0.0
    %5187 = vmatprep.subr.mxu0 0.0
    %5188 = vmatpush1.msra.mxu0 0.0
    %5189 = vmatprep.subr.mxu0 0.0
    %5190 = vmatpush1.msra.mxu0 0.0
    %5191 = vmatprep.subr.mxu0 0.0
    %5192 = vmatpush1.msra.mxu0 0.0
    %5193 = vmatprep.subr.mxu0 0.0
    %5194 = vmatpush1.msra.mxu0 0.0
    %5195 = vmatprep.subr.mxu0 0.0
    %5196 = vmatpush1.msra.mxu0 0.0
    %5197 = vmatprep.subr.mxu0 0.0
    %5198 = vmatpush1.msra.mxu0 0.0
    %5199 = vmatprep.subr.mxu0 0.0
    %5200 = vmatpush1.msra.mxu0 0.0
    %5201 = vmatprep.subr.mxu0 0.0
    %5202 = vmatpush1.msra.mxu0 0.0
    %5203 = vmatprep.subr.mxu0 0.0
    %5204 = vmatpush1.msra.mxu0 0.0
    %5205 = vmatprep.subr.mxu0 0.0
    %5206 = vmatpush1.msra.mxu0 0.0
    %5207 = vmatprep.subr.mxu0 0.0
    %5208 = vmatpush1.msra.mxu0 0.0
    %5209 = vmatprep.subr.mxu0 0.0
    %5210 = vmatpush1.msra.mxu0 0.0
    %5211 = vmatprep.subr.mxu0 0.0
    %5212 = vmatpush1.msra.mxu0 0.0
    %5213 = vmatprep.subr.mxu0 0.0
    %5214 = vmatpush1.msra.mxu0 0.0
    %5215 = vmatprep.subr.mxu0 0.0
    %5216 = vmatpush1.msra.mxu0 0.0
    %5217 = vmatprep.subr.mxu0 0.0
    %5218 = vmatpush1.msra.mxu0 0.0
    %5219 = vmatprep.subr.mxu0 0.0
    %5220 = vmatpush1.msra.mxu0 0.0
    %5221 = vmatprep.subr.mxu0 0.0
    %5222 = vmatpush1.msra.mxu0 0.0
    %5223 = vmatprep.subr.mxu0 0.0
    %5224 = vmatpush1.msra.mxu0 0.0
    %5225 = vmatprep.subr.mxu0 0.0
    %5226 = vmatpush1.msra.mxu0 0.0
    %5227 = vmatprep.subr.mxu0 0.0
    %5228 = vmatpush1.msra.mxu0 0.0
    %5229 = vmatprep.subr.mxu0 0.0
    %5230 = vmatpush1.msra.mxu0 0.0
    %5231 = vmatprep.subr.mxu0 0.0
    %5232 = vmatpush1.msra.mxu0 0.0
    %5233 = vmatprep.subr.mxu0 0.0
    %5234 = vmatpush1.msra.mxu0 0.0
    %5235 = vmatprep.subr.mxu0 0.0
    %5236 = vmatpush1.msra.mxu0 0.0
    %5237 = vmatprep.subr.mxu0 0.0
    %5238 = vmatpush1.msra.mxu0 0.0
    %5239 = vmatprep.subr.mxu0 0.0
    %5240 = vmatpush1.msra.mxu0 0.0
    %5241 = vmatprep.subr.mxu0 0.0
    %5242 = vmatpush1.msra.mxu0 0.0
    %5243 = vmatprep.mubr.f32.mxu0 0.0
    %5244 = vmatmul.mubr.f32.gmra.mrb[0].mxu0 %v4985
    %v5245 = vpop.f32.mrb[0].mxu0
    %v5246 = vadd.f32 0.0, %v5245
    %v5247 = vpop.f32.mrb[0].mxu0
    %5248 = vmatprep.mubr.f32.mxu0 0.0
    %5249 = vmatmul.mubr.f32.gmra.mrb[0].mxu0 %v4988
    %v5250 = vpop.f32.mrb[0].mxu0
    %v5251 = vadd.f32 0.0, %v5250
    %v5252 = vpop.f32.mrb[0].mxu0
    %5253 = vmatprep.mubr.f32.mxu0 0.0
    %5254 = vmatmul.mubr.f32.gmra.mrb[0].mxu0 %v4991
    %v5255 = vpop.f32.mrb[0].mxu0
    %v5256 = vadd.f32 0.0, %v5255
    %v5257 = vpop.f32.mrb[0].mxu0
    %5258 = vmatprep.mubr.f32.mxu0 0.0
    %5259 = vmatmul.mubr.f32.gmra.mrb[0].mxu0 %v4994
    %v5260 = vpop.f32.mrb[0].mxu0
    %v5261 = vadd.f32 0.0, %v5260
    %v5262 = vpop.f32.mrb[0].mxu0
    %5263 = vmatprep.mubr.f32.mxu0 0.0
    %5264 = vmatmul.mubr.f32.gmra.mrb[0].mxu0 %v4997
    %v5265 = vpop.f32.mrb[0].mxu0
    %v5266 = vadd.f32 0.0, %v5265
    %v5267 = vpop.f32.mrb[0].mxu0
    %5268 = vmatprep.mubr.f32.mxu0 0.0
    %5269 = vmatmul.mubr.f32.gmra.mrb[0].mxu0 %v5000
    %v5270 = vpop.f32.mrb[0].mxu0
    %v5271 = vadd.f32 0.0, %v5270
    %v5272 = vpop.f32.mrb[0].mxu0
    %5273 = vmatprep.mubr.f32.mxu0 0.0
    %5274 = vmatmul.mubr.f32.gmra.mrb[0].mxu0 %v5003
    %v5275 = vpop.f32.mrb[0].mxu0
    %v5276 = vadd.f32 0.0, %v5275
    %v5277 = vpop.f32.mrb[0].mxu0
    %5278 = vmatprep.mubr.f32.mxu0 0.0
    %5279 = vmatmul.mubr.f32.gmra.mrb[0].mxu0 %v5006
    %v5280 = vpop.f32.mrb[0].mxu0
    %v5281 = vadd.f32 0.0, %v5280
    %v5282 = vpop.f32.mrb[0].mxu0
    %5283 = vmatprep.mubr.f32.mxu0 0.0
    %5284 = vmatmul.mubr.f32.gmra.mrb[0].mxu0 %v5009
    %v5285 = vpop.f32.mrb[0].mxu0
    %v5286 = vadd.f32 0.0, %v5285
    %v5287 = vpop.f32.mrb[0].mxu0
    %5288 = vmatprep.mubr.f32.mxu0 0.0
    %5289 = vmatmul.mubr.f32.gmra.mrb[0].mxu0 %v5012
    %v5290 = vpop.f32.mrb[0].mxu0
    %v5291 = vadd.f32 0.0, %v5290
    %v5292 = vpop.f32.mrb[0].mxu0
    %5293 = vmatprep.mubr.f32.mxu0 0.0
    %5294 = vmatmul.mubr.f32.gmra.mrb[0].mxu0 %v5015
    %v5295 = vpop.f32.mrb[0].mxu0
    %v5296 = vadd.f32 0.0, %v5295
    %v5297 = vpop.f32.mrb[0].mxu0
    %5298 = vmatprep.mubr.f32.mxu0 0.0
    %5299 = vmatmul.mubr.f32.gmra.mrb[0].mxu0 %v5018
    %v5300 = vpop.f32.mrb[0].mxu0
    %v5301 = vadd.f32 0.0, %v5300
    %v5302 = vpop.f32.mrb[0].mxu0
    %5303 = vmatprep.mubr.f32.mxu0 0.0
    %5304 = vmatmul.mubr.f32.gmra.mrb[0].mxu0 %v5021
    %v5305 = vpop.f32.mrb[0].mxu0
    %v5306 = vadd.f32 0.0, %v5305
    %v5307 = vpop.f32.mrb[0].mxu0
    %5308 = vmatprep.mubr.f32.mxu0 0.0
    %5309 = vmatmul.mubr.f32.gmra.mrb[0].mxu0 %v5024
    %v5310 = vpop.f32.mrb[0].mxu0
    %v5311 = vadd.f32 0.0, %v5310
    %v5312 = vpop.f32.mrb[0].mxu0
    %5313 = vmatprep.mubr.f32.mxu0 0.0
    %5314 = vmatmul.mubr.f32.gmra.mrb[0].mxu0 %v5027
    %v5315 = vpop.f32.mrb[0].mxu0
    %v5316 = vadd.f32 0.0, %v5315
    %v5317 = vpop.f32.mrb[0].mxu0
    %5318 = vmatprep.mubr.f32.mxu0 0.0
    %5319 = vmatmul.mubr.f32.gmra.mrb[0].mxu0 %v5030
    %v5320 = vpop.f32.mrb[0].mxu0
    %v5321 = vadd.f32 0.0, %v5320
    %v5322 = vpop.f32.mrb[0].mxu0
    %5323 = vmatprep.mubr.f32.mxu0 0.0
    %5324 = vmatmul.mubr.f32.gmra.mrb[0].mxu0 %v5033
    %v5325 = vpop.f32.mrb[0].mxu0
    %v5326 = vadd.f32 0.0, %v5325
    %v5327 = vpop.f32.mrb[0].mxu0
    %5328 = vmatprep.mubr.f32.mxu0 0.0
    %5329 = vmatmul.mubr.f32.gmra.mrb[0].mxu0 %v5036
    %v5330 = vpop.f32.mrb[0].mxu0
    %v5331 = vadd.f32 0.0, %v5330
    %v5332 = vpop.f32.mrb[0].mxu0
    %5333 = vmatprep.mubr.f32.mxu0 0.0
    %5334 = vmatmul.mubr.f32.gmra.mrb[0].mxu0 %v5039
    %v5335 = vpop.f32.mrb[0].mxu0
    %v5336 = vadd.f32 0.0, %v5335
    %v5337 = vpop.f32.mrb[0].mxu0
    %5338 = vmatprep.mubr.f32.mxu0 0.0
    %5339 = vmatmul.mubr.f32.gmra.mrb[0].mxu0 %v5042
    %v5340 = vpop.f32.mrb[0].mxu0
    %v5341 = vadd.f32 0.0, %v5340
    %v5342 = vpop.f32.mrb[0].mxu0
    %5343 = vmatprep.mubr.f32.mxu0 0.0
    %5344 = vmatmul.mubr.f32.gmra.mrb[0].mxu0 %v5045
    %v5345 = vpop.f32.mrb[0].mxu0
    %v5346 = vadd.f32 0.0, %v5345
    %v5347 = vpop.f32.mrb[0].mxu0
    %5348 = vmatprep.mubr.f32.mxu0 0.0
    %5349 = vmatmul.mubr.f32.gmra.mrb[0].mxu0 %v5048
    %v5350 = vpop.f32.mrb[0].mxu0
    %v5351 = vadd.f32 0.0, %v5350
    %v5352 = vpop.f32.mrb[0].mxu0
    %5353 = vmatprep.mubr.f32.mxu0 0.0
    %5354 = vmatmul.mubr.f32.gmra.mrb[0].mxu0 %v5051
    %v5355 = vpop.f32.mrb[0].mxu0
    %v5356 = vadd.f32 0.0, %v5355
    %v5357 = vpop.f32.mrb[0].mxu0
    %5358 = vmatprep.mubr.f32.mxu0 0.0
    %5359 = vmatmul.mubr.f32.gmra.mrb[0].mxu0 %v5054
    %v5360 = vpop.f32.mrb[0].mxu0
    %v5361 = vadd.f32 0.0, %v5360
    %v5362 = vpop.f32.mrb[0].mxu0
    %5363 = vmatprep.mubr.f32.mxu0 0.0
    %5364 = vmatmul.mubr.f32.gmra.mrb[0].mxu0 %v5057
    %v5365 = vpop.f32.mrb[0].mxu0
    %v5366 = vadd.f32 0.0, %v5365
    %v5367 = vpop.f32.mrb[0].mxu0
    %5368 = vmatprep.mubr.f32.mxu0 0.0
    %5369 = vmatmul.mubr.f32.gmra.mrb[0].mxu0 %v5060
    %v5370 = vpop.f32.mrb[0].mxu0
    %v5371 = vadd.f32 0.0, %v5370
    %v5372 = vpop.f32.mrb[0].mxu0
    %5373 = vmatprep.mubr.f32.mxu0 0.0
    %5374 = vmatmul.mubr.f32.gmra.mrb[0].mxu0 %v5063
    %v5375 = vpop.f32.mrb[0].mxu0
    %v5376 = vadd.f32 0.0, %v5375
    %v5377 = vpop.f32.mrb[0].mxu0
    %5378 = vmatprep.mubr.f32.mxu0 0.0
    %5379 = vmatmul.mubr.f32.gmra.mrb[0].mxu0 %v5066
    %v5380 = vpop.f32.mrb[0].mxu0
    %v5381 = vadd.f32 0.0, %v5380
    %v5382 = vpop.f32.mrb[0].mxu0
    %5383 = vmatprep.mubr.f32.mxu0 0.0
    %5384 = vmatmul.mubr.f32.gmra.mrb[0].mxu0 %v5069
    %v5385 = vpop.f32.mrb[0].mxu0
    %v5386 = vadd.f32 0.0, %v5385
    %v5387 = vpop.f32.mrb[0].mxu0
    %5388 = vmatprep.mubr.f32.mxu0 0.0
    %5389 = vmatmul.mubr.f32.gmra.mrb[0].mxu0 %v5072
    %v5390 = vpop.f32.mrb[0].mxu0
    %v5391 = vadd.f32 0.0, %v5390
    %v5392 = vpop.f32.mrb[0].mxu0
    %5393 = vmatprep.mubr.f32.mxu0 0.0
    %5394 = vmatmul.mubr.f32.gmra.mrb[0].mxu0 %v5075
    %v5395 = vpop.f32.mrb[0].mxu0
    %v5396 = vadd.f32 0.0, %v5395
    %v5397 = vpop.f32.mrb[0].mxu0
    %5398 = vmatprep.mubr.f32.mxu0 0.0
    %5399 = vmatmul.mubr.f32.gmra.mrb[0].mxu0 %v5078
    %v5400 = vpop.f32.mrb[0].mxu0
    %v5401 = vadd.f32 0.0, %v5400
    %v5402 = vpop.f32.mrb[0].mxu0
    %5403 = vmatprep.mubr.f32.mxu0 0.0
    %5404 = vmatmul.mubr.f32.gmra.mrb[0].mxu0 %v5081
    %v5405 = vpop.f32.mrb[0].mxu0
    %v5406 = vadd.f32 0.0, %v5405
    %v5407 = vpop.f32.mrb[0].mxu0
    %5408 = vmatprep.mubr.f32.mxu0 0.0
    %5409 = vmatmul.mubr.f32.gmra.mrb[0].mxu0 %v5084
    %v5410 = vpop.f32.mrb[0].mxu0
    %v5411 = vadd.f32 0.0, %v5410
    %v5412 = vpop.f32.mrb[0].mxu0
    %5413 = vmatprep.mubr.f32.mxu0 0.0
    %5414 = vmatmul.mubr.f32.gmra.mrb[0].mxu0 %v5087
    %v5415 = vpop.f32.mrb[0].mxu0
    %v5416 = vadd.f32 0.0, %v5415
    %v5417 = vpop.f32.mrb[0].mxu0
    %5418 = vmatprep.mubr.f32.mxu0 0.0
    %5419 = vmatmul.mubr.f32.gmra.mrb[0].mxu0 %v5090
    %v5420 = vpop.f32.mrb[0].mxu0
    %v5421 = vadd.f32 0.0, %v5420
    %v5422 = vpop.f32.mrb[0].mxu0
    %5423 = vmatprep.mubr.f32.mxu0 0.0
    %5424 = vmatmul.mubr.f32.gmra.mrb[0].mxu0 %v5093
    %v5425 = vpop.f32.mrb[0].mxu0
    %v5426 = vadd.f32 0.0, %v5425
    %v5427 = vpop.f32.mrb[0].mxu0
    %5428 = vmatprep.mubr.f32.mxu0 0.0
    %5429 = vmatmul.mubr.f32.gmra.mrb[0].mxu0 %v5096
    %v5430 = vpop.f32.mrb[0].mxu0
    %v5431 = vadd.f32 0.0, %v5430
    %v5432 = vpop.f32.mrb[0].mxu0
    %5433 = vmatprep.mubr.f32.mxu0 0.0
    %5434 = vmatmul.mubr.f32.gmra.mrb[0].mxu0 %v5099
    %v5435 = vpop.f32.mrb[0].mxu0
    %v5436 = vadd.f32 0.0, %v5435
    %v5437 = vpop.f32.mrb[0].mxu0
    %5438 = vmatprep.mubr.f32.mxu0 0.0
    %5439 = vmatmul.mubr.f32.gmra.mrb[0].mxu0 %v5102
    %v5440 = vpop.f32.mrb[0].mxu0
    %v5441 = vadd.f32 0.0, %v5440
    %v5442 = vpop.f32.mrb[0].mxu0
    %5443 = vmatprep.mubr.f32.mxu0 0.0
    %5444 = vmatmul.mubr.f32.gmra.mrb[0].mxu0 %v5105
    %v5445 = vpop.f32.mrb[0].mxu0
    %v5446 = vadd.f32 0.0, %v5445
    %v5447 = vpop.f32.mrb[0].mxu0
    %5448 = vmatprep.mubr.f32.mxu0 0.0
    %5449 = vmatmul.mubr.f32.gmra.mrb[0].mxu0 %v5108
    %v5450 = vpop.f32.mrb[0].mxu0
    %v5451 = vadd.f32 0.0, %v5450
    %v5452 = vpop.f32.mrb[0].mxu0
    %5453 = vmatprep.mubr.f32.mxu0 0.0
    %5454 = vmatmul.mubr.f32.gmra.mrb[0].mxu0 %v5111
    %v5455 = vpop.f32.mrb[0].mxu0
    %v5456 = vadd.f32 0.0, %v5455
    %v5457 = vpop.f32.mrb[0].mxu0
    %5458 = vmatprep.mubr.f32.mxu0 0.0
    %5459 = vmatmul.mubr.f32.gmra.mrb[0].mxu0 %v5114
    %v5460 = vpop.f32.mrb[0].mxu0
    %v5461 = vadd.f32 0.0, %v5460
    %v5462 = vpop.f32.mrb[0].mxu0
    %5463 = vmatprep.mubr.f32.mxu0 0.0
    %5464 = vmatmul.mubr.f32.gmra.mrb[0].mxu0 %v5117
    %v5465 = vpop.f32.mrb[0].mxu0
    %v5466 = vadd.f32 0.0, %v5465
    %v5467 = vpop.f32.mrb[0].mxu0
    %5468 = vmatprep.mubr.f32.mxu0 0.0
    %5469 = vmatmul.mubr.f32.gmra.mrb[0].mxu0 %v5120
    %v5470 = vpop.f32.mrb[0].mxu0
    %v5471 = vadd.f32 0.0, %v5470
    %v5472 = vpop.f32.mrb[0].mxu0
    %5473 = vmatprep.mubr.f32.mxu0 0.0
    %5474 = vmatmul.mubr.f32.gmra.mrb[0].mxu0 %v5123
    %v5475 = vpop.f32.mrb[0].mxu0
    %v5476 = vadd.f32 0.0, %v5475
    %v5477 = vpop.f32.mrb[0].mxu0
    %5478 = vmatprep.mubr.f32.mxu0 0.0
    %5479 = vmatmul.mubr.f32.gmra.mrb[0].mxu0 %v5126
    %v5480 = vpop.f32.mrb[0].mxu0
    %v5481 = vadd.f32 0.0, %v5480
    %v5482 = vpop.f32.mrb[0].mxu0
    %5483 = vmatprep.mubr.f32.mxu0 0.0
    %5484 = vmatmul.mubr.f32.gmra.mrb[0].mxu0 %v5129
    %v5485 = vpop.f32.mrb[0].mxu0
    %v5486 = vadd.f32 0.0, %v5485
    %v5487 = vpop.f32.mrb[0].mxu0
    %5488 = vmatprep.mubr.f32.mxu0 0.0
    %5489 = vmatmul.mubr.f32.gmra.mrb[0].mxu0 %v5132
    %v5490 = vpop.f32.mrb[0].mxu0
    %v5491 = vadd.f32 0.0, %v5490
    %v5492 = vpop.f32.mrb[0].mxu0
    %5493 = vmatprep.mubr.f32.mxu0 0.0
    %5494 = vmatmul.mubr.f32.gmra.mrb[0].mxu0 %v5135
    %v5495 = vpop.f32.mrb[0].mxu0
    %v5496 = vadd.f32 0.0, %v5495
    %v5497 = vpop.f32.mrb[0].mxu0
    %5498 = vmatprep.mubr.f32.mxu0 0.0
    %5499 = vmatmul.mubr.f32.gmra.mrb[0].mxu0 %v5138
    %v5500 = vpop.f32.mrb[0].mxu0
    %v5501 = vadd.f32 0.0, %v5500
    %v5502 = vpop.f32.mrb[0].mxu0
    %5503 = vmatprep.mubr.f32.mxu0 0.0
    %5504 = vmatmul.mubr.f32.gmra.mrb[0].mxu0 %v5141
    %v5505 = vpop.f32.mrb[0].mxu0
    %v5506 = vadd.f32 0.0, %v5505
    %v5507 = vpop.f32.mrb[0].mxu0
    %5508 = vmatprep.mubr.f32.mxu0 0.0
    %5509 = vmatmul.mubr.f32.gmra.mrb[0].mxu0 %v5144
    %v5510 = vpop.f32.mrb[0].mxu0
    %v5511 = vadd.f32 0.0, %v5510
    %v5512 = vpop.f32.mrb[0].mxu0
    %5513 = vmatprep.mubr.f32.mxu0 0.0
    %5514 = vmatmul.mubr.f32.gmra.mrb[0].mxu0 %v5147
    %v5515 = vpop.f32.mrb[0].mxu0
    %v5516 = vadd.f32 0.0, %v5515
    %v5517 = vpop.f32.mrb[0].mxu0
    %5518 = vmatprep.mubr.f32.mxu0 0.0
    %5519 = vmatmul.mubr.f32.gmra.mrb[0].mxu0 %v5150
    %v5520 = vpop.f32.mrb[0].mxu0
    %v5521 = vadd.f32 0.0, %v5520
    %v5522 = vpop.f32.mrb[0].mxu0
    %5523 = vmatprep.mubr.f32.mxu0 0.0
    %5524 = vmatmul.mubr.f32.gmra.mrb[0].mxu0 %v5153
    %v5525 = vpop.f32.mrb[0].mxu0
    %v5526 = vadd.f32 0.0, %v5525
    %v5527 = vpop.f32.mrb[0].mxu0
    %5528 = vmatprep.mubr.f32.mxu0 0.0
    %5529 = vmatmul.mubr.f32.gmra.mrb[0].mxu0 %v5156
    %v5530 = vpop.f32.mrb[0].mxu0
    %v5531 = vadd.f32 0.0, %v5530
    %v5532 = vpop.f32.mrb[0].mxu0
    %5533 = vmatprep.mubr.f32.mxu0 0.0
    %5534 = vmatmul.mubr.f32.gmra.mrb[0].mxu0 %v5159
    %v5535 = vpop.f32.mrb[0].mxu0
    %v5536 = vadd.f32 0.0, %v5535
    %v5537 = vpop.f32.mrb[0].mxu0
    %5538 = vmatprep.mubr.f32.mxu0 0.0
    %5539 = vmatmul.mubr.f32.gmra.mrb[0].mxu0 %v5162
    %v5540 = vpop.f32.mrb[0].mxu0
    %v5541 = vadd.f32 0.0, %v5540
    %v5542 = vpop.f32.mrb[0].mxu0
    %5543 = vmatprep.mubr.f32.mxu0 0.0
    %5544 = vmatmul.mubr.f32.gmra.mrb[0].mxu0 %v5165
    %v5545 = vpop.f32.mrb[0].mxu0
    %v5546 = vadd.f32 0.0, %v5545
    %v5547 = vpop.f32.mrb[0].mxu0
    %5548 = vmatprep.mubr.f32.mxu0 0.0
    %5549 = vmatmul.mubr.f32.gmra.mrb[0].mxu0 %v5168
    %v5550 = vpop.f32.mrb[0].mxu0
    %v5551 = vadd.f32 0.0, %v5550
    %v5552 = vpop.f32.mrb[0].mxu0
    %5553 = vmatprep.mubr.f32.mxu0 0.0
    %5554 = vmatmul.mubr.f32.gmra.mrb[0].mxu0 %v5171
    %v5555 = vpop.f32.mrb[0].mxu0
    %v5556 = vadd.f32 0.0, %v5555
    %v5557 = vpop.f32.mrb[0].mxu0
    %5558 = vmatprep.mubr.f32.mxu0 0.0
    %5559 = vmatmul.mubr.f32.gmra.mrb[0].mxu0 %v5174
    %v5560 = vpop.f32.mrb[0].mxu0
    %v5561 = vadd.f32 0.0, %v5560
    %v5562 = vpop.f32.mrb[0].mxu0
    %5563 = vdwg.mxu0
    %v5564 = vld [vmem:[#allocation2] sm:$0xff]
    %v5565 = vld [vmem:[#allocation2 + $0x8] sm:$0xff]
    %v5566 = vld [vmem:[#allocation2 + $0x10] sm:$0xff]
    %v5567 = vld [vmem:[#allocation2 + $0x18] sm:$0xff]
    %v5568 = vld [vmem:[#allocation2 + $0x20] sm:$0xff]
    %v5569 = vld [vmem:[#allocation2 + $0x28] sm:$0xff]
    %v5570 = vld [vmem:[#allocation2 + $0x30] sm:$0xff]
    %v5571 = vld [vmem:[#allocation2 + $0x38] sm:$0xff]
    %v5572 = vld [vmem:[#allocation2 + $0x40] sm:$0xff]
    %v5573 = vld [vmem:[#allocation2 + $0x48] sm:$0xff]
    %v5574 = vld [vmem:[#allocation2 + $0x50] sm:$0xff]
    %v5575 = vld [vmem:[#allocation2 + $0x58] sm:$0xff]
    %v5576 = vld [vmem:[#allocation2 + $0x60] sm:$0xff]
    %v5577 = vld [vmem:[#allocation2 + $0x68] sm:$0xff]
    %v5578 = vld [vmem:[#allocation2 + $0x70] sm:$0xff]
    %v5579 = vld [vmem:[#allocation2 + $0x78] sm:$0xff]
    %v5580 = vld [vmem:[#allocation2 + $0x80] sm:$0xff]
    %v5581 = vld [vmem:[#allocation2 + $0x88] sm:$0xff]
    %v5582 = vld [vmem:[#allocation2 + $0x90] sm:$0xff]
    %v5583 = vld [vmem:[#allocation2 + $0x98] sm:$0xff]
    %v5584 = vld [vmem:[#allocation2 + $0xa0] sm:$0xff]
    %v5585 = vld [vmem:[#allocation2 + $0xa8] sm:$0xff]
    %v5586 = vld [vmem:[#allocation2 + $0xb0] sm:$0xff]
    %v5587 = vld [vmem:[#allocation2 + $0xb8] sm:$0xff]
    %v5588 = vld [vmem:[#allocation2 + $0xc0] sm:$0xff]
    %v5589 = vld [vmem:[#allocation2 + $0xc8] sm:$0xff]
    %v5590 = vld [vmem:[#allocation2 + $0xd0] sm:$0xff]
    %v5591 = vld [vmem:[#allocation2 + $0xd8] sm:$0xff]
    %v5592 = vld [vmem:[#allocation2 + $0xe0] sm:$0xff]
    %v5593 = vld [vmem:[#allocation2 + $0xe8] sm:$0xff]
    %v5594 = vld [vmem:[#allocation2 + $0xf0] sm:$0xff]
    %v5595 = vld [vmem:[#allocation2 + $0xf8] sm:$0xff]
    %v5596 = vld [vmem:[#allocation2 + $0x100] sm:$0xff]
    %v5597 = vld [vmem:[#allocation2 + $0x108] sm:$0xff]
    %v5598 = vld [vmem:[#allocation2 + $0x110] sm:$0xff]
    %v5599 = vld [vmem:[#allocation2 + $0x118] sm:$0xff]
    %v5600 = vld [vmem:[#allocation2 + $0x120] sm:$0xff]
    %v5601 = vld [vmem:[#allocation2 + $0x128] sm:$0xff]
    %v5602 = vld [vmem:[#allocation2 + $0x130] sm:$0xff]
    %v5603 = vld [vmem:[#allocation2 + $0x138] sm:$0xff]
    %v5604 = vld [vmem:[#allocation2 + $0x140] sm:$0xff]
    %v5605 = vld [vmem:[#allocation2 + $0x148] sm:$0xff]
    %v5606 = vld [vmem:[#allocation2 + $0x150] sm:$0xff]
    %v5607 = vld [vmem:[#allocation2 + $0x158] sm:$0xff]
    %v5608 = vld [vmem:[#allocation2 + $0x160] sm:$0xff]
    %v5609 = vld [vmem:[#allocation2 + $0x168] sm:$0xff]
    %v5610 = vld [vmem:[#allocation2 + $0x170] sm:$0xff]
    %v5611 = vld [vmem:[#allocation2 + $0x178] sm:$0xff]
    %v5612 = vld [vmem:[#allocation2 + $0x180] sm:$0xff]
    %v5613 = vld [vmem:[#allocation2 + $0x188] sm:$0xff]
    %v5614 = vld [vmem:[#allocation2 + $0x190] sm:$0xff]
    %v5615 = vld [vmem:[#allocation2 + $0x198] sm:$0xff]
    %v5616 = vld [vmem:[#allocation2 + $0x1a0] sm:$0xff]
    %v5617 = vld [vmem:[#allocation2 + $0x1a8] sm:$0xff]
    %v5618 = vld [vmem:[#allocation2 + $0x1b0] sm:$0xff]
    %v5619 = vld [vmem:[#allocation2 + $0x1b8] sm:$0xff]
    %v5620 = vld [vmem:[#allocation2 + $0x1c0] sm:$0xff]
    %v5621 = vld [vmem:[#allocation2 + $0x1c8] sm:$0xff]
    %v5622 = vld [vmem:[#allocation2 + $0x1d0] sm:$0xff]
    %v5623 = vld [vmem:[#allocation2 + $0x1d8] sm:$0xff]
    %v5624 = vld [vmem:[#allocation2 + $0x1e0] sm:$0xff]
    %v5625 = vld [vmem:[#allocation2 + $0x1e8] sm:$0xff]
    %v5626 = vld [vmem:[#allocation2 + $0x1f0] sm:$0xff]
    %v5627 = vld [vmem:[#allocation2 + $0x1f8] sm:$0xff]
    %v5628 = vadd.f32 %v5564, %v5246
    %v5629 = vadd.f32 %v5565, %v5251
    %v5630 = vadd.f32 %v5566, %v5256
    %v5631 = vadd.f32 %v5567, %v5261
    %v5632 = vadd.f32 %v5568, %v5266
    %v5633 = vadd.f32 %v5569, %v5271
    %v5634 = vadd.f32 %v5570, %v5276
    %v5635 = vadd.f32 %v5571, %v5281
    %v5636 = vadd.f32 %v5572, %v5286
    %v5637 = vadd.f32 %v5573, %v5291
    %v5638 = vadd.f32 %v5574, %v5296
    %v5639 = vadd.f32 %v5575, %v5301
    %v5640 = vadd.f32 %v5576, %v5306
    %v5641 = vadd.f32 %v5577, %v5311
    %v5642 = vadd.f32 %v5578, %v5316
    %v5643 = vadd.f32 %v5579, %v5321
    %v5644 = vadd.f32 %v5580, %v5326
    %v5645 = vadd.f32 %v5581, %v5331
    %v5646 = vadd.f32 %v5582, %v5336
    %v5647 = vadd.f32 %v5583, %v5341
    %v5648 = vadd.f32 %v5584, %v5346
    %v5649 = vadd.f32 %v5585, %v5351
    %v5650 = vadd.f32 %v5586, %v5356
    %v5651 = vadd.f32 %v5587, %v5361
    %v5652 = vadd.f32 %v5588, %v5366
    %v5653 = vadd.f32 %v5589, %v5371
    %v5654 = vadd.f32 %v5590, %v5376
    %v5655 = vadd.f32 %v5591, %v5381
    %v5656 = vadd.f32 %v5592, %v5386
    %v5657 = vadd.f32 %v5593, %v5391
    %v5658 = vadd.f32 %v5594, %v5396
    %v5659 = vadd.f32 %v5595, %v5401
    %v5660 = vadd.f32 %v5596, %v5406
    %v5661 = vadd.f32 %v5597, %v5411
    %v5662 = vadd.f32 %v5598, %v5416
    %v5663 = vadd.f32 %v5599, %v5421
    %v5664 = vadd.f32 %v5600, %v5426
    %v5665 = vadd.f32 %v5601, %v5431
    %v5666 = vadd.f32 %v5602, %v5436
    %v5667 = vadd.f32 %v5603, %v5441
    %v5668 = vadd.f32 %v5604, %v5446
    %v5669 = vadd.f32 %v5605, %v5451
    %v5670 = vadd.f32 %v5606, %v5456
    %v5671 = vadd.f32 %v5607, %v5461
    %v5672 = vadd.f32 %v5608, %v5466
    %v5673 = vadd.f32 %v5609, %v5471
    %v5674 = vadd.f32 %v5610, %v5476
    %v5675 = vadd.f32 %v5611, %v5481
    %v5676 = vadd.f32 %v5612, %v5486
    %v5677 = vadd.f32 %v5613, %v5491
    %v5678 = vadd.f32 %v5614, %v5496
    %v5679 = vadd.f32 %v5615, %v5501
    %v5680 = vadd.f32 %v5616, %v5506
    %v5681 = vadd.f32 %v5617, %v5511
    %v5682 = vadd.f32 %v5618, %v5516
    %v5683 = vadd.f32 %v5619, %v5521
    %v5684 = vadd.f32 %v5620, %v5526
    %v5685 = vadd.f32 %v5621, %v5531
    %v5686 = vadd.f32 %v5622, %v5536
    %v5687 = vadd.f32 %v5623, %v5541
    %v5688 = vadd.f32 %v5624, %v5546
    %v5689 = vadd.f32 %v5625, %v5551
    %v5690 = vadd.f32 %v5626, %v5556
    %v5691 = vadd.f32 %v5627, %v5561
    %5692 = vst [vmem:[#allocation2] sm:$0xff] %v5628
    %5693 = vst [vmem:[#allocation2 + $0x8] sm:$0xff] %v5629
    %5694 = vst [vmem:[#allocation2 + $0x10] sm:$0xff] %v5630
    %5695 = vst [vmem:[#allocation2 + $0x18] sm:$0xff] %v5631
    %5696 = vst [vmem:[#allocation2 + $0x20] sm:$0xff] %v5632
    %5697 = vst [vmem:[#allocation2 + $0x28] sm:$0xff] %v5633
    %5698 = vst [vmem:[#allocation2 + $0x30] sm:$0xff] %v5634
    %5699 = vst [vmem:[#allocation2 + $0x38] sm:$0xff] %v5635
    %5700 = vst [vmem:[#allocation2 + $0x40] sm:$0xff] %v5636
    %5701 = vst [vmem:[#allocation2 + $0x48] sm:$0xff] %v5637
    %5702 = vst [vmem:[#allocation2 + $0x50] sm:$0xff] %v5638
    %5703 = vst [vmem:[#allocation2 + $0x58] sm:$0xff] %v5639
    %5704 = vst [vmem:[#allocation2 + $0x60] sm:$0xff] %v5640
    %5705 = vst [vmem:[#allocation2 + $0x68] sm:$0xff] %v5641
    %5706 = vst [vmem:[#allocation2 + $0x70] sm:$0xff] %v5642
    %5707 = vst [vmem:[#allocation2 + $0x78] sm:$0xff] %v5643
    %5708 = vst [vmem:[#allocation2 + $0x80] sm:$0xff] %v5644
    %5709 = vst [vmem:[#allocation2 + $0x88] sm:$0xff] %v5645
    %5710 = vst [vmem:[#allocation2 + $0x90] sm:$0xff] %v5646
    %5711 = vst [vmem:[#allocation2 + $0x98] sm:$0xff] %v5647
    %5712 = vst [vmem:[#allocation2 + $0xa0] sm:$0xff] %v5648
    %5713 = vst [vmem:[#allocation2 + $0xa8] sm:$0xff] %v5649
    %5714 = vst [vmem:[#allocation2 + $0xb0] sm:$0xff] %v5650
    %5715 = vst [vmem:[#allocation2 + $0xb8] sm:$0xff] %v5651
    %5716 = vst [vmem:[#allocation2 + $0xc0] sm:$0xff] %v5652
    %5717 = vst [vmem:[#allocation2 + $0xc8] sm:$0xff] %v5653
    %5718 = vst [vmem:[#allocation2 + $0xd0] sm:$0xff] %v5654
    %5719 = vst [vmem:[#allocation2 + $0xd8] sm:$0xff] %v5655
    %5720 = vst [vmem:[#allocation2 + $0xe0] sm:$0xff] %v5656
    %5721 = vst [vmem:[#allocation2 + $0xe8] sm:$0xff] %v5657
    %5722 = vst [vmem:[#allocation2 + $0xf0] sm:$0xff] %v5658
    %5723 = vst [vmem:[#allocation2 + $0xf8] sm:$0xff] %v5659
    %5724 = vst [vmem:[#allocation2 + $0x100] sm:$0xff] %v5660
    %5725 = vst [vmem:[#allocation2 + $0x108] sm:$0xff] %v5661
    %5726 = vst [vmem:[#allocation2 + $0x110] sm:$0xff] %v5662
    %5727 = vst [vmem:[#allocation2 + $0x118] sm:$0xff] %v5663
    %5728 = vst [vmem:[#allocation2 + $0x120] sm:$0xff] %v5664
    %5729 = vst [vmem:[#allocation2 + $0x128] sm:$0xff] %v5665
    %5730 = vst [vmem:[#allocation2 + $0x130] sm:$0xff] %v5666
    %5731 = vst [vmem:[#allocation2 + $0x138] sm:$0xff] %v5667
    %5732 = vst [vmem:[#allocation2 + $0x140] sm:$0xff] %v5668
    %5733 = vst [vmem:[#allocation2 + $0x148] sm:$0xff] %v5669
    %5734 = vst [vmem:[#allocation2 + $0x150] sm:$0xff] %v5670
    %5735 = vst [vmem:[#allocation2 + $0x158] sm:$0xff] %v5671
    %5736 = vst [vmem:[#allocation2 + $0x160] sm:$0xff] %v5672
    %5737 = vst [vmem:[#allocation2 + $0x168] sm:$0xff] %v5673
    %5738 = vst [vmem:[#allocation2 + $0x170] sm:$0xff] %v5674
    %5739 = vst [vmem:[#allocation2 + $0x178] sm:$0xff] %v5675
    %5740 = vst [vmem:[#allocation2 + $0x180] sm:$0xff] %v5676
    %5741 = vst [vmem:[#allocation2 + $0x188] sm:$0xff] %v5677
    %5742 = vst [vmem:[#allocation2 + $0x190] sm:$0xff] %v5678
    %5743 = vst [vmem:[#allocation2 + $0x198] sm:$0xff] %v5679
    %5744 = vst [vmem:[#allocation2 + $0x1a0] sm:$0xff] %v5680
    %5745 = vst [vmem:[#allocation2 + $0x1a8] sm:$0xff] %v5681
    %5746 = vst [vmem:[#allocation2 + $0x1b0] sm:$0xff] %v5682
    %5747 = vst [vmem:[#allocation2 + $0x1b8] sm:$0xff] %v5683
    %5748 = vst [vmem:[#allocation2 + $0x1c0] sm:$0xff] %v5684
    %5749 = vst [vmem:[#allocation2 + $0x1c8] sm:$0xff] %v5685
    %5750 = vst [vmem:[#allocation2 + $0x1d0] sm:$0xff] %v5686
    %5751 = vst [vmem:[#allocation2 + $0x1d8] sm:$0xff] %v5687
    %5752 = vst [vmem:[#allocation2 + $0x1e0] sm:$0xff] %v5688
    %5753 = vst [vmem:[#allocation2 + $0x1e8] sm:$0xff] %v5689
    %5754 = vst [vmem:[#allocation2 + $0x1f0] sm:$0xff] %v5690
    %5755 = vst [vmem:[#allocation2 + $0x1f8] sm:$0xff] %v5691
    %v5756 = vld [vmem:[%s4917 + $0x1] sm:$0xff]
    %v5757 = vld [vmem:[%s4917 + $0x9] sm:$0xff]
    %v5758 = vld [vmem:[%s4917 + $0x19] sm:$0xff]
    %v5759 = vld [vmem:[%s4917 + $0x21] sm:$0xff]
    %v5760 = vld [vmem:[%s4917 + $0x31] sm:$0xff]
    %v5761 = vld [vmem:[%s4917 + $0x39] sm:$0xff]
    %v5762 = vld [vmem:[%s4917 + $0x49] sm:$0xff]
    %v5763 = vld [vmem:[%s4917 + $0x51] sm:$0xff]
    %v5764 = vld [vmem:[%s4917 + $0x61] sm:$0xff]
    %v5765 = vld [vmem:[%s4917 + $0x69] sm:$0xff]
    %v5766 = vld [vmem:[%s4917 + $0x79] sm:$0xff]
    %v5767 = vld [vmem:[%s4917 + $0x81] sm:$0xff]
    %v5768 = vld [vmem:[%s4917 + $0x91] sm:$0xff]
    %v5769 = vld [vmem:[%s4917 + $0x99] sm:$0xff]
    %v5770 = vld [vmem:[%s4917 + $0xa9] sm:$0xff]
    %v5771 = vld [vmem:[%s4917 + $0xb1] sm:$0xff]
    %v5772 = vld [vmem:[%s4917 + $0xc1] sm:$0xff]
    %v5773 = vld [vmem:[%s4917 + $0xc9] sm:$0xff]
    %v5774 = vld [vmem:[%s4917 + $0xd9] sm:$0xff]
    %v5775 = vld [vmem:[%s4917 + $0xe1] sm:$0xff]
    %v5776 = vld [vmem:[%s4917 + $0xf1] sm:$0xff]
    %v5777 = vld [vmem:[%s4917 + $0xf9] sm:$0xff]
    %v5778 = vld [vmem:[%s4917 + $0x109] sm:$0xff]
    %v5779 = vld [vmem:[%s4917 + $0x111] sm:$0xff]
    %v5780 = vld [vmem:[%s4917 + $0x121] sm:$0xff]
    %v5781 = vld [vmem:[%s4917 + $0x129] sm:$0xff]
    %v5782 = vld [vmem:[%s4917 + $0x139] sm:$0xff]
    %v5783 = vld [vmem:[%s4917 + $0x141] sm:$0xff]
    %v5784 = vld [vmem:[%s4917 + $0x151] sm:$0xff]
    %v5785 = vld [vmem:[%s4917 + $0x159] sm:$0xff]
    %v5786 = vld [vmem:[%s4917 + $0x169] sm:$0xff]
    %v5787 = vld [vmem:[%s4917 + $0x171] sm:$0xff]
    %v5788 = vld [vmem:[%s4917 + $0x1b1] sm:$0xff]
    %v5789 = vld [vmem:[%s4917 + $0x1b9] sm:$0xff]
    %v5790 = vld [vmem:[%s4917 + $0x1c9] sm:$0xff]
    %v5791 = vld [vmem:[%s4917 + $0x1d1] sm:$0xff]
    %v5792 = vld [vmem:[%s4917 + $0x1e1] sm:$0xff]
    %v5793 = vld [vmem:[%s4917 + $0x1e9] sm:$0xff]
    %v5794 = vld [vmem:[%s4917 + $0x1f9] sm:$0xff]
    %v5795 = vld [vmem:[%s4917 + $0x201] sm:$0xff]
    %v5796 = vld [vmem:[%s4917 + $0x211] sm:$0xff]
    %v5797 = vld [vmem:[%s4917 + $0x219] sm:$0xff]
    %v5798 = vld [vmem:[%s4917 + $0x229] sm:$0xff]
    %v5799 = vld [vmem:[%s4917 + $0x231] sm:$0xff]
    %v5800 = vld [vmem:[%s4917 + $0x241] sm:$0xff]
    %v5801 = vld [vmem:[%s4917 + $0x249] sm:$0xff]
    %v5802 = vld [vmem:[%s4917 + $0x259] sm:$0xff]
    %v5803 = vld [vmem:[%s4917 + $0x261] sm:$0xff]
    %v5804 = vld [vmem:[%s4917 + $0x271] sm:$0xff]
    %v5805 = vld [vmem:[%s4917 + $0x279] sm:$0xff]
    %v5806 = vld [vmem:[%s4917 + $0x289] sm:$0xff]
    %v5807 = vld [vmem:[%s4917 + $0x291] sm:$0xff]
    %v5808 = vld [vmem:[%s4917 + $0x2a1] sm:$0xff]
    %v5809 = vld [vmem:[%s4917 + $0x2a9] sm:$0xff]
    %v5810 = vld [vmem:[%s4917 + $0x2b9] sm:$0xff]
    %v5811 = vld [vmem:[%s4917 + $0x2c1] sm:$0xff]
    %v5812 = vld [vmem:[%s4917 + $0x2d1] sm:$0xff]
    %v5813 = vld [vmem:[%s4917 + $0x2d9] sm:$0xff]
    %v5814 = vld [vmem:[%s4917 + $0x2e9] sm:$0xff]
    %v5815 = vld [vmem:[%s4917 + $0x2f1] sm:$0xff]
    %v5816 = vld [vmem:[%s4917 + $0x301] sm:$0xff]
    %v5817 = vld [vmem:[%s4917 + $0x309] sm:$0xff]
    %v5818 = vld [vmem:[%s4917 + $0x319] sm:$0xff]
    %v5819 = vld [vmem:[%s4917 + $0x321] sm:$0xff]
    %s5820 = scalar_lea.vmem %s1, 28
    %v5821 = vld [vmem:[%s5820] sm:$0xf]
    %v5823 = vsel %vm80, %v5756, 0
    %v5826 = vsel %vm80, %v5757, 0
    %v5829 = vsel %vm80, %v5758, 0
    %v5832 = vsel %vm80, %v5759, 0
    %v5835 = vsel %vm80, %v5760, 0
    %v5838 = vsel %vm80, %v5761, 0
    %v5841 = vsel %vm80, %v5762, 0
    %v5844 = vsel %vm80, %v5763, 0
    %v5847 = vsel %vm80, %v5764, 0
    %v5850 = vsel %vm80, %v5765, 0
    %v5853 = vsel %vm80, %v5766, 0
    %v5856 = vsel %vm80, %v5767, 0
    %v5859 = vsel %vm80, %v5768, 0
    %v5862 = vsel %vm80, %v5769, 0
    %v5865 = vsel %vm80, %v5770, 0
    %v5868 = vsel %vm80, %v5771, 0
    %v5871 = vsel %vm80, %v5772, 0
    %v5874 = vsel %vm80, %v5773, 0
    %v5877 = vsel %vm80, %v5774, 0
    %v5880 = vsel %vm80, %v5775, 0
    %v5883 = vsel %vm80, %v5776, 0
    %v5886 = vsel %vm80, %v5777, 0
    %v5889 = vsel %vm80, %v5778, 0
    %v5892 = vsel %vm80, %v5779, 0
    %v5895 = vsel %vm80, %v5780, 0
    %v5898 = vsel %vm80, %v5781, 0
    %v5901 = vsel %vm80, %v5782, 0
    %v5904 = vsel %vm80, %v5783, 0
    %v5907 = vsel %vm80, %v5784, 0
    %v5910 = vsel %vm80, %v5785, 0
    %v5913 = vsel %vm80, %v5786, 0
    %v5916 = vsel %vm80, %v5787, 0
    %v5919 = vsel %vm80, %v5788, 0
    %v5922 = vsel %vm80, %v5789, 0
    %v5925 = vsel %vm80, %v5790, 0
    %v5928 = vsel %vm80, %v5791, 0
    %v5931 = vsel %vm80, %v5792, 0
    %v5934 = vsel %vm80, %v5793, 0
    %v5937 = vsel %vm80, %v5794, 0
    %v5940 = vsel %vm80, %v5795, 0
    %v5943 = vsel %vm80, %v5796, 0
    %v5946 = vsel %vm80, %v5797, 0
    %v5949 = vsel %vm80, %v5798, 0
    %v5952 = vsel %vm80, %v5799, 0
    %v5955 = vsel %vm80, %v5800, 0
    %v5958 = vsel %vm80, %v5801, 0
    %v5961 = vsel %vm80, %v5802, 0
    %v5964 = vsel %vm80, %v5803, 0
    %v5967 = vsel %vm80, %v5804, 0
    %v5970 = vsel %vm80, %v5805, 0
    %v5973 = vsel %vm80, %v5806, 0
    %v5976 = vsel %vm80, %v5807, 0
    %v5979 = vsel %vm80, %v5808, 0
    %v5982 = vsel %vm80, %v5809, 0
    %v5985 = vsel %vm80, %v5810, 0
    %v5988 = vsel %vm80, %v5811, 0
    %v5991 = vsel %vm80, %v5812, 0
    %v5994 = vsel %vm80, %v5813, 0
    %v5997 = vsel %vm80, %v5814, 0
    %v6000 = vsel %vm80, %v5815, 0
    %v6003 = vsel %vm80, %v5816, 0
    %v6006 = vsel %vm80, %v5817, 0
    %v6009 = vsel %vm80, %v5818, 0
    %v6012 = vsel %vm80, %v5819, 0
    %v6015 = vsel %vm273, %v5821, 0
    %6017 = vmatprep.subr.mxu0 0.0
    %6018 = vmatpush1.msra.mxu0 %v6015
    %6019 = vmatprep.subr.mxu0 0.0
    %6020 = vmatpush1.msra.mxu0 0.0
    %6021 = vmatprep.subr.mxu0 0.0
    %6022 = vmatpush1.msra.mxu0 0.0
    %6023 = vmatprep.subr.mxu0 0.0
    %6024 = vmatpush1.msra.mxu0 0.0
    %6025 = vmatprep.subr.mxu0 0.0
    %6026 = vmatpush1.msra.mxu0 0.0
    %6027 = vmatprep.subr.mxu0 0.0
    %6028 = vmatpush1.msra.mxu0 0.0
    %6029 = vmatprep.subr.mxu0 0.0
    %6030 = vmatpush1.msra.mxu0 0.0
    %6031 = vmatprep.subr.mxu0 0.0
    %6032 = vmatpush1.msra.mxu0 0.0
    %6033 = vmatprep.subr.mxu0 0.0
    %6034 = vmatpush1.msra.mxu0 0.0
    %6035 = vmatprep.subr.mxu0 0.0
    %6036 = vmatpush1.msra.mxu0 0.0
    %6037 = vmatprep.subr.mxu0 0.0
    %6038 = vmatpush1.msra.mxu0 0.0
    %6039 = vmatprep.subr.mxu0 0.0
    %6040 = vmatpush1.msra.mxu0 0.0
    %6041 = vmatprep.subr.mxu0 0.0
    %6042 = vmatpush1.msra.mxu0 0.0
    %6043 = vmatprep.subr.mxu0 0.0
    %6044 = vmatpush1.msra.mxu0 0.0
    %6045 = vmatprep.subr.mxu0 0.0
    %6046 = vmatpush1.msra.mxu0 0.0
    %6047 = vmatprep.subr.mxu0 0.0
    %6048 = vmatpush1.msra.mxu0 0.0
    %6049 = vmatprep.subr.mxu0 0.0
    %6050 = vmatpush1.msra.mxu0 0.0
    %6051 = vmatprep.subr.mxu0 0.0
    %6052 = vmatpush1.msra.mxu0 0.0
    %6053 = vmatprep.subr.mxu0 0.0
    %6054 = vmatpush1.msra.mxu0 0.0
    %6055 = vmatprep.subr.mxu0 0.0
    %6056 = vmatpush1.msra.mxu0 0.0
    %6057 = vmatprep.subr.mxu0 0.0
    %6058 = vmatpush1.msra.mxu0 0.0
    %6059 = vmatprep.subr.mxu0 0.0
    %6060 = vmatpush1.msra.mxu0 0.0
    %6061 = vmatprep.subr.mxu0 0.0
    %6062 = vmatpush1.msra.mxu0 0.0
    %6063 = vmatprep.subr.mxu0 0.0
    %6064 = vmatpush1.msra.mxu0 0.0
    %6065 = vmatprep.subr.mxu0 0.0
    %6066 = vmatpush1.msra.mxu0 0.0
    %6067 = vmatprep.subr.mxu0 0.0
    %6068 = vmatpush1.msra.mxu0 0.0
    %6069 = vmatprep.subr.mxu0 0.0
    %6070 = vmatpush1.msra.mxu0 0.0
    %6071 = vmatprep.subr.mxu0 0.0
    %6072 = vmatpush1.msra.mxu0 0.0
    %6073 = vmatprep.subr.mxu0 0.0
    %6074 = vmatpush1.msra.mxu0 0.0
    %6075 = vmatprep.subr.mxu0 0.0
    %6076 = vmatpush1.msra.mxu0 0.0
    %6077 = vmatprep.subr.mxu0 0.0
    %6078 = vmatpush1.msra.mxu0 0.0
    %6079 = vmatprep.subr.mxu0 0.0
    %6080 = vmatpush1.msra.mxu0 0.0
    %6081 = vmatprep.mubr.f32.mxu0 0.0
    %6082 = vmatmul.mubr.f32.gmra.mrb[0].mxu0 %v5823
    %v6083 = vpop.f32.mrb[0].mxu0
    %v6084 = vadd.f32 0.0, %v6083
    %v6085 = vpop.f32.mrb[0].mxu0
    %6086 = vmatprep.mubr.f32.mxu0 0.0
    %6087 = vmatmul.mubr.f32.gmra.mrb[0].mxu0 %v5826
    %v6088 = vpop.f32.mrb[0].mxu0
    %v6089 = vadd.f32 0.0, %v6088
    %v6090 = vpop.f32.mrb[0].mxu0
    %6091 = vmatprep.mubr.f32.mxu0 0.0
    %6092 = vmatmul.mubr.f32.gmra.mrb[0].mxu0 %v5829
    %v6093 = vpop.f32.mrb[0].mxu0
    %v6094 = vadd.f32 0.0, %v6093
    %v6095 = vpop.f32.mrb[0].mxu0
    %6096 = vmatprep.mubr.f32.mxu0 0.0
    %6097 = vmatmul.mubr.f32.gmra.mrb[0].mxu0 %v5832
    %v6098 = vpop.f32.mrb[0].mxu0
    %v6099 = vadd.f32 0.0, %v6098
    %v6100 = vpop.f32.mrb[0].mxu0
    %6101 = vmatprep.mubr.f32.mxu0 0.0
    %6102 = vmatmul.mubr.f32.gmra.mrb[0].mxu0 %v5835
    %v6103 = vpop.f32.mrb[0].mxu0
    %v6104 = vadd.f32 0.0, %v6103
    %v6105 = vpop.f32.mrb[0].mxu0
    %6106 = vmatprep.mubr.f32.mxu0 0.0
    %6107 = vmatmul.mubr.f32.gmra.mrb[0].mxu0 %v5838
    %v6108 = vpop.f32.mrb[0].mxu0
    %v6109 = vadd.f32 0.0, %v6108
    %v6110 = vpop.f32.mrb[0].mxu0
    %6111 = vmatprep.mubr.f32.mxu0 0.0
    %6112 = vmatmul.mubr.f32.gmra.mrb[0].mxu0 %v5841
    %v6113 = vpop.f32.mrb[0].mxu0
    %v6114 = vadd.f32 0.0, %v6113
    %v6115 = vpop.f32.mrb[0].mxu0
    %6116 = vmatprep.mubr.f32.mxu0 0.0
    %6117 = vmatmul.mubr.f32.gmra.mrb[0].mxu0 %v5844
    %v6118 = vpop.f32.mrb[0].mxu0
    %v6119 = vadd.f32 0.0, %v6118
    %v6120 = vpop.f32.mrb[0].mxu0
    %6121 = vmatprep.mubr.f32.mxu0 0.0
    %6122 = vmatmul.mubr.f32.gmra.mrb[0].mxu0 %v5847
    %v6123 = vpop.f32.mrb[0].mxu0
    %v6124 = vadd.f32 0.0, %v6123
    %v6125 = vpop.f32.mrb[0].mxu0
    %6126 = vmatprep.mubr.f32.mxu0 0.0
    %6127 = vmatmul.mubr.f32.gmra.mrb[0].mxu0 %v5850
    %v6128 = vpop.f32.mrb[0].mxu0
    %v6129 = vadd.f32 0.0, %v6128
    %v6130 = vpop.f32.mrb[0].mxu0
    %6131 = vmatprep.mubr.f32.mxu0 0.0
    %6132 = vmatmul.mubr.f32.gmra.mrb[0].mxu0 %v5853
    %v6133 = vpop.f32.mrb[0].mxu0
    %v6134 = vadd.f32 0.0, %v6133
    %v6135 = vpop.f32.mrb[0].mxu0
    %6136 = vmatprep.mubr.f32.mxu0 0.0
    %6137 = vmatmul.mubr.f32.gmra.mrb[0].mxu0 %v5856
    %v6138 = vpop.f32.mrb[0].mxu0
    %v6139 = vadd.f32 0.0, %v6138
    %v6140 = vpop.f32.mrb[0].mxu0
    %6141 = vmatprep.mubr.f32.mxu0 0.0
    %6142 = vmatmul.mubr.f32.gmra.mrb[0].mxu0 %v5859
    %v6143 = vpop.f32.mrb[0].mxu0
    %v6144 = vadd.f32 0.0, %v6143
    %v6145 = vpop.f32.mrb[0].mxu0
    %6146 = vmatprep.mubr.f32.mxu0 0.0
    %6147 = vmatmul.mubr.f32.gmra.mrb[0].mxu0 %v5862
    %v6148 = vpop.f32.mrb[0].mxu0
    %v6149 = vadd.f32 0.0, %v6148
    %v6150 = vpop.f32.mrb[0].mxu0
    %6151 = vmatprep.mubr.f32.mxu0 0.0
    %6152 = vmatmul.mubr.f32.gmra.mrb[0].mxu0 %v5865
    %v6153 = vpop.f32.mrb[0].mxu0
    %v6154 = vadd.f32 0.0, %v6153
    %v6155 = vpop.f32.mrb[0].mxu0
    %6156 = vmatprep.mubr.f32.mxu0 0.0
    %6157 = vmatmul.mubr.f32.gmra.mrb[0].mxu0 %v5868
    %v6158 = vpop.f32.mrb[0].mxu0
    %v6159 = vadd.f32 0.0, %v6158
    %v6160 = vpop.f32.mrb[0].mxu0
    %6161 = vmatprep.mubr.f32.mxu0 0.0
    %6162 = vmatmul.mubr.f32.gmra.mrb[0].mxu0 %v5871
    %v6163 = vpop.f32.mrb[0].mxu0
    %v6164 = vadd.f32 0.0, %v6163
    %v6165 = vpop.f32.mrb[0].mxu0
    %6166 = vmatprep.mubr.f32.mxu0 0.0
    %6167 = vmatmul.mubr.f32.gmra.mrb[0].mxu0 %v5874
    %v6168 = vpop.f32.mrb[0].mxu0
    %v6169 = vadd.f32 0.0, %v6168
    %v6170 = vpop.f32.mrb[0].mxu0
    %6171 = vmatprep.mubr.f32.mxu0 0.0
    %6172 = vmatmul.mubr.f32.gmra.mrb[0].mxu0 %v5877
    %v6173 = vpop.f32.mrb[0].mxu0
    %v6174 = vadd.f32 0.0, %v6173
    %v6175 = vpop.f32.mrb[0].mxu0
    %6176 = vmatprep.mubr.f32.mxu0 0.0
    %6177 = vmatmul.mubr.f32.gmra.mrb[0].mxu0 %v5880
    %v6178 = vpop.f32.mrb[0].mxu0
    %v6179 = vadd.f32 0.0, %v6178
    %v6180 = vpop.f32.mrb[0].mxu0
    %6181 = vmatprep.mubr.f32.mxu0 0.0
    %6182 = vmatmul.mubr.f32.gmra.mrb[0].mxu0 %v5883
    %v6183 = vpop.f32.mrb[0].mxu0
    %v6184 = vadd.f32 0.0, %v6183
    %v6185 = vpop.f32.mrb[0].mxu0
    %6186 = vmatprep.mubr.f32.mxu0 0.0
    %6187 = vmatmul.mubr.f32.gmra.mrb[0].mxu0 %v5886
    %v6188 = vpop.f32.mrb[0].mxu0
    %v6189 = vadd.f32 0.0, %v6188
    %v6190 = vpop.f32.mrb[0].mxu0
    %6191 = vmatprep.mubr.f32.mxu0 0.0
    %6192 = vmatmul.mubr.f32.gmra.mrb[0].mxu0 %v5889
    %v6193 = vpop.f32.mrb[0].mxu0
    %v6194 = vadd.f32 0.0, %v6193
    %v6195 = vpop.f32.mrb[0].mxu0
    %6196 = vmatprep.mubr.f32.mxu0 0.0
    %6197 = vmatmul.mubr.f32.gmra.mrb[0].mxu0 %v5892
    %v6198 = vpop.f32.mrb[0].mxu0
    %v6199 = vadd.f32 0.0, %v6198
    %v6200 = vpop.f32.mrb[0].mxu0
    %6201 = vmatprep.mubr.f32.mxu0 0.0
    %6202 = vmatmul.mubr.f32.gmra.mrb[0].mxu0 %v5895
    %v6203 = vpop.f32.mrb[0].mxu0
    %v6204 = vadd.f32 0.0, %v6203
    %v6205 = vpop.f32.mrb[0].mxu0
    %6206 = vmatprep.mubr.f32.mxu0 0.0
    %6207 = vmatmul.mubr.f32.gmra.mrb[0].mxu0 %v5898
    %v6208 = vpop.f32.mrb[0].mxu0
    %v6209 = vadd.f32 0.0, %v6208
    %v6210 = vpop.f32.mrb[0].mxu0
    %6211 = vmatprep.mubr.f32.mxu0 0.0
    %6212 = vmatmul.mubr.f32.gmra.mrb[0].mxu0 %v5901
    %v6213 = vpop.f32.mrb[0].mxu0
    %v6214 = vadd.f32 0.0, %v6213
    %v6215 = vpop.f32.mrb[0].mxu0
    %6216 = vmatprep.mubr.f32.mxu0 0.0
    %6217 = vmatmul.mubr.f32.gmra.mrb[0].mxu0 %v5904
    %v6218 = vpop.f32.mrb[0].mxu0
    %v6219 = vadd.f32 0.0, %v6218
    %v6220 = vpop.f32.mrb[0].mxu0
    %6221 = vmatprep.mubr.f32.mxu0 0.0
    %6222 = vmatmul.mubr.f32.gmra.mrb[0].mxu0 %v5907
    %v6223 = vpop.f32.mrb[0].mxu0
    %v6224 = vadd.f32 0.0, %v6223
    %v6225 = vpop.f32.mrb[0].mxu0
    %6226 = vmatprep.mubr.f32.mxu0 0.0
    %6227 = vmatmul.mubr.f32.gmra.mrb[0].mxu0 %v5910
    %v6228 = vpop.f32.mrb[0].mxu0
    %v6229 = vadd.f32 0.0, %v6228
    %v6230 = vpop.f32.mrb[0].mxu0
    %6231 = vmatprep.mubr.f32.mxu0 0.0
    %6232 = vmatmul.mubr.f32.gmra.mrb[0].mxu0 %v5913
    %v6233 = vpop.f32.mrb[0].mxu0
    %v6234 = vadd.f32 0.0, %v6233
    %v6235 = vpop.f32.mrb[0].mxu0
    %6236 = vmatprep.mubr.f32.mxu0 0.0
    %6237 = vmatmul.mubr.f32.gmra.mrb[0].mxu0 %v5916
    %v6238 = vpop.f32.mrb[0].mxu0
    %v6239 = vadd.f32 0.0, %v6238
    %v6240 = vpop.f32.mrb[0].mxu0
    %6241 = vmatprep.mubr.f32.mxu0 0.0
    %6242 = vmatmul.mubr.f32.gmra.mrb[0].mxu0 %v5919
    %v6243 = vpop.f32.mrb[0].mxu0
    %v6244 = vadd.f32 0.0, %v6243
    %v6245 = vpop.f32.mrb[0].mxu0
    %6246 = vmatprep.mubr.f32.mxu0 0.0
    %6247 = vmatmul.mubr.f32.gmra.mrb[0].mxu0 %v5922
    %v6248 = vpop.f32.mrb[0].mxu0
    %v6249 = vadd.f32 0.0, %v6248
    %v6250 = vpop.f32.mrb[0].mxu0
    %6251 = vmatprep.mubr.f32.mxu0 0.0
    %6252 = vmatmul.mubr.f32.gmra.mrb[0].mxu0 %v5925
    %v6253 = vpop.f32.mrb[0].mxu0
    %v6254 = vadd.f32 0.0, %v6253
    %v6255 = vpop.f32.mrb[0].mxu0
    %6256 = vmatprep.mubr.f32.mxu0 0.0
    %6257 = vmatmul.mubr.f32.gmra.mrb[0].mxu0 %v5928
    %v6258 = vpop.f32.mrb[0].mxu0
    %v6259 = vadd.f32 0.0, %v6258
    %v6260 = vpop.f32.mrb[0].mxu0
    %6261 = vmatprep.mubr.f32.mxu0 0.0
    %6262 = vmatmul.mubr.f32.gmra.mrb[0].mxu0 %v5931
    %v6263 = vpop.f32.mrb[0].mxu0
    %v6264 = vadd.f32 0.0, %v6263
    %v6265 = vpop.f32.mrb[0].mxu0
    %6266 = vmatprep.mubr.f32.mxu0 0.0
    %6267 = vmatmul.mubr.f32.gmra.mrb[0].mxu0 %v5934
    %v6268 = vpop.f32.mrb[0].mxu0
    %v6269 = vadd.f32 0.0, %v6268
    %v6270 = vpop.f32.mrb[0].mxu0
    %6271 = vmatprep.mubr.f32.mxu0 0.0
    %6272 = vmatmul.mubr.f32.gmra.mrb[0].mxu0 %v5937
    %v6273 = vpop.f32.mrb[0].mxu0
    %v6274 = vadd.f32 0.0, %v6273
    %v6275 = vpop.f32.mrb[0].mxu0
    %6276 = vmatprep.mubr.f32.mxu0 0.0
    %6277 = vmatmul.mubr.f32.gmra.mrb[0].mxu0 %v5940
    %v6278 = vpop.f32.mrb[0].mxu0
    %v6279 = vadd.f32 0.0, %v6278
    %v6280 = vpop.f32.mrb[0].mxu0
    %6281 = vmatprep.mubr.f32.mxu0 0.0
    %6282 = vmatmul.mubr.f32.gmra.mrb[0].mxu0 %v5943
    %v6283 = vpop.f32.mrb[0].mxu0
    %v6284 = vadd.f32 0.0, %v6283
    %v6285 = vpop.f32.mrb[0].mxu0
    %6286 = vmatprep.mubr.f32.mxu0 0.0
    %6287 = vmatmul.mubr.f32.gmra.mrb[0].mxu0 %v5946
    %v6288 = vpop.f32.mrb[0].mxu0
    %v6289 = vadd.f32 0.0, %v6288
    %v6290 = vpop.f32.mrb[0].mxu0
    %6291 = vmatprep.mubr.f32.mxu0 0.0
    %6292 = vmatmul.mubr.f32.gmra.mrb[0].mxu0 %v5949
    %v6293 = vpop.f32.mrb[0].mxu0
    %v6294 = vadd.f32 0.0, %v6293
    %v6295 = vpop.f32.mrb[0].mxu0
    %6296 = vmatprep.mubr.f32.mxu0 0.0
    %6297 = vmatmul.mubr.f32.gmra.mrb[0].mxu0 %v5952
    %v6298 = vpop.f32.mrb[0].mxu0
    %v6299 = vadd.f32 0.0, %v6298
    %v6300 = vpop.f32.mrb[0].mxu0
    %6301 = vmatprep.mubr.f32.mxu0 0.0
    %6302 = vmatmul.mubr.f32.gmra.mrb[0].mxu0 %v5955
    %v6303 = vpop.f32.mrb[0].mxu0
    %v6304 = vadd.f32 0.0, %v6303
    %v6305 = vpop.f32.mrb[0].mxu0
    %6306 = vmatprep.mubr.f32.mxu0 0.0
    %6307 = vmatmul.mubr.f32.gmra.mrb[0].mxu0 %v5958
    %v6308 = vpop.f32.mrb[0].mxu0
    %v6309 = vadd.f32 0.0, %v6308
    %v6310 = vpop.f32.mrb[0].mxu0
    %6311 = vmatprep.mubr.f32.mxu0 0.0
    %6312 = vmatmul.mubr.f32.gmra.mrb[0].mxu0 %v5961
    %v6313 = vpop.f32.mrb[0].mxu0
    %v6314 = vadd.f32 0.0, %v6313
    %v6315 = vpop.f32.mrb[0].mxu0
    %6316 = vmatprep.mubr.f32.mxu0 0.0
    %6317 = vmatmul.mubr.f32.gmra.mrb[0].mxu0 %v5964
    %v6318 = vpop.f32.mrb[0].mxu0
    %v6319 = vadd.f32 0.0, %v6318
    %v6320 = vpop.f32.mrb[0].mxu0
    %6321 = vmatprep.mubr.f32.mxu0 0.0
    %6322 = vmatmul.mubr.f32.gmra.mrb[0].mxu0 %v5967
    %v6323 = vpop.f32.mrb[0].mxu0
    %v6324 = vadd.f32 0.0, %v6323
    %v6325 = vpop.f32.mrb[0].mxu0
    %6326 = vmatprep.mubr.f32.mxu0 0.0
    %6327 = vmatmul.mubr.f32.gmra.mrb[0].mxu0 %v5970
    %v6328 = vpop.f32.mrb[0].mxu0
    %v6329 = vadd.f32 0.0, %v6328
    %v6330 = vpop.f32.mrb[0].mxu0
    %6331 = vmatprep.mubr.f32.mxu0 0.0
    %6332 = vmatmul.mubr.f32.gmra.mrb[0].mxu0 %v5973
    %v6333 = vpop.f32.mrb[0].mxu0
    %v6334 = vadd.f32 0.0, %v6333
    %v6335 = vpop.f32.mrb[0].mxu0
    %6336 = vmatprep.mubr.f32.mxu0 0.0
    %6337 = vmatmul.mubr.f32.gmra.mrb[0].mxu0 %v5976
    %v6338 = vpop.f32.mrb[0].mxu0
    %v6339 = vadd.f32 0.0, %v6338
    %v6340 = vpop.f32.mrb[0].mxu0
    %6341 = vmatprep.mubr.f32.mxu0 0.0
    %6342 = vmatmul.mubr.f32.gmra.mrb[0].mxu0 %v5979
    %v6343 = vpop.f32.mrb[0].mxu0
    %v6344 = vadd.f32 0.0, %v6343
    %v6345 = vpop.f32.mrb[0].mxu0
    %6346 = vmatprep.mubr.f32.mxu0 0.0
    %6347 = vmatmul.mubr.f32.gmra.mrb[0].mxu0 %v5982
    %v6348 = vpop.f32.mrb[0].mxu0
    %v6349 = vadd.f32 0.0, %v6348
    %v6350 = vpop.f32.mrb[0].mxu0
    %6351 = vmatprep.mubr.f32.mxu0 0.0
    %6352 = vmatmul.mubr.f32.gmra.mrb[0].mxu0 %v5985
    %v6353 = vpop.f32.mrb[0].mxu0
    %v6354 = vadd.f32 0.0, %v6353
    %v6355 = vpop.f32.mrb[0].mxu0
    %6356 = vmatprep.mubr.f32.mxu0 0.0
    %6357 = vmatmul.mubr.f32.gmra.mrb[0].mxu0 %v5988
    %v6358 = vpop.f32.mrb[0].mxu0
    %v6359 = vadd.f32 0.0, %v6358
    %v6360 = vpop.f32.mrb[0].mxu0
    %6361 = vmatprep.mubr.f32.mxu0 0.0
    %6362 = vmatmul.mubr.f32.gmra.mrb[0].mxu0 %v5991
    %v6363 = vpop.f32.mrb[0].mxu0
    %v6364 = vadd.f32 0.0, %v6363
    %v6365 = vpop.f32.mrb[0].mxu0
    %6366 = vmatprep.mubr.f32.mxu0 0.0
    %6367 = vmatmul.mubr.f32.gmra.mrb[0].mxu0 %v5994
    %v6368 = vpop.f32.mrb[0].mxu0
    %v6369 = vadd.f32 0.0, %v6368
    %v6370 = vpop.f32.mrb[0].mxu0
    %6371 = vmatprep.mubr.f32.mxu0 0.0
    %6372 = vmatmul.mubr.f32.gmra.mrb[0].mxu0 %v5997
    %v6373 = vpop.f32.mrb[0].mxu0
    %v6374 = vadd.f32 0.0, %v6373
    %v6375 = vpop.f32.mrb[0].mxu0
    %6376 = vmatprep.mubr.f32.mxu0 0.0
    %6377 = vmatmul.mubr.f32.gmra.mrb[0].mxu0 %v6000
    %v6378 = vpop.f32.mrb[0].mxu0
    %v6379 = vadd.f32 0.0, %v6378
    %v6380 = vpop.f32.mrb[0].mxu0
    %6381 = vmatprep.mubr.f32.mxu0 0.0
    %6382 = vmatmul.mubr.f32.gmra.mrb[0].mxu0 %v6003
    %v6383 = vpop.f32.mrb[0].mxu0
    %v6384 = vadd.f32 0.0, %v6383
    %v6385 = vpop.f32.mrb[0].mxu0
    %6386 = vmatprep.mubr.f32.mxu0 0.0
    %6387 = vmatmul.mubr.f32.gmra.mrb[0].mxu0 %v6006
    %v6388 = vpop.f32.mrb[0].mxu0
    %v6389 = vadd.f32 0.0, %v6388
    %v6390 = vpop.f32.mrb[0].mxu0
    %6391 = vmatprep.mubr.f32.mxu0 0.0
    %6392 = vmatmul.mubr.f32.gmra.mrb[0].mxu0 %v6009
    %v6393 = vpop.f32.mrb[0].mxu0
    %v6394 = vadd.f32 0.0, %v6393
    %v6395 = vpop.f32.mrb[0].mxu0
    %6396 = vmatprep.mubr.f32.mxu0 0.0
    %6397 = vmatmul.mubr.f32.gmra.mrb[0].mxu0 %v6012
    %v6398 = vpop.f32.mrb[0].mxu0
    %v6399 = vadd.f32 0.0, %v6398
    %v6400 = vpop.f32.mrb[0].mxu0
    %6401 = vdwg.mxu0
    %v6402 = vld [vmem:[#allocation2] sm:$0xff]
    %v6403 = vld [vmem:[#allocation2 + $0x8] sm:$0xff]
    %v6404 = vld [vmem:[#allocation2 + $0x10] sm:$0xff]
    %v6405 = vld [vmem:[#allocation2 + $0x18] sm:$0xff]
    %v6406 = vld [vmem:[#allocation2 + $0x20] sm:$0xff]
    %v6407 = vld [vmem:[#allocation2 + $0x28] sm:$0xff]
    %v6408 = vld [vmem:[#allocation2 + $0x30] sm:$0xff]
    %v6409 = vld [vmem:[#allocation2 + $0x38] sm:$0xff]
    %v6410 = vld [vmem:[#allocation2 + $0x40] sm:$0xff]
    %v6411 = vld [vmem:[#allocation2 + $0x48] sm:$0xff]
    %v6412 = vld [vmem:[#allocation2 + $0x50] sm:$0xff]
    %v6413 = vld [vmem:[#allocation2 + $0x58] sm:$0xff]
    %v6414 = vld [vmem:[#allocation2 + $0x60] sm:$0xff]
    %v6415 = vld [vmem:[#allocation2 + $0x68] sm:$0xff]
    %v6416 = vld [vmem:[#allocation2 + $0x70] sm:$0xff]
    %v6417 = vld [vmem:[#allocation2 + $0x78] sm:$0xff]
    %v6418 = vld [vmem:[#allocation2 + $0x80] sm:$0xff]
    %v6419 = vld [vmem:[#allocation2 + $0x88] sm:$0xff]
    %v6420 = vld [vmem:[#allocation2 + $0x90] sm:$0xff]
    %v6421 = vld [vmem:[#allocation2 + $0x98] sm:$0xff]
    %v6422 = vld [vmem:[#allocation2 + $0xa0] sm:$0xff]
    %v6423 = vld [vmem:[#allocation2 + $0xa8] sm:$0xff]
    %v6424 = vld [vmem:[#allocation2 + $0xb0] sm:$0xff]
    %v6425 = vld [vmem:[#allocation2 + $0xb8] sm:$0xff]
    %v6426 = vld [vmem:[#allocation2 + $0xc0] sm:$0xff]
    %v6427 = vld [vmem:[#allocation2 + $0xc8] sm:$0xff]
    %v6428 = vld [vmem:[#allocation2 + $0xd0] sm:$0xff]
    %v6429 = vld [vmem:[#allocation2 + $0xd8] sm:$0xff]
    %v6430 = vld [vmem:[#allocation2 + $0xe0] sm:$0xff]
    %v6431 = vld [vmem:[#allocation2 + $0xe8] sm:$0xff]
    %v6432 = vld [vmem:[#allocation2 + $0xf0] sm:$0xff]
    %v6433 = vld [vmem:[#allocation2 + $0xf8] sm:$0xff]
    %v6434 = vld [vmem:[#allocation2 + $0x100] sm:$0xff]
    %v6435 = vld [vmem:[#allocation2 + $0x108] sm:$0xff]
    %v6436 = vld [vmem:[#allocation2 + $0x110] sm:$0xff]
    %v6437 = vld [vmem:[#allocation2 + $0x118] sm:$0xff]
    %v6438 = vld [vmem:[#allocation2 + $0x120] sm:$0xff]
    %v6439 = vld [vmem:[#allocation2 + $0x128] sm:$0xff]
    %v6440 = vld [vmem:[#allocation2 + $0x130] sm:$0xff]
    %v6441 = vld [vmem:[#allocation2 + $0x138] sm:$0xff]
    %v6442 = vld [vmem:[#allocation2 + $0x140] sm:$0xff]
    %v6443 = vld [vmem:[#allocation2 + $0x148] sm:$0xff]
    %v6444 = vld [vmem:[#allocation2 + $0x150] sm:$0xff]
    %v6445 = vld [vmem:[#allocation2 + $0x158] sm:$0xff]
    %v6446 = vld [vmem:[#allocation2 + $0x160] sm:$0xff]
    %v6447 = vld [vmem:[#allocation2 + $0x168] sm:$0xff]
    %v6448 = vld [vmem:[#allocation2 + $0x170] sm:$0xff]
    %v6449 = vld [vmem:[#allocation2 + $0x178] sm:$0xff]
    %v6450 = vld [vmem:[#allocation2 + $0x180] sm:$0xff]
    %v6451 = vld [vmem:[#allocation2 + $0x188] sm:$0xff]
    %v6452 = vld [vmem:[#allocation2 + $0x190] sm:$0xff]
    %v6453 = vld [vmem:[#allocation2 + $0x198] sm:$0xff]
    %v6454 = vld [vmem:[#allocation2 + $0x1a0] sm:$0xff]
    %v6455 = vld [vmem:[#allocation2 + $0x1a8] sm:$0xff]
    %v6456 = vld [vmem:[#allocation2 + $0x1b0] sm:$0xff]
    %v6457 = vld [vmem:[#allocation2 + $0x1b8] sm:$0xff]
    %v6458 = vld [vmem:[#allocation2 + $0x1c0] sm:$0xff]
    %v6459 = vld [vmem:[#allocation2 + $0x1c8] sm:$0xff]
    %v6460 = vld [vmem:[#allocation2 + $0x1d0] sm:$0xff]
    %v6461 = vld [vmem:[#allocation2 + $0x1d8] sm:$0xff]
    %v6462 = vld [vmem:[#allocation2 + $0x1e0] sm:$0xff]
    %v6463 = vld [vmem:[#allocation2 + $0x1e8] sm:$0xff]
    %v6464 = vld [vmem:[#allocation2 + $0x1f0] sm:$0xff]
    %v6465 = vld [vmem:[#allocation2 + $0x1f8] sm:$0xff]
    %v6466 = vadd.f32 %v6402, %v6084
    %v6467 = vadd.f32 %v6403, %v6089
    %v6468 = vadd.f32 %v6404, %v6094
    %v6469 = vadd.f32 %v6405, %v6099
    %v6470 = vadd.f32 %v6406, %v6104
    %v6471 = vadd.f32 %v6407, %v6109
    %v6472 = vadd.f32 %v6408, %v6114
    %v6473 = vadd.f32 %v6409, %v6119
    %v6474 = vadd.f32 %v6410, %v6124
    %v6475 = vadd.f32 %v6411, %v6129
    %v6476 = vadd.f32 %v6412, %v6134
    %v6477 = vadd.f32 %v6413, %v6139
    %v6478 = vadd.f32 %v6414, %v6144
    %v6479 = vadd.f32 %v6415, %v6149
    %v6480 = vadd.f32 %v6416, %v6154
    %v6481 = vadd.f32 %v6417, %v6159
    %v6482 = vadd.f32 %v6418, %v6164
    %v6483 = vadd.f32 %v6419, %v6169
    %v6484 = vadd.f32 %v6420, %v6174
    %v6485 = vadd.f32 %v6421, %v6179
    %v6486 = vadd.f32 %v6422, %v6184
    %v6487 = vadd.f32 %v6423, %v6189
    %v6488 = vadd.f32 %v6424, %v6194
    %v6489 = vadd.f32 %v6425, %v6199
    %v6490 = vadd.f32 %v6426, %v6204
    %v6491 = vadd.f32 %v6427, %v6209
    %v6492 = vadd.f32 %v6428, %v6214
    %v6493 = vadd.f32 %v6429, %v6219
    %v6494 = vadd.f32 %v6430, %v6224
    %v6495 = vadd.f32 %v6431, %v6229
    %v6496 = vadd.f32 %v6432, %v6234
    %v6497 = vadd.f32 %v6433, %v6239
    %v6498 = vadd.f32 %v6434, %v6244
    %v6499 = vadd.f32 %v6435, %v6249
    %v6500 = vadd.f32 %v6436, %v6254
    %v6501 = vadd.f32 %v6437, %v6259
    %v6502 = vadd.f32 %v6438, %v6264
    %v6503 = vadd.f32 %v6439, %v6269
    %v6504 = vadd.f32 %v6440, %v6274
    %v6505 = vadd.f32 %v6441, %v6279
    %v6506 = vadd.f32 %v6442, %v6284
    %v6507 = vadd.f32 %v6443, %v6289
    %v6508 = vadd.f32 %v6444, %v6294
    %v6509 = vadd.f32 %v6445, %v6299
    %v6510 = vadd.f32 %v6446, %v6304
    %v6511 = vadd.f32 %v6447, %v6309
    %v6512 = vadd.f32 %v6448, %v6314
    %v6513 = vadd.f32 %v6449, %v6319
    %v6514 = vadd.f32 %v6450, %v6324
    %v6515 = vadd.f32 %v6451, %v6329
    %v6516 = vadd.f32 %v6452, %v6334
    %v6517 = vadd.f32 %v6453, %v6339
    %v6518 = vadd.f32 %v6454, %v6344
    %v6519 = vadd.f32 %v6455, %v6349
    %v6520 = vadd.f32 %v6456, %v6354
    %v6521 = vadd.f32 %v6457, %v6359
    %v6522 = vadd.f32 %v6458, %v6364
    %v6523 = vadd.f32 %v6459, %v6369
    %v6524 = vadd.f32 %v6460, %v6374
    %v6525 = vadd.f32 %v6461, %v6379
    %v6526 = vadd.f32 %v6462, %v6384
    %v6527 = vadd.f32 %v6463, %v6389
    %v6528 = vadd.f32 %v6464, %v6394
    %v6529 = vadd.f32 %v6465, %v6399
    %6530 = vst [vmem:[#allocation2] sm:$0xff] %v6466
    %6531 = vst [vmem:[#allocation2 + $0x8] sm:$0xff] %v6467
    %6532 = vst [vmem:[#allocation2 + $0x10] sm:$0xff] %v6468
    %6533 = vst [vmem:[#allocation2 + $0x18] sm:$0xff] %v6469
    %6534 = vst [vmem:[#allocation2 + $0x20] sm:$0xff] %v6470
    %6535 = vst [vmem:[#allocation2 + $0x28] sm:$0xff] %v6471
    %6536 = vst [vmem:[#allocation2 + $0x30] sm:$0xff] %v6472
    %6537 = vst [vmem:[#allocation2 + $0x38] sm:$0xff] %v6473
    %6538 = vst [vmem:[#allocation2 + $0x40] sm:$0xff] %v6474
    %6539 = vst [vmem:[#allocation2 + $0x48] sm:$0xff] %v6475
    %6540 = vst [vmem:[#allocation2 + $0x50] sm:$0xff] %v6476
    %6541 = vst [vmem:[#allocation2 + $0x58] sm:$0xff] %v6477
    %6542 = vst [vmem:[#allocation2 + $0x60] sm:$0xff] %v6478
    %6543 = vst [vmem:[#allocation2 + $0x68] sm:$0xff] %v6479
    %6544 = vst [vmem:[#allocation2 + $0x70] sm:$0xff] %v6480
    %6545 = vst [vmem:[#allocation2 + $0x78] sm:$0xff] %v6481
    %6546 = vst [vmem:[#allocation2 + $0x80] sm:$0xff] %v6482
    %6547 = vst [vmem:[#allocation2 + $0x88] sm:$0xff] %v6483
    %6548 = vst [vmem:[#allocation2 + $0x90] sm:$0xff] %v6484
    %6549 = vst [vmem:[#allocation2 + $0x98] sm:$0xff] %v6485
    %6550 = vst [vmem:[#allocation2 + $0xa0] sm:$0xff] %v6486
    %6551 = vst [vmem:[#allocation2 + $0xa8] sm:$0xff] %v6487
    %6552 = vst [vmem:[#allocation2 + $0xb0] sm:$0xff] %v6488
    %6553 = vst [vmem:[#allocation2 + $0xb8] sm:$0xff] %v6489
    %6554 = vst [vmem:[#allocation2 + $0xc0] sm:$0xff] %v6490
    %6555 = vst [vmem:[#allocation2 + $0xc8] sm:$0xff] %v6491
    %6556 = vst [vmem:[#allocation2 + $0xd0] sm:$0xff] %v6492
    %6557 = vst [vmem:[#allocation2 + $0xd8] sm:$0xff] %v6493
    %6558 = vst [vmem:[#allocation2 + $0xe0] sm:$0xff] %v6494
    %6559 = vst [vmem:[#allocation2 + $0xe8] sm:$0xff] %v6495
    %6560 = vst [vmem:[#allocation2 + $0xf0] sm:$0xff] %v6496
    %6561 = vst [vmem:[#allocation2 + $0xf8] sm:$0xff] %v6497
    %6562 = vst [vmem:[#allocation2 + $0x100] sm:$0xff] %v6498
    %6563 = vst [vmem:[#allocation2 + $0x108] sm:$0xff] %v6499
    %6564 = vst [vmem:[#allocation2 + $0x110] sm:$0xff] %v6500
    %6565 = vst [vmem:[#allocation2 + $0x118] sm:$0xff] %v6501
    %6566 = vst [vmem:[#allocation2 + $0x120] sm:$0xff] %v6502
    %6567 = vst [vmem:[#allocation2 + $0x128] sm:$0xff] %v6503
    %6568 = vst [vmem:[#allocation2 + $0x130] sm:$0xff] %v6504
    %6569 = vst [vmem:[#allocation2 + $0x138] sm:$0xff] %v6505
    %6570 = vst [vmem:[#allocation2 + $0x140] sm:$0xff] %v6506
    %6571 = vst [vmem:[#allocation2 + $0x148] sm:$0xff] %v6507
    %6572 = vst [vmem:[#allocation2 + $0x150] sm:$0xff] %v6508
    %6573 = vst [vmem:[#allocation2 + $0x158] sm:$0xff] %v6509
    %6574 = vst [vmem:[#allocation2 + $0x160] sm:$0xff] %v6510
    %6575 = vst [vmem:[#allocation2 + $0x168] sm:$0xff] %v6511
    %6576 = vst [vmem:[#allocation2 + $0x170] sm:$0xff] %v6512
    %6577 = vst [vmem:[#allocation2 + $0x178] sm:$0xff] %v6513
    %6578 = vst [vmem:[#allocation2 + $0x180] sm:$0xff] %v6514
    %6579 = vst [vmem:[#allocation2 + $0x188] sm:$0xff] %v6515
    %6580 = vst [vmem:[#allocation2 + $0x190] sm:$0xff] %v6516
    %6581 = vst [vmem:[#allocation2 + $0x198] sm:$0xff] %v6517
    %6582 = vst [vmem:[#allocation2 + $0x1a0] sm:$0xff] %v6518
    %6583 = vst [vmem:[#allocation2 + $0x1a8] sm:$0xff] %v6519
    %6584 = vst [vmem:[#allocation2 + $0x1b0] sm:$0xff] %v6520
    %6585 = vst [vmem:[#allocation2 + $0x1b8] sm:$0xff] %v6521
    %6586 = vst [vmem:[#allocation2 + $0x1c0] sm:$0xff] %v6522
    %6587 = vst [vmem:[#allocation2 + $0x1c8] sm:$0xff] %v6523
    %6588 = vst [vmem:[#allocation2 + $0x1d0] sm:$0xff] %v6524
    %6589 = vst [vmem:[#allocation2 + $0x1d8] sm:$0xff] %v6525
    %6590 = vst [vmem:[#allocation2 + $0x1e0] sm:$0xff] %v6526
    %6591 = vst [vmem:[#allocation2 + $0x1e8] sm:$0xff] %v6527
    %6592 = vst [vmem:[#allocation2 + $0x1f0] sm:$0xff] %v6528
    %6593 = vst [vmem:[#allocation2 + $0x1f8] sm:$0xff] %v6529
    %v6594 = vld [vmem:[%s4917 + $0x2] sm:$0xff]
    %v6595 = vld [vmem:[%s4917 + $0xa] sm:$0xff]
    %v6596 = vld [vmem:[%s4917 + $0x1a] sm:$0xff]
    %v6597 = vld [vmem:[%s4917 + $0x22] sm:$0xff]
    %v6598 = vld [vmem:[%s4917 + $0x32] sm:$0xff]
    %v6599 = vld [vmem:[%s4917 + $0x3a] sm:$0xff]
    %v6600 = vld [vmem:[%s4917 + $0x4a] sm:$0xff]
    %v6601 = vld [vmem:[%s4917 + $0x52] sm:$0xff]
    %v6602 = vld [vmem:[%s4917 + $0x62] sm:$0xff]
    %v6603 = vld [vmem:[%s4917 + $0x6a] sm:$0xff]
    %v6604 = vld [vmem:[%s4917 + $0x7a] sm:$0xff]
    %v6605 = vld [vmem:[%s4917 + $0x82] sm:$0xff]
    %v6606 = vld [vmem:[%s4917 + $0x92] sm:$0xff]
    %v6607 = vld [vmem:[%s4917 + $0x9a] sm:$0xff]
    %v6608 = vld [vmem:[%s4917 + $0xaa] sm:$0xff]
    %v6609 = vld [vmem:[%s4917 + $0xb2] sm:$0xff]
    %v6610 = vld [vmem:[%s4917 + $0xc2] sm:$0xff]
    %v6611 = vld [vmem:[%s4917 + $0xca] sm:$0xff]
    %v6612 = vld [vmem:[%s4917 + $0xda] sm:$0xff]
    %v6613 = vld [vmem:[%s4917 + $0xe2] sm:$0xff]
    %v6614 = vld [vmem:[%s4917 + $0xf2] sm:$0xff]
    %v6615 = vld [vmem:[%s4917 + $0xfa] sm:$0xff]
    %v6616 = vld [vmem:[%s4917 + $0x10a] sm:$0xff]
    %v6617 = vld [vmem:[%s4917 + $0x112] sm:$0xff]
    %v6618 = vld [vmem:[%s4917 + $0x122] sm:$0xff]
    %v6619 = vld [vmem:[%s4917 + $0x12a] sm:$0xff]
    %v6620 = vld [vmem:[%s4917 + $0x13a] sm:$0xff]
    %v6621 = vld [vmem:[%s4917 + $0x142] sm:$0xff]
    %v6622 = vld [vmem:[%s4917 + $0x152] sm:$0xff]
    %v6623 = vld [vmem:[%s4917 + $0x15a] sm:$0xff]
    %v6624 = vld [vmem:[%s4917 + $0x16a] sm:$0xff]
    %v6625 = vld [vmem:[%s4917 + $0x172] sm:$0xff]
    %v6626 = vld [vmem:[%s4917 + $0x1b2] sm:$0xff]
    %v6627 = vld [vmem:[%s4917 + $0x1ba] sm:$0xff]
    %v6628 = vld [vmem:[%s4917 + $0x1ca] sm:$0xff]
    %v6629 = vld [vmem:[%s4917 + $0x1d2] sm:$0xff]
    %v6630 = vld [vmem:[%s4917 + $0x1e2] sm:$0xff]
    %v6631 = vld [vmem:[%s4917 + $0x1ea] sm:$0xff]
    %v6632 = vld [vmem:[%s4917 + $0x1fa] sm:$0xff]
    %v6633 = vld [vmem:[%s4917 + $0x202] sm:$0xff]
    %v6634 = vld [vmem:[%s4917 + $0x212] sm:$0xff]
    %v6635 = vld [vmem:[%s4917 + $0x21a] sm:$0xff]
    %v6636 = vld [vmem:[%s4917 + $0x22a] sm:$0xff]
    %v6637 = vld [vmem:[%s4917 + $0x232] sm:$0xff]
    %v6638 = vld [vmem:[%s4917 + $0x242] sm:$0xff]
    %v6639 = vld [vmem:[%s4917 + $0x24a] sm:$0xff]
    %v6640 = vld [vmem:[%s4917 + $0x25a] sm:$0xff]
    %v6641 = vld [vmem:[%s4917 + $0x262] sm:$0xff]
    %v6642 = vld [vmem:[%s4917 + $0x272] sm:$0xff]
    %v6643 = vld [vmem:[%s4917 + $0x27a] sm:$0xff]
    %v6644 = vld [vmem:[%s4917 + $0x28a] sm:$0xff]
    %v6645 = vld [vmem:[%s4917 + $0x292] sm:$0xff]
    %v6646 = vld [vmem:[%s4917 + $0x2a2] sm:$0xff]
    %v6647 = vld [vmem:[%s4917 + $0x2aa] sm:$0xff]
    %v6648 = vld [vmem:[%s4917 + $0x2ba] sm:$0xff]
    %v6649 = vld [vmem:[%s4917 + $0x2c2] sm:$0xff]
    %v6650 = vld [vmem:[%s4917 + $0x2d2] sm:$0xff]
    %v6651 = vld [vmem:[%s4917 + $0x2da] sm:$0xff]
    %v6652 = vld [vmem:[%s4917 + $0x2ea] sm:$0xff]
    %v6653 = vld [vmem:[%s4917 + $0x2f2] sm:$0xff]
    %v6654 = vld [vmem:[%s4917 + $0x302] sm:$0xff]
    %v6655 = vld [vmem:[%s4917 + $0x30a] sm:$0xff]
    %v6656 = vld [vmem:[%s4917 + $0x31a] sm:$0xff]
    %v6657 = vld [vmem:[%s4917 + $0x322] sm:$0xff]
    %s6658 = scalar_lea.vmem %s1, 32
    %v6659 = vld [vmem:[%s6658] sm:$0xf]
    %v6661 = vsel %vm80, %v6594, 0
    %v6664 = vsel %vm80, %v6595, 0
    %v6667 = vsel %vm80, %v6596, 0
    %v6670 = vsel %vm80, %v6597, 0
    %v6673 = vsel %vm80, %v6598, 0
    %v6676 = vsel %vm80, %v6599, 0
    %v6679 = vsel %vm80, %v6600, 0
    %v6682 = vsel %vm80, %v6601, 0
    %v6685 = vsel %vm80, %v6602, 0
    %v6688 = vsel %vm80, %v6603, 0
    %v6691 = vsel %vm80, %v6604, 0
    %v6694 = vsel %vm80, %v6605, 0
    %v6697 = vsel %vm80, %v6606, 0
    %v6700 = vsel %vm80, %v6607, 0
    %v6703 = vsel %vm80, %v6608, 0
    %v6706 = vsel %vm80, %v6609, 0
    %v6709 = vsel %vm80, %v6610, 0
    %v6712 = vsel %vm80, %v6611, 0
    %v6715 = vsel %vm80, %v6612, 0
    %v6718 = vsel %vm80, %v6613, 0
    %v6721 = vsel %vm80, %v6614, 0
    %v6724 = vsel %vm80, %v6615, 0
    %v6727 = vsel %vm80, %v6616, 0
    %v6730 = vsel %vm80, %v6617, 0
    %v6733 = vsel %vm80, %v6618, 0
    %v6736 = vsel %vm80, %v6619, 0
    %v6739 = vsel %vm80, %v6620, 0
    %v6742 = vsel %vm80, %v6621, 0
    %v6745 = vsel %vm80, %v6622, 0
    %v6748 = vsel %vm80, %v6623, 0
    %v6751 = vsel %vm80, %v6624, 0
    %v6754 = vsel %vm80, %v6625, 0
    %v6757 = vsel %vm80, %v6626, 0
    %v6760 = vsel %vm80, %v6627, 0
    %v6763 = vsel %vm80, %v6628, 0
    %v6766 = vsel %vm80, %v6629, 0
    %v6769 = vsel %vm80, %v6630, 0
    %v6772 = vsel %vm80, %v6631, 0
    %v6775 = vsel %vm80, %v6632, 0
    %v6778 = vsel %vm80, %v6633, 0
    %v6781 = vsel %vm80, %v6634, 0
    %v6784 = vsel %vm80, %v6635, 0
    %v6787 = vsel %vm80, %v6636, 0
    %v6790 = vsel %vm80, %v6637, 0
    %v6793 = vsel %vm80, %v6638, 0
    %v6796 = vsel %vm80, %v6639, 0
    %v6799 = vsel %vm80, %v6640, 0
    %v6802 = vsel %vm80, %v6641, 0
    %v6805 = vsel %vm80, %v6642, 0
    %v6808 = vsel %vm80, %v6643, 0
    %v6811 = vsel %vm80, %v6644, 0
    %v6814 = vsel %vm80, %v6645, 0
    %v6817 = vsel %vm80, %v6646, 0
    %v6820 = vsel %vm80, %v6647, 0
    %v6823 = vsel %vm80, %v6648, 0
    %v6826 = vsel %vm80, %v6649, 0
    %v6829 = vsel %vm80, %v6650, 0
    %v6832 = vsel %vm80, %v6651, 0
    %v6835 = vsel %vm80, %v6652, 0
    %v6838 = vsel %vm80, %v6653, 0
    %v6841 = vsel %vm80, %v6654, 0
    %v6844 = vsel %vm80, %v6655, 0
    %v6847 = vsel %vm80, %v6656, 0
    %v6850 = vsel %vm80, %v6657, 0
    %v6853 = vsel %vm273, %v6659, 0
    %6855 = vmatprep.subr.mxu0 0.0
    %6856 = vmatpush1.msra.mxu0 %v6853
    %6857 = vmatprep.subr.mxu0 0.0
    %6858 = vmatpush1.msra.mxu0 0.0
    %6859 = vmatprep.subr.mxu0 0.0
    %6860 = vmatpush1.msra.mxu0 0.0
    %6861 = vmatprep.subr.mxu0 0.0
    %6862 = vmatpush1.msra.mxu0 0.0
    %6863 = vmatprep.subr.mxu0 0.0
    %6864 = vmatpush1.msra.mxu0 0.0
    %6865 = vmatprep.subr.mxu0 0.0
    %6866 = vmatpush1.msra.mxu0 0.0
    %6867 = vmatprep.subr.mxu0 0.0
    %6868 = vmatpush1.msra.mxu0 0.0
    %6869 = vmatprep.subr.mxu0 0.0
    %6870 = vmatpush1.msra.mxu0 0.0
    %6871 = vmatprep.subr.mxu0 0.0
    %6872 = vmatpush1.msra.mxu0 0.0
    %6873 = vmatprep.subr.mxu0 0.0
    %6874 = vmatpush1.msra.mxu0 0.0
    %6875 = vmatprep.subr.mxu0 0.0
    %6876 = vmatpush1.msra.mxu0 0.0
    %6877 = vmatprep.subr.mxu0 0.0
    %6878 = vmatpush1.msra.mxu0 0.0
    %6879 = vmatprep.subr.mxu0 0.0
    %6880 = vmatpush1.msra.mxu0 0.0
    %6881 = vmatprep.subr.mxu0 0.0
    %6882 = vmatpush1.msra.mxu0 0.0
    %6883 = vmatprep.subr.mxu0 0.0
    %6884 = vmatpush1.msra.mxu0 0.0
    %6885 = vmatprep.subr.mxu0 0.0
    %6886 = vmatpush1.msra.mxu0 0.0
    %6887 = vmatprep.subr.mxu0 0.0
    %6888 = vmatpush1.msra.mxu0 0.0
    %6889 = vmatprep.subr.mxu0 0.0
    %6890 = vmatpush1.msra.mxu0 0.0
    %6891 = vmatprep.subr.mxu0 0.0
    %6892 = vmatpush1.msra.mxu0 0.0
    %6893 = vmatprep.subr.mxu0 0.0
    %6894 = vmatpush1.msra.mxu0 0.0
    %6895 = vmatprep.subr.mxu0 0.0
    %6896 = vmatpush1.msra.mxu0 0.0
    %6897 = vmatprep.subr.mxu0 0.0
    %6898 = vmatpush1.msra.mxu0 0.0
    %6899 = vmatprep.subr.mxu0 0.0
    %6900 = vmatpush1.msra.mxu0 0.0
    %6901 = vmatprep.subr.mxu0 0.0
    %6902 = vmatpush1.msra.mxu0 0.0
    %6903 = vmatprep.subr.mxu0 0.0
    %6904 = vmatpush1.msra.mxu0 0.0
    %6905 = vmatprep.subr.mxu0 0.0
    %6906 = vmatpush1.msra.mxu0 0.0
    %6907 = vmatprep.subr.mxu0 0.0
    %6908 = vmatpush1.msra.mxu0 0.0
    %6909 = vmatprep.subr.mxu0 0.0
    %6910 = vmatpush1.msra.mxu0 0.0
    %6911 = vmatprep.subr.mxu0 0.0
    %6912 = vmatpush1.msra.mxu0 0.0
    %6913 = vmatprep.subr.mxu0 0.0
    %6914 = vmatpush1.msra.mxu0 0.0
    %6915 = vmatprep.subr.mxu0 0.0
    %6916 = vmatpush1.msra.mxu0 0.0
    %6917 = vmatprep.subr.mxu0 0.0
    %6918 = vmatpush1.msra.mxu0 0.0
    %6919 = vmatprep.mubr.f32.mxu0 0.0
    %6920 = vmatmul.mubr.f32.gmra.mrb[0].mxu0 %v6661
    %v6921 = vpop.f32.mrb[0].mxu0
    %v6922 = vadd.f32 0.0, %v6921
    %v6923 = vpop.f32.mrb[0].mxu0
    %6924 = vmatprep.mubr.f32.mxu0 0.0
    %6925 = vmatmul.mubr.f32.gmra.mrb[0].mxu0 %v6664
    %v6926 = vpop.f32.mrb[0].mxu0
    %v6927 = vadd.f32 0.0, %v6926
    %v6928 = vpop.f32.mrb[0].mxu0
    %6929 = vmatprep.mubr.f32.mxu0 0.0
    %6930 = vmatmul.mubr.f32.gmra.mrb[0].mxu0 %v6667
    %v6931 = vpop.f32.mrb[0].mxu0
    %v6932 = vadd.f32 0.0, %v6931
    %v6933 = vpop.f32.mrb[0].mxu0
    %6934 = vmatprep.mubr.f32.mxu0 0.0
    %6935 = vmatmul.mubr.f32.gmra.mrb[0].mxu0 %v6670
    %v6936 = vpop.f32.mrb[0].mxu0
    %v6937 = vadd.f32 0.0, %v6936
    %v6938 = vpop.f32.mrb[0].mxu0
    %6939 = vmatprep.mubr.f32.mxu0 0.0
    %6940 = vmatmul.mubr.f32.gmra.mrb[0].mxu0 %v6673
    %v6941 = vpop.f32.mrb[0].mxu0
    %v6942 = vadd.f32 0.0, %v6941
    %v6943 = vpop.f32.mrb[0].mxu0
    %6944 = vmatprep.mubr.f32.mxu0 0.0
    %6945 = vmatmul.mubr.f32.gmra.mrb[0].mxu0 %v6676
    %v6946 = vpop.f32.mrb[0].mxu0
    %v6947 = vadd.f32 0.0, %v6946
    %v6948 = vpop.f32.mrb[0].mxu0
    %6949 = vmatprep.mubr.f32.mxu0 0.0
    %6950 = vmatmul.mubr.f32.gmra.mrb[0].mxu0 %v6679
    %v6951 = vpop.f32.mrb[0].mxu0
    %v6952 = vadd.f32 0.0, %v6951
    %v6953 = vpop.f32.mrb[0].mxu0
    %6954 = vmatprep.mubr.f32.mxu0 0.0
    %6955 = vmatmul.mubr.f32.gmra.mrb[0].mxu0 %v6682
    %v6956 = vpop.f32.mrb[0].mxu0
    %v6957 = vadd.f32 0.0, %v6956
    %v6958 = vpop.f32.mrb[0].mxu0
    %6959 = vmatprep.mubr.f32.mxu0 0.0
    %6960 = vmatmul.mubr.f32.gmra.mrb[0].mxu0 %v6685
    %v6961 = vpop.f32.mrb[0].mxu0
    %v6962 = vadd.f32 0.0, %v6961
    %v6963 = vpop.f32.mrb[0].mxu0
    %6964 = vmatprep.mubr.f32.mxu0 0.0
    %6965 = vmatmul.mubr.f32.gmra.mrb[0].mxu0 %v6688
    %v6966 = vpop.f32.mrb[0].mxu0
    %v6967 = vadd.f32 0.0, %v6966
    %v6968 = vpop.f32.mrb[0].mxu0
    %6969 = vmatprep.mubr.f32.mxu0 0.0
    %6970 = vmatmul.mubr.f32.gmra.mrb[0].mxu0 %v6691
    %v6971 = vpop.f32.mrb[0].mxu0
    %v6972 = vadd.f32 0.0, %v6971
    %v6973 = vpop.f32.mrb[0].mxu0
    %6974 = vmatprep.mubr.f32.mxu0 0.0
    %6975 = vmatmul.mubr.f32.gmra.mrb[0].mxu0 %v6694
    %v6976 = vpop.f32.mrb[0].mxu0
    %v6977 = vadd.f32 0.0, %v6976
    %v6978 = vpop.f32.mrb[0].mxu0
    %6979 = vmatprep.mubr.f32.mxu0 0.0
    %6980 = vmatmul.mubr.f32.gmra.mrb[0].mxu0 %v6697
    %v6981 = vpop.f32.mrb[0].mxu0
    %v6982 = vadd.f32 0.0, %v6981
    %v6983 = vpop.f32.mrb[0].mxu0
    %6984 = vmatprep.mubr.f32.mxu0 0.0
    %6985 = vmatmul.mubr.f32.gmra.mrb[0].mxu0 %v6700
    %v6986 = vpop.f32.mrb[0].mxu0
    %v6987 = vadd.f32 0.0, %v6986
    %v6988 = vpop.f32.mrb[0].mxu0
    %6989 = vmatprep.mubr.f32.mxu0 0.0
    %6990 = vmatmul.mubr.f32.gmra.mrb[0].mxu0 %v6703
    %v6991 = vpop.f32.mrb[0].mxu0
    %v6992 = vadd.f32 0.0, %v6991
    %v6993 = vpop.f32.mrb[0].mxu0
    %6994 = vmatprep.mubr.f32.mxu0 0.0
    %6995 = vmatmul.mubr.f32.gmra.mrb[0].mxu0 %v6706
    %v6996 = vpop.f32.mrb[0].mxu0
    %v6997 = vadd.f32 0.0, %v6996
    %v6998 = vpop.f32.mrb[0].mxu0
    %6999 = vmatprep.mubr.f32.mxu0 0.0
    %7000 = vmatmul.mubr.f32.gmra.mrb[0].mxu0 %v6709
    %v7001 = vpop.f32.mrb[0].mxu0
    %v7002 = vadd.f32 0.0, %v7001
    %v7003 = vpop.f32.mrb[0].mxu0
    %7004 = vmatprep.mubr.f32.mxu0 0.0
    %7005 = vmatmul.mubr.f32.gmra.mrb[0].mxu0 %v6712
    %v7006 = vpop.f32.mrb[0].mxu0
    %v7007 = vadd.f32 0.0, %v7006
    %v7008 = vpop.f32.mrb[0].mxu0
    %7009 = vmatprep.mubr.f32.mxu0 0.0
    %7010 = vmatmul.mubr.f32.gmra.mrb[0].mxu0 %v6715
    %v7011 = vpop.f32.mrb[0].mxu0
    %v7012 = vadd.f32 0.0, %v7011
    %v7013 = vpop.f32.mrb[0].mxu0
    %7014 = vmatprep.mubr.f32.mxu0 0.0
    %7015 = vmatmul.mubr.f32.gmra.mrb[0].mxu0 %v6718
    %v7016 = vpop.f32.mrb[0].mxu0
    %v7017 = vadd.f32 0.0, %v7016
    %v7018 = vpop.f32.mrb[0].mxu0
    %7019 = vmatprep.mubr.f32.mxu0 0.0
    %7020 = vmatmul.mubr.f32.gmra.mrb[0].mxu0 %v6721
    %v7021 = vpop.f32.mrb[0].mxu0
    %v7022 = vadd.f32 0.0, %v7021
    %v7023 = vpop.f32.mrb[0].mxu0
    %7024 = vmatprep.mubr.f32.mxu0 0.0
    %7025 = vmatmul.mubr.f32.gmra.mrb[0].mxu0 %v6724
    %v7026 = vpop.f32.mrb[0].mxu0
    %v7027 = vadd.f32 0.0, %v7026
    %v7028 = vpop.f32.mrb[0].mxu0
    %7029 = vmatprep.mubr.f32.mxu0 0.0
    %7030 = vmatmul.mubr.f32.gmra.mrb[0].mxu0 %v6727
    %v7031 = vpop.f32.mrb[0].mxu0
    %v7032 = vadd.f32 0.0, %v7031
    %v7033 = vpop.f32.mrb[0].mxu0
    %7034 = vmatprep.mubr.f32.mxu0 0.0
    %7035 = vmatmul.mubr.f32.gmra.mrb[0].mxu0 %v6730
    %v7036 = vpop.f32.mrb[0].mxu0
    %v7037 = vadd.f32 0.0, %v7036
    %v7038 = vpop.f32.mrb[0].mxu0
    %7039 = vmatprep.mubr.f32.mxu0 0.0
    %7040 = vmatmul.mubr.f32.gmra.mrb[0].mxu0 %v6733
    %v7041 = vpop.f32.mrb[0].mxu0
    %v7042 = vadd.f32 0.0, %v7041
    %v7043 = vpop.f32.mrb[0].mxu0
    %7044 = vmatprep.mubr.f32.mxu0 0.0
    %7045 = vmatmul.mubr.f32.gmra.mrb[0].mxu0 %v6736
    %v7046 = vpop.f32.mrb[0].mxu0
    %v7047 = vadd.f32 0.0, %v7046
    %v7048 = vpop.f32.mrb[0].mxu0
    %7049 = vmatprep.mubr.f32.mxu0 0.0
    %7050 = vmatmul.mubr.f32.gmra.mrb[0].mxu0 %v6739
    %v7051 = vpop.f32.mrb[0].mxu0
    %v7052 = vadd.f32 0.0, %v7051
    %v7053 = vpop.f32.mrb[0].mxu0
    %7054 = vmatprep.mubr.f32.mxu0 0.0
    %7055 = vmatmul.mubr.f32.gmra.mrb[0].mxu0 %v6742
    %v7056 = vpop.f32.mrb[0].mxu0
    %v7057 = vadd.f32 0.0, %v7056
    %v7058 = vpop.f32.mrb[0].mxu0
    %7059 = vmatprep.mubr.f32.mxu0 0.0
    %7060 = vmatmul.mubr.f32.gmra.mrb[0].mxu0 %v6745
    %v7061 = vpop.f32.mrb[0].mxu0
    %v7062 = vadd.f32 0.0, %v7061
    %v7063 = vpop.f32.mrb[0].mxu0
    %7064 = vmatprep.mubr.f32.mxu0 0.0
    %7065 = vmatmul.mubr.f32.gmra.mrb[0].mxu0 %v6748
    %v7066 = vpop.f32.mrb[0].mxu0
    %v7067 = vadd.f32 0.0, %v7066
    %v7068 = vpop.f32.mrb[0].mxu0
    %7069 = vmatprep.mubr.f32.mxu0 0.0
    %7070 = vmatmul.mubr.f32.gmra.mrb[0].mxu0 %v6751
    %v7071 = vpop.f32.mrb[0].mxu0
    %v7072 = vadd.f32 0.0, %v7071
    %v7073 = vpop.f32.mrb[0].mxu0
    %7074 = vmatprep.mubr.f32.mxu0 0.0
    %7075 = vmatmul.mubr.f32.gmra.mrb[0].mxu0 %v6754
    %v7076 = vpop.f32.mrb[0].mxu0
    %v7077 = vadd.f32 0.0, %v7076
    %v7078 = vpop.f32.mrb[0].mxu0
    %7079 = vmatprep.mubr.f32.mxu0 0.0
    %7080 = vmatmul.mubr.f32.gmra.mrb[0].mxu0 %v6757
    %v7081 = vpop.f32.mrb[0].mxu0
    %v7082 = vadd.f32 0.0, %v7081
    %v7083 = vpop.f32.mrb[0].mxu0
    %7084 = vmatprep.mubr.f32.mxu0 0.0
    %7085 = vmatmul.mubr.f32.gmra.mrb[0].mxu0 %v6760
    %v7086 = vpop.f32.mrb[0].mxu0
    %v7087 = vadd.f32 0.0, %v7086
    %v7088 = vpop.f32.mrb[0].mxu0
    %7089 = vmatprep.mubr.f32.mxu0 0.0
    %7090 = vmatmul.mubr.f32.gmra.mrb[0].mxu0 %v6763
    %v7091 = vpop.f32.mrb[0].mxu0
    %v7092 = vadd.f32 0.0, %v7091
    %v7093 = vpop.f32.mrb[0].mxu0
    %7094 = vmatprep.mubr.f32.mxu0 0.0
    %7095 = vmatmul.mubr.f32.gmra.mrb[0].mxu0 %v6766
    %v7096 = vpop.f32.mrb[0].mxu0
    %v7097 = vadd.f32 0.0, %v7096
    %v7098 = vpop.f32.mrb[0].mxu0
    %7099 = vmatprep.mubr.f32.mxu0 0.0
    %7100 = vmatmul.mubr.f32.gmra.mrb[0].mxu0 %v6769
    %v7101 = vpop.f32.mrb[0].mxu0
    %v7102 = vadd.f32 0.0, %v7101
    %v7103 = vpop.f32.mrb[0].mxu0
    %7104 = vmatprep.mubr.f32.mxu0 0.0
    %7105 = vmatmul.mubr.f32.gmra.mrb[0].mxu0 %v6772
    %v7106 = vpop.f32.mrb[0].mxu0
    %v7107 = vadd.f32 0.0, %v7106
    %v7108 = vpop.f32.mrb[0].mxu0
    %7109 = vmatprep.mubr.f32.mxu0 0.0
    %7110 = vmatmul.mubr.f32.gmra.mrb[0].mxu0 %v6775
    %v7111 = vpop.f32.mrb[0].mxu0
    %v7112 = vadd.f32 0.0, %v7111
    %v7113 = vpop.f32.mrb[0].mxu0
    %7114 = vmatprep.mubr.f32.mxu0 0.0
    %7115 = vmatmul.mubr.f32.gmra.mrb[0].mxu0 %v6778
    %v7116 = vpop.f32.mrb[0].mxu0
    %v7117 = vadd.f32 0.0, %v7116
    %v7118 = vpop.f32.mrb[0].mxu0
    %7119 = vmatprep.mubr.f32.mxu0 0.0
    %7120 = vmatmul.mubr.f32.gmra.mrb[0].mxu0 %v6781
    %v7121 = vpop.f32.mrb[0].mxu0
    %v7122 = vadd.f32 0.0, %v7121
    %v7123 = vpop.f32.mrb[0].mxu0
    %7124 = vmatprep.mubr.f32.mxu0 0.0
    %7125 = vmatmul.mubr.f32.gmra.mrb[0].mxu0 %v6784
    %v7126 = vpop.f32.mrb[0].mxu0
    %v7127 = vadd.f32 0.0, %v7126
    %v7128 = vpop.f32.mrb[0].mxu0
    %7129 = vmatprep.mubr.f32.mxu0 0.0
    %7130 = vmatmul.mubr.f32.gmra.mrb[0].mxu0 %v6787
    %v7131 = vpop.f32.mrb[0].mxu0
    %v7132 = vadd.f32 0.0, %v7131
    %v7133 = vpop.f32.mrb[0].mxu0
    %7134 = vmatprep.mubr.f32.mxu0 0.0
    %7135 = vmatmul.mubr.f32.gmra.mrb[0].mxu0 %v6790
    %v7136 = vpop.f32.mrb[0].mxu0
    %v7137 = vadd.f32 0.0, %v7136
    %v7138 = vpop.f32.mrb[0].mxu0
    %7139 = vmatprep.mubr.f32.mxu0 0.0
    %7140 = vmatmul.mubr.f32.gmra.mrb[0].mxu0 %v6793
    %v7141 = vpop.f32.mrb[0].mxu0
    %v7142 = vadd.f32 0.0, %v7141
    %v7143 = vpop.f32.mrb[0].mxu0
    %7144 = vmatprep.mubr.f32.mxu0 0.0
    %7145 = vmatmul.mubr.f32.gmra.mrb[0].mxu0 %v6796
    %v7146 = vpop.f32.mrb[0].mxu0
    %v7147 = vadd.f32 0.0, %v7146
    %v7148 = vpop.f32.mrb[0].mxu0
    %7149 = vmatprep.mubr.f32.mxu0 0.0
    %7150 = vmatmul.mubr.f32.gmra.mrb[0].mxu0 %v6799
    %v7151 = vpop.f32.mrb[0].mxu0
    %v7152 = vadd.f32 0.0, %v7151
    %v7153 = vpop.f32.mrb[0].mxu0
    %7154 = vmatprep.mubr.f32.mxu0 0.0
    %7155 = vmatmul.mubr.f32.gmra.mrb[0].mxu0 %v6802
    %v7156 = vpop.f32.mrb[0].mxu0
    %v7157 = vadd.f32 0.0, %v7156
    %v7158 = vpop.f32.mrb[0].mxu0
    %7159 = vmatprep.mubr.f32.mxu0 0.0
    %7160 = vmatmul.mubr.f32.gmra.mrb[0].mxu0 %v6805
    %v7161 = vpop.f32.mrb[0].mxu0
    %v7162 = vadd.f32 0.0, %v7161
    %v7163 = vpop.f32.mrb[0].mxu0
    %7164 = vmatprep.mubr.f32.mxu0 0.0
    %7165 = vmatmul.mubr.f32.gmra.mrb[0].mxu0 %v6808
    %v7166 = vpop.f32.mrb[0].mxu0
    %v7167 = vadd.f32 0.0, %v7166
    %v7168 = vpop.f32.mrb[0].mxu0
    %7169 = vmatprep.mubr.f32.mxu0 0.0
    %7170 = vmatmul.mubr.f32.gmra.mrb[0].mxu0 %v6811
    %v7171 = vpop.f32.mrb[0].mxu0
    %v7172 = vadd.f32 0.0, %v7171
    %v7173 = vpop.f32.mrb[0].mxu0
    %7174 = vmatprep.mubr.f32.mxu0 0.0
    %7175 = vmatmul.mubr.f32.gmra.mrb[0].mxu0 %v6814
    %v7176 = vpop.f32.mrb[0].mxu0
    %v7177 = vadd.f32 0.0, %v7176
    %v7178 = vpop.f32.mrb[0].mxu0
    %7179 = vmatprep.mubr.f32.mxu0 0.0
    %7180 = vmatmul.mubr.f32.gmra.mrb[0].mxu0 %v6817
    %v7181 = vpop.f32.mrb[0].mxu0
    %v7182 = vadd.f32 0.0, %v7181
    %v7183 = vpop.f32.mrb[0].mxu0
    %7184 = vmatprep.mubr.f32.mxu0 0.0
    %7185 = vmatmul.mubr.f32.gmra.mrb[0].mxu0 %v6820
    %v7186 = vpop.f32.mrb[0].mxu0
    %v7187 = vadd.f32 0.0, %v7186
    %v7188 = vpop.f32.mrb[0].mxu0
    %7189 = vmatprep.mubr.f32.mxu0 0.0
    %7190 = vmatmul.mubr.f32.gmra.mrb[0].mxu0 %v6823
    %v7191 = vpop.f32.mrb[0].mxu0
    %v7192 = vadd.f32 0.0, %v7191
    %v7193 = vpop.f32.mrb[0].mxu0
    %7194 = vmatprep.mubr.f32.mxu0 0.0
    %7195 = vmatmul.mubr.f32.gmra.mrb[0].mxu0 %v6826
    %v7196 = vpop.f32.mrb[0].mxu0
    %v7197 = vadd.f32 0.0, %v7196
    %v7198 = vpop.f32.mrb[0].mxu0
    %7199 = vmatprep.mubr.f32.mxu0 0.0
    %7200 = vmatmul.mubr.f32.gmra.mrb[0].mxu0 %v6829
    %v7201 = vpop.f32.mrb[0].mxu0
    %v7202 = vadd.f32 0.0, %v7201
    %v7203 = vpop.f32.mrb[0].mxu0
    %7204 = vmatprep.mubr.f32.mxu0 0.0
    %7205 = vmatmul.mubr.f32.gmra.mrb[0].mxu0 %v6832
    %v7206 = vpop.f32.mrb[0].mxu0
    %v7207 = vadd.f32 0.0, %v7206
    %v7208 = vpop.f32.mrb[0].mxu0
    %7209 = vmatprep.mubr.f32.mxu0 0.0
    %7210 = vmatmul.mubr.f32.gmra.mrb[0].mxu0 %v6835
    %v7211 = vpop.f32.mrb[0].mxu0
    %v7212 = vadd.f32 0.0, %v7211
    %v7213 = vpop.f32.mrb[0].mxu0
    %7214 = vmatprep.mubr.f32.mxu0 0.0
    %7215 = vmatmul.mubr.f32.gmra.mrb[0].mxu0 %v6838
    %v7216 = vpop.f32.mrb[0].mxu0
    %v7217 = vadd.f32 0.0, %v7216
    %v7218 = vpop.f32.mrb[0].mxu0
    %7219 = vmatprep.mubr.f32.mxu0 0.0
    %7220 = vmatmul.mubr.f32.gmra.mrb[0].mxu0 %v6841
    %v7221 = vpop.f32.mrb[0].mxu0
    %v7222 = vadd.f32 0.0, %v7221
    %v7223 = vpop.f32.mrb[0].mxu0
    %7224 = vmatprep.mubr.f32.mxu0 0.0
    %7225 = vmatmul.mubr.f32.gmra.mrb[0].mxu0 %v6844
    %v7226 = vpop.f32.mrb[0].mxu0
    %v7227 = vadd.f32 0.0, %v7226
    %v7228 = vpop.f32.mrb[0].mxu0
    %7229 = vmatprep.mubr.f32.mxu0 0.0
    %7230 = vmatmul.mubr.f32.gmra.mrb[0].mxu0 %v6847
    %v7231 = vpop.f32.mrb[0].mxu0
    %v7232 = vadd.f32 0.0, %v7231
    %v7233 = vpop.f32.mrb[0].mxu0
    %7234 = vmatprep.mubr.f32.mxu0 0.0
    %7235 = vmatmul.mubr.f32.gmra.mrb[0].mxu0 %v6850
    %v7236 = vpop.f32.mrb[0].mxu0
    %v7237 = vadd.f32 0.0, %v7236
    %v7238 = vpop.f32.mrb[0].mxu0
    %7239 = vdwg.mxu0
    %v7240 = vld [vmem:[#allocation2] sm:$0xff]
    %v7241 = vld [vmem:[#allocation2 + $0x8] sm:$0xff]
    %v7242 = vld [vmem:[#allocation2 + $0x10] sm:$0xff]
    %v7243 = vld [vmem:[#allocation2 + $0x18] sm:$0xff]
    %v7244 = vld [vmem:[#allocation2 + $0x20] sm:$0xff]
    %v7245 = vld [vmem:[#allocation2 + $0x28] sm:$0xff]
    %v7246 = vld [vmem:[#allocation2 + $0x30] sm:$0xff]
    %v7247 = vld [vmem:[#allocation2 + $0x38] sm:$0xff]
    %v7248 = vld [vmem:[#allocation2 + $0x40] sm:$0xff]
    %v7249 = vld [vmem:[#allocation2 + $0x48] sm:$0xff]
    %v7250 = vld [vmem:[#allocation2 + $0x50] sm:$0xff]
    %v7251 = vld [vmem:[#allocation2 + $0x58] sm:$0xff]
    %v7252 = vld [vmem:[#allocation2 + $0x60] sm:$0xff]
    %v7253 = vld [vmem:[#allocation2 + $0x68] sm:$0xff]
    %v7254 = vld [vmem:[#allocation2 + $0x70] sm:$0xff]
    %v7255 = vld [vmem:[#allocation2 + $0x78] sm:$0xff]
    %v7256 = vld [vmem:[#allocation2 + $0x80] sm:$0xff]
    %v7257 = vld [vmem:[#allocation2 + $0x88] sm:$0xff]
    %v7258 = vld [vmem:[#allocation2 + $0x90] sm:$0xff]
    %v7259 = vld [vmem:[#allocation2 + $0x98] sm:$0xff]
    %v7260 = vld [vmem:[#allocation2 + $0xa0] sm:$0xff]
    %v7261 = vld [vmem:[#allocation2 + $0xa8] sm:$0xff]
    %v7262 = vld [vmem:[#allocation2 + $0xb0] sm:$0xff]
    %v7263 = vld [vmem:[#allocation2 + $0xb8] sm:$0xff]
    %v7264 = vld [vmem:[#allocation2 + $0xc0] sm:$0xff]
    %v7265 = vld [vmem:[#allocation2 + $0xc8] sm:$0xff]
    %v7266 = vld [vmem:[#allocation2 + $0xd0] sm:$0xff]
    %v7267 = vld [vmem:[#allocation2 + $0xd8] sm:$0xff]
    %v7268 = vld [vmem:[#allocation2 + $0xe0] sm:$0xff]
    %v7269 = vld [vmem:[#allocation2 + $0xe8] sm:$0xff]
    %v7270 = vld [vmem:[#allocation2 + $0xf0] sm:$0xff]
    %v7271 = vld [vmem:[#allocation2 + $0xf8] sm:$0xff]
    %v7272 = vld [vmem:[#allocation2 + $0x100] sm:$0xff]
    %v7273 = vld [vmem:[#allocation2 + $0x108] sm:$0xff]
    %v7274 = vld [vmem:[#allocation2 + $0x110] sm:$0xff]
    %v7275 = vld [vmem:[#allocation2 + $0x118] sm:$0xff]
    %v7276 = vld [vmem:[#allocation2 + $0x120] sm:$0xff]
    %v7277 = vld [vmem:[#allocation2 + $0x128] sm:$0xff]
    %v7278 = vld [vmem:[#allocation2 + $0x130] sm:$0xff]
    %v7279 = vld [vmem:[#allocation2 + $0x138] sm:$0xff]
    %v7280 = vld [vmem:[#allocation2 + $0x140] sm:$0xff]
    %v7281 = vld [vmem:[#allocation2 + $0x148] sm:$0xff]
    %v7282 = vld [vmem:[#allocation2 + $0x150] sm:$0xff]
    %v7283 = vld [vmem:[#allocation2 + $0x158] sm:$0xff]
    %v7284 = vld [vmem:[#allocation2 + $0x160] sm:$0xff]
    %v7285 = vld [vmem:[#allocation2 + $0x168] sm:$0xff]
    %v7286 = vld [vmem:[#allocation2 + $0x170] sm:$0xff]
    %v7287 = vld [vmem:[#allocation2 + $0x178] sm:$0xff]
    %v7288 = vld [vmem:[#allocation2 + $0x180] sm:$0xff]
    %v7289 = vld [vmem:[#allocation2 + $0x188] sm:$0xff]
    %v7290 = vld [vmem:[#allocation2 + $0x190] sm:$0xff]
    %v7291 = vld [vmem:[#allocation2 + $0x198] sm:$0xff]
    %v7292 = vld [vmem:[#allocation2 + $0x1a0] sm:$0xff]
    %v7293 = vld [vmem:[#allocation2 + $0x1a8] sm:$0xff]
    %v7294 = vld [vmem:[#allocation2 + $0x1b0] sm:$0xff]
    %v7295 = vld [vmem:[#allocation2 + $0x1b8] sm:$0xff]
    %v7296 = vld [vmem:[#allocation2 + $0x1c0] sm:$0xff]
    %v7297 = vld [vmem:[#allocation2 + $0x1c8] sm:$0xff]
    %v7298 = vld [vmem:[#allocation2 + $0x1d0] sm:$0xff]
    %v7299 = vld [vmem:[#allocation2 + $0x1d8] sm:$0xff]
    %v7300 = vld [vmem:[#allocation2 + $0x1e0] sm:$0xff]
    %v7301 = vld [vmem:[#allocation2 + $0x1e8] sm:$0xff]
    %v7302 = vld [vmem:[#allocation2 + $0x1f0] sm:$0xff]
    %v7303 = vld [vmem:[#allocation2 + $0x1f8] sm:$0xff]
    %v7304 = vadd.f32 %v7240, %v6922
    %v7305 = vadd.f32 %v7241, %v6927
    %v7306 = vadd.f32 %v7242, %v6932
    %v7307 = vadd.f32 %v7243, %v6937
    %v7308 = vadd.f32 %v7244, %v6942
    %v7309 = vadd.f32 %v7245, %v6947
    %v7310 = vadd.f32 %v7246, %v6952
    %v7311 = vadd.f32 %v7247, %v6957
    %v7312 = vadd.f32 %v7248, %v6962
    %v7313 = vadd.f32 %v7249, %v6967
    %v7314 = vadd.f32 %v7250, %v6972
    %v7315 = vadd.f32 %v7251, %v6977
    %v7316 = vadd.f32 %v7252, %v6982
    %v7317 = vadd.f32 %v7253, %v6987
    %v7318 = vadd.f32 %v7254, %v6992
    %v7319 = vadd.f32 %v7255, %v6997
    %v7320 = vadd.f32 %v7256, %v7002
    %v7321 = vadd.f32 %v7257, %v7007
    %v7322 = vadd.f32 %v7258, %v7012
    %v7323 = vadd.f32 %v7259, %v7017
    %v7324 = vadd.f32 %v7260, %v7022
    %v7325 = vadd.f32 %v7261, %v7027
    %v7326 = vadd.f32 %v7262, %v7032
    %v7327 = vadd.f32 %v7263, %v7037
    %v7328 = vadd.f32 %v7264, %v7042
    %v7329 = vadd.f32 %v7265, %v7047
    %v7330 = vadd.f32 %v7266, %v7052
    %v7331 = vadd.f32 %v7267, %v7057
    %v7332 = vadd.f32 %v7268, %v7062
    %v7333 = vadd.f32 %v7269, %v7067
    %v7334 = vadd.f32 %v7270, %v7072
    %v7335 = vadd.f32 %v7271, %v7077
    %v7336 = vadd.f32 %v7272, %v7082
    %v7337 = vadd.f32 %v7273, %v7087
    %v7338 = vadd.f32 %v7274, %v7092
    %v7339 = vadd.f32 %v7275, %v7097
    %v7340 = vadd.f32 %v7276, %v7102
    %v7341 = vadd.f32 %v7277, %v7107
    %v7342 = vadd.f32 %v7278, %v7112
    %v7343 = vadd.f32 %v7279, %v7117
    %v7344 = vadd.f32 %v7280, %v7122
    %v7345 = vadd.f32 %v7281, %v7127
    %v7346 = vadd.f32 %v7282, %v7132
    %v7347 = vadd.f32 %v7283, %v7137
    %v7348 = vadd.f32 %v7284, %v7142
    %v7349 = vadd.f32 %v7285, %v7147
    %v7350 = vadd.f32 %v7286, %v7152
    %v7351 = vadd.f32 %v7287, %v7157
    %v7352 = vadd.f32 %v7288, %v7162
    %v7353 = vadd.f32 %v7289, %v7167
    %v7354 = vadd.f32 %v7290, %v7172
    %v7355 = vadd.f32 %v7291, %v7177
    %v7356 = vadd.f32 %v7292, %v7182
    %v7357 = vadd.f32 %v7293, %v7187
    %v7358 = vadd.f32 %v7294, %v7192
    %v7359 = vadd.f32 %v7295, %v7197
    %v7360 = vadd.f32 %v7296, %v7202
    %v7361 = vadd.f32 %v7297, %v7207
    %v7362 = vadd.f32 %v7298, %v7212
    %v7363 = vadd.f32 %v7299, %v7217
    %v7364 = vadd.f32 %v7300, %v7222
    %v7365 = vadd.f32 %v7301, %v7227
    %v7366 = vadd.f32 %v7302, %v7232
    %v7367 = vadd.f32 %v7303, %v7237
    %7368 = vst [vmem:[#allocation2] sm:$0xff] %v7304
    %7369 = vst [vmem:[#allocation2 + $0x8] sm:$0xff] %v7305
    %7370 = vst [vmem:[#allocation2 + $0x10] sm:$0xff] %v7306
    %7371 = vst [vmem:[#allocation2 + $0x18] sm:$0xff] %v7307
    %7372 = vst [vmem:[#allocation2 + $0x20] sm:$0xff] %v7308
    %7373 = vst [vmem:[#allocation2 + $0x28] sm:$0xff] %v7309
    %7374 = vst [vmem:[#allocation2 + $0x30] sm:$0xff] %v7310
    %7375 = vst [vmem:[#allocation2 + $0x38] sm:$0xff] %v7311
    %7376 = vst [vmem:[#allocation2 + $0x40] sm:$0xff] %v7312
    %7377 = vst [vmem:[#allocation2 + $0x48] sm:$0xff] %v7313
    %7378 = vst [vmem:[#allocation2 + $0x50] sm:$0xff] %v7314
    %7379 = vst [vmem:[#allocation2 + $0x58] sm:$0xff] %v7315
    %7380 = vst [vmem:[#allocation2 + $0x60] sm:$0xff] %v7316
    %7381 = vst [vmem:[#allocation2 + $0x68] sm:$0xff] %v7317
    %7382 = vst [vmem:[#allocation2 + $0x70] sm:$0xff] %v7318
    %7383 = vst [vmem:[#allocation2 + $0x78] sm:$0xff] %v7319
    %7384 = vst [vmem:[#allocation2 + $0x80] sm:$0xff] %v7320
    %7385 = vst [vmem:[#allocation2 + $0x88] sm:$0xff] %v7321
    %7386 = vst [vmem:[#allocation2 + $0x90] sm:$0xff] %v7322
    %7387 = vst [vmem:[#allocation2 + $0x98] sm:$0xff] %v7323
    %7388 = vst [vmem:[#allocation2 + $0xa0] sm:$0xff] %v7324
    %7389 = vst [vmem:[#allocation2 + $0xa8] sm:$0xff] %v7325
    %7390 = vst [vmem:[#allocation2 + $0xb0] sm:$0xff] %v7326
    %7391 = vst [vmem:[#allocation2 + $0xb8] sm:$0xff] %v7327
    %7392 = vst [vmem:[#allocation2 + $0xc0] sm:$0xff] %v7328
    %7393 = vst [vmem:[#allocation2 + $0xc8] sm:$0xff] %v7329
    %7394 = vst [vmem:[#allocation2 + $0xd0] sm:$0xff] %v7330
    %7395 = vst [vmem:[#allocation2 + $0xd8] sm:$0xff] %v7331
    %7396 = vst [vmem:[#allocation2 + $0xe0] sm:$0xff] %v7332
    %7397 = vst [vmem:[#allocation2 + $0xe8] sm:$0xff] %v7333
    %7398 = vst [vmem:[#allocation2 + $0xf0] sm:$0xff] %v7334
    %7399 = vst [vmem:[#allocation2 + $0xf8] sm:$0xff] %v7335
    %7400 = vst [vmem:[#allocation2 + $0x100] sm:$0xff] %v7336
    %7401 = vst [vmem:[#allocation2 + $0x108] sm:$0xff] %v7337
    %7402 = vst [vmem:[#allocation2 + $0x110] sm:$0xff] %v7338
    %7403 = vst [vmem:[#allocation2 + $0x118] sm:$0xff] %v7339
    %7404 = vst [vmem:[#allocation2 + $0x120] sm:$0xff] %v7340
    %7405 = vst [vmem:[#allocation2 + $0x128] sm:$0xff] %v7341
    %7406 = vst [vmem:[#allocation2 + $0x130] sm:$0xff] %v7342
    %7407 = vst [vmem:[#allocation2 + $0x138] sm:$0xff] %v7343
    %7408 = vst [vmem:[#allocation2 + $0x140] sm:$0xff] %v7344
    %7409 = vst [vmem:[#allocation2 + $0x148] sm:$0xff] %v7345
    %7410 = vst [vmem:[#allocation2 + $0x150] sm:$0xff] %v7346
    %7411 = vst [vmem:[#allocation2 + $0x158] sm:$0xff] %v7347
    %7412 = vst [vmem:[#allocation2 + $0x160] sm:$0xff] %v7348
    %7413 = vst [vmem:[#allocation2 + $0x168] sm:$0xff] %v7349
    %7414 = vst [vmem:[#allocation2 + $0x170] sm:$0xff] %v7350
    %7415 = vst [vmem:[#allocation2 + $0x178] sm:$0xff] %v7351
    %7416 = vst [vmem:[#allocation2 + $0x180] sm:$0xff] %v7352
    %7417 = vst [vmem:[#allocation2 + $0x188] sm:$0xff] %v7353
    %7418 = vst [vmem:[#allocation2 + $0x190] sm:$0xff] %v7354
    %7419 = vst [vmem:[#allocation2 + $0x198] sm:$0xff] %v7355
    %7420 = vst [vmem:[#allocation2 + $0x1a0] sm:$0xff] %v7356
    %7421 = vst [vmem:[#allocation2 + $0x1a8] sm:$0xff] %v7357
    %7422 = vst [vmem:[#allocation2 + $0x1b0] sm:$0xff] %v7358
    %7423 = vst [vmem:[#allocation2 + $0x1b8] sm:$0xff] %v7359
    %7424 = vst [vmem:[#allocation2 + $0x1c0] sm:$0xff] %v7360
    %7425 = vst [vmem:[#allocation2 + $0x1c8] sm:$0xff] %v7361
    %7426 = vst [vmem:[#allocation2 + $0x1d0] sm:$0xff] %v7362
    %7427 = vst [vmem:[#allocation2 + $0x1d8] sm:$0xff] %v7363
    %7428 = vst [vmem:[#allocation2 + $0x1e0] sm:$0xff] %v7364
    %7429 = vst [vmem:[#allocation2 + $0x1e8] sm:$0xff] %v7365
    %7430 = vst [vmem:[#allocation2 + $0x1f0] sm:$0xff] %v7366
    %7431 = vst [vmem:[#allocation2 + $0x1f8] sm:$0xff] %v7367
    %v7432 = vld [vmem:[#allocation2] sm:$0xff]
    %v7433 = vld [vmem:[#allocation2 + $0x8] sm:$0xff]
    %v7434 = vld [vmem:[#allocation2 + $0x10] sm:$0xff]
    %v7435 = vld [vmem:[#allocation2 + $0x18] sm:$0xff]
    %v7436 = vld [vmem:[#allocation2 + $0x20] sm:$0xff]
    %v7437 = vld [vmem:[#allocation2 + $0x28] sm:$0xff]
    %v7438 = vld [vmem:[#allocation2 + $0x30] sm:$0xff]
    %v7439 = vld [vmem:[#allocation2 + $0x38] sm:$0xff]
    %v7440 = vld [vmem:[#allocation2 + $0x40] sm:$0xff]
    %v7441 = vld [vmem:[#allocation2 + $0x48] sm:$0xff]
    %v7442 = vld [vmem:[#allocation2 + $0x50] sm:$0xff]
    %v7443 = vld [vmem:[#allocation2 + $0x58] sm:$0xff]
    %v7444 = vld [vmem:[#allocation2 + $0x60] sm:$0xff]
    %v7445 = vld [vmem:[#allocation2 + $0x68] sm:$0xff]
    %v7446 = vld [vmem:[#allocation2 + $0x70] sm:$0xff]
    %v7447 = vld [vmem:[#allocation2 + $0x78] sm:$0xff]
    %v7448 = vld [vmem:[#allocation2 + $0x80] sm:$0xff]
    %v7449 = vld [vmem:[#allocation2 + $0x88] sm:$0xff]
    %v7450 = vld [vmem:[#allocation2 + $0x90] sm:$0xff]
    %v7451 = vld [vmem:[#allocation2 + $0x98] sm:$0xff]
    %v7452 = vld [vmem:[#allocation2 + $0xa0] sm:$0xff]
    %v7453 = vld [vmem:[#allocation2 + $0xa8] sm:$0xff]
    %v7454 = vld [vmem:[#allocation2 + $0xb0] sm:$0xff]
    %v7455 = vld [vmem:[#allocation2 + $0xb8] sm:$0xff]
    %v7456 = vld [vmem:[#allocation2 + $0xc0] sm:$0xff]
    %v7457 = vld [vmem:[#allocation2 + $0xc8] sm:$0xff]
    %v7458 = vld [vmem:[#allocation2 + $0xd0] sm:$0xff]
    %v7459 = vld [vmem:[#allocation2 + $0xd8] sm:$0xff]
    %v7460 = vld [vmem:[#allocation2 + $0xe0] sm:$0xff]
    %v7461 = vld [vmem:[#allocation2 + $0xe8] sm:$0xff]
    %v7462 = vld [vmem:[#allocation2 + $0xf0] sm:$0xff]
    %v7463 = vld [vmem:[#allocation2 + $0xf8] sm:$0xff]
    %v7464 = vld [vmem:[#allocation2 + $0x100] sm:$0xff]
    %v7465 = vld [vmem:[#allocation2 + $0x108] sm:$0xff]
    %v7466 = vld [vmem:[#allocation2 + $0x110] sm:$0xff]
    %v7467 = vld [vmem:[#allocation2 + $0x118] sm:$0xff]
    %v7468 = vld [vmem:[#allocation2 + $0x120] sm:$0xff]
    %v7469 = vld [vmem:[#allocation2 + $0x128] sm:$0xff]
    %v7470 = vld [vmem:[#allocation2 + $0x130] sm:$0xff]
    %v7471 = vld [vmem:[#allocation2 + $0x138] sm:$0xff]
    %v7472 = vld [vmem:[#allocation2 + $0x140] sm:$0xff]
    %v7473 = vld [vmem:[#allocation2 + $0x148] sm:$0xff]
    %v7474 = vld [vmem:[#allocation2 + $0x150] sm:$0xff]
    %v7475 = vld [vmem:[#allocation2 + $0x158] sm:$0xff]
    %v7476 = vld [vmem:[#allocation2 + $0x160] sm:$0xff]
    %v7477 = vld [vmem:[#allocation2 + $0x168] sm:$0xff]
    %v7478 = vld [vmem:[#allocation2 + $0x170] sm:$0xff]
    %v7479 = vld [vmem:[#allocation2 + $0x178] sm:$0xff]
    %v7480 = vld [vmem:[#allocation2 + $0x180] sm:$0xff]
    %v7481 = vld [vmem:[#allocation2 + $0x188] sm:$0xff]
    %v7482 = vld [vmem:[#allocation2 + $0x190] sm:$0xff]
    %v7483 = vld [vmem:[#allocation2 + $0x198] sm:$0xff]
    %v7484 = vld [vmem:[#allocation2 + $0x1a0] sm:$0xff]
    %v7485 = vld [vmem:[#allocation2 + $0x1a8] sm:$0xff]
    %v7486 = vld [vmem:[#allocation2 + $0x1b0] sm:$0xff]
    %v7487 = vld [vmem:[#allocation2 + $0x1b8] sm:$0xff]
    %v7488 = vld [vmem:[#allocation2 + $0x1c0] sm:$0xff]
    %v7489 = vld [vmem:[#allocation2 + $0x1c8] sm:$0xff]
    %v7490 = vld [vmem:[#allocation2 + $0x1d0] sm:$0xff]
    %v7491 = vld [vmem:[#allocation2 + $0x1d8] sm:$0xff]
    %v7492 = vld [vmem:[#allocation2 + $0x1e0] sm:$0xff]
    %v7493 = vld [vmem:[#allocation2 + $0x1e8] sm:$0xff]
    %v7494 = vld [vmem:[#allocation2 + $0x1f0] sm:$0xff]
    %v7495 = vld [vmem:[#allocation2 + $0x1f8] sm:$0xff]
    %v7496 = vld [vmem:[%s2] sm:$0x1]
    %v7498 = vlaneseq
    %v7499 = vshrl.u32 %v7498, 7
    %v7500 = vsub.s32 0, %v7499
    %v7501 = vrot.slane %v7496, %v7500
    %v7503 = vadd.f32 %v7432, %v7501
    %v7504 = vadd.f32 %v7433, %v7501
    %v7505 = vadd.f32 %v7434, %v7501
    %v7506 = vadd.f32 %v7435, %v7501
    %v7507 = vadd.f32 %v7436, %v7501
    %v7508 = vadd.f32 %v7437, %v7501
    %v7509 = vadd.f32 %v7438, %v7501
    %v7510 = vadd.f32 %v7439, %v7501
    %v7511 = vadd.f32 %v7440, %v7501
    %v7512 = vadd.f32 %v7441, %v7501
    %v7513 = vadd.f32 %v7442, %v7501
    %v7514 = vadd.f32 %v7443, %v7501
    %v7515 = vadd.f32 %v7444, %v7501
    %v7516 = vadd.f32 %v7445, %v7501
    %v7517 = vadd.f32 %v7446, %v7501
    %v7518 = vadd.f32 %v7447, %v7501
    %v7519 = vadd.f32 %v7448, %v7501
    %v7520 = vadd.f32 %v7449, %v7501
    %v7521 = vadd.f32 %v7450, %v7501
    %v7522 = vadd.f32 %v7451, %v7501
    %v7523 = vadd.f32 %v7452, %v7501
    %v7524 = vadd.f32 %v7453, %v7501
    %v7525 = vadd.f32 %v7454, %v7501
    %v7526 = vadd.f32 %v7455, %v7501
    %v7527 = vadd.f32 %v7456, %v7501
    %v7528 = vadd.f32 %v7457, %v7501
    %v7529 = vadd.f32 %v7458, %v7501
    %v7530 = vadd.f32 %v7459, %v7501
    %v7531 = vadd.f32 %v7460, %v7501
    %v7532 = vadd.f32 %v7461, %v7501
    %v7533 = vadd.f32 %v7462, %v7501
    %v7534 = vadd.f32 %v7463, %v7501
    %v7535 = vadd.f32 %v7464, %v7501
    %v7536 = vadd.f32 %v7465, %v7501
    %v7537 = vadd.f32 %v7466, %v7501
    %v7538 = vadd.f32 %v7467, %v7501
    %v7539 = vadd.f32 %v7468, %v7501
    %v7540 = vadd.f32 %v7469, %v7501
    %v7541 = vadd.f32 %v7470, %v7501
    %v7542 = vadd.f32 %v7471, %v7501
    %v7543 = vadd.f32 %v7472, %v7501
    %v7544 = vadd.f32 %v7473, %v7501
    %v7545 = vadd.f32 %v7474, %v7501
    %v7546 = vadd.f32 %v7475, %v7501
    %v7547 = vadd.f32 %v7476, %v7501
    %v7548 = vadd.f32 %v7477, %v7501
    %v7549 = vadd.f32 %v7478, %v7501
    %v7550 = vadd.f32 %v7479, %v7501
    %v7551 = vadd.f32 %v7480, %v7501
    %v7552 = vadd.f32 %v7481, %v7501
    %v7553 = vadd.f32 %v7482, %v7501
    %v7554 = vadd.f32 %v7483, %v7501
    %v7555 = vadd.f32 %v7484, %v7501
    %v7556 = vadd.f32 %v7485, %v7501
    %v7557 = vadd.f32 %v7486, %v7501
    %v7558 = vadd.f32 %v7487, %v7501
    %v7559 = vadd.f32 %v7488, %v7501
    %v7560 = vadd.f32 %v7489, %v7501
    %v7561 = vadd.f32 %v7490, %v7501
    %v7562 = vadd.f32 %v7491, %v7501
    %v7563 = vadd.f32 %v7492, %v7501
    %v7564 = vadd.f32 %v7493, %v7501
    %v7565 = vadd.f32 %v7494, %v7501
    %v7566 = vadd.f32 %v7495, %v7501
    %v7567 = vmax.f32 %v7503, 0.0
    %v7568 = vmax.f32 %v7504, 0.0
    %v7569 = vmax.f32 %v7505, 0.0
    %v7570 = vmax.f32 %v7506, 0.0
    %v7571 = vmax.f32 %v7507, 0.0
    %v7572 = vmax.f32 %v7508, 0.0
    %v7573 = vmax.f32 %v7509, 0.0
    %v7574 = vmax.f32 %v7510, 0.0
    %v7575 = vmax.f32 %v7511, 0.0
    %v7576 = vmax.f32 %v7512, 0.0
    %v7577 = vmax.f32 %v7513, 0.0
    %v7578 = vmax.f32 %v7514, 0.0
    %v7579 = vmax.f32 %v7515, 0.0
    %v7580 = vmax.f32 %v7516, 0.0
    %v7581 = vmax.f32 %v7517, 0.0
    %v7582 = vmax.f32 %v7518, 0.0
    %v7583 = vmax.f32 %v7519, 0.0
    %v7584 = vmax.f32 %v7520, 0.0
    %v7585 = vmax.f32 %v7521, 0.0
    %v7586 = vmax.f32 %v7522, 0.0
    %v7587 = vmax.f32 %v7523, 0.0
    %v7588 = vmax.f32 %v7524, 0.0
    %v7589 = vmax.f32 %v7525, 0.0
    %v7590 = vmax.f32 %v7526, 0.0
    %v7591 = vmax.f32 %v7527, 0.0
    %v7592 = vmax.f32 %v7528, 0.0
    %v7593 = vmax.f32 %v7529, 0.0
    %v7594 = vmax.f32 %v7530, 0.0
    %v7595 = vmax.f32 %v7531, 0.0
    %v7596 = vmax.f32 %v7532, 0.0
    %v7597 = vmax.f32 %v7533, 0.0
    %v7598 = vmax.f32 %v7534, 0.0
    %v7599 = vmax.f32 %v7535, 0.0
    %v7600 = vmax.f32 %v7536, 0.0
    %v7601 = vmax.f32 %v7537, 0.0
    %v7602 = vmax.f32 %v7538, 0.0
    %v7603 = vmax.f32 %v7539, 0.0
    %v7604 = vmax.f32 %v7540, 0.0
    %v7605 = vmax.f32 %v7541, 0.0
    %v7606 = vmax.f32 %v7542, 0.0
    %v7607 = vmax.f32 %v7543, 0.0
    %v7608 = vmax.f32 %v7544, 0.0
    %v7609 = vmax.f32 %v7545, 0.0
    %v7610 = vmax.f32 %v7546, 0.0
    %v7611 = vmax.f32 %v7547, 0.0
    %v7612 = vmax.f32 %v7548, 0.0
    %v7613 = vmax.f32 %v7549, 0.0
    %v7614 = vmax.f32 %v7550, 0.0
    %v7615 = vmax.f32 %v7551, 0.0
    %v7616 = vmax.f32 %v7552, 0.0
    %v7617 = vmax.f32 %v7553, 0.0
    %v7618 = vmax.f32 %v7554, 0.0
    %v7619 = vmax.f32 %v7555, 0.0
    %v7620 = vmax.f32 %v7556, 0.0
    %v7621 = vmax.f32 %v7557, 0.0
    %v7622 = vmax.f32 %v7558, 0.0
    %v7623 = vmax.f32 %v7559, 0.0
    %v7624 = vmax.f32 %v7560, 0.0
    %v7625 = vmax.f32 %v7561, 0.0
    %v7626 = vmax.f32 %v7562, 0.0
    %v7627 = vmax.f32 %v7563, 0.0
    %v7628 = vmax.f32 %v7564, 0.0
    %v7629 = vmax.f32 %v7565, 0.0
    %v7630 = vmax.f32 %v7566, 0.0
    %7631 = vst [vmem:[#allocation2] sm:$0xff] %v7567
    %7632 = vst [vmem:[#allocation2 + $0x8] sm:$0xff] %v7568
    %7633 = vst [vmem:[#allocation2 + $0x10] sm:$0xff] %v7569
    %7634 = vst [vmem:[#allocation2 + $0x18] sm:$0xff] %v7570
    %7635 = vst [vmem:[#allocation2 + $0x20] sm:$0xff] %v7571
    %7636 = vst [vmem:[#allocation2 + $0x28] sm:$0xff] %v7572
    %7637 = vst [vmem:[#allocation2 + $0x30] sm:$0xff] %v7573
    %7638 = vst [vmem:[#allocation2 + $0x38] sm:$0xff] %v7574
    %7639 = vst [vmem:[#allocation2 + $0x40] sm:$0xff] %v7575
    %7640 = vst [vmem:[#allocation2 + $0x48] sm:$0xff] %v7576
    %7641 = vst [vmem:[#allocation2 + $0x50] sm:$0xff] %v7577
    %7642 = vst [vmem:[#allocation2 + $0x58] sm:$0xff] %v7578
    %7643 = vst [vmem:[#allocation2 + $0x60] sm:$0xff] %v7579
    %7644 = vst [vmem:[#allocation2 + $0x68] sm:$0xff] %v7580
    %7645 = vst [vmem:[#allocation2 + $0x70] sm:$0xff] %v7581
    %7646 = vst [vmem:[#allocation2 + $0x78] sm:$0xff] %v7582
    %7647 = vst [vmem:[#allocation2 + $0x80] sm:$0xff] %v7583
    %7648 = vst [vmem:[#allocation2 + $0x88] sm:$0xff] %v7584
    %7649 = vst [vmem:[#allocation2 + $0x90] sm:$0xff] %v7585
    %7650 = vst [vmem:[#allocation2 + $0x98] sm:$0xff] %v7586
    %7651 = vst [vmem:[#allocation2 + $0xa0] sm:$0xff] %v7587
    %7652 = vst [vmem:[#allocation2 + $0xa8] sm:$0xff] %v7588
    %7653 = vst [vmem:[#allocation2 + $0xb0] sm:$0xff] %v7589
    %7654 = vst [vmem:[#allocation2 + $0xb8] sm:$0xff] %v7590
    %7655 = vst [vmem:[#allocation2 + $0xc0] sm:$0xff] %v7591
    %7656 = vst [vmem:[#allocation2 + $0xc8] sm:$0xff] %v7592
    %7657 = vst [vmem:[#allocation2 + $0xd0] sm:$0xff] %v7593
    %7658 = vst [vmem:[#allocation2 + $0xd8] sm:$0xff] %v7594
    %7659 = vst [vmem:[#allocation2 + $0xe0] sm:$0xff] %v7595
    %7660 = vst [vmem:[#allocation2 + $0xe8] sm:$0xff] %v7596
    %7661 = vst [vmem:[#allocation2 + $0xf0] sm:$0xff] %v7597
    %7662 = vst [vmem:[#allocation2 + $0xf8] sm:$0xff] %v7598
    %7663 = vst [vmem:[#allocation2 + $0x100] sm:$0xff] %v7599
    %7664 = vst [vmem:[#allocation2 + $0x108] sm:$0xff] %v7600
    %7665 = vst [vmem:[#allocation2 + $0x110] sm:$0xff] %v7601
    %7666 = vst [vmem:[#allocation2 + $0x118] sm:$0xff] %v7602
    %7667 = vst [vmem:[#allocation2 + $0x120] sm:$0xff] %v7603
    %7668 = vst [vmem:[#allocation2 + $0x128] sm:$0xff] %v7604
    %7669 = vst [vmem:[#allocation2 + $0x130] sm:$0xff] %v7605
    %7670 = vst [vmem:[#allocation2 + $0x138] sm:$0xff] %v7606
    %7671 = vst [vmem:[#allocation2 + $0x140] sm:$0xff] %v7607
    %7672 = vst [vmem:[#allocation2 + $0x148] sm:$0xff] %v7608
    %7673 = vst [vmem:[#allocation2 + $0x150] sm:$0xff] %v7609
    %7674 = vst [vmem:[#allocation2 + $0x158] sm:$0xff] %v7610
    %7675 = vst [vmem:[#allocation2 + $0x160] sm:$0xff] %v7611
    %7676 = vst [vmem:[#allocation2 + $0x168] sm:$0xff] %v7612
    %7677 = vst [vmem:[#allocation2 + $0x170] sm:$0xff] %v7613
    %7678 = vst [vmem:[#allocation2 + $0x178] sm:$0xff] %v7614
    %7679 = vst [vmem:[#allocation2 + $0x180] sm:$0xff] %v7615
    %7680 = vst [vmem:[#allocation2 + $0x188] sm:$0xff] %v7616
    %7681 = vst [vmem:[#allocation2 + $0x190] sm:$0xff] %v7617
    %7682 = vst [vmem:[#allocation2 + $0x198] sm:$0xff] %v7618
    %7683 = vst [vmem:[#allocation2 + $0x1a0] sm:$0xff] %v7619
    %7684 = vst [vmem:[#allocation2 + $0x1a8] sm:$0xff] %v7620
    %7685 = vst [vmem:[#allocation2 + $0x1b0] sm:$0xff] %v7621
    %7686 = vst [vmem:[#allocation2 + $0x1b8] sm:$0xff] %v7622
    %7687 = vst [vmem:[#allocation2 + $0x1c0] sm:$0xff] %v7623
    %7688 = vst [vmem:[#allocation2 + $0x1c8] sm:$0xff] %v7624
    %7689 = vst [vmem:[#allocation2 + $0x1d0] sm:$0xff] %v7625
    %7690 = vst [vmem:[#allocation2 + $0x1d8] sm:$0xff] %v7626
    %7691 = vst [vmem:[#allocation2 + $0x1e0] sm:$0xff] %v7627
    %7692 = vst [vmem:[#allocation2 + $0x1e8] sm:$0xff] %v7628
    %7693 = vst [vmem:[#allocation2 + $0x1f0] sm:$0xff] %v7629
    %7694 = vst [vmem:[#allocation2 + $0x1f8] sm:$0xff] %v7630
    // Predicated region
    $region14: #{tpu_custom_call.1} parent=1 // pred_check
      _
    $region15: #{tpu_custom_call.1} parent=1 // pred_check_branch
      %7696 = sbr.rel (0) target = $region17
    $region16: #{tpu_custom_call.1} parent=1 // pred_region
      %s7698 = ssub.s32 8192, 8192
      %7699 = vsyncadd [#allocation3], %s7698
      %s7700 = sshll.u32 [#allocation2], 4
      %s7701 = int_to_ptr.vmem [resolvable:$true] %s7700
      %7706 = dma.vmem_to_hbm [thread:$0]  %s7701, 8192, %s3, [#allocation3], 128, 128, 8
    $region17: #{tpu_custom_call.1} parent=1 // pred_fallthru
      _
    // Predicated region
    $region18: #{tpu_custom_call.1} parent=1 // pred_check
      _
    $region19: #{tpu_custom_call.1} parent=1 // pred_check_branch
      %7708 = sbr.rel (0) target = $region21
    $region20: #{tpu_custom_call.1} parent=1 // pred_region
      %7709 = dma.done [#allocation3], 8192
    $region21: #{tpu_custom_call.1} parent=1 // pred_fallthru
      _
    %7710 = vsyncpa [#allocation3], 1

</llo_original>
